<compile_context>
chip_gen: v7x
topology: tpu7x:2x2x1
jax: 0.10.0
libtpu: 0.0.40
codegen_flags: <defaults>
</compile_context>

<pallas_src>
import functools

import jax
import jax.numpy as jnp
from jax import lax
from jax.experimental import pallas as pl
from jax.experimental.pallas import tpu as pltpu

MASK_VAL = -1e9                      # plain Python float (finite "minus infinity")
VMEM_LIMIT = 48 * 1024 * 1024        # <= v7x 64 MiB physical; plenty for v5e/v6e
ACT_DTYPE = jnp.bfloat16             # storage dtype for weights + activations


def _ceil_to(v, m):
    return -(-v // m) * m


def _ln_rows(y, gamma, beta, eps):
    """Row-wise LayerNorm in f32."""
    mu = jnp.mean(y, axis=-1, keepdims=True)
    var = jnp.mean((y - mu) ** 2, axis=-1, keepdims=True)
    return (y - mu) * lax.rsqrt(var + eps) * gamma + beta


# --------------------------------------------------------------------------
# Dense: y = act(x @ w + b), tiled over (M, N), bf16 MXU inputs, f32 accumulate
# --------------------------------------------------------------------------
def _dense_kernel(x_ref, w_ref, b_ref, o_ref, *, activation):
    y = jnp.dot(x_ref[...], w_ref[...], preferred_element_type=jnp.float32)
    y = y + b_ref[...]
    if activation == "relu":
        y = jnp.maximum(y, 0.0)
    elif activation == "tanh":
        y = jnp.tanh(y)
    o_ref[...] = y.astype(o_ref.dtype)


def dense(x, w, b, activation="none", out_dtype=ACT_DTYPE, tm=256, tn=512):
    M, K = x.shape
    N = w.shape[1]
    x = x.astype(ACT_DTYPE)
    w = w.astype(ACT_DTYPE)
    b = b.astype(jnp.float32)

    if M <= tm:
        TM, Mp = M, M
    else:
        TM = tm
        Mp = _ceil_to(M, TM)
        x = jnp.pad(x, ((0, Mp - M), (0, 0)))
    if N <= tn:
        TN, Np = N, N
    else:
        Np = _ceil_to(N, 128)
        TN = next(t for t in (512, 384, 256, 128) if Np % t == 0)
        if Np != N:
            w = jnp.pad(w, ((0, 0), (0, Np - N)))
            b = jnp.pad(b, (0, Np - N))
    n_i, n_j = Mp // TM, Np // TN

    # Fetch the larger operand only once: weight-dominated layers stream weights
    # with the M axis innermost; activation-dominated layers the other way.
    if n_i > 1 and n_j > 1 and (Np * K) > (Mp * K):
        grid = (n_j, n_i)
        x_map = lambda j, i: (i, 0)
        w_map = lambda j, i: (0, j)
        b_map = lambda j, i: (0, j)
        o_map = lambda j, i: (i, j)
    else:
        grid = (n_i, n_j)
        x_map = lambda i, j: (i, 0)
        w_map = lambda i, j: (0, j)
        b_map = lambda i, j: (0, j)
        o_map = lambda i, j: (i, j)

    out = pl.pallas_call(
        functools.partial(_dense_kernel, activation=activation),
        out_shape=jax.ShapeDtypeStruct((Mp, Np), out_dtype),
        grid=grid,
        in_specs=[pl.BlockSpec((TM, K), x_map),
                  pl.BlockSpec((K, TN), w_map),
                  pl.BlockSpec((1, TN), b_map)],
        out_specs=pl.BlockSpec((TM, TN), o_map),
        compiler_params=pltpu.CompilerParams(
            dimension_semantics=("parallel", "parallel"),
            vmem_limit_bytes=VMEM_LIMIT),
    )(x, w, b.reshape(1, -1))
    if Mp != M or Np != N:
        out = out[:M, :N]
    return out


# --------------------------------------------------------------------------
# Fused feed-forward block: LayerNorm(x + W2 @ relu(W1 @ x + b1) + b2)
# Both FF weights resident in VMEM; single pass over the activations.
# --------------------------------------------------------------------------
def _ffn_kernel(x_ref, w1_ref, b1_ref, w2_ref, b2_ref, g_ref, bt_ref, o_ref, *, eps):
    x = x_ref[...]                                          # (TM, E) bf16
    h = jnp.dot(x, w1_ref[...], preferred_element_type=jnp.float32) + b1_ref[...]
    h = jnp.maximum(h, 0.0)
    y = jnp.dot(h.astype(x.dtype), w2_ref[...], preferred_element_type=jnp.float32)
    y = y + b2_ref[...] + x.astype(jnp.float32)
    o_ref[...] = _ln_rows(y, g_ref[...], bt_ref[...], eps).astype(o_ref.dtype)


def ffn_block(x, w1, b1, w2, b2, gamma, beta, eps=1e-5, tm=256):
    M, E = x.shape
    FF = w1.shape[1]
    if M <= tm:
        TM, Mp = M, M
        xp = x
    else:
        TM = tm
        Mp = _ceil_to(M, TM)
        xp = jnp.pad(x, ((0, Mp - M), (0, 0)))
    out = pl.pallas_call(
        functools.partial(_ffn_kernel, eps=eps),
        out_shape=jax.ShapeDtypeStruct((Mp, E), ACT_DTYPE),
        grid=(Mp // TM,),
        in_specs=[pl.BlockSpec((TM, E), lambda i: (i, 0)),
                  pl.BlockSpec((E, FF), lambda i: (0, 0)),
                  pl.BlockSpec((1, FF), lambda i: (0, 0)),
                  pl.BlockSpec((FF, E), lambda i: (0, 0)),
                  pl.BlockSpec((1, E), lambda i: (0, 0)),
                  pl.BlockSpec((1, E), lambda i: (0, 0)),
                  pl.BlockSpec((1, E), lambda i: (0, 0))],
        out_specs=pl.BlockSpec((TM, E), lambda i: (i, 0)),
        compiler_params=pltpu.CompilerParams(
            dimension_semantics=("parallel",), vmem_limit_bytes=VMEM_LIMIT),
    )(xp.astype(ACT_DTYPE), w1.astype(ACT_DTYPE),
      b1.reshape(1, FF).astype(jnp.float32), w2.astype(ACT_DTYPE),
      b2.reshape(1, E).astype(jnp.float32),
      gamma.reshape(1, E).astype(jnp.float32), beta.reshape(1, E).astype(jnp.float32))
    return out[:M] if Mp != M else out


# --------------------------------------------------------------------------
# Standalone LayerNorm (final encoder / decoder norms)
# --------------------------------------------------------------------------
def _layernorm_kernel(x_ref, g_ref, b_ref, o_ref, *, eps):
    x = x_ref[...].astype(jnp.float32)
    o_ref[...] = _ln_rows(x, g_ref[...], b_ref[...], eps).astype(o_ref.dtype)


def layernorm(x, gamma, beta, eps=1e-5, tm=512):
    M, D = x.shape
    TM = M if M <= tm else tm
    Mp = _ceil_to(M, TM)
    xp = jnp.pad(x, ((0, Mp - M), (0, 0))) if Mp != M else x
    out = pl.pallas_call(
        functools.partial(_layernorm_kernel, eps=eps),
        out_shape=jax.ShapeDtypeStruct((Mp, D), ACT_DTYPE),
        grid=(Mp // TM,),
        in_specs=[pl.BlockSpec((TM, D), lambda i: (i, 0)),
                  pl.BlockSpec((1, D), lambda i: (0, 0)),
                  pl.BlockSpec((1, D), lambda i: (0, 0))],
        out_specs=pl.BlockSpec((TM, D), lambda i: (i, 0)),
        compiler_params=pltpu.CompilerParams(
            dimension_semantics=("parallel",), vmem_limit_bytes=VMEM_LIMIT),
    )(xp.astype(ACT_DTYPE), gamma.reshape(1, D).astype(jnp.float32),
      beta.reshape(1, D).astype(jnp.float32))
    return out[:M] if Mp != M else out


# --------------------------------------------------------------------------
# Multi-head attention, fused with out-projection + residual + LayerNorm.
# One program per batch element; all heads computed in-kernel; causal mask
# built from iota; key-padding mask passed as additive (B, 1, Lk) f32.
# concat_h(o_h) @ Wo is computed as sum_h o_h @ Wo[h*Dh:(h+1)*Dh]  (no concat).
# --------------------------------------------------------------------------
def _mha_heads_outproj(q, k, v, bias, wo, nhead):
    Lq, E = q.shape
    Dh = E // nhead
    scale = 1.0 / (Dh ** 0.5)
    acc = jnp.zeros((Lq, E), jnp.float32)
    for h in range(nhead):
        sl = slice(h * Dh, (h + 1) * Dh)
        s = lax.dot_general(q[:, sl], k[:, sl], (((1,), (1,)), ((), ())),
                            preferred_element_type=jnp.float32) * scale
        s = s + bias
        m = jnp.max(s, axis=-1, keepdims=True)
        p = jnp.exp(s - m)
        p = p / jnp.sum(p, axis=-1, keepdims=True)
        o_h = jnp.dot(p.astype(ACT_DTYPE), v[:, sl],
                      preferred_element_type=jnp.float32)
        acc = acc + jnp.dot(o_h.astype(ACT_DTYPE), wo[sl, :],
                            preferred_element_type=jnp.float32)
    return acc


def _self_mha_kernel(qkv_ref, mask_ref, wo_ref, bo_ref, res_ref, g_ref, bt_ref,
                     o_ref, *, nhead, causal, eps):
    qkv = qkv_ref[0]                                     # (L, 3E) bf16
    L = qkv.shape[0]
    E = qkv.shape[-1] // 3
    bias = mask_ref[0]                                   # (1, L) additive f32
    if causal:
        row = lax.broadcasted_iota(jnp.int32, (L, L), 0)
        col = lax.broadcasted_iota(jnp.int32, (L, L), 1)
        bias = bias + jnp.where(col > row, MASK_VAL, 0.0)
    ctx = _mha_heads_outproj(qkv[:, :E], qkv[:, E:2 * E], qkv[:, 2 * E:],
                             bias, wo_ref[...], nhead)
    y = ctx + bo_ref[...] + res_ref[0].astype(jnp.float32)
    o_ref[0] = _ln_rows(y, g_ref[...], bt_ref[...], eps).astype(o_ref.dtype)


def _cross_mha_kernel(q_ref, kv_ref, mask_ref, wo_ref, bo_ref, res_ref, g_ref,
                      bt_ref, o_ref, *, nhead, eps):
    q = q_ref[0]                                         # (Lq, E)  bf16
    kv = kv_ref[0]                                       # (Lk, 2E) bf16
    E = q.shape[-1]
    ctx = _mha_heads_outproj(q, kv[:, :E], kv[:, E:], mask_ref[0],
                             wo_ref[...], nhead)
    y = ctx + bo_ref[...] + res_ref[0].astype(jnp.float32)
    o_ref[0] = _ln_rows(y, g_ref[...], bt_ref[...], eps).astype(o_ref.dtype)


def mha_self_block(qkv, mask_add, res, wo, bo, gamma, beta, nhead, causal, eps=1e-5):
    B, L, E3 = qkv.shape
    E = E3 // 3
    return pl.pallas_call(
        functools.partial(_self_mha_kernel, nhead=nhead, causal=causal, eps=eps),
        out_shape=jax.ShapeDtypeStruct((B, L, E), ACT_DTYPE),
        grid=(B,),
        in_specs=[pl.BlockSpec((1, L, E3), lambda b: (b, 0, 0)),
                  pl.BlockSpec((1, 1, L), lambda b: (b, 0, 0)),
                  pl.BlockSpec((E, E), lambda b: (0, 0)),
                  pl.BlockSpec((1, E), lambda b: (0, 0)),
                  pl.BlockSpec((1, L, E), lambda b: (b, 0, 0)),
                  pl.BlockSpec((1, E), lambda b: (0, 0)),
                  pl.BlockSpec((1, E), lambda b: (0, 0))],
        out_specs=pl.BlockSpec((1, L, E), lambda b: (b, 0, 0)),
        compiler_params=pltpu.CompilerParams(
            dimension_semantics=("parallel",), vmem_limit_bytes=VMEM_LIMIT),
    )(qkv.astype(ACT_DTYPE), mask_add, wo.astype(ACT_DTYPE),
      bo.reshape(1, E).astype(jnp.float32), res.astype(ACT_DTYPE),
      gamma.reshape(1, E).astype(jnp.float32), beta.reshape(1, E).astype(jnp.float32))


def mha_cross_block(q, kv, mask_add, res, wo, bo, gamma, beta, nhead, eps=1e-5):
    B, Lq, E = q.shape
    Lk = kv.shape[1]
    return pl.pallas_call(
        functools.partial(_cross_mha_kernel, nhead=nhead, eps=eps),
        out_shape=jax.ShapeDtypeStruct((B, Lq, E), ACT_DTYPE),
        grid=(B,),
        in_specs=[pl.BlockSpec((1, Lq, E), lambda b: (b, 0, 0)),
                  pl.BlockSpec((1, Lk, 2 * E), lambda b: (b, 0, 0)),
                  pl.BlockSpec((1, 1, Lk), lambda b: (b, 0, 0)),
                  pl.BlockSpec((E, E), lambda b: (0, 0)),
                  pl.BlockSpec((1, E), lambda b: (0, 0)),
                  pl.BlockSpec((1, Lq, E), lambda b: (b, 0, 0)),
                  pl.BlockSpec((1, E), lambda b: (0, 0)),
                  pl.BlockSpec((1, E), lambda b: (0, 0))],
        out_specs=pl.BlockSpec((1, Lq, E), lambda b: (b, 0, 0)),
        compiler_params=pltpu.CompilerParams(
            dimension_semantics=("parallel",), vmem_limit_bytes=VMEM_LIMIT),
    )(q.astype(ACT_DTYPE), kv.astype(ACT_DTYPE), mask_add, wo.astype(ACT_DTYPE),
      bo.reshape(1, E).astype(jnp.float32), res.astype(ACT_DTYPE),
      gamma.reshape(1, E).astype(jnp.float32), beta.reshape(1, E).astype(jnp.float32))


# --------------------------------------------------------------------------
# Bi-directional LSTM recurrence as ONE pallas_call (direction = grid axis).
# W_hh resident in VMEM (bf16); gate math in f32; length masking in-kernel.
# --------------------------------------------------------------------------
def _lstm_kernel(xp_ref, len_ref, whh_ref, bhh_ref, hT_ref, h_scr, c_scr, *, H, T):
    whh = whh_ref[0]                         # (H, 4H) bf16
    bhh = bhh_ref[0]                         # (1, 4H) f32
    lengths = len_ref[...]                   # (TN, 1) int32

    def sigmoid(z):
        return 1.0 / (1.0 + jnp.exp(-z))

    def step(t, h, c):
        g = xp_ref[0, t].astype(jnp.float32) \
            + jnp.dot(h.astype(ACT_DTYPE), whh, preferred_element_type=jnp.float32) \
            + bhh
        i = sigmoid(g[:, 0 * H:1 * H])
        f = sigmoid(g[:, 1 * H:2 * H])
        gg = jnp.tanh(g[:, 2 * H:3 * H])
        o = sigmoid(g[:, 3 * H:4 * H])
        c_new = f * c + i * gg
        h_new = o * jnp.tanh(c_new)
        valid = t < lengths
        return jnp.where(valid, h_new, h), jnp.where(valid, c_new, c)

    if T <= 32:                              # static unroll: LLO sees full recurrence
        h = jnp.zeros(h_scr.shape, jnp.float32)
        c = jnp.zeros(c_scr.shape, jnp.float32)
        for t in range(T):
            h, c = step(t, h, c)
        hT_ref[0] = h.astype(hT_ref.dtype)
    else:
        h_scr[...] = jnp.zeros(h_scr.shape, jnp.float32)
        c_scr[...] = jnp.zeros(c_scr.shape, jnp.float32)

        def body(t, carry):
            h, c = step(t, h_scr[...], c_scr[...])
            h_scr[...] = h
            c_scr[...] = c
            return carry

        lax.fori_loop(0, T, body, 0)
        hT_ref[0] = h_scr[...].astype(hT_ref.dtype)


def bilstm_last_hidden(xp_both, lengths, w_hh_both, b_hh_both, hidden, row_tile=256):
    """xp_both:(2, T, N, 4H) precomputed input projections. Returns (2, N, H)."""
    D, T, N, H4 = xp_both.shape
    H = hidden
    if N <= row_tile:
        TN, Np = N, N
    else:
        TN = row_tile
        Np = _ceil_to(N, TN)
        xp_both = jnp.pad(xp_both, ((0, 0), (0, 0), (0, Np - N), (0, 0)))
        lengths = jnp.pad(lengths, (0, Np - N))

    out = pl.pallas_call(
        functools.partial(_lstm_kernel, H=H, T=T),
        out_shape=jax.ShapeDtypeStruct((D, Np, H), ACT_DTYPE),
        grid=(D, Np // TN),
        in_specs=[
            pl.BlockSpec((1, T, TN, H4), lambda d, n: (d, 0, n, 0)),
            pl.BlockSpec((TN, 1), lambda d, n: (n, 0)),
            pl.BlockSpec((1, H, H4), lambda d, n: (d, 0, 0)),
            pl.BlockSpec((1, 1, H4), lambda d, n: (d, 0, 0)),
        ],
        out_specs=pl.BlockSpec((1, TN, H), lambda d, n: (d, n, 0)),
        scratch_shapes=[pltpu.VMEM((TN, H), jnp.float32),
                        pltpu.VMEM((TN, H), jnp.float32)],
        compiler_params=pltpu.CompilerParams(
            dimension_semantics=("parallel", "parallel"),
            vmem_limit_bytes=VMEM_LIMIT),
    )(xp_both.astype(ACT_DTYPE), lengths.reshape(Np, 1).astype(jnp.int32),
      w_hh_both.astype(ACT_DTYPE), b_hh_both.reshape(D, 1, H4).astype(jnp.float32))
    return out[:, :N] if Np != N else out


# --------------------------------------------------------------------------
# Transformer layers (PyTorch nn.Transformer post-LN semantics, batch-major)
# --------------------------------------------------------------------------
def encoder_layer(x, p, nhead, mask_add):
    B, L, E = x.shape
    xf = x.reshape(B * L, E)
    qkv = dense(xf, p["self_attn"]["w_qkv"], p["self_attn"]["b_qkv"]).reshape(B, L, 3 * E)
    x1 = mha_self_block(qkv, mask_add, x, p["self_attn"]["wo"], p["self_attn"]["bo"],
                        p["ln1_w"], p["ln1_b"], nhead, causal=False)
    x2 = ffn_block(x1.reshape(B * L, E), p["ff1_w"], p["ff1_b"], p["ff2_w"], p["ff2_b"],
                   p["ln2_w"], p["ln2_b"])
    return x2.reshape(B, L, E)


def decoder_layer(y, memory, p, nhead, tgt_mask_add, mem_mask_add):
    B, Lt, E = y.shape
    Ls = memory.shape[1]
    yf = y.reshape(B * Lt, E)
    qkv = dense(yf, p["self_attn"]["w_qkv"], p["self_attn"]["b_qkv"]).reshape(B, Lt, 3 * E)
    y1 = mha_self_block(qkv, tgt_mask_add, y, p["self_attn"]["wo"], p["self_attn"]["bo"],
                        p["ln1_w"], p["ln1_b"], nhead, causal=True)
    q = dense(y1.reshape(B * Lt, E), p["cross_attn"]["wq"], p["cross_attn"]["bq"]).reshape(B, Lt, E)
    kv = dense(memory.reshape(B * Ls, E), p["cross_attn"]["w_kv"],
               p["cross_attn"]["b_kv"]).reshape(B, Ls, 2 * E)
    y2 = mha_cross_block(q, kv, mem_mask_add, y1, p["cross_attn"]["wo"],
                         p["cross_attn"]["bo"], p["ln2_w"], p["ln2_b"], nhead)
    y3 = ffn_block(y2.reshape(B * Lt, E), p["ff1_w"], p["ff1_b"], p["ff2_w"], p["ff2_b"],
                   p["ln3_w"], p["ln3_b"])
    return y3.reshape(B, Lt, E)


def transformer(src, tgt, tp, nhead, src_mask_add, tgt_mask_add, mem_mask_add):
    B, Ls, E = src.shape
    Lt = tgt.shape[1]
    x = src
    for lp in tp["encoder_layers"]:
        x = encoder_layer(x, lp, nhead, src_mask_add)
    memory = layernorm(x.reshape(B * Ls, E), tp["enc_norm_w"], tp["enc_norm_b"]).reshape(B, Ls, E)
    y = tgt
    for lp in tp["decoder_layers"]:
        y = decoder_layer(y, memory, lp, nhead, tgt_mask_add, mem_mask_add)
    return layernorm(y.reshape(B * Lt, E), tp["dec_norm_w"], tp["dec_norm_b"]).reshape(B, Lt, E)


# --------------------------------------------------------------------------
# Path encoder (canonical code2seq ContextLSTMEncoder)
# TODO(synk): ContextLSTMEncoder source was not in the provided snippet; this is the
#             canonical code2seq context encoder (subtoken-embedding sum + bi-LSTM
#             over AST paths + Linear->tanh, dropout = eval identity).
# --------------------------------------------------------------------------
def path_encoder(params, cfg, start, end, path, path_lengths):
    B, C, _ = start.shape
    Pt = path.shape[2]
    Da = cfg["ast_dim"]
    H = cfg["ast_hidden"]
    N = B * C

    sub_emb = params["subtoken_embedding"]
    start_e = jnp.take(sub_emb, start.reshape(N, -1), axis=0).astype(jnp.float32) \
                 .sum(axis=1).astype(ACT_DTYPE)
    end_e = jnp.take(sub_emb, end.reshape(N, -1), axis=0).astype(jnp.float32) \
               .sum(axis=1).astype(ACT_DTYPE)

    path_ids = path.reshape(N, Pt)
    plen = path_lengths.reshape(N).astype(jnp.int32)

    # one embedding gather + one fused (fw|bw) input projection;
    # the backward half is reversed along time (within valid length) with a cheap gather
    emb = jnp.take(params["ast_embedding"], path_ids, axis=0)               # (N, Pt, Da) bf16
    w_ih_both = jnp.concatenate([params["lstm_fw"]["w_ih"], params["lstm_bw"]["w_ih"]], axis=1)
    b_ih_both = jnp.concatenate([params["lstm_fw"]["b_ih"], params["lstm_bw"]["b_ih"]], axis=0)
    proj = dense(emb.reshape(N * Pt, Da), w_ih_both, b_ih_both).reshape(N, Pt, 8 * H)

    proj_fw = proj[:, :, :4 * H]
    t_idx = jnp.arange(Pt)[None, :]
    rev_idx = jnp.clip(plen[:, None] - 1 - t_idx, 0, Pt - 1)
    proj_bw = jnp.take_along_axis(proj[:, :, 4 * H:], rev_idx[:, :, None], axis=1)
    xp_both = jnp.stack([proj_fw, proj_bw], axis=0).transpose(0, 2, 1, 3)   # (2, Pt, N, 4H)

    w_hh_both = jnp.stack([params["lstm_fw"]["w_hh"], params["lstm_bw"]["w_hh"]], axis=0)
    b_hh_both = jnp.stack([params["lstm_fw"]["b_hh"], params["lstm_bw"]["b_hh"]], axis=0)
    h_last = bilstm_last_hidden(xp_both, plen, w_hh_both, b_hh_both, H)     # (2, N, H)

    ctx = jnp.concatenate([start_e, h_last[0], h_last[1], end_e], axis=-1).astype(ACT_DTYPE)
    out = dense(ctx, params["combine_w"], params["combine_b"], activation="tanh")
    return out.reshape(B, C, -1)


# --------------------------------------------------------------------------
# Full CustomTransformer forward
# --------------------------------------------------------------------------
def make_forward(cfg):
    nhead = cfg["nhead"]
    pad_idx = cfg["label_pad_idx"]
    E = cfg["d_model"]

    def forward(params, start, end, path, start_lengths, end_lengths,
                path_lengths, context_mask, label):
        B, Lt = label.shape
        label_embed = jnp.take(params["label_embedding"], label, axis=0)       # (B, Lt, E)
        enc_paths = path_encoder(params, cfg, start, end, path, path_lengths)  # (B, Ls, E)
        Ls = enc_paths.shape[1]

        # additive key-padding masks as (B, 1, Lk) — no O(B*L^2) bias in HBM
        src_kpm = (context_mask == 0.0)           # True == ignore (PyTorch convention)
        tgt_kpm = (label == pad_idx)
        src_mask_add = jnp.where(src_kpm, MASK_VAL, 0.0).astype(jnp.float32).reshape(B, 1, Ls)
        tgt_mask_add = jnp.where(tgt_kpm, MASK_VAL, 0.0).astype(jnp.float32).reshape(B, 1, Lt)

        dec = transformer(enc_paths, label_embed, params["transformer"], nhead,
                          src_mask_add, tgt_mask_add, src_mask_add)             # (B, Lt, E)
        logits = dense(dec.reshape(B * Lt, E), params["fc_w"], params["fc_b"],
                       out_dtype=jnp.float32)
        return logits.reshape(B, Lt, -1)

    return jax.jit(forward)


# --------------------------------------------------------------------------
# Deterministic parameter initialization (weights/embeddings stored in bf16)
# --------------------------------------------------------------------------
def init_params(key, cfg):
    keys = iter(jax.random.split(key, 512))
    f32 = jnp.float32

    def nrm(shape, scale=0.1):
        return (scale * jax.random.normal(next(keys), shape, dtype=f32)).astype(ACT_DTYPE)

    E, FF = cfg["d_model"], cfg["ffn"]

    def self_attn_p():
        return dict(w_qkv=nrm((E, 3 * E)), b_qkv=jnp.zeros((3 * E,), f32),
                    wo=nrm((E, E)), bo=jnp.zeros((E,), f32))

    def cross_attn_p():
        return dict(wq=nrm((E, E)), bq=jnp.zeros((E,), f32),
                    w_kv=nrm((E, 2 * E)), b_kv=jnp.zeros((2 * E,), f32),
                    wo=nrm((E, E)), bo=jnp.zeros((E,), f32))

    def enc_layer_p():
        return dict(self_attn=self_attn_p(),
                    ff1_w=nrm((E, FF)), ff1_b=jnp.zeros((FF,), f32),
                    ff2_w=nrm((FF, E)), ff2_b=jnp.zeros((E,), f32),
                    ln1_w=jnp.ones((E,), f32), ln1_b=jnp.zeros((E,), f32),
                    ln2_w=jnp.ones((E,), f32), ln2_b=jnp.zeros((E,), f32))

    def dec_layer_p():
        return dict(self_attn=self_attn_p(), cross_attn=cross_attn_p(),
                    ff1_w=nrm((E, FF)), ff1_b=jnp.zeros((FF,), f32),
                    ff2_w=nrm((FF, E)), ff2_b=jnp.zeros((E,), f32),
                    ln1_w=jnp.ones((E,), f32), ln1_b=jnp.zeros((E,), f32),
                    ln2_w=jnp.ones((E,), f32), ln2_b=jnp.zeros((E,), f32),
                    ln3_w=jnp.ones((E,), f32), ln3_b=jnp.zeros((E,), f32))

    H = cfg["ast_hidden"]

    def lstm_p():
        return dict(w_ih=nrm((cfg["ast_dim"], 4 * H)), w_hh=nrm((H, 4 * H)),
                    b_ih=jnp.zeros((4 * H,), f32), b_hh=jnp.zeros((4 * H,), f32))

    label_emb = nrm((cfg["label_vocab"], E)).at[cfg["label_pad_idx"]].set(0.0)
    sub_emb = nrm((cfg["subtoken_vocab"], cfg["subtoken_dim"])).at[cfg["subtoken_pad_idx"]].set(0.0)
    ast_emb = nrm((cfg["ast_vocab"], cfg["ast_dim"])).at[cfg["ast_pad_idx"]].set(0.0)

    combine_in = 2 * cfg["subtoken_dim"] + 2 * H
    return dict(
        label_embedding=label_emb,
        subtoken_embedding=sub_emb,
        ast_embedding=ast_emb,
        lstm_fw=lstm_p(), lstm_bw=lstm_p(),
        combine_w=nrm((combine_in, cfg["context_dim"])),
        combine_b=jnp.zeros((cfg["context_dim"],), f32),
        transformer=dict(
            encoder_layers=[enc_layer_p() for _ in range(cfg["num_encoder_layers"])],
            decoder_layers=[dec_layer_p() for _ in range(cfg["num_decoder_layers"])],
            enc_norm_w=jnp.ones((E,), f32), enc_norm_b=jnp.zeros((E,), f32),
            dec_norm_w=jnp.ones((E,), f32), dec_norm_b=jnp.zeros((E,), f32),
        ),
        fc_w=nrm((E, cfg["label_vocab"])),
        fc_b=jnp.zeros((cfg["label_vocab"],), f32),
    )


# --------------------------------------------------------------------------
if __name__ == "__main__":
    cfg = dict(
        d_model=32, nhead=4, num_encoder_layers=2, num_decoder_layers=2, ffn=64,
        label_vocab=24, label_pad_idx=0,
        subtoken_vocab=20, subtoken_pad_idx=0, subtoken_dim=16, subtoken_len=4,
        ast_vocab=12, ast_pad_idx=0, ast_dim=16, ast_path_len=5, ast_hidden=16,
        context_dim=32, max_contexts=8,
    )
    key = jax.random.PRNGKey(0)
    k_param, k_in = jax.random.split(key)
    params = init_params(k_param, cfg)

    B, C, St, Pt, Lt = 2, cfg["max_contexts"], cfg["subtoken_len"], cfg["ast_path_len"], 6
    ks = jax.random.split(k_in, 8)
    start = jax.random.randint(ks[0], (B, C, St), 1, cfg["subtoken_vocab"])
    end = jax.random.randint(ks[1], (B, C, St), 1, cfg["subtoken_vocab"])
    path = jax.random.randint(ks[2], (B, C, Pt), 1, cfg["ast_vocab"])
    start_lengths = jnp.full((B, C), St, dtype=jnp.int32)
    end_lengths = jnp.full((B, C), St, dtype=jnp.int32)
    path_lengths = jax.random.randint(ks[3], (B, C), 2, Pt + 1)
    # 1.0 = valid context, 0.0 = padded context (as in the PyTorch module)
    context_mask = jnp.ones((B, C), jnp.float32).at[0, C - 1].set(0.0).at[1, C - 2:].set(0.0)
    # labels drawn without the pad index (avoids fully-masked softmax rows, as PyTorch)
    label = jax.random.randint(ks[4], (B, Lt), 1, cfg["label_vocab"])

    forward = make_forward(cfg)
    out = forward(params, start, end, path, start_lengths, end_lengths,
                  path_lengths, context_mask, label)
    out = jax.block_until_ready(out)
    assert out.shape == (B, Lt, cfg["label_vocab"]), out.shape
    assert bool(jnp.all(jnp.isfinite(out)))
    print("KERNEL_OK")
</pallas_src>

<mosaic_0001>
module attributes {stable_mosaic.version = 11 : i64} {
  func.func @_dense_kernel(%arg0: i32, %arg1: i32, %arg2: memref<80x16xbf16, #tpu.memory_space<vmem>>, %arg3: memref<16x128xbf16, #tpu.memory_space<vmem>>, %arg4: memref<1x128xf32, #tpu.memory_space<vmem>>, %arg5: memref<80x128xbf16, #tpu.memory_space<vmem>>) attributes {dimension_semantics = [#tpu.dimension_semantics<parallel>, #tpu.dimension_semantics<parallel>], iteration_bounds = array<i64: 1, 1>, scalar_prefetch = 0 : i64, scratch_operands = 0 : i64, tpu.core_type = #tpu.core_type<tc>, window_params = [{transform_indices = @transform_0, window_bounds = array<i64: 80, 16>}, {transform_indices = @transform_1, window_bounds = array<i64: 16, 128>}, {transform_indices = @transform_2, window_bounds = array<i64: 1, 128>}, {transform_indices = @transform_3, window_bounds = array<i64: 80, 128>}]} {
    %c0 = arith.constant 0 : index
    %c0_0 = arith.constant 0 : index
    %0 = vector.load %arg2[%c0, %c0_0] : memref<80x16xbf16, #tpu.memory_space<vmem>>, vector<80x16xbf16>
    %c0_1 = arith.constant 0 : index
    %c0_2 = arith.constant 0 : index
    %1 = vector.load %arg3[%c0_1, %c0_2] : memref<16x128xbf16, #tpu.memory_space<vmem>>, vector<16x128xbf16>
    %cst = arith.constant dense<0.000000e+00> : vector<80x128xf32>
    %2 = tpu.matmul %0, %1, %cst {dimension_numbers = #tpu.dot_dimension_numbers<[1], [0], [0], [1], [0, 0, 1, 1], [], []>} : vector<80x16xbf16>, vector<16x128xbf16>, vector<80x128xf32> -> vector<80x128xf32>
    %c0_3 = arith.constant 0 : index
    %c0_4 = arith.constant 0 : index
    %3 = vector.load %arg4[%c0_3, %c0_4] : memref<1x128xf32, #tpu.memory_space<vmem>>, vector<1x128xf32>
    %4 = vector.broadcast %3 : vector<1x128xf32> to vector<80x128xf32>
    %5 = arith.addf %2, %4 : vector<80x128xf32>
    %6 = arith.truncf %5 : vector<80x128xf32> to vector<80x128xbf16>
    %c0_5 = arith.constant 0 : index
    %c0_6 = arith.constant 0 : index
    %7 = vector.load %arg5[%c0_5, %c0_6] : memref<80x128xbf16, #tpu.memory_space<vmem>>, vector<80x128xbf16>
    tpu.vector_store %arg5[%c0_5, %c0_6], %6 {strides = array<i32>} : memref<80x128xbf16, #tpu.memory_space<vmem>>, vector<80x128xbf16>,
    return
  }
  func.func @transform_0(%arg0: i32, %arg1: i32) -> (i32, i32) {
    %c0_i32 = arith.constant 0 : i32
    %c0_i32_0 = arith.constant 0 : i32
    return %arg0, %c0_i32 : i32, i32
  }
  func.func @transform_1(%arg0: i32, %arg1: i32) -> (i32, i32) {
    %c0_i32 = arith.constant 0 : i32
    %c0_i32_0 = arith.constant 0 : i32
    return %c0_i32, %arg1 : i32, i32
  }
  func.func @transform_2(%arg0: i32, %arg1: i32) -> (i32, i32) {
    %c0_i32 = arith.constant 0 : i32
    %c0_i32_0 = arith.constant 0 : i32
    return %c0_i32, %arg1 : i32, i32
  }
  func.func @transform_3(%arg0: i32, %arg1: i32) -> (i32, i32) {
    %c0_i32 = arith.constant 0 : i32
    return %arg0, %arg1 : i32, i32
  }
}

module attributes {stable_mosaic.version = 11 : i64} {
  func.func @_lstm_kernel(%arg0: i32, %arg1: i32, %arg2: memref<1x5x16x64xbf16, #tpu.memory_space<vmem>>, %arg3: memref<16x1xi32, #tpu.memory_space<vmem>>, %arg4: memref<1x16x64xbf16, #tpu.memory_space<vmem>>, %arg5: memref<1x1x64xf32, #tpu.memory_space<vmem>>, %arg6: memref<1x16x16xbf16, #tpu.memory_space<vmem>>, %arg7: memref<16x16xf32, #tpu.memory_space<vmem>>, %arg8: memref<16x16xf32, #tpu.memory_space<vmem>>) attributes {dimension_semantics = [#tpu.dimension_semantics<parallel>, #tpu.dimension_semantics<parallel>], iteration_bounds = array<i64: 2, 1>, scalar_prefetch = 0 : i64, scratch_operands = 2 : i64, tpu.core_type = #tpu.core_type<tc>, window_params = [{transform_indices = @transform_0, window_bounds = array<i64: 1, 5, 16, 64>}, {transform_indices = @transform_1, window_bounds = array<i64: 16, 1>}, {transform_indices = @transform_2, window_bounds = array<i64: 1, 16, 64>}, {transform_indices = @transform_3, window_bounds = array<i64: 1, 1, 64>}, {transform_indices = @transform_4, window_bounds = array<i64: 1, 16, 16>}]} {
    %c0 = arith.constant 0 : index
    %c0_0 = arith.constant 0 : index
    %c0_1 = arith.constant 0 : index
    %0 = vector.load %arg4[%c0, %c0_0, %c0_1] : memref<1x16x64xbf16, #tpu.memory_space<vmem>>, vector<1x16x64xbf16>
    %1 = vector.shape_cast %0 : vector<1x16x64xbf16> to vector<16x64xbf16>
    %c0_2 = arith.constant 0 : index
    %c0_3 = arith.constant 0 : index
    %c0_4 = arith.constant 0 : index
    %2 = vector.load %arg5[%c0_2, %c0_3, %c0_4] : memref<1x1x64xf32, #tpu.memory_space<vmem>>, vector<1x1x64xf32>
    %3 = vector.shape_cast %2 : vector<1x1x64xf32> to vector<1x64xf32>
    %c0_5 = arith.constant 0 : index
    %c0_6 = arith.constant 0 : index
    %4 = vector.load %arg3[%c0_5, %c0_6] : memref<16x1xi32, #tpu.memory_space<vmem>>, vector<16x1xi32>
    %cst = arith.constant 0.000000e+00 : f32
    %5 = vector.broadcast %cst : f32 to vector<16x16xf32>
    %cst_7 = arith.constant 0.000000e+00 : f32
    %6 = vector.broadcast %cst_7 : f32 to vector<16x16xf32>
    %c0_8 = arith.constant 0 : index
    %c0_9 = arith.constant 0 : index
    %c0_10 = arith.constant 0 : index
    %c0_11 = arith.constant 0 : index
    %7 = vector.load %arg2[%c0_8, %c0_9, %c0_10, %c0_11] : memref<1x5x16x64xbf16, #tpu.memory_space<vmem>>, vector<1x1x16x64xbf16>
    %8 = vector.shape_cast %7 : vector<1x1x16x64xbf16> to vector<16x64xbf16>
    %9 = arith.extf %8 : vector<16x64xbf16> to vector<16x64xf32>
    %10 = arith.truncf %5 : vector<16x16xf32> to vector<16x16xbf16>
    %cst_12 = arith.constant dense<0.000000e+00> : vector<16x64xf32>
    %11 = tpu.matmul %10, %1, %cst_12 {dimension_numbers = #tpu.dot_dimension_numbers<[1], [0], [0], [1], [0, 0, 1, 1], [], []>} : vector<16x16xbf16>, vector<16x64xbf16>, vector<16x64xf32> -> vector<16x64xf32>
    %12 = arith.addf %9, %11 : vector<16x64xf32>
    %13 = vector.broadcast %3 : vector<1x64xf32> to vector<16x64xf32>
    %14 = arith.addf %12, %13 : vector<16x64xf32>
    %15 = vector.extract_strided_slice %14 {offsets = [0, 0], sizes = [16, 16], strides = [1, 1]} : vector<16x64xf32> to vector<16x16xf32>
    %cst_13 = arith.constant 0.000000e+00 : f32
    %16 = vector.broadcast %cst_13 : f32 to vector<16x16xf32>
    %17 = arith.subf %16, %15 : vector<16x16xf32>
    %18 = math.exp %17 : vector<16x16xf32>
    %cst_14 = arith.constant 1.000000e+00 : f32
    %19 = vector.broadcast %cst_14 : f32 to vector<16x16xf32>
    %20 = arith.addf %19, %18 : vector<16x16xf32>
    %cst_15 = arith.constant 1.000000e+00 : f32
    %21 = vector.broadcast %cst_15 : f32 to vector<16x16xf32>
    %22 = arith.divf %21, %20 : vector<16x16xf32>
    %23 = vector.extract_strided_slice %14 {offsets = [0, 16], sizes = [16, 16], strides = [1, 1]} : vector<16x64xf32> to vector<16x16xf32>
    %cst_16 = arith.constant 0.000000e+00 : f32
    %24 = vector.broadcast %cst_16 : f32 to vector<16x16xf32>
    %25 = arith.subf %24, %23 : vector<16x16xf32>
    %26 = math.exp %25 : vector<16x16xf32>
    %cst_17 = arith.constant 1.000000e+00 : f32
    %27 = vector.broadcast %cst_17 : f32 to vector<16x16xf32>
    %28 = arith.addf %27, %26 : vector<16x16xf32>
    %cst_18 = arith.constant 1.000000e+00 : f32
    %29 = vector.broadcast %cst_18 : f32 to vector<16x16xf32>
    %30 = arith.divf %29, %28 : vector<16x16xf32>
    %31 = vector.extract_strided_slice %14 {offsets = [0, 32], sizes = [16, 16], strides = [1, 1]} : vector<16x64xf32> to vector<16x16xf32>
    %32 = math.tanh %31 : vector<16x16xf32>
    %33 = vector.extract_strided_slice %14 {offsets = [0, 48], sizes = [16, 16], strides = [1, 1]} : vector<16x64xf32> to vector<16x16xf32>
    %cst_19 = arith.constant 0.000000e+00 : f32
    %34 = vector.broadcast %cst_19 : f32 to vector<16x16xf32>
    %35 = arith.subf %34, %33 : vector<16x16xf32>
    %36 = math.exp %35 : vector<16x16xf32>
    %cst_20 = arith.constant 1.000000e+00 : f32
    %37 = vector.broadcast %cst_20 : f32 to vector<16x16xf32>
    %38 = arith.addf %37, %36 : vector<16x16xf32>
    %cst_21 = arith.constant 1.000000e+00 : f32
    %39 = vector.broadcast %cst_21 : f32 to vector<16x16xf32>
    %40 = arith.divf %39, %38 : vector<16x16xf32>
    %41 = arith.mulf %30, %6 : vector<16x16xf32>
    %42 = arith.mulf %22, %32 : vector<16x16xf32>
    %43 = arith.addf %41, %42 : vector<16x16xf32>
    %44 = math.tanh %43 : vector<16x16xf32>
    %45 = arith.mulf %40, %44 : vector<16x16xf32>
    %c0_i32 = arith.constant 0 : i32
    %46 = vector.broadcast %c0_i32 : i32 to vector<16x1xi32>
    %47 = arith.cmpi sgt, %4, %46 : vector<16x1xi32>
    %48 = vector.shape_cast %47 : vector<16x1xi1> to vector<16x1xi1>
    %49 = vector.broadcast %48 : vector<16x1xi1> to vector<16x16xi1>
    %50 = arith.select %49, %45, %5 : vector<16x16xi1>, vector<16x16xf32>
    %51 = vector.shape_cast %47 : vector<16x1xi1> to vector<16x1xi1>
    %52 = vector.broadcast %51 : vector<16x1xi1> to vector<16x16xi1>
    %53 = arith.select %52, %43, %6 : vector<16x16xi1>, vector<16x16xf32>
    %c0_22 = arith.constant 0 : index
    %c1 = arith.constant 1 : index
    %c0_23 = arith.constant 0 : index
    %c0_24 = arith.constant 0 : index
    %54 = vector.load %arg2[%c0_22, %c1, %c0_23, %c0_24] : memref<1x5x16x64xbf16, #tpu.memory_space<vmem>>, vector<1x1x16x64xbf16>
    %55 = vector.shape_cast %54 : vector<1x1x16x64xbf16> to vector<16x64xbf16>
    %56 = arith.extf %55 : vector<16x64xbf16> to vector<16x64xf32>
    %57 = arith.truncf %50 : vector<16x16xf32> to vector<16x16xbf16>
    %cst_25 = arith.constant dense<0.000000e+00> : vector<16x64xf32>
    %58 = tpu.matmul %57, %1, %cst_25 {dimension_numbers = #tpu.dot_dimension_numbers<[1], [0], [0], [1], [0, 0, 1, 1], [], []>} : vector<16x16xbf16>, vector<16x64xbf16>, vector<16x64xf32> -> vector<16x64xf32>
    %59 = arith.addf %56, %58 : vector<16x64xf32>
    %60 = vector.broadcast %3 : vector<1x64xf32> to vector<16x64xf32>
    %61 = arith.addf %59, %60 : vector<16x64xf32>
    %62 = vector.extract_strided_slice %61 {offsets = [0, 0], sizes = [16, 16], strides = [1, 1]} : vector<16x64xf32> to vector<16x16xf32>
    %cst_26 = arith.constant 0.000000e+00 : f32
    %63 = vector.broadcast %cst_26 : f32 to vector<16x16xf32>
    %64 = arith.subf %63, %62 : vector<16x16xf32>
    %65 = math.exp %64 : vector<16x16xf32>
    %cst_27 = arith.constant 1.000000e+00 : f32
    %66 = vector.broadcast %cst_27 : f32 to vector<16x16xf32>
    %67 = arith.addf %66, %65 : vector<16x16xf32>
    %cst_28 = arith.constant 1.000000e+00 : f32
    %68 = vector.broadcast %cst_28 : f32 to vector<16x16xf32>
    %69 = arith.divf %68, %67 : vector<16x16xf32>
    %70 = vector.extract_strided_slice %61 {offsets = [0, 16], sizes = [16, 16], strides = [1, 1]} : vector<16x64xf32> to vector<16x16xf32>
    %cst_29 = arith.constant 0.000000e+00 : f32
    %71 = vector.broadcast %cst_29 : f32 to vector<16x16xf32>
    %72 = arith.subf %71, %70 : vector<16x16xf32>
    %73 = math.exp %72 : vector<16x16xf32>
    %cst_30 = arith.constant 1.000000e+00 : f32
    %74 = vector.broadcast %cst_30 : f32 to vector<16x16xf32>
    %75 = arith.addf %74, %73 : vector<16x16xf32>
    %cst_31 = arith.constant 1.000000e+00 : f32
    %76 = vector.broadcast %cst_31 : f32 to vector<16x16xf32>
    %77 = arith.divf %76, %75 : vector<16x16xf32>
    %78 = vector.extract_strided_slice %61 {offsets = [0, 32], sizes = [16, 16], strides = [1, 1]} : vector<16x64xf32> to vector<16x16xf32>
    %79 = math.tanh %78 : vector<16x16xf32>
    %80 = vector.extract_strided_slice %61 {offsets = [0, 48], sizes = [16, 16], strides = [1, 1]} : vector<16x64xf32> to vector<16x16xf32>
    %cst_32 = arith.constant 0.000000e+00 : f32
    %81 = vector.broadcast %cst_32 : f32 to vector<16x16xf32>
    %82 = arith.subf %81, %80 : vector<16x16xf32>
    %83 = math.exp %82 : vector<16x16xf32>
    %cst_33 = arith.constant 1.000000e+00 : f32
    %84 = vector.broadcast %cst_33 : f32 to vector<16x16xf32>
    %85 = arith.addf %84, %83 : vector<16x16xf32>
    %cst_34 = arith.constant 1.000000e+00 : f32
    %86 = vector.broadcast %cst_34 : f32 to vector<16x16xf32>
    %87 = arith.divf %86, %85 : vector<16x16xf32>
    %88 = arith.mulf %77, %53 : vector<16x16xf32>
    %89 = arith.mulf %69, %79 : vector<16x16xf32>
    %90 = arith.addf %88, %89 : vector<16x16xf32>
    %91 = math.tanh %90 : vector<16x16xf32>
    %92 = arith.mulf %87, %91 : vector<16x16xf32>
    %c1_i32 = arith.constant 1 : i32
    %93 = vector.broadcast %c1_i32 : i32 to vector<16x1xi32>
    %94 = arith.cmpi sgt, %4, %93 : vector<16x1xi32>
    %95 = vector.shape_cast %94 : vector<16x1xi1> to vector<16x1xi1>
    %96 = vector.broadcast %95 : vector<16x1xi1> to vector<16x16xi1>
    %97 = arith.select %96, %92, %50 : vector<16x16xi1>, vector<16x16xf32>
    %98 = vector.shape_cast %94 : vector<16x1xi1> to vector<16x1xi1>
    %99 = vector.broadcast %98 : vector<16x1xi1> to vector<16x16xi1>
    %100 = arith.select %99, %90, %53 : vector<16x16xi1>, vector<16x16xf32>
    %c0_35 = arith.constant 0 : index
    %c2 = arith.constant 2 : index
    %c0_36 = arith.constant 0 : index
    %c0_37 = arith.constant 0 : index
    %101 = vector.load %arg2[%c0_35, %c2, %c0_36, %c0_37] : memref<1x5x16x64xbf16, #tpu.memory_space<vmem>>, vector<1x1x16x64xbf16>
    %102 = vector.shape_cast %101 : vector<1x1x16x64xbf16> to vector<16x64xbf16>
    %103 = arith.extf %102 : vector<16x64xbf16> to vector<16x64xf32>
    %104 = arith.truncf %97 : vector<16x16xf32> to vector<16x16xbf16>
    %cst_38 = arith.constant dense<0.000000e+00> : vector<16x64xf32>
    %105 = tpu.matmul %104, %1, %cst_38 {dimension_numbers = #tpu.dot_dimension_numbers<[1], [0], [0], [1], [0, 0, 1, 1], [], []>} : vector<16x16xbf16>, vector<16x64xbf16>, vector<16x64xf32> -> vector<16x64xf32>
    %106 = arith.addf %103, %105 : vector<16x64xf32>
    %107 = vector.broadcast %3 : vector<1x64xf32> to vector<16x64xf32>
    %108 = arith.addf %106, %107 : vector<16x64xf32>
    %109 = vector.extract_strided_slice %108 {offsets = [0, 0], sizes = [16, 16], strides = [1, 1]} : vector<16x64xf32> to vector<16x16xf32>
    %cst_39 = arith.constant 0.000000e+00 : f32
    %110 = vector.broadcast %cst_39 : f32 to vector<16x16xf32>
    %111 = arith.subf %110, %109 : vector<16x16xf32>
    %112 = math.exp %111 : vector<16x16xf32>
    %cst_40 = arith.constant 1.000000e+00 : f32
    %113 = vector.broadcast %cst_40 : f32 to vector<16x16xf32>
    %114 = arith.addf %113, %112 : vector<16x16xf32>
    %cst_41 = arith.constant 1.000000e+00 : f32
    %115 = vector.broadcast %cst_41 : f32 to vector<16x16xf32>
    %116 = arith.divf %115, %114 : vector<16x16xf32>
    %117 = vector.extract_strided_slice %108 {offsets = [0, 16], sizes = [16, 16], strides = [1, 1]} : vector<16x64xf32> to vector<16x16xf32>
    %cst_42 = arith.constant 0.000000e+00 : f32
    %118 = vector.broadcast %cst_42 : f32 to vector<16x16xf32>
    %119 = arith.subf %118, %117 : vector<16x16xf32>
    %120 = math.exp %119 : vector<16x16xf32>
    %cst_43 = arith.constant 1.000000e+00 : f32
    %121 = vector.broadcast %cst_43 : f32 to vector<16x16xf32>
    %122 = arith.addf %121, %120 : vector<16x16xf32>
    %cst_44 = arith.constant 1.000000e+00 : f32
    %123 = vector.broadcast %cst_44 : f32 to vector<16x16xf32>
    %124 = arith.divf %123, %122 : vector<16x16xf32>
    %125 = vector.extract_strided_slice %108 {offsets = [0, 32], sizes = [16, 16], strides = [1, 1]} : vector<16x64xf32> to vector<16x16xf32>
    %126 = math.tanh %125 : vector<16x16xf32>
    %127 = vector.extract_strided_slice %108 {offsets = [0, 48], sizes = [16, 16], strides = [1, 1]} : vector<16x64xf32> to vector<16x16xf32>
    %cst_45 = arith.constant 0.000000e+00 : f32
    %128 = vector.broadcast %cst_45 : f32 to vector<16x16xf32>
    %129 = arith.subf %128, %127 : vector<16x16xf32>
    %130 = math.exp %129 : vector<16x16xf32>
    %cst_46 = arith.constant 1.000000e+00 : f32
    %131 = vector.broadcast %cst_46 : f32 to vector<16x16xf32>
    %132 = arith.addf %131, %130 : vector<16x16xf32>
    %cst_47 = arith.constant 1.000000e+00 : f32
    %133 = vector.broadcast %cst_47 : f32 to vector<16x16xf32>
    %134 = arith.divf %133, %132 : vector<16x16xf32>
    %135 = arith.mulf %124, %100 : vector<16x16xf32>
    %136 = arith.mulf %116, %126 : vector<16x16xf32>
    %137 = arith.addf %135, %136 : vector<16x16xf32>
    %138 = math.tanh %137 : vector<16x16xf32>
    %139 = arith.mulf %134, %138 : vector<16x16xf32>
    %c2_i32 = arith.constant 2 : i32
    %140 = vector.broadcast %c2_i32 : i32 to vector<16x1xi32>
    %141 = arith.cmpi sgt, %4, %140 : vector<16x1xi32>
    %142 = vector.shape_cast %141 : vector<16x1xi1> to vector<16x1xi1>
    %143 = vector.broadcast %142 : vector<16x1xi1> to vector<16x16xi1>
    %144 = arith.select %143, %139, %97 : vector<16x16xi1>, vector<16x16xf32>
    %145 = vector.shape_cast %141 : vector<16x1xi1> to vector<16x1xi1>
    %146 = vector.broadcast %145 : vector<16x1xi1> to vector<16x16xi1>
    %147 = arith.select %146, %137, %100 : vector<16x16xi1>, vector<16x16xf32>
    %c0_48 = arith.constant 0 : index
    %c3 = arith.constant 3 : index
    %c0_49 = arith.constant 0 : index
    %c0_50 = arith.constant 0 : index
    %148 = vector.load %arg2[%c0_48, %c3, %c0_49, %c0_50] : memref<1x5x16x64xbf16, #tpu.memory_space<vmem>>, vector<1x1x16x64xbf16>
    %149 = vector.shape_cast %148 : vector<1x1x16x64xbf16> to vector<16x64xbf16>
    %150 = arith.extf %149 : vector<16x64xbf16> to vector<16x64xf32>
    %151 = arith.truncf %144 : vector<16x16xf32> to vector<16x16xbf16>
    %cst_51 = arith.constant dense<0.000000e+00> : vector<16x64xf32>
    %152 = tpu.matmul %151, %1, %cst_51 {dimension_numbers = #tpu.dot_dimension_numbers<[1], [0], [0], [1], [0, 0, 1, 1], [], []>} : vector<16x16xbf16>, vector<16x64xbf16>, vector<16x64xf32> -> vector<16x64xf32>
    %153 = arith.addf %150, %152 : vector<16x64xf32>
    %154 = vector.broadcast %3 : vector<1x64xf32> to vector<16x64xf32>
    %155 = arith.addf %153, %154 : vector<16x64xf32>
    %156 = vector.extract_strided_slice %155 {offsets = [0, 0], sizes = [16, 16], strides = [1, 1]} : vector<16x64xf32> to vector<16x16xf32>
    %cst_52 = arith.constant 0.000000e+00 : f32
    %157 = vector.broadcast %cst_52 : f32 to vector<16x16xf32>
    %158 = arith.subf %157, %156 : vector<16x16xf32>
    %159 = math.exp %158 : vector<16x16xf32>
    %cst_53 = arith.constant 1.000000e+00 : f32
    %160 = vector.broadcast %cst_53 : f32 to vector<16x16xf32>
    %161 = arith.addf %160, %159 : vector<16x16xf32>
    %cst_54 = arith.constant 1.000000e+00 : f32
    %162 = vector.broadcast %cst_54 : f32 to vector<16x16xf32>
    %163 = arith.divf %162, %161 : vector<16x16xf32>
    %164 = vector.extract_strided_slice %155 {offsets = [0, 16], sizes = [16, 16], strides = [1, 1]} : vector<16x64xf32> to vector<16x16xf32>
    %cst_55 = arith.constant 0.000000e+00 : f32
    %165 = vector.broadcast %cst_55 : f32 to vector<16x16xf32>
    %166 = arith.subf %165, %164 : vector<16x16xf32>
    %167 = math.exp %166 : vector<16x16xf32>
    %cst_56 = arith.constant 1.000000e+00 : f32
    %168 = vector.broadcast %cst_56 : f32 to vector<16x16xf32>
    %169 = arith.addf %168, %167 : vector<16x16xf32>
    %cst_57 = arith.constant 1.000000e+00 : f32
    %170 = vector.broadcast %cst_57 : f32 to vector<16x16xf32>
    %171 = arith.divf %170, %169 : vector<16x16xf32>
    %172 = vector.extract_strided_slice %155 {offsets = [0, 32], sizes = [16, 16], strides = [1, 1]} : vector<16x64xf32> to vector<16x16xf32>
    %173 = math.tanh %172 : vector<16x16xf32>
    %174 = vector.extract_strided_slice %155 {offsets = [0, 48], sizes = [16, 16], strides = [1, 1]} : vector<16x64xf32> to vector<16x16xf32>
    %cst_58 = arith.constant 0.000000e+00 : f32
    %175 = vector.broadcast %cst_58 : f32 to vector<16x16xf32>
    %176 = arith.subf %175, %174 : vector<16x16xf32>
    %177 = math.exp %176 : vector<16x16xf32>
    %cst_59 = arith.constant 1.000000e+00 : f32
    %178 = vector.broadcast %cst_59 : f32 to vector<16x16xf32>
    %179 = arith.addf %178, %177 : vector<16x16xf32>
    %cst_60 = arith.constant 1.000000e+00 : f32
    %180 = vector.broadcast %cst_60 : f32 to vector<16x16xf32>
    %181 = arith.divf %180, %179 : vector<16x16xf32>
    %182 = arith.mulf %171, %147 : vector<16x16xf32>
    %183 = arith.mulf %163, %173 : vector<16x16xf32>
    %184 = arith.addf %182, %183 : vector<16x16xf32>
    %185 = math.tanh %184 : vector<16x16xf32>
    %186 = arith.mulf %181, %185 : vector<16x16xf32>
    %c3_i32 = arith.constant 3 : i32
    %187 = vector.broadcast %c3_i32 : i32 to vector<16x1xi32>
    %188 = arith.cmpi sgt, %4, %187 : vector<16x1xi32>
    %189 = vector.shape_cast %188 : vector<16x1xi1> to vector<16x1xi1>
    %190 = vector.broadcast %189 : vector<16x1xi1> to vector<16x16xi1>
    %191 = arith.select %190, %186, %144 : vector<16x16xi1>, vector<16x16xf32>
    %192 = vector.shape_cast %188 : vector<16x1xi1> to vector<16x1xi1>
    %193 = vector.broadcast %192 : vector<16x1xi1> to vector<16x16xi1>
    %194 = arith.select %193, %184, %147 : vector<16x16xi1>, vector<16x16xf32>
    %c0_61 = arith.constant 0 : index
    %c4 = arith.constant 4 : index
    %c0_62 = arith.constant 0 : index
    %c0_63 = arith.constant 0 : index
    %195 = vector.load %arg2[%c0_61, %c4, %c0_62, %c0_63] : memref<1x5x16x64xbf16, #tpu.memory_space<vmem>>, vector<1x1x16x64xbf16>
    %196 = vector.shape_cast %195 : vector<1x1x16x64xbf16> to vector<16x64xbf16>
    %197 = arith.extf %196 : vector<16x64xbf16> to vector<16x64xf32>
    %198 = arith.truncf %191 : vector<16x16xf32> to vector<16x16xbf16>
    %cst_64 = arith.constant dense<0.000000e+00> : vector<16x64xf32>
    %199 = tpu.matmul %198, %1, %cst_64 {dimension_numbers = #tpu.dot_dimension_numbers<[1], [0], [0], [1], [0, 0, 1, 1], [], []>} : vector<16x16xbf16>, vector<16x64xbf16>, vector<16x64xf32> -> vector<16x64xf32>
    %200 = arith.addf %197, %199 : vector<16x64xf32>
    %201 = vector.broadcast %3 : vector<1x64xf32> to vector<16x64xf32>
    %202 = arith.addf %200, %201 : vector<16x64xf32>
    %203 = vector.extract_strided_slice %202 {offsets = [0, 0], sizes = [16, 16], strides = [1, 1]} : vector<16x64xf32> to vector<16x16xf32>
    %cst_65 = arith.constant 0.000000e+00 : f32
    %204 = vector.broadcast %cst_65 : f32 to vector<16x16xf32>
    %205 = arith.subf %204, %203 : vector<16x16xf32>
    %206 = math.exp %205 : vector<16x16xf32>
    %cst_66 = arith.constant 1.000000e+00 : f32
    %207 = vector.broadcast %cst_66 : f32 to vector<16x16xf32>
    %208 = arith.addf %207, %206 : vector<16x16xf32>
    %cst_67 = arith.constant 1.000000e+00 : f32
    %209 = vector.broadcast %cst_67 : f32 to vector<16x16xf32>
    %210 = arith.divf %209, %208 : vector<16x16xf32>
    %211 = vector.extract_strided_slice %202 {offsets = [0, 16], sizes = [16, 16], strides = [1, 1]} : vector<16x64xf32> to vector<16x16xf32>
    %cst_68 = arith.constant 0.000000e+00 : f32
    %212 = vector.broadcast %cst_68 : f32 to vector<16x16xf32>
    %213 = arith.subf %212, %211 : vector<16x16xf32>
    %214 = math.exp %213 : vector<16x16xf32>
    %cst_69 = arith.constant 1.000000e+00 : f32
    %215 = vector.broadcast %cst_69 : f32 to vector<16x16xf32>
    %216 = arith.addf %215, %214 : vector<16x16xf32>
    %cst_70 = arith.constant 1.000000e+00 : f32
    %217 = vector.broadcast %cst_70 : f32 to vector<16x16xf32>
    %218 = arith.divf %217, %216 : vector<16x16xf32>
    %219 = vector.extract_strided_slice %202 {offsets = [0, 32], sizes = [16, 16], strides = [1, 1]} : vector<16x64xf32> to vector<16x16xf32>
    %220 = math.tanh %219 : vector<16x16xf32>
    %221 = vector.extract_strided_slice %202 {offsets = [0, 48], sizes = [16, 16], strides = [1, 1]} : vector<16x64xf32> to vector<16x16xf32>
    %cst_71 = arith.constant 0.000000e+00 : f32
    %222 = vector.broadcast %cst_71 : f32 to vector<16x16xf32>
    %223 = arith.subf %222, %221 : vector<16x16xf32>
    %224 = math.exp %223 : vector<16x16xf32>
    %cst_72 = arith.constant 1.000000e+00 : f32
    %225 = vector.broadcast %cst_72 : f32 to vector<16x16xf32>
    %226 = arith.addf %225, %224 : vector<16x16xf32>
    %cst_73 = arith.constant 1.000000e+00 : f32
    %227 = vector.broadcast %cst_73 : f32 to vector<16x16xf32>
    %228 = arith.divf %227, %226 : vector<16x16xf32>
    %229 = arith.mulf %218, %194 : vector<16x16xf32>
    %230 = arith.mulf %210, %220 : vector<16x16xf32>
    %231 = arith.addf %229, %230 : vector<16x16xf32>
    %232 = math.tanh %231 : vector<16x16xf32>
    %233 = arith.mulf %228, %232 : vector<16x16xf32>
    %c4_i32 = arith.constant 4 : i32
    %234 = vector.broadcast %c4_i32 : i32 to vector<16x1xi32>
    %235 = arith.cmpi sgt, %4, %234 : vector<16x1xi32>
    %236 = vector.shape_cast %235 : vector<16x1xi1> to vector<16x1xi1>
    %237 = vector.broadcast %236 : vector<16x1xi1> to vector<16x16xi1>
    %238 = arith.select %237, %233, %191 : vector<16x16xi1>, vector<16x16xf32>
    %239 = arith.truncf %238 : vector<16x16xf32> to vector<16x16xbf16>
    %c0_74 = arith.constant 0 : index
    %c0_75 = arith.constant 0 : index
    %c0_76 = arith.constant 0 : index
    %240 = vector.load %arg6[%c0_74, %c0_75, %c0_76] : memref<1x16x16xbf16, #tpu.memory_space<vmem>>, vector<1x16x16xbf16>
    %241 = vector.shape_cast %240 : vector<1x16x16xbf16> to vector<16x16xbf16>
    %242 = vector.shape_cast %239 : vector<16x16xbf16> to vector<1x16x16xbf16>
    tpu.vector_store %arg6[%c0_74, %c0_75, %c0_76], %242 {strides = array<i32>} : memref<1x16x16xbf16, #tpu.memory_space<vmem>>, vector<1x16x16xbf16>,
    return
  }
  func.func @transform_0(%arg0: i32, %arg1: i32) -> (i32, i32, i32, i32) {
    %c0_i32 = arith.constant 0 : i32
    %c0_i32_0 = arith.constant 0 : i32
    %c0_i32_1 = arith.constant 0 : i32
    return %arg0, %c0_i32, %arg1, %c0_i32_0 : i32, i32, i32, i32
  }
  func.func @transform_1(%arg0: i32, %arg1: i32) -> (i32, i32) {
    %c0_i32 = arith.constant 0 : i32
    %c0_i32_0 = arith.constant 0 : i32
    return %arg1, %c0_i32 : i32, i32
  }
  func.func @transform_2(%arg0: i32, %arg1: i32) -> (i32, i32, i32) {
    %c0_i32 = arith.constant 0 : i32
    %c0_i32_0 = arith.constant 0 : i32
    %c0_i32_1 = arith.constant 0 : i32
    return %arg0, %c0_i32, %c0_i32_0 : i32, i32, i32
  }
  func.func @transform_3(%arg0: i32, %arg1: i32) -> (i32, i32, i32) {
    %c0_i32 = arith.constant 0 : i32
    %c0_i32_0 = arith.constant 0 : i32
    %c0_i32_1 = arith.constant 0 : i32
    return %arg0, %c0_i32, %c0_i32_0 : i32, i32, i32
  }
  func.func @transform_4(%arg0: i32, %arg1: i32) -> (i32, i32, i32) {
    %c0_i32 = arith.constant 0 : i32
    %c0_i32_0 = arith.constant 0 : i32
    return %arg0, %arg1, %c0_i32 : i32, i32, i32
  }
}

module attributes {stable_mosaic.version = 11 : i64} {
  func.func @_dense_kernel(%arg0: i32, %arg1: i32, %arg2: memref<16x64xbf16, #tpu.memory_space<vmem>>, %arg3: memref<64x32xbf16, #tpu.memory_space<vmem>>, %arg4: memref<1x32xf32, #tpu.memory_space<vmem>>, %arg5: memref<16x32xbf16, #tpu.memory_space<vmem>>) attributes {dimension_semantics = [#tpu.dimension_semantics<parallel>, #tpu.dimension_semantics<parallel>], iteration_bounds = array<i64: 1, 1>, scalar_prefetch = 0 : i64, scratch_operands = 0 : i64, tpu.core_type = #tpu.core_type<tc>, window_params = [{transform_indices = @transform_0, window_bounds = array<i64: 16, 64>}, {transform_indices = @transform_1, window_bounds = array<i64: 64, 32>}, {transform_indices = @transform_2, window_bounds = array<i64: 1, 32>}, {transform_indices = @transform_3, window_bounds = array<i64: 16, 32>}]} {
    %c0 = arith.constant 0 : index
    %c0_0 = arith.constant 0 : index
    %0 = vector.load %arg2[%c0, %c0_0] : memref<16x64xbf16, #tpu.memory_space<vmem>>, vector<16x64xbf16>
    %c0_1 = arith.constant 0 : index
    %c0_2 = arith.constant 0 : index
    %1 = vector.load %arg3[%c0_1, %c0_2] : memref<64x32xbf16, #tpu.memory_space<vmem>>, vector<64x32xbf16>
    %cst = arith.constant dense<0.000000e+00> : vector<16x32xf32>
    %2 = tpu.matmul %0, %1, %cst {dimension_numbers = #tpu.dot_dimension_numbers<[1], [0], [0], [1], [0, 0, 1, 1], [], []>} : vector<16x64xbf16>, vector<64x32xbf16>, vector<16x32xf32> -> vector<16x32xf32>
    %c0_3 = arith.constant 0 : index
    %c0_4 = arith.constant 0 : index
    %3 = vector.load %arg4[%c0_3, %c0_4] : memref<1x32xf32, #tpu.memory_space<vmem>>, vector<1x32xf32>
    %4 = vector.broadcast %3 : vector<1x32xf32> to vector<16x32xf32>
    %5 = arith.addf %2, %4 : vector<16x32xf32>
    %6 = math.tanh %5 : vector<16x32xf32>
    %7 = arith.truncf %6 : vector<16x32xf32> to vector<16x32xbf16>
    %c0_5 = arith.constant 0 : index
    %c0_6 = arith.constant 0 : index
    %8 = vector.load %arg5[%c0_5, %c0_6] : memref<16x32xbf16, #tpu.memory_space<vmem>>, vector<16x32xbf16>
    tpu.vector_store %arg5[%c0_5, %c0_6], %7 {strides = array<i32>} : memref<16x32xbf16, #tpu.memory_space<vmem>>, vector<16x32xbf16>,
    return
  }
  func.func @transform_0(%arg0: i32, %arg1: i32) -> (i32, i32) {
    %c0_i32 = arith.constant 0 : i32
    %c0_i32_0 = arith.constant 0 : i32
    return %arg0, %c0_i32 : i32, i32
  }
  func.func @transform_1(%arg0: i32, %arg1: i32) -> (i32, i32) {
    %c0_i32 = arith.constant 0 : i32
    %c0_i32_0 = arith.constant 0 : i32
    return %c0_i32, %arg1 : i32, i32
  }
  func.func @transform_2(%arg0: i32, %arg1: i32) -> (i32, i32) {
    %c0_i32 = arith.constant 0 : i32
    %c0_i32_0 = arith.constant 0 : i32
    return %c0_i32, %arg1 : i32, i32
  }
  func.func @transform_3(%arg0: i32, %arg1: i32) -> (i32, i32) {
    %c0_i32 = arith.constant 0 : i32
    return %arg0, %arg1 : i32, i32
  }
}

module attributes {stable_mosaic.version = 11 : i64} {
  func.func @_dense_kernel(%arg0: i32, %arg1: i32, %arg2: memref<16x32xbf16, #tpu.memory_space<vmem>>, %arg3: memref<32x96xbf16, #tpu.memory_space<vmem>>, %arg4: memref<1x96xf32, #tpu.memory_space<vmem>>, %arg5: memref<16x96xbf16, #tpu.memory_space<vmem>>) attributes {dimension_semantics = [#tpu.dimension_semantics<parallel>, #tpu.dimension_semantics<parallel>], iteration_bounds = array<i64: 1, 1>, scalar_prefetch = 0 : i64, scratch_operands = 0 : i64, tpu.core_type = #tpu.core_type<tc>, window_params = [{transform_indices = @transform_0, window_bounds = array<i64: 16, 32>}, {transform_indices = @transform_1, window_bounds = array<i64: 32, 96>}, {transform_indices = @transform_2, window_bounds = array<i64: 1, 96>}, {transform_indices = @transform_3, window_bounds = array<i64: 16, 96>}]} {
    %c0 = arith.constant 0 : index
    %c0_0 = arith.constant 0 : index
    %0 = vector.load %arg2[%c0, %c0_0] : memref<16x32xbf16, #tpu.memory_space<vmem>>, vector<16x32xbf16>
    %c0_1 = arith.constant 0 : index
    %c0_2 = arith.constant 0 : index
    %1 = vector.load %arg3[%c0_1, %c0_2] : memref<32x96xbf16, #tpu.memory_space<vmem>>, vector<32x96xbf16>
    %cst = arith.constant dense<0.000000e+00> : vector<16x96xf32>
    %2 = tpu.matmul %0, %1, %cst {dimension_numbers = #tpu.dot_dimension_numbers<[1], [0], [0], [1], [0, 0, 1, 1], [], []>} : vector<16x32xbf16>, vector<32x96xbf16>, vector<16x96xf32> -> vector<16x96xf32>
    %c0_3 = arith.constant 0 : index
    %c0_4 = arith.constant 0 : index
    %3 = vector.load %arg4[%c0_3, %c0_4] : memref<1x96xf32, #tpu.memory_space<vmem>>, vector<1x96xf32>
    %4 = vector.broadcast %3 : vector<1x96xf32> to vector<16x96xf32>
    %5 = arith.addf %2, %4 : vector<16x96xf32>
    %6 = arith.truncf %5 : vector<16x96xf32> to vector<16x96xbf16>
    %c0_5 = arith.constant 0 : index
    %c0_6 = arith.constant 0 : index
    %7 = vector.load %arg5[%c0_5, %c0_6] : memref<16x96xbf16, #tpu.memory_space<vmem>>, vector<16x96xbf16>
    tpu.vector_store %arg5[%c0_5, %c0_6], %6 {strides = array<i32>} : memref<16x96xbf16, #tpu.memory_space<vmem>>, vector<16x96xbf16>,
    return
  }
  func.func @transform_0(%arg0: i32, %arg1: i32) -> (i32, i32) {
    %c0_i32 = arith.constant 0 : i32
    %c0_i32_0 = arith.constant 0 : i32
    return %arg0, %c0_i32 : i32, i32
  }
  func.func @transform_1(%arg0: i32, %arg1: i32) -> (i32, i32) {
    %c0_i32 = arith.constant 0 : i32
    %c0_i32_0 = arith.constant 0 : i32
    return %c0_i32, %arg1 : i32, i32
  }
  func.func @transform_2(%arg0: i32, %arg1: i32) -> (i32, i32) {
    %c0_i32 = arith.constant 0 : i32
    %c0_i32_0 = arith.constant 0 : i32
    return %c0_i32, %arg1 : i32, i32
  }
  func.func @transform_3(%arg0: i32, %arg1: i32) -> (i32, i32) {
    %c0_i32 = arith.constant 0 : i32
    return %arg0, %arg1 : i32, i32
  }
}

module attributes {stable_mosaic.version = 11 : i64} {
  func.func @_layernorm_kernel(%arg0: i32, %arg1: memref<16x32xbf16, #tpu.memory_space<vmem>>, %arg2: memref<1x32xf32, #tpu.memory_space<vmem>>, %arg3: memref<1x32xf32, #tpu.memory_space<vmem>>, %arg4: memref<16x32xbf16, #tpu.memory_space<vmem>>) attributes {dimension_semantics = [#tpu.dimension_semantics<parallel>], iteration_bounds = array<i64: 1>, scalar_prefetch = 0 : i64, scratch_operands = 0 : i64, tpu.core_type = #tpu.core_type<tc>, window_params = [{transform_indices = @transform_0, window_bounds = array<i64: 16, 32>}, {pipeline_mode = #tpu.pipeline_mode<synchronous>, transform_indices = @transform_1, window_bounds = array<i64: 1, 32>}, {pipeline_mode = #tpu.pipeline_mode<synchronous>, transform_indices = @transform_2, window_bounds = array<i64: 1, 32>}, {transform_indices = @transform_3, window_bounds = array<i64: 16, 32>}]} {
    %c0 = arith.constant 0 : index
    %c0_0 = arith.constant 0 : index
    %0 = vector.load %arg1[%c0, %c0_0] : memref<16x32xbf16, #tpu.memory_space<vmem>>, vector<16x32xbf16>
    %1 = arith.extf %0 : vector<16x32xbf16> to vector<16x32xf32>
    %c0_1 = arith.constant 0 : index
    %c0_2 = arith.constant 0 : index
    %2 = vector.load %arg2[%c0_1, %c0_2] : memref<1x32xf32, #tpu.memory_space<vmem>>, vector<1x32xf32>
    %c0_3 = arith.constant 0 : index
    %c0_4 = arith.constant 0 : index
    %3 = vector.load %arg3[%c0_3, %c0_4] : memref<1x32xf32, #tpu.memory_space<vmem>>, vector<1x32xf32>
    %cst = arith.constant dense<0.000000e+00> : vector<16xf32>
    %4 = vector.multi_reduction <add>, %1, %cst [1] : vector<16x32xf32> to vector<16xf32>
    %5 = vector.shape_cast %4 : vector<16xf32> to vector<16x1xf32>
    %cst_5 = arith.constant 3.200000e+01 : f32
    %6 = vector.broadcast %cst_5 : f32 to vector<16x1xf32>
    %7 = arith.divf %5, %6 : vector<16x1xf32>
    %8 = vector.broadcast %7 : vector<16x1xf32> to vector<16x32xf32>
    %9 = arith.subf %1, %8 : vector<16x32xf32>
    %10 = arith.mulf %9, %9 : vector<16x32xf32>
    %cst_6 = arith.constant dense<0.000000e+00> : vector<16xf32>
    %11 = vector.multi_reduction <add>, %10, %cst_6 [1] : vector<16x32xf32> to vector<16xf32>
    %12 = vector.shape_cast %11 : vector<16xf32> to vector<16x1xf32>
    %cst_7 = arith.constant 3.200000e+01 : f32
    %13 = vector.broadcast %cst_7 : f32 to vector<16x1xf32>
    %14 = arith.divf %12, %13 : vector<16x1xf32>
    %15 = vector.broadcast %7 : vector<16x1xf32> to vector<16x32xf32>
    %16 = arith.subf %1, %15 : vector<16x32xf32>
    %cst_8 = arith.constant 9.99999974E-6 : f32
    %17 = vector.broadcast %cst_8 : f32 to vector<16x1xf32>
    %18 = arith.addf %14, %17 : vector<16x1xf32>
    %19 = math.rsqrt %18 : vector<16x1xf32>
    %20 = vector.broadcast %19 : vector<16x1xf32> to vector<16x32xf32>
    %21 = arith.mulf %16, %20 : vector<16x32xf32>
    %22 = vector.broadcast %2 : vector<1x32xf32> to vector<16x32xf32>
    %23 = arith.mulf %21, %22 : vector<16x32xf32>
    %24 = vector.broadcast %3 : vector<1x32xf32> to vector<16x32xf32>
    %25 = arith.addf %23, %24 : vector<16x32xf32>
    %26 = arith.truncf %25 : vector<16x32xf32> to vector<16x32xbf16>
    %c0_9 = arith.constant 0 : index
    %c0_10 = arith.constant 0 : index
    %27 = vector.load %arg4[%c0_9, %c0_10] : memref<16x32xbf16, #tpu.memory_space<vmem>>, vector<16x32xbf16>
    tpu.vector_store %arg4[%c0_9, %c0_10], %26 {strides = array<i32>} : memref<16x32xbf16, #tpu.memory_space<vmem>>, vector<16x32xbf16>,
    return
  }
  func.func @transform_0(%arg0: i32) -> (i32, i32) {
    %c0_i32 = arith.constant 0 : i32
    %c0_i32_0 = arith.constant 0 : i32
    return %arg0, %c0_i32 : i32, i32
  }
  func.func @transform_1(%arg0: i32) -> (i32, i32) {
    %c0_i32 = arith.constant 0 : i32
    %c0_i32_0 = arith.constant 0 : i32
    %c0_i32_1 = arith.constant 0 : i32
    return %c0_i32, %c0_i32_0 : i32, i32
  }
  func.func @transform_2(%arg0: i32) -> (i32, i32) {
    %c0_i32 = arith.constant 0 : i32
    %c0_i32_0 = arith.constant 0 : i32
    %c0_i32_1 = arith.constant 0 : i32
    return %c0_i32, %c0_i32_0 : i32, i32
  }
  func.func @transform_3(%arg0: i32) -> (i32, i32) {
    %c0_i32 = arith.constant 0 : i32
    %c0_i32_0 = arith.constant 0 : i32
    return %arg0, %c0_i32 : i32, i32
  }
}

module attributes {stable_mosaic.version = 11 : i64} {
  func.func @_ffn_kernel(%arg0: i32, %arg1: memref<16x32xbf16, #tpu.memory_space<vmem>>, %arg2: memref<32x64xbf16, #tpu.memory_space<vmem>>, %arg3: memref<1x64xf32, #tpu.memory_space<vmem>>, %arg4: memref<64x32xbf16, #tpu.memory_space<vmem>>, %arg5: memref<1x32xf32, #tpu.memory_space<vmem>>, %arg6: memref<1x32xf32, #tpu.memory_space<vmem>>, %arg7: memref<1x32xf32, #tpu.memory_space<vmem>>, %arg8: memref<16x32xbf16, #tpu.memory_space<vmem>>) attributes {dimension_semantics = [#tpu.dimension_semantics<parallel>], iteration_bounds = array<i64: 1>, scalar_prefetch = 0 : i64, scratch_operands = 0 : i64, tpu.core_type = #tpu.core_type<tc>, window_params = [{transform_indices = @transform_0, window_bounds = array<i64: 16, 32>}, {pipeline_mode = #tpu.pipeline_mode<synchronous>, transform_indices = @transform_1, window_bounds = array<i64: 32, 64>}, {pipeline_mode = #tpu.pipeline_mode<synchronous>, transform_indices = @transform_2, window_bounds = array<i64: 1, 64>}, {pipeline_mode = #tpu.pipeline_mode<synchronous>, transform_indices = @transform_3, window_bounds = array<i64: 64, 32>}, {pipeline_mode = #tpu.pipeline_mode<synchronous>, transform_indices = @transform_4, window_bounds = array<i64: 1, 32>}, {pipeline_mode = #tpu.pipeline_mode<synchronous>, transform_indices = @transform_5, window_bounds = array<i64: 1, 32>}, {pipeline_mode = #tpu.pipeline_mode<synchronous>, transform_indices = @transform_6, window_bounds = array<i64: 1, 32>}, {transform_indices = @transform_7, window_bounds = array<i64: 16, 32>}]} {
    %c0 = arith.constant 0 : index
    %c0_0 = arith.constant 0 : index
    %0 = vector.load %arg1[%c0, %c0_0] : memref<16x32xbf16, #tpu.memory_space<vmem>>, vector<16x32xbf16>
    %c0_1 = arith.constant 0 : index
    %c0_2 = arith.constant 0 : index
    %1 = vector.load %arg2[%c0_1, %c0_2] : memref<32x64xbf16, #tpu.memory_space<vmem>>, vector<32x64xbf16>
    %cst = arith.constant dense<0.000000e+00> : vector<16x64xf32>
    %2 = tpu.matmul %0, %1, %cst {dimension_numbers = #tpu.dot_dimension_numbers<[1], [0], [0], [1], [0, 0, 1, 1], [], []>} : vector<16x32xbf16>, vector<32x64xbf16>, vector<16x64xf32> -> vector<16x64xf32>
    %c0_3 = arith.constant 0 : index
    %c0_4 = arith.constant 0 : index
    %3 = vector.load %arg3[%c0_3, %c0_4] : memref<1x64xf32, #tpu.memory_space<vmem>>, vector<1x64xf32>
    %4 = vector.broadcast %3 : vector<1x64xf32> to vector<16x64xf32>
    %5 = arith.addf %2, %4 : vector<16x64xf32>
    %cst_5 = arith.constant 0.000000e+00 : f32
    %6 = vector.broadcast %cst_5 : f32 to vector<16x64xf32>
    %7 = arith.maximumf %5, %6 : vector<16x64xf32>
    %8 = arith.truncf %7 : vector<16x64xf32> to vector<16x64xbf16>
    %c0_6 = arith.constant 0 : index
    %c0_7 = arith.constant 0 : index
    %9 = vector.load %arg4[%c0_6, %c0_7] : memref<64x32xbf16, #tpu.memory_space<vmem>>, vector<64x32xbf16>
    %cst_8 = arith.constant dense<0.000000e+00> : vector<16x32xf32>
    %10 = tpu.matmul %8, %9, %cst_8 {dimension_numbers = #tpu.dot_dimension_numbers<[1], [0], [0], [1], [0, 0, 1, 1], [], []>} : vector<16x64xbf16>, vector<64x32xbf16>, vector<16x32xf32> -> vector<16x32xf32>
    %c0_9 = arith.constant 0 : index
    %c0_10 = arith.constant 0 : index
    %11 = vector.load %arg5[%c0_9, %c0_10] : memref<1x32xf32, #tpu.memory_space<vmem>>, vector<1x32xf32>
    %12 = vector.broadcast %11 : vector<1x32xf32> to vector<16x32xf32>
    %13 = arith.addf %10, %12 : vector<16x32xf32>
    %14 = arith.extf %0 : vector<16x32xbf16> to vector<16x32xf32>
    %15 = arith.addf %13, %14 : vector<16x32xf32>
    %c0_11 = arith.constant 0 : index
    %c0_12 = arith.constant 0 : index
    %16 = vector.load %arg6[%c0_11, %c0_12] : memref<1x32xf32, #tpu.memory_space<vmem>>, vector<1x32xf32>
    %c0_13 = arith.constant 0 : index
    %c0_14 = arith.constant 0 : index
    %17 = vector.load %arg7[%c0_13, %c0_14] : memref<1x32xf32, #tpu.memory_space<vmem>>, vector<1x32xf32>
    %cst_15 = arith.constant dense<0.000000e+00> : vector<16xf32>
    %18 = vector.multi_reduction <add>, %15, %cst_15 [1] : vector<16x32xf32> to vector<16xf32>
    %19 = vector.shape_cast %18 : vector<16xf32> to vector<16x1xf32>
    %cst_16 = arith.constant 3.200000e+01 : f32
    %20 = vector.broadcast %cst_16 : f32 to vector<16x1xf32>
    %21 = arith.divf %19, %20 : vector<16x1xf32>
    %22 = vector.broadcast %21 : vector<16x1xf32> to vector<16x32xf32>
    %23 = arith.subf %15, %22 : vector<16x32xf32>
    %24 = arith.mulf %23, %23 : vector<16x32xf32>
    %cst_17 = arith.constant dense<0.000000e+00> : vector<16xf32>
    %25 = vector.multi_reduction <add>, %24, %cst_17 [1] : vector<16x32xf32> to vector<16xf32>
    %26 = vector.shape_cast %25 : vector<16xf32> to vector<16x1xf32>
    %cst_18 = arith.constant 3.200000e+01 : f32
    %27 = vector.broadcast %cst_18 : f32 to vector<16x1xf32>
    %28 = arith.divf %26, %27 : vector<16x1xf32>
    %29 = vector.broadcast %21 : vector<16x1xf32> to vector<16x32xf32>
    %30 = arith.subf %15, %29 : vector<16x32xf32>
    %cst_19 = arith.constant 9.99999974E-6 : f32
    %31 = vector.broadcast %cst_19 : f32 to vector<16x1xf32>
    %32 = arith.addf %28, %31 : vector<16x1xf32>
    %33 = math.rsqrt %32 : vector<16x1xf32>
    %34 = vector.broadcast %33 : vector<16x1xf32> to vector<16x32xf32>
    %35 = arith.mulf %30, %34 : vector<16x32xf32>
    %36 = vector.broadcast %16 : vector<1x32xf32> to vector<16x32xf32>
    %37 = arith.mulf %35, %36 : vector<16x32xf32>
    %38 = vector.broadcast %17 : vector<1x32xf32> to vector<16x32xf32>
    %39 = arith.addf %37, %38 : vector<16x32xf32>
    %40 = arith.truncf %39 : vector<16x32xf32> to vector<16x32xbf16>
    %c0_20 = arith.constant 0 : index
    %c0_21 = arith.constant 0 : index
    %41 = vector.load %arg8[%c0_20, %c0_21] : memref<16x32xbf16, #tpu.memory_space<vmem>>, vector<16x32xbf16>
    tpu.vector_store %arg8[%c0_20, %c0_21], %40 {strides = array<i32>} : memref<16x32xbf16, #tpu.memory_space<vmem>>, vector<16x32xbf16>,
    return
  }
  func.func @transform_0(%arg0: i32) -> (i32, i32) {
    %c0_i32 = arith.constant 0 : i32
    %c0_i32_0 = arith.constant 0 : i32
    return %arg0, %c0_i32 : i32, i32
  }
  func.func @transform_1(%arg0: i32) -> (i32, i32) {
    %c0_i32 = arith.constant 0 : i32
    %c0_i32_0 = arith.constant 0 : i32
    %c0_i32_1 = arith.constant 0 : i32
    return %c0_i32, %c0_i32_0 : i32, i32
  }
  func.func @transform_2(%arg0: i32) -> (i32, i32) {
    %c0_i32 = arith.constant 0 : i32
    %c0_i32_0 = arith.constant 0 : i32
    %c0_i32_1 = arith.constant 0 : i32
    return %c0_i32, %c0_i32_0 : i32, i32
  }
  func.func @transform_3(%arg0: i32) -> (i32, i32) {
    %c0_i32 = arith.constant 0 : i32
    %c0_i32_0 = arith.constant 0 : i32
    %c0_i32_1 = arith.constant 0 : i32
    return %c0_i32, %c0_i32_0 : i32, i32
  }
  func.func @transform_4(%arg0: i32) -> (i32, i32) {
    %c0_i32 = arith.constant 0 : i32
    %c0_i32_0 = arith.constant 0 : i32
    %c0_i32_1 = arith.constant 0 : i32
    return %c0_i32, %c0_i32_0 : i32, i32
  }
  func.func @transform_5(%arg0: i32) -> (i32, i32) {
    %c0_i32 = arith.constant 0 : i32
    %c0_i32_0 = arith.constant 0 : i32
    %c0_i32_1 = arith.constant 0 : i32
    return %c0_i32, %c0_i32_0 : i32, i32
  }
  func.func @transform_6(%arg0: i32) -> (i32, i32) {
    %c0_i32 = arith.constant 0 : i32
    %c0_i32_0 = arith.constant 0 : i32
    %c0_i32_1 = arith.constant 0 : i32
    return %c0_i32, %c0_i32_0 : i32, i32
  }
  func.func @transform_7(%arg0: i32) -> (i32, i32) {
    %c0_i32 = arith.constant 0 : i32
    %c0_i32_0 = arith.constant 0 : i32
    return %arg0, %c0_i32 : i32, i32
  }
}

module attributes {stable_mosaic.version = 11 : i64} {
  func.func @_self_mha_kernel(%arg0: i32, %arg1: memref<1x8x96xbf16, #tpu.memory_space<vmem>>, %arg2: memref<1x1x8xf32, #tpu.memory_space<vmem>>, %arg3: memref<32x32xbf16, #tpu.memory_space<vmem>>, %arg4: memref<1x32xf32, #tpu.memory_space<vmem>>, %arg5: memref<1x8x32xbf16, #tpu.memory_space<vmem>>, %arg6: memref<1x32xf32, #tpu.memory_space<vmem>>, %arg7: memref<1x32xf32, #tpu.memory_space<vmem>>, %arg8: memref<1x8x32xbf16, #tpu.memory_space<vmem>>) attributes {dimension_semantics = [#tpu.dimension_semantics<parallel>], iteration_bounds = array<i64: 2>, scalar_prefetch = 0 : i64, scratch_operands = 0 : i64, tpu.core_type = #tpu.core_type<tc>, window_params = [{transform_indices = @transform_0, window_bounds = array<i64: 1, 8, 96>}, {transform_indices = @transform_1, window_bounds = array<i64: 1, 1, 8>}, {pipeline_mode = #tpu.pipeline_mode<synchronous>, transform_indices = @transform_2, window_bounds = array<i64: 32, 32>}, {pipeline_mode = #tpu.pipeline_mode<synchronous>, transform_indices = @transform_3, window_bounds = array<i64: 1, 32>}, {transform_indices = @transform_4, window_bounds = array<i64: 1, 8, 32>}, {pipeline_mode = #tpu.pipeline_mode<synchronous>, transform_indices = @transform_5, window_bounds = array<i64: 1, 32>}, {pipeline_mode = #tpu.pipeline_mode<synchronous>, transform_indices = @transform_6, window_bounds = array<i64: 1, 32>}, {transform_indices = @transform_7, window_bounds = array<i64: 1, 8, 32>}]} {
    %c0 = arith.constant 0 : index
    %c0_0 = arith.constant 0 : index
    %c0_1 = arith.constant 0 : index
    %0 = vector.load %arg1[%c0, %c0_0, %c0_1] : memref<1x8x96xbf16, #tpu.memory_space<vmem>>, vector<1x8x96xbf16>
    %1 = vector.shape_cast %0 : vector<1x8x96xbf16> to vector<8x96xbf16>
    %c0_2 = arith.constant 0 : index
    %c0_3 = arith.constant 0 : index
    %c0_4 = arith.constant 0 : index
    %2 = vector.load %arg2[%c0_2, %c0_3, %c0_4] : memref<1x1x8xf32, #tpu.memory_space<vmem>>, vector<1x1x8xf32>
    %3 = vector.shape_cast %2 : vector<1x1x8xf32> to vector<1x8xf32>
    %4 = vector.extract_strided_slice %1 {offsets = [0, 0], sizes = [8, 32], strides = [1, 1]} : vector<8x96xbf16> to vector<8x32xbf16>
    %5 = vector.extract_strided_slice %1 {offsets = [0, 32], sizes = [8, 32], strides = [1, 1]} : vector<8x96xbf16> to vector<8x32xbf16>
    %6 = vector.extract_strided_slice %1 {offsets = [0, 64], sizes = [8, 32], strides = [1, 1]} : vector<8x96xbf16> to vector<8x32xbf16>
    %c0_5 = arith.constant 0 : index
    %c0_6 = arith.constant 0 : index
    %7 = vector.load %arg3[%c0_5, %c0_6] : memref<32x32xbf16, #tpu.memory_space<vmem>>, vector<32x32xbf16>
    %cst = arith.constant 0.000000e+00 : f32
    %8 = vector.broadcast %cst : f32 to vector<8x32xf32>
    %9 = vector.extract_strided_slice %4 {offsets = [0, 0], sizes = [8, 8], strides = [1, 1]} : vector<8x32xbf16> to vector<8x8xbf16>
    %10 = vector.extract_strided_slice %5 {offsets = [0, 0], sizes = [8, 8], strides = [1, 1]} : vector<8x32xbf16> to vector<8x8xbf16>
    %cst_7 = arith.constant dense<0.000000e+00> : vector<8x8xf32>
    %11 = tpu.matmul %9, %10, %cst_7 {dimension_numbers = #tpu.dot_dimension_numbers<[1], [1], [0], [0], [0, 0, 1, 0], [], []>} : vector<8x8xbf16>, vector<8x8xbf16>, vector<8x8xf32> -> vector<8x8xf32>
    %cst_8 = arith.constant 0.353553385 : f32
    %12 = vector.broadcast %cst_8 : f32 to vector<8x8xf32>
    %13 = arith.mulf %11, %12 : vector<8x8xf32>
    %14 = vector.broadcast %3 : vector<1x8xf32> to vector<8x8xf32>
    %15 = arith.addf %13, %14 : vector<8x8xf32>
    %cst_9 = arith.constant dense<0xFF800000> : vector<8xf32>
    %16 = vector.multi_reduction <maximumf>, %15, %cst_9 [1] : vector<8x8xf32> to vector<8xf32>
    %17 = vector.shape_cast %16 : vector<8xf32> to vector<8x1xf32>
    %18 = vector.broadcast %17 : vector<8x1xf32> to vector<8x8xf32>
    %19 = arith.subf %15, %18 : vector<8x8xf32>
    %20 = math.exp %19 : vector<8x8xf32>
    %cst_10 = arith.constant dense<0.000000e+00> : vector<8xf32>
    %21 = vector.multi_reduction <add>, %20, %cst_10 [1] : vector<8x8xf32> to vector<8xf32>
    %22 = vector.shape_cast %21 : vector<8xf32> to vector<8x1xf32>
    %23 = vector.broadcast %22 : vector<8x1xf32> to vector<8x8xf32>
    %24 = arith.divf %20, %23 : vector<8x8xf32>
    %25 = arith.truncf %24 : vector<8x8xf32> to vector<8x8xbf16>
    %26 = vector.extract_strided_slice %6 {offsets = [0, 0], sizes = [8, 8], strides = [1, 1]} : vector<8x32xbf16> to vector<8x8xbf16>
    %cst_11 = arith.constant dense<0.000000e+00> : vector<8x8xf32>
    %27 = tpu.matmul %25, %26, %cst_11 {dimension_numbers = #tpu.dot_dimension_numbers<[1], [0], [0], [1], [0, 0, 1, 1], [], []>} : vector<8x8xbf16>, vector<8x8xbf16>, vector<8x8xf32> -> vector<8x8xf32>
    %28 = arith.truncf %27 : vector<8x8xf32> to vector<8x8xbf16>
    %29 = vector.extract_strided_slice %7 {offsets = [0, 0], sizes = [8, 32], strides = [1, 1]} : vector<32x32xbf16> to vector<8x32xbf16>
    %cst_12 = arith.constant dense<0.000000e+00> : vector<8x32xf32>
    %30 = tpu.matmul %28, %29, %cst_12 {dimension_numbers = #tpu.dot_dimension_numbers<[1], [0], [0], [1], [0, 0, 1, 1], [], []>} : vector<8x8xbf16>, vector<8x32xbf16>, vector<8x32xf32> -> vector<8x32xf32>
    %31 = arith.addf %8, %30 : vector<8x32xf32>
    %32 = vector.extract_strided_slice %4 {offsets = [0, 8], sizes = [8, 8], strides = [1, 1]} : vector<8x32xbf16> to vector<8x8xbf16>
    %33 = vector.extract_strided_slice %5 {offsets = [0, 8], sizes = [8, 8], strides = [1, 1]} : vector<8x32xbf16> to vector<8x8xbf16>
    %cst_13 = arith.constant dense<0.000000e+00> : vector<8x8xf32>
    %34 = tpu.matmul %32, %33, %cst_13 {dimension_numbers = #tpu.dot_dimension_numbers<[1], [1], [0], [0], [0, 0, 1, 0], [], []>} : vector<8x8xbf16>, vector<8x8xbf16>, vector<8x8xf32> -> vector<8x8xf32>
    %cst_14 = arith.constant 0.353553385 : f32
    %35 = vector.broadcast %cst_14 : f32 to vector<8x8xf32>
    %36 = arith.mulf %34, %35 : vector<8x8xf32>
    %37 = vector.broadcast %3 : vector<1x8xf32> to vector<8x8xf32>
    %38 = arith.addf %36, %37 : vector<8x8xf32>
    %cst_15 = arith.constant dense<0xFF800000> : vector<8xf32>
    %39 = vector.multi_reduction <maximumf>, %38, %cst_15 [1] : vector<8x8xf32> to vector<8xf32>
    %40 = vector.shape_cast %39 : vector<8xf32> to vector<8x1xf32>
    %41 = vector.broadcast %40 : vector<8x1xf32> to vector<8x8xf32>
    %42 = arith.subf %38, %41 : vector<8x8xf32>
    %43 = math.exp %42 : vector<8x8xf32>
    %cst_16 = arith.constant dense<0.000000e+00> : vector<8xf32>
    %44 = vector.multi_reduction <add>, %43, %cst_16 [1] : vector<8x8xf32> to vector<8xf32>
    %45 = vector.shape_cast %44 : vector<8xf32> to vector<8x1xf32>
    %46 = vector.broadcast %45 : vector<8x1xf32> to vector<8x8xf32>
    %47 = arith.divf %43, %46 : vector<8x8xf32>
    %48 = arith.truncf %47 : vector<8x8xf32> to vector<8x8xbf16>
    %49 = vector.extract_strided_slice %6 {offsets = [0, 8], sizes = [8, 8], strides = [1, 1]} : vector<8x32xbf16> to vector<8x8xbf16>
    %cst_17 = arith.constant dense<0.000000e+00> : vector<8x8xf32>
    %50 = tpu.matmul %48, %49, %cst_17 {dimension_numbers = #tpu.dot_dimension_numbers<[1], [0], [0], [1], [0, 0, 1, 1], [], []>} : vector<8x8xbf16>, vector<8x8xbf16>, vector<8x8xf32> -> vector<8x8xf32>
    %51 = arith.truncf %50 : vector<8x8xf32> to vector<8x8xbf16>
    %52 = vector.extract_strided_slice %7 {offsets = [8, 0], sizes = [8, 32], strides = [1, 1]} : vector<32x32xbf16> to vector<8x32xbf16>
    %cst_18 = arith.constant dense<0.000000e+00> : vector<8x32xf32>
    %53 = tpu.matmul %51, %52, %cst_18 {dimension_numbers = #tpu.dot_dimension_numbers<[1], [0], [0], [1], [0, 0, 1, 1], [], []>} : vector<8x8xbf16>, vector<8x32xbf16>, vector<8x32xf32> -> vector<8x32xf32>
    %54 = arith.addf %31, %53 : vector<8x32xf32>
    %55 = vector.extract_strided_slice %4 {offsets = [0, 16], sizes = [8, 8], strides = [1, 1]} : vector<8x32xbf16> to vector<8x8xbf16>
    %56 = vector.extract_strided_slice %5 {offsets = [0, 16], sizes = [8, 8], strides = [1, 1]} : vector<8x32xbf16> to vector<8x8xbf16>
    %cst_19 = arith.constant dense<0.000000e+00> : vector<8x8xf32>
    %57 = tpu.matmul %55, %56, %cst_19 {dimension_numbers = #tpu.dot_dimension_numbers<[1], [1], [0], [0], [0, 0, 1, 0], [], []>} : vector<8x8xbf16>, vector<8x8xbf16>, vector<8x8xf32> -> vector<8x8xf32>
    %cst_20 = arith.constant 0.353553385 : f32
    %58 = vector.broadcast %cst_20 : f32 to vector<8x8xf32>
    %59 = arith.mulf %57, %58 : vector<8x8xf32>
    %60 = vector.broadcast %3 : vector<1x8xf32> to vector<8x8xf32>
    %61 = arith.addf %59, %60 : vector<8x8xf32>
    %cst_21 = arith.constant dense<0xFF800000> : vector<8xf32>
    %62 = vector.multi_reduction <maximumf>, %61, %cst_21 [1] : vector<8x8xf32> to vector<8xf32>
    %63 = vector.shape_cast %62 : vector<8xf32> to vector<8x1xf32>
    %64 = vector.broadcast %63 : vector<8x1xf32> to vector<8x8xf32>
    %65 = arith.subf %61, %64 : vector<8x8xf32>
    %66 = math.exp %65 : vector<8x8xf32>
    %cst_22 = arith.constant dense<0.000000e+00> : vector<8xf32>
    %67 = vector.multi_reduction <add>, %66, %cst_22 [1] : vector<8x8xf32> to vector<8xf32>
    %68 = vector.shape_cast %67 : vector<8xf32> to vector<8x1xf32>
    %69 = vector.broadcast %68 : vector<8x1xf32> to vector<8x8xf32>
    %70 = arith.divf %66, %69 : vector<8x8xf32>
    %71 = arith.truncf %70 : vector<8x8xf32> to vector<8x8xbf16>
    %72 = vector.extract_strided_slice %6 {offsets = [0, 16], sizes = [8, 8], strides = [1, 1]} : vector<8x32xbf16> to vector<8x8xbf16>
    %cst_23 = arith.constant dense<0.000000e+00> : vector<8x8xf32>
    %73 = tpu.matmul %71, %72, %cst_23 {dimension_numbers = #tpu.dot_dimension_numbers<[1], [0], [0], [1], [0, 0, 1, 1], [], []>} : vector<8x8xbf16>, vector<8x8xbf16>, vector<8x8xf32> -> vector<8x8xf32>
    %74 = arith.truncf %73 : vector<8x8xf32> to vector<8x8xbf16>
    %75 = vector.extract_strided_slice %7 {offsets = [16, 0], sizes = [8, 32], strides = [1, 1]} : vector<32x32xbf16> to vector<8x32xbf16>
    %cst_24 = arith.constant dense<0.000000e+00> : vector<8x32xf32>
    %76 = tpu.matmul %74, %75, %cst_24 {dimension_numbers = #tpu.dot_dimension_numbers<[1], [0], [0], [1], [0, 0, 1, 1], [], []>} : vector<8x8xbf16>, vector<8x32xbf16>, vector<8x32xf32> -> vector<8x32xf32>
    %77 = arith.addf %54, %76 : vector<8x32xf32>
    %78 = vector.extract_strided_slice %4 {offsets = [0, 24], sizes = [8, 8], strides = [1, 1]} : vector<8x32xbf16> to vector<8x8xbf16>
    %79 = vector.extract_strided_slice %5 {offsets = [0, 24], sizes = [8, 8], strides = [1, 1]} : vector<8x32xbf16> to vector<8x8xbf16>
    %cst_25 = arith.constant dense<0.000000e+00> : vector<8x8xf32>
    %80 = tpu.matmul %78, %79, %cst_25 {dimension_numbers = #tpu.dot_dimension_numbers<[1], [1], [0], [0], [0, 0, 1, 0], [], []>} : vector<8x8xbf16>, vector<8x8xbf16>, vector<8x8xf32> -> vector<8x8xf32>
    %cst_26 = arith.constant 0.353553385 : f32
    %81 = vector.broadcast %cst_26 : f32 to vector<8x8xf32>
    %82 = arith.mulf %80, %81 : vector<8x8xf32>
    %83 = vector.broadcast %3 : vector<1x8xf32> to vector<8x8xf32>
    %84 = arith.addf %82, %83 : vector<8x8xf32>
    %cst_27 = arith.constant dense<0xFF800000> : vector<8xf32>
    %85 = vector.multi_reduction <maximumf>, %84, %cst_27 [1] : vector<8x8xf32> to vector<8xf32>
    %86 = vector.shape_cast %85 : vector<8xf32> to vector<8x1xf32>
    %87 = vector.broadcast %86 : vector<8x1xf32> to vector<8x8xf32>
    %88 = arith.subf %84, %87 : vector<8x8xf32>
    %89 = math.exp %88 : vector<8x8xf32>
    %cst_28 = arith.constant dense<0.000000e+00> : vector<8xf32>
    %90 = vector.multi_reduction <add>, %89, %cst_28 [1] : vector<8x8xf32> to vector<8xf32>
    %91 = vector.shape_cast %90 : vector<8xf32> to vector<8x1xf32>
    %92 = vector.broadcast %91 : vector<8x1xf32> to vector<8x8xf32>
    %93 = arith.divf %89, %92 : vector<8x8xf32>
    %94 = arith.truncf %93 : vector<8x8xf32> to vector<8x8xbf16>
    %95 = vector.extract_strided_slice %6 {offsets = [0, 24], sizes = [8, 8], strides = [1, 1]} : vector<8x32xbf16> to vector<8x8xbf16>
    %cst_29 = arith.constant dense<0.000000e+00> : vector<8x8xf32>
    %96 = tpu.matmul %94, %95, %cst_29 {dimension_numbers = #tpu.dot_dimension_numbers<[1], [0], [0], [1], [0, 0, 1, 1], [], []>} : vector<8x8xbf16>, vector<8x8xbf16>, vector<8x8xf32> -> vector<8x8xf32>
    %97 = arith.truncf %96 : vector<8x8xf32> to vector<8x8xbf16>
    %98 = vector.extract_strided_slice %7 {offsets = [24, 0], sizes = [8, 32], strides = [1, 1]} : vector<32x32xbf16> to vector<8x32xbf16>
    %cst_30 = arith.constant dense<0.000000e+00> : vector<8x32xf32>
    %99 = tpu.matmul %97, %98, %cst_30 {dimension_numbers = #tpu.dot_dimension_numbers<[1], [0], [0], [1], [0, 0, 1, 1], [], []>} : vector<8x8xbf16>, vector<8x32xbf16>, vector<8x32xf32> -> vector<8x32xf32>
    %100 = arith.addf %77, %99 : vector<8x32xf32>
    %c0_31 = arith.constant 0 : index
    %c0_32 = arith.constant 0 : index
    %101 = vector.load %arg4[%c0_31, %c0_32] : memref<1x32xf32, #tpu.memory_space<vmem>>, vector<1x32xf32>
    %102 = vector.broadcast %101 : vector<1x32xf32> to vector<8x32xf32>
    %103 = arith.addf %100, %102 : vector<8x32xf32>
    %c0_33 = arith.constant 0 : index
    %c0_34 = arith.constant 0 : index
    %c0_35 = arith.constant 0 : index
    %104 = vector.load %arg5[%c0_33, %c0_34, %c0_35] : memref<1x8x32xbf16, #tpu.memory_space<vmem>>, vector<1x8x32xbf16>
    %105 = vector.shape_cast %104 : vector<1x8x32xbf16> to vector<8x32xbf16>
    %106 = arith.extf %105 : vector<8x32xbf16> to vector<8x32xf32>
    %107 = arith.addf %103, %106 : vector<8x32xf32>
    %c0_36 = arith.constant 0 : index
    %c0_37 = arith.constant 0 : index
    %108 = vector.load %arg6[%c0_36, %c0_37] : memref<1x32xf32, #tpu.memory_space<vmem>>, vector<1x32xf32>
    %c0_38 = arith.constant 0 : index
    %c0_39 = arith.constant 0 : index
    %109 = vector.load %arg7[%c0_38, %c0_39] : memref<1x32xf32, #tpu.memory_space<vmem>>, vector<1x32xf32>
    %cst_40 = arith.constant dense<0.000000e+00> : vector<8xf32>
    %110 = vector.multi_reduction <add>, %107, %cst_40 [1] : vector<8x32xf32> to vector<8xf32>
    %111 = vector.shape_cast %110 : vector<8xf32> to vector<8x1xf32>
    %cst_41 = arith.constant 3.200000e+01 : f32
    %112 = vector.broadcast %cst_41 : f32 to vector<8x1xf32>
    %113 = arith.divf %111, %112 : vector<8x1xf32>
    %114 = vector.broadcast %113 : vector<8x1xf32> to vector<8x32xf32>
    %115 = arith.subf %107, %114 : vector<8x32xf32>
    %116 = arith.mulf %115, %115 : vector<8x32xf32>
    %cst_42 = arith.constant dense<0.000000e+00> : vector<8xf32>
    %117 = vector.multi_reduction <add>, %116, %cst_42 [1] : vector<8x32xf32> to vector<8xf32>
    %118 = vector.shape_cast %117 : vector<8xf32> to vector<8x1xf32>
    %cst_43 = arith.constant 3.200000e+01 : f32
    %119 = vector.broadcast %cst_43 : f32 to vector<8x1xf32>
    %120 = arith.divf %118, %119 : vector<8x1xf32>
    %121 = vector.broadcast %113 : vector<8x1xf32> to vector<8x32xf32>
    %122 = arith.subf %107, %121 : vector<8x32xf32>
    %cst_44 = arith.constant 9.99999974E-6 : f32
    %123 = vector.broadcast %cst_44 : f32 to vector<8x1xf32>
    %124 = arith.addf %120, %123 : vector<8x1xf32>
    %125 = math.rsqrt %124 : vector<8x1xf32>
    %126 = vector.broadcast %125 : vector<8x1xf32> to vector<8x32xf32>
    %127 = arith.mulf %122, %126 : vector<8x32xf32>
    %128 = vector.broadcast %108 : vector<1x32xf32> to vector<8x32xf32>
    %129 = arith.mulf %127, %128 : vector<8x32xf32>
    %130 = vector.broadcast %109 : vector<1x32xf32> to vector<8x32xf32>
    %131 = arith.addf %129, %130 : vector<8x32xf32>
    %132 = arith.truncf %131 : vector<8x32xf32> to vector<8x32xbf16>
    %c0_45 = arith.constant 0 : index
    %c0_46 = arith.constant 0 : index
    %c0_47 = arith.constant 0 : index
    %133 = vector.load %arg8[%c0_45, %c0_46, %c0_47] : memref<1x8x32xbf16, #tpu.memory_space<vmem>>, vector<1x8x32xbf16>
    %134 = vector.shape_cast %133 : vector<1x8x32xbf16> to vector<8x32xbf16>
    %135 = vector.shape_cast %132 : vector<8x32xbf16> to vector<1x8x32xbf16>
    tpu.vector_store %arg8[%c0_45, %c0_46, %c0_47], %135 {strides = array<i32>} : memref<1x8x32xbf16, #tpu.memory_space<vmem>>, vector<1x8x32xbf16>,
    return
  }
  func.func @transform_0(%arg0: i32) -> (i32, i32, i32) {
    %c0_i32 = arith.constant 0 : i32
    %c0_i32_0 = arith.constant 0 : i32
    %c0_i32_1 = arith.constant 0 : i32
    return %arg0, %c0_i32, %c0_i32_0 : i32, i32, i32
  }
  func.func @transform_1(%arg0: i32) -> (i32, i32, i32) {
    %c0_i32 = arith.constant 0 : i32
    %c0_i32_0 = arith.constant 0 : i32
    %c0_i32_1 = arith.constant 0 : i32
    return %arg0, %c0_i32, %c0_i32_0 : i32, i32, i32
  }
  func.func @transform_2(%arg0: i32) -> (i32, i32) {
    %c0_i32 = arith.constant 0 : i32
    %c0_i32_0 = arith.constant 0 : i32
    %c0_i32_1 = arith.constant 0 : i32
    return %c0_i32, %c0_i32_0 : i32, i32
  }
  func.func @transform_3(%arg0: i32) -> (i32, i32) {
    %c0_i32 = arith.constant 0 : i32
    %c0_i32_0 = arith.constant 0 : i32
    %c0_i32_1 = arith.constant 0 : i32
    return %c0_i32, %c0_i32_0 : i32, i32
  }
  func.func @transform_4(%arg0: i32) -> (i32, i32, i32) {
    %c0_i32 = arith.constant 0 : i32
    %c0_i32_0 = arith.constant 0 : i32
    %c0_i32_1 = arith.constant 0 : i32
    return %arg0, %c0_i32, %c0_i32_0 : i32, i32, i32
  }
  func.func @transform_5(%arg0: i32) -> (i32, i32) {
    %c0_i32 = arith.constant 0 : i32
    %c0_i32_0 = arith.constant 0 : i32
    %c0_i32_1 = arith.constant 0 : i32
    return %c0_i32, %c0_i32_0 : i32, i32
  }
  func.func @transform_6(%arg0: i32) -> (i32, i32) {
    %c0_i32 = arith.constant 0 : i32
    %c0_i32_0 = arith.constant 0 : i32
    %c0_i32_1 = arith.constant 0 : i32
    return %c0_i32, %c0_i32_0 : i32, i32
  }
  func.func @transform_7(%arg0: i32) -> (i32, i32, i32) {
    %c0_i32 = arith.constant 0 : i32
    %c0_i32_0 = arith.constant 0 : i32
    %c0_i32_1 = arith.constant 0 : i32
    return %arg0, %c0_i32, %c0_i32_0 : i32, i32, i32
  }
}

module attributes {stable_mosaic.version = 11 : i64} {
  func.func @_dense_kernel(%arg0: i32, %arg1: i32, %arg2: memref<16x32xbf16, #tpu.memory_space<vmem>>, %arg3: memref<32x64xbf16, #tpu.memory_space<vmem>>, %arg4: memref<1x64xf32, #tpu.memory_space<vmem>>, %arg5: memref<16x64xbf16, #tpu.memory_space<vmem>>) attributes {dimension_semantics = [#tpu.dimension_semantics<parallel>, #tpu.dimension_semantics<parallel>], iteration_bounds = array<i64: 1, 1>, scalar_prefetch = 0 : i64, scratch_operands = 0 : i64, tpu.core_type = #tpu.core_type<tc>, window_params = [{transform_indices = @transform_0, window_bounds = array<i64: 16, 32>}, {transform_indices = @transform_1, window_bounds = array<i64: 32, 64>}, {transform_indices = @transform_2, window_bounds = array<i64: 1, 64>}, {transform_indices = @transform_3, window_bounds = array<i64: 16, 64>}]} {
    %c0 = arith.constant 0 : index
    %c0_0 = arith.constant 0 : index
    %0 = vector.load %arg2[%c0, %c0_0] : memref<16x32xbf16, #tpu.memory_space<vmem>>, vector<16x32xbf16>
    %c0_1 = arith.constant 0 : index
    %c0_2 = arith.constant 0 : index
    %1 = vector.load %arg3[%c0_1, %c0_2] : memref<32x64xbf16, #tpu.memory_space<vmem>>, vector<32x64xbf16>
    %cst = arith.constant dense<0.000000e+00> : vector<16x64xf32>
    %2 = tpu.matmul %0, %1, %cst {dimension_numbers = #tpu.dot_dimension_numbers<[1], [0], [0], [1], [0, 0, 1, 1], [], []>} : vector<16x32xbf16>, vector<32x64xbf16>, vector<16x64xf32> -> vector<16x64xf32>
    %c0_3 = arith.constant 0 : index
    %c0_4 = arith.constant 0 : index
    %3 = vector.load %arg4[%c0_3, %c0_4] : memref<1x64xf32, #tpu.memory_space<vmem>>, vector<1x64xf32>
    %4 = vector.broadcast %3 : vector<1x64xf32> to vector<16x64xf32>
    %5 = arith.addf %2, %4 : vector<16x64xf32>
    %6 = arith.truncf %5 : vector<16x64xf32> to vector<16x64xbf16>
    %c0_5 = arith.constant 0 : index
    %c0_6 = arith.constant 0 : index
    %7 = vector.load %arg5[%c0_5, %c0_6] : memref<16x64xbf16, #tpu.memory_space<vmem>>, vector<16x64xbf16>
    tpu.vector_store %arg5[%c0_5, %c0_6], %6 {strides = array<i32>} : memref<16x64xbf16, #tpu.memory_space<vmem>>, vector<16x64xbf16>,
    return
  }
  func.func @transform_0(%arg0: i32, %arg1: i32) -> (i32, i32) {
    %c0_i32 = arith.constant 0 : i32
    %c0_i32_0 = arith.constant 0 : i32
    return %arg0, %c0_i32 : i32, i32
  }
  func.func @transform_1(%arg0: i32, %arg1: i32) -> (i32, i32) {
    %c0_i32 = arith.constant 0 : i32
    %c0_i32_0 = arith.constant 0 : i32
    return %c0_i32, %arg1 : i32, i32
  }
  func.func @transform_2(%arg0: i32, %arg1: i32) -> (i32, i32) {
    %c0_i32 = arith.constant 0 : i32
    %c0_i32_0 = arith.constant 0 : i32
    return %c0_i32, %arg1 : i32, i32
  }
  func.func @transform_3(%arg0: i32, %arg1: i32) -> (i32, i32) {
    %c0_i32 = arith.constant 0 : i32
    return %arg0, %arg1 : i32, i32
  }
}

module attributes {stable_mosaic.version = 11 : i64} {
  func.func @_dense_kernel(%arg0: i32, %arg1: i32, %arg2: memref<12x32xbf16, #tpu.memory_space<vmem>>, %arg3: memref<32x32xbf16, #tpu.memory_space<vmem>>, %arg4: memref<1x32xf32, #tpu.memory_space<vmem>>, %arg5: memref<12x32xbf16, #tpu.memory_space<vmem>>) attributes {dimension_semantics = [#tpu.dimension_semantics<parallel>, #tpu.dimension_semantics<parallel>], iteration_bounds = array<i64: 1, 1>, scalar_prefetch = 0 : i64, scratch_operands = 0 : i64, tpu.core_type = #tpu.core_type<tc>, window_params = [{transform_indices = @transform_0, window_bounds = array<i64: 12, 32>}, {transform_indices = @transform_1, window_bounds = array<i64: 32, 32>}, {transform_indices = @transform_2, window_bounds = array<i64: 1, 32>}, {transform_indices = @transform_3, window_bounds = array<i64: 12, 32>}]} {
    %c0 = arith.constant 0 : index
    %c0_0 = arith.constant 0 : index
    %0 = vector.load %arg2[%c0, %c0_0] : memref<12x32xbf16, #tpu.memory_space<vmem>>, vector<12x32xbf16>
    %c0_1 = arith.constant 0 : index
    %c0_2 = arith.constant 0 : index
    %1 = vector.load %arg3[%c0_1, %c0_2] : memref<32x32xbf16, #tpu.memory_space<vmem>>, vector<32x32xbf16>
    %cst = arith.constant dense<0.000000e+00> : vector<12x32xf32>
    %2 = tpu.matmul %0, %1, %cst {dimension_numbers = #tpu.dot_dimension_numbers<[1], [0], [0], [1], [0, 0, 1, 1], [], []>} : vector<12x32xbf16>, vector<32x32xbf16>, vector<12x32xf32> -> vector<12x32xf32>
    %c0_3 = arith.constant 0 : index
    %c0_4 = arith.constant 0 : index
    %3 = vector.load %arg4[%c0_3, %c0_4] : memref<1x32xf32, #tpu.memory_space<vmem>>, vector<1x32xf32>
    %4 = vector.broadcast %3 : vector<1x32xf32> to vector<12x32xf32>
    %5 = arith.addf %2, %4 : vector<12x32xf32>
    %6 = arith.truncf %5 : vector<12x32xf32> to vector<12x32xbf16>
    %c0_5 = arith.constant 0 : index
    %c0_6 = arith.constant 0 : index
    %7 = vector.load %arg5[%c0_5, %c0_6] : memref<12x32xbf16, #tpu.memory_space<vmem>>, vector<12x32xbf16>
    tpu.vector_store %arg5[%c0_5, %c0_6], %6 {strides = array<i32>} : memref<12x32xbf16, #tpu.memory_space<vmem>>, vector<12x32xbf16>,
    return
  }
  func.func @transform_0(%arg0: i32, %arg1: i32) -> (i32, i32) {
    %c0_i32 = arith.constant 0 : i32
    %c0_i32_0 = arith.constant 0 : i32
    return %arg0, %c0_i32 : i32, i32
  }
  func.func @transform_1(%arg0: i32, %arg1: i32) -> (i32, i32) {
    %c0_i32 = arith.constant 0 : i32
    %c0_i32_0 = arith.constant 0 : i32
    return %c0_i32, %arg1 : i32, i32
  }
  func.func @transform_2(%arg0: i32, %arg1: i32) -> (i32, i32) {
    %c0_i32 = arith.constant 0 : i32
    %c0_i32_0 = arith.constant 0 : i32
    return %c0_i32, %arg1 : i32, i32
  }
  func.func @transform_3(%arg0: i32, %arg1: i32) -> (i32, i32) {
    %c0_i32 = arith.constant 0 : i32
    return %arg0, %arg1 : i32, i32
  }
}

module attributes {stable_mosaic.version = 11 : i64} {
  func.func @_self_mha_kernel(%arg0: i32, %arg1: memref<1x6x96xbf16, #tpu.memory_space<vmem>>, %arg2: memref<1x1x6xf32, #tpu.memory_space<vmem>>, %arg3: memref<32x32xbf16, #tpu.memory_space<vmem>>, %arg4: memref<1x32xf32, #tpu.memory_space<vmem>>, %arg5: memref<1x6x32xbf16, #tpu.memory_space<vmem>>, %arg6: memref<1x32xf32, #tpu.memory_space<vmem>>, %arg7: memref<1x32xf32, #tpu.memory_space<vmem>>, %arg8: memref<1x6x32xbf16, #tpu.memory_space<vmem>>) attributes {dimension_semantics = [#tpu.dimension_semantics<parallel>], iteration_bounds = array<i64: 2>, scalar_prefetch = 0 : i64, scratch_operands = 0 : i64, tpu.core_type = #tpu.core_type<tc>, window_params = [{transform_indices = @transform_0, window_bounds = array<i64: 1, 6, 96>}, {transform_indices = @transform_1, window_bounds = array<i64: 1, 1, 6>}, {pipeline_mode = #tpu.pipeline_mode<synchronous>, transform_indices = @transform_2, window_bounds = array<i64: 32, 32>}, {pipeline_mode = #tpu.pipeline_mode<synchronous>, transform_indices = @transform_3, window_bounds = array<i64: 1, 32>}, {transform_indices = @transform_4, window_bounds = array<i64: 1, 6, 32>}, {pipeline_mode = #tpu.pipeline_mode<synchronous>, transform_indices = @transform_5, window_bounds = array<i64: 1, 32>}, {pipeline_mode = #tpu.pipeline_mode<synchronous>, transform_indices = @transform_6, window_bounds = array<i64: 1, 32>}, {transform_indices = @transform_7, window_bounds = array<i64: 1, 6, 32>}]} {
    %c0 = arith.constant 0 : index
    %c0_0 = arith.constant 0 : index
    %c0_1 = arith.constant 0 : index
    %0 = vector.load %arg1[%c0, %c0_0, %c0_1] : memref<1x6x96xbf16, #tpu.memory_space<vmem>>, vector<1x6x96xbf16>
    %1 = vector.shape_cast %0 : vector<1x6x96xbf16> to vector<6x96xbf16>
    %c0_2 = arith.constant 0 : index
    %c0_3 = arith.constant 0 : index
    %c0_4 = arith.constant 0 : index
    %2 = vector.load %arg2[%c0_2, %c0_3, %c0_4] : memref<1x1x6xf32, #tpu.memory_space<vmem>>, vector<1x1x6xf32>
    %3 = vector.shape_cast %2 : vector<1x1x6xf32> to vector<1x6xf32>
    %4 = tpu.iota {dimensions = array<i32: 0>} : vector<6x6xi32>
    %5 = tpu.iota {dimensions = array<i32: 1>} : vector<6x6xi32>
    %6 = arith.cmpi sgt, %5, %4 : vector<6x6xi32>
    %cst = arith.constant -1.000000e+09 : f32
    %cst_5 = arith.constant 0.000000e+00 : f32
    %7 = vector.broadcast %cst : f32 to vector<6x6xf32>
    %8 = vector.broadcast %cst_5 : f32 to vector<6x6xf32>
    %9 = arith.select %6, %7, %8 : vector<6x6xi1>, vector<6x6xf32>
    %10 = vector.broadcast %3 : vector<1x6xf32> to vector<6x6xf32>
    %11 = arith.addf %10, %9 : vector<6x6xf32>
    %12 = vector.extract_strided_slice %1 {offsets = [0, 0], sizes = [6, 32], strides = [1, 1]} : vector<6x96xbf16> to vector<6x32xbf16>
    %13 = vector.extract_strided_slice %1 {offsets = [0, 32], sizes = [6, 32], strides = [1, 1]} : vector<6x96xbf16> to vector<6x32xbf16>
    %14 = vector.extract_strided_slice %1 {offsets = [0, 64], sizes = [6, 32], strides = [1, 1]} : vector<6x96xbf16> to vector<6x32xbf16>
    %c0_6 = arith.constant 0 : index
    %c0_7 = arith.constant 0 : index
    %15 = vector.load %arg3[%c0_6, %c0_7] : memref<32x32xbf16, #tpu.memory_space<vmem>>, vector<32x32xbf16>
    %cst_8 = arith.constant 0.000000e+00 : f32
    %16 = vector.broadcast %cst_8 : f32 to vector<6x32xf32>
    %17 = vector.extract_strided_slice %12 {offsets = [0, 0], sizes = [6, 8], strides = [1, 1]} : vector<6x32xbf16> to vector<6x8xbf16>
    %18 = vector.extract_strided_slice %13 {offsets = [0, 0], sizes = [6, 8], strides = [1, 1]} : vector<6x32xbf16> to vector<6x8xbf16>
    %cst_9 = arith.constant dense<0.000000e+00> : vector<6x6xf32>
    %19 = tpu.matmul %17, %18, %cst_9 {dimension_numbers = #tpu.dot_dimension_numbers<[1], [1], [0], [0], [0, 0, 1, 0], [], []>} : vector<6x8xbf16>, vector<6x8xbf16>, vector<6x6xf32> -> vector<6x6xf32>
    %cst_10 = arith.constant 0.353553385 : f32
    %20 = vector.broadcast %cst_10 : f32 to vector<6x6xf32>
    %21 = arith.mulf %19, %20 : vector<6x6xf32>
    %22 = arith.addf %21, %11 : vector<6x6xf32>
    %cst_11 = arith.constant dense<0xFF800000> : vector<6xf32>
    %23 = vector.multi_reduction <maximumf>, %22, %cst_11 [1] : vector<6x6xf32> to vector<6xf32>
    %24 = vector.shape_cast %23 : vector<6xf32> to vector<6x1xf32>
    %25 = vector.broadcast %24 : vector<6x1xf32> to vector<6x6xf32>
    %26 = arith.subf %22, %25 : vector<6x6xf32>
    %27 = math.exp %26 : vector<6x6xf32>
    %cst_12 = arith.constant dense<0.000000e+00> : vector<6xf32>
    %28 = vector.multi_reduction <add>, %27, %cst_12 [1] : vector<6x6xf32> to vector<6xf32>
    %29 = vector.shape_cast %28 : vector<6xf32> to vector<6x1xf32>
    %30 = vector.broadcast %29 : vector<6x1xf32> to vector<6x6xf32>
    %31 = arith.divf %27, %30 : vector<6x6xf32>
    %32 = arith.truncf %31 : vector<6x6xf32> to vector<6x6xbf16>
    %33 = vector.extract_strided_slice %14 {offsets = [0, 0], sizes = [6, 8], strides = [1, 1]} : vector<6x32xbf16> to vector<6x8xbf16>
    %cst_13 = arith.constant dense<0.000000e+00> : vector<6x8xf32>
    %34 = tpu.matmul %32, %33, %cst_13 {dimension_numbers = #tpu.dot_dimension_numbers<[1], [0], [0], [1], [0, 0, 1, 1], [], []>} : vector<6x6xbf16>, vector<6x8xbf16>, vector<6x8xf32> -> vector<6x8xf32>
    %35 = arith.truncf %34 : vector<6x8xf32> to vector<6x8xbf16>
    %36 = vector.extract_strided_slice %15 {offsets = [0, 0], sizes = [8, 32], strides = [1, 1]} : vector<32x32xbf16> to vector<8x32xbf16>
    %cst_14 = arith.constant dense<0.000000e+00> : vector<6x32xf32>
    %37 = tpu.matmul %35, %36, %cst_14 {dimension_numbers = #tpu.dot_dimension_numbers<[1], [0], [0], [1], [0, 0, 1, 1], [], []>} : vector<6x8xbf16>, vector<8x32xbf16>, vector<6x32xf32> -> vector<6x32xf32>
    %38 = arith.addf %16, %37 : vector<6x32xf32>
    %39 = vector.extract_strided_slice %12 {offsets = [0, 8], sizes = [6, 8], strides = [1, 1]} : vector<6x32xbf16> to vector<6x8xbf16>
    %40 = vector.extract_strided_slice %13 {offsets = [0, 8], sizes = [6, 8], strides = [1, 1]} : vector<6x32xbf16> to vector<6x8xbf16>
    %cst_15 = arith.constant dense<0.000000e+00> : vector<6x6xf32>
    %41 = tpu.matmul %39, %40, %cst_15 {dimension_numbers = #tpu.dot_dimension_numbers<[1], [1], [0], [0], [0, 0, 1, 0], [], []>} : vector<6x8xbf16>, vector<6x8xbf16>, vector<6x6xf32> -> vector<6x6xf32>
    %cst_16 = arith.constant 0.353553385 : f32
    %42 = vector.broadcast %cst_16 : f32 to vector<6x6xf32>
    %43 = arith.mulf %41, %42 : vector<6x6xf32>
    %44 = arith.addf %43, %11 : vector<6x6xf32>
    %cst_17 = arith.constant dense<0xFF800000> : vector<6xf32>
    %45 = vector.multi_reduction <maximumf>, %44, %cst_17 [1] : vector<6x6xf32> to vector<6xf32>
    %46 = vector.shape_cast %45 : vector<6xf32> to vector<6x1xf32>
    %47 = vector.broadcast %46 : vector<6x1xf32> to vector<6x6xf32>
    %48 = arith.subf %44, %47 : vector<6x6xf32>
    %49 = math.exp %48 : vector<6x6xf32>
    %cst_18 = arith.constant dense<0.000000e+00> : vector<6xf32>
    %50 = vector.multi_reduction <add>, %49, %cst_18 [1] : vector<6x6xf32> to vector<6xf32>
    %51 = vector.shape_cast %50 : vector<6xf32> to vector<6x1xf32>
    %52 = vector.broadcast %51 : vector<6x1xf32> to vector<6x6xf32>
    %53 = arith.divf %49, %52 : vector<6x6xf32>
    %54 = arith.truncf %53 : vector<6x6xf32> to vector<6x6xbf16>
    %55 = vector.extract_strided_slice %14 {offsets = [0, 8], sizes = [6, 8], strides = [1, 1]} : vector<6x32xbf16> to vector<6x8xbf16>
    %cst_19 = arith.constant dense<0.000000e+00> : vector<6x8xf32>
    %56 = tpu.matmul %54, %55, %cst_19 {dimension_numbers = #tpu.dot_dimension_numbers<[1], [0], [0], [1], [0, 0, 1, 1], [], []>} : vector<6x6xbf16>, vector<6x8xbf16>, vector<6x8xf32> -> vector<6x8xf32>
    %57 = arith.truncf %56 : vector<6x8xf32> to vector<6x8xbf16>
    %58 = vector.extract_strided_slice %15 {offsets = [8, 0], sizes = [8, 32], strides = [1, 1]} : vector<32x32xbf16> to vector<8x32xbf16>
    %cst_20 = arith.constant dense<0.000000e+00> : vector<6x32xf32>
    %59 = tpu.matmul %57, %58, %cst_20 {dimension_numbers = #tpu.dot_dimension_numbers<[1], [0], [0], [1], [0, 0, 1, 1], [], []>} : vector<6x8xbf16>, vector<8x32xbf16>, vector<6x32xf32> -> vector<6x32xf32>
    %60 = arith.addf %38, %59 : vector<6x32xf32>
    %61 = vector.extract_strided_slice %12 {offsets = [0, 16], sizes = [6, 8], strides = [1, 1]} : vector<6x32xbf16> to vector<6x8xbf16>
    %62 = vector.extract_strided_slice %13 {offsets = [0, 16], sizes = [6, 8], strides = [1, 1]} : vector<6x32xbf16> to vector<6x8xbf16>
    %cst_21 = arith.constant dense<0.000000e+00> : vector<6x6xf32>
    %63 = tpu.matmul %61, %62, %cst_21 {dimension_numbers = #tpu.dot_dimension_numbers<[1], [1], [0], [0], [0, 0, 1, 0], [], []>} : vector<6x8xbf16>, vector<6x8xbf16>, vector<6x6xf32> -> vector<6x6xf32>
    %cst_22 = arith.constant 0.353553385 : f32
    %64 = vector.broadcast %cst_22 : f32 to vector<6x6xf32>
    %65 = arith.mulf %63, %64 : vector<6x6xf32>
    %66 = arith.addf %65, %11 : vector<6x6xf32>
    %cst_23 = arith.constant dense<0xFF800000> : vector<6xf32>
    %67 = vector.multi_reduction <maximumf>, %66, %cst_23 [1] : vector<6x6xf32> to vector<6xf32>
    %68 = vector.shape_cast %67 : vector<6xf32> to vector<6x1xf32>
    %69 = vector.broadcast %68 : vector<6x1xf32> to vector<6x6xf32>
    %70 = arith.subf %66, %69 : vector<6x6xf32>
    %71 = math.exp %70 : vector<6x6xf32>
    %cst_24 = arith.constant dense<0.000000e+00> : vector<6xf32>
    %72 = vector.multi_reduction <add>, %71, %cst_24 [1] : vector<6x6xf32> to vector<6xf32>
    %73 = vector.shape_cast %72 : vector<6xf32> to vector<6x1xf32>
    %74 = vector.broadcast %73 : vector<6x1xf32> to vector<6x6xf32>
    %75 = arith.divf %71, %74 : vector<6x6xf32>
    %76 = arith.truncf %75 : vector<6x6xf32> to vector<6x6xbf16>
    %77 = vector.extract_strided_slice %14 {offsets = [0, 16], sizes = [6, 8], strides = [1, 1]} : vector<6x32xbf16> to vector<6x8xbf16>
    %cst_25 = arith.constant dense<0.000000e+00> : vector<6x8xf32>
    %78 = tpu.matmul %76, %77, %cst_25 {dimension_numbers = #tpu.dot_dimension_numbers<[1], [0], [0], [1], [0, 0, 1, 1], [], []>} : vector<6x6xbf16>, vector<6x8xbf16>, vector<6x8xf32> -> vector<6x8xf32>
    %79 = arith.truncf %78 : vector<6x8xf32> to vector<6x8xbf16>
    %80 = vector.extract_strided_slice %15 {offsets = [16, 0], sizes = [8, 32], strides = [1, 1]} : vector<32x32xbf16> to vector<8x32xbf16>
    %cst_26 = arith.constant dense<0.000000e+00> : vector<6x32xf32>
    %81 = tpu.matmul %79, %80, %cst_26 {dimension_numbers = #tpu.dot_dimension_numbers<[1], [0], [0], [1], [0, 0, 1, 1], [], []>} : vector<6x8xbf16>, vector<8x32xbf16>, vector<6x32xf32> -> vector<6x32xf32>
    %82 = arith.addf %60, %81 : vector<6x32xf32>
    %83 = vector.extract_strided_slice %12 {offsets = [0, 24], sizes = [6, 8], strides = [1, 1]} : vector<6x32xbf16> to vector<6x8xbf16>
    %84 = vector.extract_strided_slice %13 {offsets = [0, 24], sizes = [6, 8], strides = [1, 1]} : vector<6x32xbf16> to vector<6x8xbf16>
    %cst_27 = arith.constant dense<0.000000e+00> : vector<6x6xf32>
    %85 = tpu.matmul %83, %84, %cst_27 {dimension_numbers = #tpu.dot_dimension_numbers<[1], [1], [0], [0], [0, 0, 1, 0], [], []>} : vector<6x8xbf16>, vector<6x8xbf16>, vector<6x6xf32> -> vector<6x6xf32>
    %cst_28 = arith.constant 0.353553385 : f32
    %86 = vector.broadcast %cst_28 : f32 to vector<6x6xf32>
    %87 = arith.mulf %85, %86 : vector<6x6xf32>
    %88 = arith.addf %87, %11 : vector<6x6xf32>
    %cst_29 = arith.constant dense<0xFF800000> : vector<6xf32>
    %89 = vector.multi_reduction <maximumf>, %88, %cst_29 [1] : vector<6x6xf32> to vector<6xf32>
    %90 = vector.shape_cast %89 : vector<6xf32> to vector<6x1xf32>
    %91 = vector.broadcast %90 : vector<6x1xf32> to vector<6x6xf32>
    %92 = arith.subf %88, %91 : vector<6x6xf32>
    %93 = math.exp %92 : vector<6x6xf32>
    %cst_30 = arith.constant dense<0.000000e+00> : vector<6xf32>
    %94 = vector.multi_reduction <add>, %93, %cst_30 [1] : vector<6x6xf32> to vector<6xf32>
    %95 = vector.shape_cast %94 : vector<6xf32> to vector<6x1xf32>
    %96 = vector.broadcast %95 : vector<6x1xf32> to vector<6x6xf32>
    %97 = arith.divf %93, %96 : vector<6x6xf32>
    %98 = arith.truncf %97 : vector<6x6xf32> to vector<6x6xbf16>
    %99 = vector.extract_strided_slice %14 {offsets = [0, 24], sizes = [6, 8], strides = [1, 1]} : vector<6x32xbf16> to vector<6x8xbf16>
    %cst_31 = arith.constant dense<0.000000e+00> : vector<6x8xf32>
    %100 = tpu.matmul %98, %99, %cst_31 {dimension_numbers = #tpu.dot_dimension_numbers<[1], [0], [0], [1], [0, 0, 1, 1], [], []>} : vector<6x6xbf16>, vector<6x8xbf16>, vector<6x8xf32> -> vector<6x8xf32>
    %101 = arith.truncf %100 : vector<6x8xf32> to vector<6x8xbf16>
    %102 = vector.extract_strided_slice %15 {offsets = [24, 0], sizes = [8, 32], strides = [1, 1]} : vector<32x32xbf16> to vector<8x32xbf16>
    %cst_32 = arith.constant dense<0.000000e+00> : vector<6x32xf32>
    %103 = tpu.matmul %101, %102, %cst_32 {dimension_numbers = #tpu.dot_dimension_numbers<[1], [0], [0], [1], [0, 0, 1, 1], [], []>} : vector<6x8xbf16>, vector<8x32xbf16>, vector<6x32xf32> -> vector<6x32xf32>
    %104 = arith.addf %82, %103 : vector<6x32xf32>
    %c0_33 = arith.constant 0 : index
    %c0_34 = arith.constant 0 : index
    %105 = vector.load %arg4[%c0_33, %c0_34] : memref<1x32xf32, #tpu.memory_space<vmem>>, vector<1x32xf32>
    %106 = vector.broadcast %105 : vector<1x32xf32> to vector<6x32xf32>
    %107 = arith.addf %104, %106 : vector<6x32xf32>
    %c0_35 = arith.constant 0 : index
    %c0_36 = arith.constant 0 : index
    %c0_37 = arith.constant 0 : index
    %108 = vector.load %arg5[%c0_35, %c0_36, %c0_37] : memref<1x6x32xbf16, #tpu.memory_space<vmem>>, vector<1x6x32xbf16>
    %109 = vector.shape_cast %108 : vector<1x6x32xbf16> to vector<6x32xbf16>
    %110 = arith.extf %109 : vector<6x32xbf16> to vector<6x32xf32>
    %111 = arith.addf %107, %110 : vector<6x32xf32>
    %c0_38 = arith.constant 0 : index
    %c0_39 = arith.constant 0 : index
    %112 = vector.load %arg6[%c0_38, %c0_39] : memref<1x32xf32, #tpu.memory_space<vmem>>, vector<1x32xf32>
    %c0_40 = arith.constant 0 : index
    %c0_41 = arith.constant 0 : index
    %113 = vector.load %arg7[%c0_40, %c0_41] : memref<1x32xf32, #tpu.memory_space<vmem>>, vector<1x32xf32>
    %cst_42 = arith.constant dense<0.000000e+00> : vector<6xf32>
    %114 = vector.multi_reduction <add>, %111, %cst_42 [1] : vector<6x32xf32> to vector<6xf32>
    %115 = vector.shape_cast %114 : vector<6xf32> to vector<6x1xf32>
    %cst_43 = arith.constant 3.200000e+01 : f32
    %116 = vector.broadcast %cst_43 : f32 to vector<6x1xf32>
    %117 = arith.divf %115, %116 : vector<6x1xf32>
    %118 = vector.broadcast %117 : vector<6x1xf32> to vector<6x32xf32>
    %119 = arith.subf %111, %118 : vector<6x32xf32>
    %120 = arith.mulf %119, %119 : vector<6x32xf32>
    %cst_44 = arith.constant dense<0.000000e+00> : vector<6xf32>
    %121 = vector.multi_reduction <add>, %120, %cst_44 [1] : vector<6x32xf32> to vector<6xf32>
    %122 = vector.shape_cast %121 : vector<6xf32> to vector<6x1xf32>
    %cst_45 = arith.constant 3.200000e+01 : f32
    %123 = vector.broadcast %cst_45 : f32 to vector<6x1xf32>
    %124 = arith.divf %122, %123 : vector<6x1xf32>
    %125 = vector.broadcast %117 : vector<6x1xf32> to vector<6x32xf32>
    %126 = arith.subf %111, %125 : vector<6x32xf32>
    %cst_46 = arith.constant 9.99999974E-6 : f32
    %127 = vector.broadcast %cst_46 : f32 to vector<6x1xf32>
    %128 = arith.addf %124, %127 : vector<6x1xf32>
    %129 = math.rsqrt %128 : vector<6x1xf32>
    %130 = vector.broadcast %129 : vector<6x1xf32> to vector<6x32xf32>
    %131 = arith.mulf %126, %130 : vector<6x32xf32>
    %132 = vector.broadcast %112 : vector<1x32xf32> to vector<6x32xf32>
    %133 = arith.mulf %131, %132 : vector<6x32xf32>
    %134 = vector.broadcast %113 : vector<1x32xf32> to vector<6x32xf32>
    %135 = arith.addf %133, %134 : vector<6x32xf32>
    %136 = arith.truncf %135 : vector<6x32xf32> to vector<6x32xbf16>
    %c0_47 = arith.constant 0 : index
    %c0_48 = arith.constant 0 : index
    %c0_49 = arith.constant 0 : index
    %137 = vector.load %arg8[%c0_47, %c0_48, %c0_49] : memref<1x6x32xbf16, #tpu.memory_space<vmem>>, vector<1x6x32xbf16>
    %138 = vector.shape_cast %137 : vector<1x6x32xbf16> to vector<6x32xbf16>
    %139 = vector.shape_cast %136 : vector<6x32xbf16> to vector<1x6x32xbf16>
    tpu.vector_store %arg8[%c0_47, %c0_48, %c0_49], %139 {strides = array<i32>} : memref<1x6x32xbf16, #tpu.memory_space<vmem>>, vector<1x6x32xbf16>,
    return
  }
  func.func @transform_0(%arg0: i32) -> (i32, i32, i32) {
    %c0_i32 = arith.constant 0 : i32
    %c0_i32_0 = arith.constant 0 : i32
    %c0_i32_1 = arith.constant 0 : i32
    return %arg0, %c0_i32, %c0_i32_0 : i32, i32, i32
  }
  func.func @transform_1(%arg0: i32) -> (i32, i32, i32) {
    %c0_i32 = arith.constant 0 : i32
    %c0_i32_0 = arith.constant 0 : i32
    %c0_i32_1 = arith.constant 0 : i32
    return %arg0, %c0_i32, %c0_i32_0 : i32, i32, i32
  }
  func.func @transform_2(%arg0: i32) -> (i32, i32) {
    %c0_i32 = arith.constant 0 : i32
    %c0_i32_0 = arith.constant 0 : i32
    %c0_i32_1 = arith.constant 0 : i32
    return %c0_i32, %c0_i32_0 : i32, i32
  }
  func.func @transform_3(%arg0: i32) -> (i32, i32) {
    %c0_i32 = arith.constant 0 : i32
    %c0_i32_0 = arith.constant 0 : i32
    %c0_i32_1 = arith.constant 0 : i32
    return %c0_i32, %c0_i32_0 : i32, i32
  }
  func.func @transform_4(%arg0: i32) -> (i32, i32, i32) {
    %c0_i32 = arith.constant 0 : i32
    %c0_i32_0 = arith.constant 0 : i32
    %c0_i32_1 = arith.constant 0 : i32
    return %arg0, %c0_i32, %c0_i32_0 : i32, i32, i32
  }
  func.func @transform_5(%arg0: i32) -> (i32, i32) {
    %c0_i32 = arith.constant 0 : i32
    %c0_i32_0 = arith.constant 0 : i32
    %c0_i32_1 = arith.constant 0 : i32
    return %c0_i32, %c0_i32_0 : i32, i32
  }
  func.func @transform_6(%arg0: i32) -> (i32, i32) {
    %c0_i32 = arith.constant 0 : i32
    %c0_i32_0 = arith.constant 0 : i32
    %c0_i32_1 = arith.constant 0 : i32
    return %c0_i32, %c0_i32_0 : i32, i32
  }
  func.func @transform_7(%arg0: i32) -> (i32, i32, i32) {
    %c0_i32 = arith.constant 0 : i32
    %c0_i32_0 = arith.constant 0 : i32
    %c0_i32_1 = arith.constant 0 : i32
    return %arg0, %c0_i32, %c0_i32_0 : i32, i32, i32
  }
}

module attributes {stable_mosaic.version = 11 : i64} {
  func.func @_dense_kernel(%arg0: i32, %arg1: i32, %arg2: memref<12x32xbf16, #tpu.memory_space<vmem>>, %arg3: memref<32x96xbf16, #tpu.memory_space<vmem>>, %arg4: memref<1x96xf32, #tpu.memory_space<vmem>>, %arg5: memref<12x96xbf16, #tpu.memory_space<vmem>>) attributes {dimension_semantics = [#tpu.dimension_semantics<parallel>, #tpu.dimension_semantics<parallel>], iteration_bounds = array<i64: 1, 1>, scalar_prefetch = 0 : i64, scratch_operands = 0 : i64, tpu.core_type = #tpu.core_type<tc>, window_params = [{transform_indices = @transform_0, window_bounds = array<i64: 12, 32>}, {transform_indices = @transform_1, window_bounds = array<i64: 32, 96>}, {transform_indices = @transform_2, window_bounds = array<i64: 1, 96>}, {transform_indices = @transform_3, window_bounds = array<i64: 12, 96>}]} {
    %c0 = arith.constant 0 : index
    %c0_0 = arith.constant 0 : index
    %0 = vector.load %arg2[%c0, %c0_0] : memref<12x32xbf16, #tpu.memory_space<vmem>>, vector<12x32xbf16>
    %c0_1 = arith.constant 0 : index
    %c0_2 = arith.constant 0 : index
    %1 = vector.load %arg3[%c0_1, %c0_2] : memref<32x96xbf16, #tpu.memory_space<vmem>>, vector<32x96xbf16>
    %cst = arith.constant dense<0.000000e+00> : vector<12x96xf32>
    %2 = tpu.matmul %0, %1, %cst {dimension_numbers = #tpu.dot_dimension_numbers<[1], [0], [0], [1], [0, 0, 1, 1], [], []>} : vector<12x32xbf16>, vector<32x96xbf16>, vector<12x96xf32> -> vector<12x96xf32>
    %c0_3 = arith.constant 0 : index
    %c0_4 = arith.constant 0 : index
    %3 = vector.load %arg4[%c0_3, %c0_4] : memref<1x96xf32, #tpu.memory_space<vmem>>, vector<1x96xf32>
    %4 = vector.broadcast %3 : vector<1x96xf32> to vector<12x96xf32>
    %5 = arith.addf %2, %4 : vector<12x96xf32>
    %6 = arith.truncf %5 : vector<12x96xf32> to vector<12x96xbf16>
    %c0_5 = arith.constant 0 : index
    %c0_6 = arith.constant 0 : index
    %7 = vector.load %arg5[%c0_5, %c0_6] : memref<12x96xbf16, #tpu.memory_space<vmem>>, vector<12x96xbf16>
    tpu.vector_store %arg5[%c0_5, %c0_6], %6 {strides = array<i32>} : memref<12x96xbf16, #tpu.memory_space<vmem>>, vector<12x96xbf16>,
    return
  }
  func.func @transform_0(%arg0: i32, %arg1: i32) -> (i32, i32) {
    %c0_i32 = arith.constant 0 : i32
    %c0_i32_0 = arith.constant 0 : i32
    return %arg0, %c0_i32 : i32, i32
  }
  func.func @transform_1(%arg0: i32, %arg1: i32) -> (i32, i32) {
    %c0_i32 = arith.constant 0 : i32
    %c0_i32_0 = arith.constant 0 : i32
    return %c0_i32, %arg1 : i32, i32
  }
  func.func @transform_2(%arg0: i32, %arg1: i32) -> (i32, i32) {
    %c0_i32 = arith.constant 0 : i32
    %c0_i32_0 = arith.constant 0 : i32
    return %c0_i32, %arg1 : i32, i32
  }
  func.func @transform_3(%arg0: i32, %arg1: i32) -> (i32, i32) {
    %c0_i32 = arith.constant 0 : i32
    return %arg0, %arg1 : i32, i32
  }
}

module attributes {stable_mosaic.version = 11 : i64} {
  func.func @_ffn_kernel(%arg0: i32, %arg1: memref<12x32xbf16, #tpu.memory_space<vmem>>, %arg2: memref<32x64xbf16, #tpu.memory_space<vmem>>, %arg3: memref<1x64xf32, #tpu.memory_space<vmem>>, %arg4: memref<64x32xbf16, #tpu.memory_space<vmem>>, %arg5: memref<1x32xf32, #tpu.memory_space<vmem>>, %arg6: memref<1x32xf32, #tpu.memory_space<vmem>>, %arg7: memref<1x32xf32, #tpu.memory_space<vmem>>, %arg8: memref<12x32xbf16, #tpu.memory_space<vmem>>) attributes {dimension_semantics = [#tpu.dimension_semantics<parallel>], iteration_bounds = array<i64: 1>, scalar_prefetch = 0 : i64, scratch_operands = 0 : i64, tpu.core_type = #tpu.core_type<tc>, window_params = [{transform_indices = @transform_0, window_bounds = array<i64: 12, 32>}, {pipeline_mode = #tpu.pipeline_mode<synchronous>, transform_indices = @transform_1, window_bounds = array<i64: 32, 64>}, {pipeline_mode = #tpu.pipeline_mode<synchronous>, transform_indices = @transform_2, window_bounds = array<i64: 1, 64>}, {pipeline_mode = #tpu.pipeline_mode<synchronous>, transform_indices = @transform_3, window_bounds = array<i64: 64, 32>}, {pipeline_mode = #tpu.pipeline_mode<synchronous>, transform_indices = @transform_4, window_bounds = array<i64: 1, 32>}, {pipeline_mode = #tpu.pipeline_mode<synchronous>, transform_indices = @transform_5, window_bounds = array<i64: 1, 32>}, {pipeline_mode = #tpu.pipeline_mode<synchronous>, transform_indices = @transform_6, window_bounds = array<i64: 1, 32>}, {transform_indices = @transform_7, window_bounds = array<i64: 12, 32>}]} {
    %c0 = arith.constant 0 : index
    %c0_0 = arith.constant 0 : index
    %0 = vector.load %arg1[%c0, %c0_0] : memref<12x32xbf16, #tpu.memory_space<vmem>>, vector<12x32xbf16>
    %c0_1 = arith.constant 0 : index
    %c0_2 = arith.constant 0 : index
    %1 = vector.load %arg2[%c0_1, %c0_2] : memref<32x64xbf16, #tpu.memory_space<vmem>>, vector<32x64xbf16>
    %cst = arith.constant dense<0.000000e+00> : vector<12x64xf32>
    %2 = tpu.matmul %0, %1, %cst {dimension_numbers = #tpu.dot_dimension_numbers<[1], [0], [0], [1], [0, 0, 1, 1], [], []>} : vector<12x32xbf16>, vector<32x64xbf16>, vector<12x64xf32> -> vector<12x64xf32>
    %c0_3 = arith.constant 0 : index
    %c0_4 = arith.constant 0 : index
    %3 = vector.load %arg3[%c0_3, %c0_4] : memref<1x64xf32, #tpu.memory_space<vmem>>, vector<1x64xf32>
    %4 = vector.broadcast %3 : vector<1x64xf32> to vector<12x64xf32>
    %5 = arith.addf %2, %4 : vector<12x64xf32>
    %cst_5 = arith.constant 0.000000e+00 : f32
    %6 = vector.broadcast %cst_5 : f32 to vector<12x64xf32>
    %7 = arith.maximumf %5, %6 : vector<12x64xf32>
    %8 = arith.truncf %7 : vector<12x64xf32> to vector<12x64xbf16>
    %c0_6 = arith.constant 0 : index
    %c0_7 = arith.constant 0 : index
    %9 = vector.load %arg4[%c0_6, %c0_7] : memref<64x32xbf16, #tpu.memory_space<vmem>>, vector<64x32xbf16>
    %cst_8 = arith.constant dense<0.000000e+00> : vector<12x32xf32>
    %10 = tpu.matmul %8, %9, %cst_8 {dimension_numbers = #tpu.dot_dimension_numbers<[1], [0], [0], [1], [0, 0, 1, 1], [], []>} : vector<12x64xbf16>, vector<64x32xbf16>, vector<12x32xf32> -> vector<12x32xf32>
    %c0_9 = arith.constant 0 : index
    %c0_10 = arith.constant 0 : index
    %11 = vector.load %arg5[%c0_9, %c0_10] : memref<1x32xf32, #tpu.memory_space<vmem>>, vector<1x32xf32>
    %12 = vector.broadcast %11 : vector<1x32xf32> to vector<12x32xf32>
    %13 = arith.addf %10, %12 : vector<12x32xf32>
    %14 = arith.extf %0 : vector<12x32xbf16> to vector<12x32xf32>
    %15 = arith.addf %13, %14 : vector<12x32xf32>
    %c0_11 = arith.constant 0 : index
    %c0_12 = arith.constant 0 : index
    %16 = vector.load %arg6[%c0_11, %c0_12] : memref<1x32xf32, #tpu.memory_space<vmem>>, vector<1x32xf32>
    %c0_13 = arith.constant 0 : index
    %c0_14 = arith.constant 0 : index
    %17 = vector.load %arg7[%c0_13, %c0_14] : memref<1x32xf32, #tpu.memory_space<vmem>>, vector<1x32xf32>
    %cst_15 = arith.constant dense<0.000000e+00> : vector<12xf32>
    %18 = vector.multi_reduction <add>, %15, %cst_15 [1] : vector<12x32xf32> to vector<12xf32>
    %19 = vector.shape_cast %18 : vector<12xf32> to vector<12x1xf32>
    %cst_16 = arith.constant 3.200000e+01 : f32
    %20 = vector.broadcast %cst_16 : f32 to vector<12x1xf32>
    %21 = arith.divf %19, %20 : vector<12x1xf32>
    %22 = vector.broadcast %21 : vector<12x1xf32> to vector<12x32xf32>
    %23 = arith.subf %15, %22 : vector<12x32xf32>
    %24 = arith.mulf %23, %23 : vector<12x32xf32>
    %cst_17 = arith.constant dense<0.000000e+00> : vector<12xf32>
    %25 = vector.multi_reduction <add>, %24, %cst_17 [1] : vector<12x32xf32> to vector<12xf32>
    %26 = vector.shape_cast %25 : vector<12xf32> to vector<12x1xf32>
    %cst_18 = arith.constant 3.200000e+01 : f32
    %27 = vector.broadcast %cst_18 : f32 to vector<12x1xf32>
    %28 = arith.divf %26, %27 : vector<12x1xf32>
    %29 = vector.broadcast %21 : vector<12x1xf32> to vector<12x32xf32>
    %30 = arith.subf %15, %29 : vector<12x32xf32>
    %cst_19 = arith.constant 9.99999974E-6 : f32
    %31 = vector.broadcast %cst_19 : f32 to vector<12x1xf32>
    %32 = arith.addf %28, %31 : vector<12x1xf32>
    %33 = math.rsqrt %32 : vector<12x1xf32>
    %34 = vector.broadcast %33 : vector<12x1xf32> to vector<12x32xf32>
    %35 = arith.mulf %30, %34 : vector<12x32xf32>
    %36 = vector.broadcast %16 : vector<1x32xf32> to vector<12x32xf32>
    %37 = arith.mulf %35, %36 : vector<12x32xf32>
    %38 = vector.broadcast %17 : vector<1x32xf32> to vector<12x32xf32>
    %39 = arith.addf %37, %38 : vector<12x32xf32>
    %40 = arith.truncf %39 : vector<12x32xf32> to vector<12x32xbf16>
    %c0_20 = arith.constant 0 : index
    %c0_21 = arith.constant 0 : index
    %41 = vector.load %arg8[%c0_20, %c0_21] : memref<12x32xbf16, #tpu.memory_space<vmem>>, vector<12x32xbf16>
    tpu.vector_store %arg8[%c0_20, %c0_21], %40 {strides = array<i32>} : memref<12x32xbf16, #tpu.memory_space<vmem>>, vector<12x32xbf16>,
    return
  }
  func.func @transform_0(%arg0: i32) -> (i32, i32) {
    %c0_i32 = arith.constant 0 : i32
    %c0_i32_0 = arith.constant 0 : i32
    return %arg0, %c0_i32 : i32, i32
  }
  func.func @transform_1(%arg0: i32) -> (i32, i32) {
    %c0_i32 = arith.constant 0 : i32
    %c0_i32_0 = arith.constant 0 : i32
    %c0_i32_1 = arith.constant 0 : i32
    return %c0_i32, %c0_i32_0 : i32, i32
  }
  func.func @transform_2(%arg0: i32) -> (i32, i32) {
    %c0_i32 = arith.constant 0 : i32
    %c0_i32_0 = arith.constant 0 : i32
    %c0_i32_1 = arith.constant 0 : i32
    return %c0_i32, %c0_i32_0 : i32, i32
  }
  func.func @transform_3(%arg0: i32) -> (i32, i32) {
    %c0_i32 = arith.constant 0 : i32
    %c0_i32_0 = arith.constant 0 : i32
    %c0_i32_1 = arith.constant 0 : i32
    return %c0_i32, %c0_i32_0 : i32, i32
  }
  func.func @transform_4(%arg0: i32) -> (i32, i32) {
    %c0_i32 = arith.constant 0 : i32
    %c0_i32_0 = arith.constant 0 : i32
    %c0_i32_1 = arith.constant 0 : i32
    return %c0_i32, %c0_i32_0 : i32, i32
  }
  func.func @transform_5(%arg0: i32) -> (i32, i32) {
    %c0_i32 = arith.constant 0 : i32
    %c0_i32_0 = arith.constant 0 : i32
    %c0_i32_1 = arith.constant 0 : i32
    return %c0_i32, %c0_i32_0 : i32, i32
  }
  func.func @transform_6(%arg0: i32) -> (i32, i32) {
    %c0_i32 = arith.constant 0 : i32
    %c0_i32_0 = arith.constant 0 : i32
    %c0_i32_1 = arith.constant 0 : i32
    return %c0_i32, %c0_i32_0 : i32, i32
  }
  func.func @transform_7(%arg0: i32) -> (i32, i32) {
    %c0_i32 = arith.constant 0 : i32
    %c0_i32_0 = arith.constant 0 : i32
    return %arg0, %c0_i32 : i32, i32
  }
}

module attributes {stable_mosaic.version = 11 : i64} {
  func.func @_cross_mha_kernel(%arg0: i32, %arg1: memref<1x6x32xbf16, #tpu.memory_space<vmem>>, %arg2: memref<1x8x64xbf16, #tpu.memory_space<vmem>>, %arg3: memref<1x1x8xf32, #tpu.memory_space<vmem>>, %arg4: memref<32x32xbf16, #tpu.memory_space<vmem>>, %arg5: memref<1x32xf32, #tpu.memory_space<vmem>>, %arg6: memref<1x6x32xbf16, #tpu.memory_space<vmem>>, %arg7: memref<1x32xf32, #tpu.memory_space<vmem>>, %arg8: memref<1x32xf32, #tpu.memory_space<vmem>>, %arg9: memref<1x6x32xbf16, #tpu.memory_space<vmem>>) attributes {dimension_semantics = [#tpu.dimension_semantics<parallel>], iteration_bounds = array<i64: 2>, scalar_prefetch = 0 : i64, scratch_operands = 0 : i64, tpu.core_type = #tpu.core_type<tc>, window_params = [{transform_indices = @transform_0, window_bounds = array<i64: 1, 6, 32>}, {transform_indices = @transform_1, window_bounds = array<i64: 1, 8, 64>}, {transform_indices = @transform_2, window_bounds = array<i64: 1, 1, 8>}, {pipeline_mode = #tpu.pipeline_mode<synchronous>, transform_indices = @transform_3, window_bounds = array<i64: 32, 32>}, {pipeline_mode = #tpu.pipeline_mode<synchronous>, transform_indices = @transform_4, window_bounds = array<i64: 1, 32>}, {transform_indices = @transform_5, window_bounds = array<i64: 1, 6, 32>}, {pipeline_mode = #tpu.pipeline_mode<synchronous>, transform_indices = @transform_6, window_bounds = array<i64: 1, 32>}, {pipeline_mode = #tpu.pipeline_mode<synchronous>, transform_indices = @transform_7, window_bounds = array<i64: 1, 32>}, {transform_indices = @transform_8, window_bounds = array<i64: 1, 6, 32>}]} {
    %c0 = arith.constant 0 : index
    %c0_0 = arith.constant 0 : index
    %c0_1 = arith.constant 0 : index
    %0 = vector.load %arg1[%c0, %c0_0, %c0_1] : memref<1x6x32xbf16, #tpu.memory_space<vmem>>, vector<1x6x32xbf16>
    %1 = vector.shape_cast %0 : vector<1x6x32xbf16> to vector<6x32xbf16>
    %c0_2 = arith.constant 0 : index
    %c0_3 = arith.constant 0 : index
    %c0_4 = arith.constant 0 : index
    %2 = vector.load %arg2[%c0_2, %c0_3, %c0_4] : memref<1x8x64xbf16, #tpu.memory_space<vmem>>, vector<1x8x64xbf16>
    %3 = vector.shape_cast %2 : vector<1x8x64xbf16> to vector<8x64xbf16>
    %4 = vector.extract_strided_slice %3 {offsets = [0, 0], sizes = [8, 32], strides = [1, 1]} : vector<8x64xbf16> to vector<8x32xbf16>
    %5 = vector.extract_strided_slice %3 {offsets = [0, 32], sizes = [8, 32], strides = [1, 1]} : vector<8x64xbf16> to vector<8x32xbf16>
    %c0_5 = arith.constant 0 : index
    %c0_6 = arith.constant 0 : index
    %c0_7 = arith.constant 0 : index
    %6 = vector.load %arg3[%c0_5, %c0_6, %c0_7] : memref<1x1x8xf32, #tpu.memory_space<vmem>>, vector<1x1x8xf32>
    %7 = vector.shape_cast %6 : vector<1x1x8xf32> to vector<1x8xf32>
    %c0_8 = arith.constant 0 : index
    %c0_9 = arith.constant 0 : index
    %8 = vector.load %arg4[%c0_8, %c0_9] : memref<32x32xbf16, #tpu.memory_space<vmem>>, vector<32x32xbf16>
    %cst = arith.constant 0.000000e+00 : f32
    %9 = vector.broadcast %cst : f32 to vector<6x32xf32>
    %10 = vector.extract_strided_slice %1 {offsets = [0, 0], sizes = [6, 8], strides = [1, 1]} : vector<6x32xbf16> to vector<6x8xbf16>
    %11 = vector.extract_strided_slice %4 {offsets = [0, 0], sizes = [8, 8], strides = [1, 1]} : vector<8x32xbf16> to vector<8x8xbf16>
    %cst_10 = arith.constant dense<0.000000e+00> : vector<6x8xf32>
    %12 = tpu.matmul %10, %11, %cst_10 {dimension_numbers = #tpu.dot_dimension_numbers<[1], [1], [0], [0], [0, 0, 1, 0], [], []>} : vector<6x8xbf16>, vector<8x8xbf16>, vector<6x8xf32> -> vector<6x8xf32>
    %cst_11 = arith.constant 0.353553385 : f32
    %13 = vector.broadcast %cst_11 : f32 to vector<6x8xf32>
    %14 = arith.mulf %12, %13 : vector<6x8xf32>
    %15 = vector.broadcast %7 : vector<1x8xf32> to vector<6x8xf32>
    %16 = arith.addf %14, %15 : vector<6x8xf32>
    %cst_12 = arith.constant dense<0xFF800000> : vector<6xf32>
    %17 = vector.multi_reduction <maximumf>, %16, %cst_12 [1] : vector<6x8xf32> to vector<6xf32>
    %18 = vector.shape_cast %17 : vector<6xf32> to vector<6x1xf32>
    %19 = vector.broadcast %18 : vector<6x1xf32> to vector<6x8xf32>
    %20 = arith.subf %16, %19 : vector<6x8xf32>
    %21 = math.exp %20 : vector<6x8xf32>
    %cst_13 = arith.constant dense<0.000000e+00> : vector<6xf32>
    %22 = vector.multi_reduction <add>, %21, %cst_13 [1] : vector<6x8xf32> to vector<6xf32>
    %23 = vector.shape_cast %22 : vector<6xf32> to vector<6x1xf32>
    %24 = vector.broadcast %23 : vector<6x1xf32> to vector<6x8xf32>
    %25 = arith.divf %21, %24 : vector<6x8xf32>
    %26 = arith.truncf %25 : vector<6x8xf32> to vector<6x8xbf16>
    %27 = vector.extract_strided_slice %5 {offsets = [0, 0], sizes = [8, 8], strides = [1, 1]} : vector<8x32xbf16> to vector<8x8xbf16>
    %cst_14 = arith.constant dense<0.000000e+00> : vector<6x8xf32>
    %28 = tpu.matmul %26, %27, %cst_14 {dimension_numbers = #tpu.dot_dimension_numbers<[1], [0], [0], [1], [0, 0, 1, 1], [], []>} : vector<6x8xbf16>, vector<8x8xbf16>, vector<6x8xf32> -> vector<6x8xf32>
    %29 = arith.truncf %28 : vector<6x8xf32> to vector<6x8xbf16>
    %30 = vector.extract_strided_slice %8 {offsets = [0, 0], sizes = [8, 32], strides = [1, 1]} : vector<32x32xbf16> to vector<8x32xbf16>
    %cst_15 = arith.constant dense<0.000000e+00> : vector<6x32xf32>
    %31 = tpu.matmul %29, %30, %cst_15 {dimension_numbers = #tpu.dot_dimension_numbers<[1], [0], [0], [1], [0, 0, 1, 1], [], []>} : vector<6x8xbf16>, vector<8x32xbf16>, vector<6x32xf32> -> vector<6x32xf32>
    %32 = arith.addf %9, %31 : vector<6x32xf32>
    %33 = vector.extract_strided_slice %1 {offsets = [0, 8], sizes = [6, 8], strides = [1, 1]} : vector<6x32xbf16> to vector<6x8xbf16>
    %34 = vector.extract_strided_slice %4 {offsets = [0, 8], sizes = [8, 8], strides = [1, 1]} : vector<8x32xbf16> to vector<8x8xbf16>
    %cst_16 = arith.constant dense<0.000000e+00> : vector<6x8xf32>
    %35 = tpu.matmul %33, %34, %cst_16 {dimension_numbers = #tpu.dot_dimension_numbers<[1], [1], [0], [0], [0, 0, 1, 0], [], []>} : vector<6x8xbf16>, vector<8x8xbf16>, vector<6x8xf32> -> vector<6x8xf32>
    %cst_17 = arith.constant 0.353553385 : f32
    %36 = vector.broadcast %cst_17 : f32 to vector<6x8xf32>
    %37 = arith.mulf %35, %36 : vector<6x8xf32>
    %38 = vector.broadcast %7 : vector<1x8xf32> to vector<6x8xf32>
    %39 = arith.addf %37, %38 : vector<6x8xf32>
    %cst_18 = arith.constant dense<0xFF800000> : vector<6xf32>
    %40 = vector.multi_reduction <maximumf>, %39, %cst_18 [1] : vector<6x8xf32> to vector<6xf32>
    %41 = vector.shape_cast %40 : vector<6xf32> to vector<6x1xf32>
    %42 = vector.broadcast %41 : vector<6x1xf32> to vector<6x8xf32>
    %43 = arith.subf %39, %42 : vector<6x8xf32>
    %44 = math.exp %43 : vector<6x8xf32>
    %cst_19 = arith.constant dense<0.000000e+00> : vector<6xf32>
    %45 = vector.multi_reduction <add>, %44, %cst_19 [1] : vector<6x8xf32> to vector<6xf32>
    %46 = vector.shape_cast %45 : vector<6xf32> to vector<6x1xf32>
    %47 = vector.broadcast %46 : vector<6x1xf32> to vector<6x8xf32>
    %48 = arith.divf %44, %47 : vector<6x8xf32>
    %49 = arith.truncf %48 : vector<6x8xf32> to vector<6x8xbf16>
    %50 = vector.extract_strided_slice %5 {offsets = [0, 8], sizes = [8, 8], strides = [1, 1]} : vector<8x32xbf16> to vector<8x8xbf16>
    %cst_20 = arith.constant dense<0.000000e+00> : vector<6x8xf32>
    %51 = tpu.matmul %49, %50, %cst_20 {dimension_numbers = #tpu.dot_dimension_numbers<[1], [0], [0], [1], [0, 0, 1, 1], [], []>} : vector<6x8xbf16>, vector<8x8xbf16>, vector<6x8xf32> -> vector<6x8xf32>
    %52 = arith.truncf %51 : vector<6x8xf32> to vector<6x8xbf16>
    %53 = vector.extract_strided_slice %8 {offsets = [8, 0], sizes = [8, 32], strides = [1, 1]} : vector<32x32xbf16> to vector<8x32xbf16>
    %cst_21 = arith.constant dense<0.000000e+00> : vector<6x32xf32>
    %54 = tpu.matmul %52, %53, %cst_21 {dimension_numbers = #tpu.dot_dimension_numbers<[1], [0], [0], [1], [0, 0, 1, 1], [], []>} : vector<6x8xbf16>, vector<8x32xbf16>, vector<6x32xf32> -> vector<6x32xf32>
    %55 = arith.addf %32, %54 : vector<6x32xf32>
    %56 = vector.extract_strided_slice %1 {offsets = [0, 16], sizes = [6, 8], strides = [1, 1]} : vector<6x32xbf16> to vector<6x8xbf16>
    %57 = vector.extract_strided_slice %4 {offsets = [0, 16], sizes = [8, 8], strides = [1, 1]} : vector<8x32xbf16> to vector<8x8xbf16>
    %cst_22 = arith.constant dense<0.000000e+00> : vector<6x8xf32>
    %58 = tpu.matmul %56, %57, %cst_22 {dimension_numbers = #tpu.dot_dimension_numbers<[1], [1], [0], [0], [0, 0, 1, 0], [], []>} : vector<6x8xbf16>, vector<8x8xbf16>, vector<6x8xf32> -> vector<6x8xf32>
    %cst_23 = arith.constant 0.353553385 : f32
    %59 = vector.broadcast %cst_23 : f32 to vector<6x8xf32>
    %60 = arith.mulf %58, %59 : vector<6x8xf32>
    %61 = vector.broadcast %7 : vector<1x8xf32> to vector<6x8xf32>
    %62 = arith.addf %60, %61 : vector<6x8xf32>
    %cst_24 = arith.constant dense<0xFF800000> : vector<6xf32>
    %63 = vector.multi_reduction <maximumf>, %62, %cst_24 [1] : vector<6x8xf32> to vector<6xf32>
    %64 = vector.shape_cast %63 : vector<6xf32> to vector<6x1xf32>
    %65 = vector.broadcast %64 : vector<6x1xf32> to vector<6x8xf32>
    %66 = arith.subf %62, %65 : vector<6x8xf32>
    %67 = math.exp %66 : vector<6x8xf32>
    %cst_25 = arith.constant dense<0.000000e+00> : vector<6xf32>
    %68 = vector.multi_reduction <add>, %67, %cst_25 [1] : vector<6x8xf32> to vector<6xf32>
    %69 = vector.shape_cast %68 : vector<6xf32> to vector<6x1xf32>
    %70 = vector.broadcast %69 : vector<6x1xf32> to vector<6x8xf32>
    %71 = arith.divf %67, %70 : vector<6x8xf32>
    %72 = arith.truncf %71 : vector<6x8xf32> to vector<6x8xbf16>
    %73 = vector.extract_strided_slice %5 {offsets = [0, 16], sizes = [8, 8], strides = [1, 1]} : vector<8x32xbf16> to vector<8x8xbf16>
    %cst_26 = arith.constant dense<0.000000e+00> : vector<6x8xf32>
    %74 = tpu.matmul %72, %73, %cst_26 {dimension_numbers = #tpu.dot_dimension_numbers<[1], [0], [0], [1], [0, 0, 1, 1], [], []>} : vector<6x8xbf16>, vector<8x8xbf16>, vector<6x8xf32> -> vector<6x8xf32>
    %75 = arith.truncf %74 : vector<6x8xf32> to vector<6x8xbf16>
    %76 = vector.extract_strided_slice %8 {offsets = [16, 0], sizes = [8, 32], strides = [1, 1]} : vector<32x32xbf16> to vector<8x32xbf16>
    %cst_27 = arith.constant dense<0.000000e+00> : vector<6x32xf32>
    %77 = tpu.matmul %75, %76, %cst_27 {dimension_numbers = #tpu.dot_dimension_numbers<[1], [0], [0], [1], [0, 0, 1, 1], [], []>} : vector<6x8xbf16>, vector<8x32xbf16>, vector<6x32xf32> -> vector<6x32xf32>
    %78 = arith.addf %55, %77 : vector<6x32xf32>
    %79 = vector.extract_strided_slice %1 {offsets = [0, 24], sizes = [6, 8], strides = [1, 1]} : vector<6x32xbf16> to vector<6x8xbf16>
    %80 = vector.extract_strided_slice %4 {offsets = [0, 24], sizes = [8, 8], strides = [1, 1]} : vector<8x32xbf16> to vector<8x8xbf16>
    %cst_28 = arith.constant dense<0.000000e+00> : vector<6x8xf32>
    %81 = tpu.matmul %79, %80, %cst_28 {dimension_numbers = #tpu.dot_dimension_numbers<[1], [1], [0], [0], [0, 0, 1, 0], [], []>} : vector<6x8xbf16>, vector<8x8xbf16>, vector<6x8xf32> -> vector<6x8xf32>
    %cst_29 = arith.constant 0.353553385 : f32
    %82 = vector.broadcast %cst_29 : f32 to vector<6x8xf32>
    %83 = arith.mulf %81, %82 : vector<6x8xf32>
    %84 = vector.broadcast %7 : vector<1x8xf32> to vector<6x8xf32>
    %85 = arith.addf %83, %84 : vector<6x8xf32>
    %cst_30 = arith.constant dense<0xFF800000> : vector<6xf32>
    %86 = vector.multi_reduction <maximumf>, %85, %cst_30 [1] : vector<6x8xf32> to vector<6xf32>
    %87 = vector.shape_cast %86 : vector<6xf32> to vector<6x1xf32>
    %88 = vector.broadcast %87 : vector<6x1xf32> to vector<6x8xf32>
    %89 = arith.subf %85, %88 : vector<6x8xf32>
    %90 = math.exp %89 : vector<6x8xf32>
    %cst_31 = arith.constant dense<0.000000e+00> : vector<6xf32>
    %91 = vector.multi_reduction <add>, %90, %cst_31 [1] : vector<6x8xf32> to vector<6xf32>
    %92 = vector.shape_cast %91 : vector<6xf32> to vector<6x1xf32>
    %93 = vector.broadcast %92 : vector<6x1xf32> to vector<6x8xf32>
    %94 = arith.divf %90, %93 : vector<6x8xf32>
    %95 = arith.truncf %94 : vector<6x8xf32> to vector<6x8xbf16>
    %96 = vector.extract_strided_slice %5 {offsets = [0, 24], sizes = [8, 8], strides = [1, 1]} : vector<8x32xbf16> to vector<8x8xbf16>
    %cst_32 = arith.constant dense<0.000000e+00> : vector<6x8xf32>
    %97 = tpu.matmul %95, %96, %cst_32 {dimension_numbers = #tpu.dot_dimension_numbers<[1], [0], [0], [1], [0, 0, 1, 1], [], []>} : vector<6x8xbf16>, vector<8x8xbf16>, vector<6x8xf32> -> vector<6x8xf32>
    %98 = arith.truncf %97 : vector<6x8xf32> to vector<6x8xbf16>
    %99 = vector.extract_strided_slice %8 {offsets = [24, 0], sizes = [8, 32], strides = [1, 1]} : vector<32x32xbf16> to vector<8x32xbf16>
    %cst_33 = arith.constant dense<0.000000e+00> : vector<6x32xf32>
    %100 = tpu.matmul %98, %99, %cst_33 {dimension_numbers = #tpu.dot_dimension_numbers<[1], [0], [0], [1], [0, 0, 1, 1], [], []>} : vector<6x8xbf16>, vector<8x32xbf16>, vector<6x32xf32> -> vector<6x32xf32>
    %101 = arith.addf %78, %100 : vector<6x32xf32>
    %c0_34 = arith.constant 0 : index
    %c0_35 = arith.constant 0 : index
    %102 = vector.load %arg5[%c0_34, %c0_35] : memref<1x32xf32, #tpu.memory_space<vmem>>, vector<1x32xf32>
    %103 = vector.broadcast %102 : vector<1x32xf32> to vector<6x32xf32>
    %104 = arith.addf %101, %103 : vector<6x32xf32>
    %c0_36 = arith.constant 0 : index
    %c0_37 = arith.constant 0 : index
    %c0_38 = arith.constant 0 : index
    %105 = vector.load %arg6[%c0_36, %c0_37, %c0_38] : memref<1x6x32xbf16, #tpu.memory_space<vmem>>, vector<1x6x32xbf16>
    %106 = vector.shape_cast %105 : vector<1x6x32xbf16> to vector<6x32xbf16>
    %107 = arith.extf %106 : vector<6x32xbf16> to vector<6x32xf32>
    %108 = arith.addf %104, %107 : vector<6x32xf32>
    %c0_39 = arith.constant 0 : index
    %c0_40 = arith.constant 0 : index
    %109 = vector.load %arg7[%c0_39, %c0_40] : memref<1x32xf32, #tpu.memory_space<vmem>>, vector<1x32xf32>
    %c0_41 = arith.constant 0 : index
    %c0_42 = arith.constant 0 : index
    %110 = vector.load %arg8[%c0_41, %c0_42] : memref<1x32xf32, #tpu.memory_space<vmem>>, vector<1x32xf32>
    %cst_43 = arith.constant dense<0.000000e+00> : vector<6xf32>
    %111 = vector.multi_reduction <add>, %108, %cst_43 [1] : vector<6x32xf32> to vector<6xf32>
    %112 = vector.shape_cast %111 : vector<6xf32> to vector<6x1xf32>
    %cst_44 = arith.constant 3.200000e+01 : f32
    %113 = vector.broadcast %cst_44 : f32 to vector<6x1xf32>
    %114 = arith.divf %112, %113 : vector<6x1xf32>
    %115 = vector.broadcast %114 : vector<6x1xf32> to vector<6x32xf32>
    %116 = arith.subf %108, %115 : vector<6x32xf32>
    %117 = arith.mulf %116, %116 : vector<6x32xf32>
    %cst_45 = arith.constant dense<0.000000e+00> : vector<6xf32>
    %118 = vector.multi_reduction <add>, %117, %cst_45 [1] : vector<6x32xf32> to vector<6xf32>
    %119 = vector.shape_cast %118 : vector<6xf32> to vector<6x1xf32>
    %cst_46 = arith.constant 3.200000e+01 : f32
    %120 = vector.broadcast %cst_46 : f32 to vector<6x1xf32>
    %121 = arith.divf %119, %120 : vector<6x1xf32>
    %122 = vector.broadcast %114 : vector<6x1xf32> to vector<6x32xf32>
    %123 = arith.subf %108, %122 : vector<6x32xf32>
    %cst_47 = arith.constant 9.99999974E-6 : f32
    %124 = vector.broadcast %cst_47 : f32 to vector<6x1xf32>
    %125 = arith.addf %121, %124 : vector<6x1xf32>
    %126 = math.rsqrt %125 : vector<6x1xf32>
    %127 = vector.broadcast %126 : vector<6x1xf32> to vector<6x32xf32>
    %128 = arith.mulf %123, %127 : vector<6x32xf32>
    %129 = vector.broadcast %109 : vector<1x32xf32> to vector<6x32xf32>
    %130 = arith.mulf %128, %129 : vector<6x32xf32>
    %131 = vector.broadcast %110 : vector<1x32xf32> to vector<6x32xf32>
    %132 = arith.addf %130, %131 : vector<6x32xf32>
    %133 = arith.truncf %132 : vector<6x32xf32> to vector<6x32xbf16>
    %c0_48 = arith.constant 0 : index
    %c0_49 = arith.constant 0 : index
    %c0_50 = arith.constant 0 : index
    %134 = vector.load %arg9[%c0_48, %c0_49, %c0_50] : memref<1x6x32xbf16, #tpu.memory_space<vmem>>, vector<1x6x32xbf16>
    %135 = vector.shape_cast %134 : vector<1x6x32xbf16> to vector<6x32xbf16>
    %136 = vector.shape_cast %133 : vector<6x32xbf16> to vector<1x6x32xbf16>
    tpu.vector_store %arg9[%c0_48, %c0_49, %c0_50], %136 {strides = array<i32>} : memref<1x6x32xbf16, #tpu.memory_space<vmem>>, vector<1x6x32xbf16>,
    return
  }
  func.func @transform_0(%arg0: i32) -> (i32, i32, i32) {
    %c0_i32 = arith.constant 0 : i32
    %c0_i32_0 = arith.constant 0 : i32
    %c0_i32_1 = arith.constant 0 : i32
    return %arg0, %c0_i32, %c0_i32_0 : i32, i32, i32
  }
  func.func @transform_1(%arg0: i32) -> (i32, i32, i32) {
    %c0_i32 = arith.constant 0 : i32
    %c0_i32_0 = arith.constant 0 : i32
    %c0_i32_1 = arith.constant 0 : i32
    return %arg0, %c0_i32, %c0_i32_0 : i32, i32, i32
  }
  func.func @transform_2(%arg0: i32) -> (i32, i32, i32) {
    %c0_i32 = arith.constant 0 : i32
    %c0_i32_0 = arith.constant 0 : i32
    %c0_i32_1 = arith.constant 0 : i32
    return %arg0, %c0_i32, %c0_i32_0 : i32, i32, i32
  }
  func.func @transform_3(%arg0: i32) -> (i32, i32) {
    %c0_i32 = arith.constant 0 : i32
    %c0_i32_0 = arith.constant 0 : i32
    %c0_i32_1 = arith.constant 0 : i32
    return %c0_i32, %c0_i32_0 : i32, i32
  }
  func.func @transform_4(%arg0: i32) -> (i32, i32) {
    %c0_i32 = arith.constant 0 : i32
    %c0_i32_0 = arith.constant 0 : i32
    %c0_i32_1 = arith.constant 0 : i32
    return %c0_i32, %c0_i32_0 : i32, i32
  }
  func.func @transform_5(%arg0: i32) -> (i32, i32, i32) {
    %c0_i32 = arith.constant 0 : i32
    %c0_i32_0 = arith.constant 0 : i32
    %c0_i32_1 = arith.constant 0 : i32
    return %arg0, %c0_i32, %c0_i32_0 : i32, i32, i32
  }
  func.func @transform_6(%arg0: i32) -> (i32, i32) {
    %c0_i32 = arith.constant 0 : i32
    %c0_i32_0 = arith.constant 0 : i32
    %c0_i32_1 = arith.constant 0 : i32
    return %c0_i32, %c0_i32_0 : i32, i32
  }
  func.func @transform_7(%arg0: i32) -> (i32, i32) {
    %c0_i32 = arith.constant 0 : i32
    %c0_i32_0 = arith.constant 0 : i32
    %c0_i32_1 = arith.constant 0 : i32
    return %c0_i32, %c0_i32_0 : i32, i32
  }
  func.func @transform_8(%arg0: i32) -> (i32, i32, i32) {
    %c0_i32 = arith.constant 0 : i32
    %c0_i32_0 = arith.constant 0 : i32
    %c0_i32_1 = arith.constant 0 : i32
    return %arg0, %c0_i32, %c0_i32_0 : i32, i32, i32
  }
}

module attributes {stable_mosaic.version = 11 : i64} {
  func.func @_layernorm_kernel(%arg0: i32, %arg1: memref<12x32xbf16, #tpu.memory_space<vmem>>, %arg2: memref<1x32xf32, #tpu.memory_space<vmem>>, %arg3: memref<1x32xf32, #tpu.memory_space<vmem>>, %arg4: memref<12x32xbf16, #tpu.memory_space<vmem>>) attributes {dimension_semantics = [#tpu.dimension_semantics<parallel>], iteration_bounds = array<i64: 1>, scalar_prefetch = 0 : i64, scratch_operands = 0 : i64, tpu.core_type = #tpu.core_type<tc>, window_params = [{transform_indices = @transform_0, window_bounds = array<i64: 12, 32>}, {pipeline_mode = #tpu.pipeline_mode<synchronous>, transform_indices = @transform_1, window_bounds = array<i64: 1, 32>}, {pipeline_mode = #tpu.pipeline_mode<synchronous>, transform_indices = @transform_2, window_bounds = array<i64: 1, 32>}, {transform_indices = @transform_3, window_bounds = array<i64: 12, 32>}]} {
    %c0 = arith.constant 0 : index
    %c0_0 = arith.constant 0 : index
    %0 = vector.load %arg1[%c0, %c0_0] : memref<12x32xbf16, #tpu.memory_space<vmem>>, vector<12x32xbf16>
    %1 = arith.extf %0 : vector<12x32xbf16> to vector<12x32xf32>
    %c0_1 = arith.constant 0 : index
    %c0_2 = arith.constant 0 : index
    %2 = vector.load %arg2[%c0_1, %c0_2] : memref<1x32xf32, #tpu.memory_space<vmem>>, vector<1x32xf32>
    %c0_3 = arith.constant 0 : index
    %c0_4 = arith.constant 0 : index
    %3 = vector.load %arg3[%c0_3, %c0_4] : memref<1x32xf32, #tpu.memory_space<vmem>>, vector<1x32xf32>
    %cst = arith.constant dense<0.000000e+00> : vector<12xf32>
    %4 = vector.multi_reduction <add>, %1, %cst [1] : vector<12x32xf32> to vector<12xf32>
    %5 = vector.shape_cast %4 : vector<12xf32> to vector<12x1xf32>
    %cst_5 = arith.constant 3.200000e+01 : f32
    %6 = vector.broadcast %cst_5 : f32 to vector<12x1xf32>
    %7 = arith.divf %5, %6 : vector<12x1xf32>
    %8 = vector.broadcast %7 : vector<12x1xf32> to vector<12x32xf32>
    %9 = arith.subf %1, %8 : vector<12x32xf32>
    %10 = arith.mulf %9, %9 : vector<12x32xf32>
    %cst_6 = arith.constant dense<0.000000e+00> : vector<12xf32>
    %11 = vector.multi_reduction <add>, %10, %cst_6 [1] : vector<12x32xf32> to vector<12xf32>
    %12 = vector.shape_cast %11 : vector<12xf32> to vector<12x1xf32>
    %cst_7 = arith.constant 3.200000e+01 : f32
    %13 = vector.broadcast %cst_7 : f32 to vector<12x1xf32>
    %14 = arith.divf %12, %13 : vector<12x1xf32>
    %15 = vector.broadcast %7 : vector<12x1xf32> to vector<12x32xf32>
    %16 = arith.subf %1, %15 : vector<12x32xf32>
    %cst_8 = arith.constant 9.99999974E-6 : f32
    %17 = vector.broadcast %cst_8 : f32 to vector<12x1xf32>
    %18 = arith.addf %14, %17 : vector<12x1xf32>
    %19 = math.rsqrt %18 : vector<12x1xf32>
    %20 = vector.broadcast %19 : vector<12x1xf32> to vector<12x32xf32>
    %21 = arith.mulf %16, %20 : vector<12x32xf32>
    %22 = vector.broadcast %2 : vector<1x32xf32> to vector<12x32xf32>
    %23 = arith.mulf %21, %22 : vector<12x32xf32>
    %24 = vector.broadcast %3 : vector<1x32xf32> to vector<12x32xf32>
    %25 = arith.addf %23, %24 : vector<12x32xf32>
    %26 = arith.truncf %25 : vector<12x32xf32> to vector<12x32xbf16>
    %c0_9 = arith.constant 0 : index
    %c0_10 = arith.constant 0 : index
    %27 = vector.load %arg4[%c0_9, %c0_10] : memref<12x32xbf16, #tpu.memory_space<vmem>>, vector<12x32xbf16>
    tpu.vector_store %arg4[%c0_9, %c0_10], %26 {strides = array<i32>} : memref<12x32xbf16, #tpu.memory_space<vmem>>, vector<12x32xbf16>,
    return
  }
  func.func @transform_0(%arg0: i32) -> (i32, i32) {
    %c0_i32 = arith.constant 0 : i32
    %c0_i32_0 = arith.constant 0 : i32
    return %arg0, %c0_i32 : i32, i32
  }
  func.func @transform_1(%arg0: i32) -> (i32, i32) {
    %c0_i32 = arith.constant 0 : i32
    %c0_i32_0 = arith.constant 0 : i32
    %c0_i32_1 = arith.constant 0 : i32
    return %c0_i32, %c0_i32_0 : i32, i32
  }
  func.func @transform_2(%arg0: i32) -> (i32, i32) {
    %c0_i32 = arith.constant 0 : i32
    %c0_i32_0 = arith.constant 0 : i32
    %c0_i32_1 = arith.constant 0 : i32
    return %c0_i32, %c0_i32_0 : i32, i32
  }
  func.func @transform_3(%arg0: i32) -> (i32, i32) {
    %c0_i32 = arith.constant 0 : i32
    %c0_i32_0 = arith.constant 0 : i32
    return %arg0, %c0_i32 : i32, i32
  }
}

module attributes {stable_mosaic.version = 11 : i64} {
  func.func @_dense_kernel(%arg0: i32, %arg1: i32, %arg2: memref<12x32xbf16, #tpu.memory_space<vmem>>, %arg3: memref<32x24xbf16, #tpu.memory_space<vmem>>, %arg4: memref<1x24xf32, #tpu.memory_space<vmem>>, %arg5: memref<12x24xf32, #tpu.memory_space<vmem>>) attributes {dimension_semantics = [#tpu.dimension_semantics<parallel>, #tpu.dimension_semantics<parallel>], iteration_bounds = array<i64: 1, 1>, scalar_prefetch = 0 : i64, scratch_operands = 0 : i64, tpu.core_type = #tpu.core_type<tc>, window_params = [{transform_indices = @transform_0, window_bounds = array<i64: 12, 32>}, {transform_indices = @transform_1, window_bounds = array<i64: 32, 24>}, {transform_indices = @transform_2, window_bounds = array<i64: 1, 24>}, {transform_indices = @transform_3, window_bounds = array<i64: 12, 24>}]} {
    %c0 = arith.constant 0 : index
    %c0_0 = arith.constant 0 : index
    %0 = vector.load %arg2[%c0, %c0_0] : memref<12x32xbf16, #tpu.memory_space<vmem>>, vector<12x32xbf16>
    %c0_1 = arith.constant 0 : index
    %c0_2 = arith.constant 0 : index
    %1 = vector.load %arg3[%c0_1, %c0_2] : memref<32x24xbf16, #tpu.memory_space<vmem>>, vector<32x24xbf16>
    %cst = arith.constant dense<0.000000e+00> : vector<12x24xf32>
    %2 = tpu.matmul %0, %1, %cst {dimension_numbers = #tpu.dot_dimension_numbers<[1], [0], [0], [1], [0, 0, 1, 1], [], []>} : vector<12x32xbf16>, vector<32x24xbf16>, vector<12x24xf32> -> vector<12x24xf32>
    %c0_3 = arith.constant 0 : index
    %c0_4 = arith.constant 0 : index
    %3 = vector.load %arg4[%c0_3, %c0_4] : memref<1x24xf32, #tpu.memory_space<vmem>>, vector<1x24xf32>
    %4 = vector.broadcast %3 : vector<1x24xf32> to vector<12x24xf32>
    %5 = arith.addf %2, %4 : vector<12x24xf32>
    %c0_5 = arith.constant 0 : index
    %c0_6 = arith.constant 0 : index
    %6 = vector.load %arg5[%c0_5, %c0_6] : memref<12x24xf32, #tpu.memory_space<vmem>>, vector<12x24xf32>
    tpu.vector_store %arg5[%c0_5, %c0_6], %5 {strides = array<i32>} : memref<12x24xf32, #tpu.memory_space<vmem>>, vector<12x24xf32>,
    return
  }
  func.func @transform_0(%arg0: i32, %arg1: i32) -> (i32, i32) {
    %c0_i32 = arith.constant 0 : i32
    %c0_i32_0 = arith.constant 0 : i32
    return %arg0, %c0_i32 : i32, i32
  }
  func.func @transform_1(%arg0: i32, %arg1: i32) -> (i32, i32) {
    %c0_i32 = arith.constant 0 : i32
    %c0_i32_0 = arith.constant 0 : i32
    return %c0_i32, %arg1 : i32, i32
  }
  func.func @transform_2(%arg0: i32, %arg1: i32) -> (i32, i32) {
    %c0_i32 = arith.constant 0 : i32
    %c0_i32_0 = arith.constant 0 : i32
    return %c0_i32, %arg1 : i32, i32
  }
  func.func @transform_3(%arg0: i32, %arg1: i32) -> (i32, i32) {
    %c0_i32 = arith.constant 0 : i32
    return %arg0, %arg1 : i32, i32
  }
}

</mosaic_0001>

<llo_original>
// kernel: forward.24
$region0: #{forward.24}
  #allocation0 [shape = 'u32[]', space=smem, size = 0x4, offset = 0x4, fixed_abs, tag = 'smem constant byte address 0x4 - core index']
  #allocation1 [shape = 'u32[144,128]{1,0:T(1,128)}', space=vmem, size = 0x12000, scoped, tag = 'internal scratch']
  %s0 = inlined_call_operand.vmem [shape: bf16[80,16], index: 0, kind: input, shape index: {}]
  %s1 = inlined_call_operand.vmem [shape: bf16[16,128], index: 1, kind: input, shape index: {}]
  %s2 = inlined_call_operand.vmem [shape: f32[1,128], index: 2, kind: input, shape index: {}]
  %s3 = inlined_call_operand.vmem [shape: bf16[80,128], index: 3, kind: output, shape index: {}]
  %s4 = sld [smem:[#allocation0]]
  $region22: #{forward.24} parent=0
    _
  %s6 = ssub.s32 1, %s4
  %s7 = scalar_select 0, %s6, %s4
  // Predicated region
  $region2: #{forward.24} parent=0 // pred_check
    _
  $region3: #{forward.24} parent=0 // pred_check_branch
    %9 = sbr.rel (0) target = $region5
  $region4: #{forward.24} parent=0 // pred_region
    _
  $region5: #{forward.24} parent=0 // pred_fallthru
    _
  // Predicated region
  $region6: #{forward.24} parent=0 // pred_check
    _
  $region7: #{forward.24} parent=0 // pred_check_branch
    %11 = sbr.rel (0) target = $region9
  $region8: #{forward.24} parent=0 // pred_region
    _
  $region9: #{forward.24} parent=0 // pred_fallthru
    _
  // Predicated region
  $region10: #{forward.24} parent=0 // pred_check
    _
  $region11: #{forward.24} parent=0 // pred_check_branch
    %13 = sbr.rel (0) target = $region13
  $region12: #{forward.24} parent=0 // pred_region
    _
  $region13: #{forward.24} parent=0 // pred_fallthru
    _
  %v15 = vld [vmem:[%s0] sm:$0xf]
  %v16 = vld [vmem:[%s0 + $0x4] sm:$0xf]
  %v17 = vld [vmem:[%s0 + $0x8] sm:$0xf]
  %v18 = vld [vmem:[%s0 + $0xc] sm:$0xf]
  %v19 = vld [vmem:[%s0 + $0x10] sm:$0xf]
  %v20 = vld [vmem:[%s0 + $0x14] sm:$0xf]
  %v21 = vld [vmem:[%s0 + $0x18] sm:$0xf]
  %v22 = vld [vmem:[%s0 + $0x1c] sm:$0xf]
  %v23 = vld [vmem:[%s0 + $0x20] sm:$0xf]
  %v24 = vld [vmem:[%s0 + $0x24] sm:$0xf]
  %v25 = vld [vmem:[%s1] sm:$0xf]
  %v26 = vld [vmem:[%s1 + $0x4] sm:$0xf]
  %v27 = vld [vmem:[%s2] sm:$0x1]
  %v29 = vlaneseq
  %v30 = vshrl.u32 %v29, 7
  %v31 = vsub.s32 0, %v30
  %v32 = vrot.slane %v27, %v31
  %v44 = vunpack.c.l.b16 %v15
  %v45 = vunpack.c.l.b16 %v16
  %v46 = vunpack.c.l.b16 %v17
  %v47 = vunpack.c.l.b16 %v18
  %v48 = vunpack.c.l.b16 %v19
  %v49 = vunpack.c.l.b16 %v20
  %v50 = vunpack.c.l.b16 %v21
  %v51 = vunpack.c.l.b16 %v22
  %v52 = vunpack.c.l.b16 %v23
  %v53 = vunpack.c.l.b16 %v24
  %v54 = vpack.c.b16 %v45, %v44
  %v55 = vpack.c.b16 %v47, %v46
  %v56 = vpack.c.b16 %v49, %v48
  %v57 = vpack.c.b16 %v51, %v50
  %v58 = vpack.c.b16 %v53, %v52
  %v61 = vunpack.c.l.b16 %v25
  %v62 = vunpack.c.l.b16 %v26
  %v63 = vpack.c.b16 %v62, %v61
  %vm65 = vcmask 130048
  %v67 = vsel %vm65, %v54, 0
  %v70 = vsel %vm65, %v55, 0
  %v73 = vsel %vm65, %v56, 0
  %v76 = vsel %vm65, %v57, 0
  %v79 = vsel %vm65, %v58, 0
  %81 = vmatprep.subr.bf16.mxu0 0
  %82 = vmatpush1.bf16.msra.mxu0 %v63
  %83 = vmatprep.subr.bf16.mxu0 0
  %84 = vmatpush1.bf16.msra.mxu0 0
  %85 = vmatprep.subr.bf16.mxu0 0
  %86 = vmatpush1.bf16.msra.mxu0 0
  %87 = vmatprep.subr.bf16.mxu0 0
  %88 = vmatpush1.bf16.msra.mxu0 0
  %89 = vmatprep.subr.bf16.mxu0 0
  %90 = vmatpush1.bf16.msra.mxu0 0
  %91 = vmatprep.subr.bf16.mxu0 0
  %92 = vmatpush1.bf16.msra.mxu0 0
  %93 = vmatprep.subr.bf16.mxu0 0
  %94 = vmatpush1.bf16.msra.mxu0 0
  %95 = vmatprep.subr.bf16.mxu0 0
  %96 = vmatpush1.bf16.msra.mxu0 0
  %97 = vmatprep.subr.bf16.mxu0 0
  %98 = vmatpush1.bf16.msra.mxu0 0
  %99 = vmatprep.subr.bf16.mxu0 0
  %100 = vmatpush1.bf16.msra.mxu0 0
  %101 = vmatprep.subr.bf16.mxu0 0
  %102 = vmatpush1.bf16.msra.mxu0 0
  %103 = vmatprep.subr.bf16.mxu0 0
  %104 = vmatpush1.bf16.msra.mxu0 0
  %105 = vmatprep.subr.bf16.mxu0 0
  %106 = vmatpush1.bf16.msra.mxu0 0
  %107 = vmatprep.subr.bf16.mxu0 0
  %108 = vmatpush1.bf16.msra.mxu0 0
  %109 = vmatprep.subr.bf16.mxu0 0
  %110 = vmatpush1.bf16.msra.mxu0 0
  %111 = vmatprep.subr.bf16.mxu0 0
  %112 = vmatpush1.bf16.msra.mxu0 0
  %113 = vmatprep.mubr.bf16.mxu0 0
  %114 = vmatmul.mubr.bf16.gmra.mrb[0].mxu0 %v67
  %v115 = vpop.f32.mrb[0].mxu0
  %v116 = vadd.f32 %v32, %v115
  %v117 = vpop.f32.mrb[0].mxu0
  %v118 = vpop.f32.mrb[0].mxu0
  %v119 = vadd.f32 %v32, %v118
  %v120 = vpop.f32.mrb[0].mxu0
  %121 = vmatprep.mubr.bf16.mxu0 0
  %122 = vmatmul.mubr.bf16.gmra.mrb[0].mxu0 %v70
  %v123 = vpop.f32.mrb[0].mxu0
  %v124 = vadd.f32 %v32, %v123
  %v125 = vpop.f32.mrb[0].mxu0
  %v126 = vpop.f32.mrb[0].mxu0
  %v127 = vadd.f32 %v32, %v126
  %v128 = vpop.f32.mrb[0].mxu0
  %129 = vmatprep.mubr.bf16.mxu0 0
  %130 = vmatmul.mubr.bf16.gmra.mrb[0].mxu0 %v73
  %v131 = vpop.f32.mrb[0].mxu0
  %v132 = vadd.f32 %v32, %v131
  %v133 = vpop.f32.mrb[0].mxu0
  %v134 = vpop.f32.mrb[0].mxu0
  %v135 = vadd.f32 %v32, %v134
  %v136 = vpop.f32.mrb[0].mxu0
  %137 = vmatprep.mubr.bf16.mxu0 0
  %138 = vmatmul.mubr.bf16.gmra.mrb[0].mxu0 %v76
  %v139 = vpop.f32.mrb[0].mxu0
  %v140 = vadd.f32 %v32, %v139
  %v141 = vpop.f32.mrb[0].mxu0
  %v142 = vpop.f32.mrb[0].mxu0
  %v143 = vadd.f32 %v32, %v142
  %v144 = vpop.f32.mrb[0].mxu0
  %145 = vmatprep.mubr.bf16.mxu0 0
  %146 = vmatmul.mubr.bf16.gmra.mrb[0].mxu0 %v79
  %v147 = vpop.f32.mrb[0].mxu0
  %v148 = vadd.f32 %v32, %v147
  %v149 = vpop.f32.mrb[0].mxu0
  %v150 = vpop.f32.mrb[0].mxu0
  %v151 = vadd.f32 %v32, %v150
  %v152 = vpop.f32.mrb[0].mxu0
  %153 = vdwg.mxu0
  %v154 = vpack.c.bf16 %v119, %v116
  %v155 = vpack.c.bf16 %v127, %v124
  %v156 = vpack.c.bf16 %v135, %v132
  %v157 = vpack.c.bf16 %v143, %v140
  %v158 = vpack.c.bf16 %v151, %v148
  %v164 = vunpack.c.l.b16 %v154
  %v165 = vunpack.c.h.b16 %v154
  %v166 = vunpack.c.l.b16 %v155
  %v167 = vunpack.c.h.b16 %v155
  %v168 = vunpack.c.l.b16 %v156
  %v169 = vunpack.c.h.b16 %v156
  %v170 = vunpack.c.l.b16 %v157
  %v171 = vunpack.c.h.b16 %v157
  %v172 = vunpack.c.l.b16 %v158
  %v173 = vunpack.c.h.b16 %v158
  %v174 = vpack.c.b16 %v164, %v164
  %v175 = vpack.c.b16 %v165, %v165
  %v176 = vpack.c.b16 %v166, %v166
  %v177 = vpack.c.b16 %v167, %v167
  %v178 = vpack.c.b16 %v168, %v168
  %v179 = vpack.c.b16 %v169, %v169
  %v180 = vpack.c.b16 %v170, %v170
  %v181 = vpack.c.b16 %v171, %v171
  %v182 = vpack.c.b16 %v172, %v172
  %v183 = vpack.c.b16 %v173, %v173
  %194 = vst [vmem:[%s3] sm:$0xf] %v174
  %195 = vst [vmem:[%s3 + $0x4] sm:$0xf] %v175
  %196 = vst [vmem:[%s3 + $0x8] sm:$0xf] %v176
  %197 = vst [vmem:[%s3 + $0xc] sm:$0xf] %v177
  %198 = vst [vmem:[%s3 + $0x10] sm:$0xf] %v178
  %199 = vst [vmem:[%s3 + $0x14] sm:$0xf] %v179
  %200 = vst [vmem:[%s3 + $0x18] sm:$0xf] %v180
  %201 = vst [vmem:[%s3 + $0x1c] sm:$0xf] %v181
  %202 = vst [vmem:[%s3 + $0x20] sm:$0xf] %v182
  %203 = vst [vmem:[%s3 + $0x24] sm:$0xf] %v183
  // Predicated region
  $region14: #{forward.24} parent=0 // pred_check
    _
  $region15: #{forward.24} parent=0 // pred_check_branch
    %205 = sbr.rel (0) target = $region17
  $region16: #{forward.24} parent=0 // pred_region
    _
  $region17: #{forward.24} parent=0 // pred_fallthru
    _
  // Predicated region
  $region18: #{forward.24} parent=0 // pred_check
    _
  $region19: #{forward.24} parent=0 // pred_check_branch
    %207 = sbr.rel (0) target = $region21
  $region20: #{forward.24} parent=0 // pred_region
    _
  $region21: #{forward.24} parent=0 // pred_fallthru
    _

// kernel: forward.25
$region0: #{forward.25}
  #allocation0 [shape = 'u32[]', space=smem, size = 0x4, offset = 0x4, fixed_abs, tag = 'smem constant byte address 0x4 - core index']
  #allocation1 [shape = 'u32[144,128]{1,0:T(1,128)}', space=vmem, size = 0x12000, scoped, tag = 'internal scratch']
  #allocation2 [shape = 'f32[16,16]{1,0:T(8,128)}', space=vmem, size = 0x2000, scoped, tag = 'scratch operand']
  #allocation3 [shape = 'f32[16,16]{1,0:T(8,128)}', space=vmem, size = 0x2000, scoped, tag = 'scratch operand']
  %s0 = inlined_call_operand.vmem [shape: bf16[2,5,16,64], index: 0, kind: input, shape index: {}]
  %s1 = inlined_call_operand.vmem [shape: s32[16,1], index: 1, kind: input, shape index: {}]
  %s2 = inlined_call_operand.vmem [shape: bf16[2,16,64], index: 2, kind: input, shape index: {}]
  %s3 = inlined_call_operand.vmem [shape: f32[2,1,64], index: 3, kind: input, shape index: {}]
  %s4 = inlined_call_operand.vmem [shape: bf16[2,16,16], index: 4, kind: output, shape index: {}]
  %s5 = sld [smem:[#allocation0]]
  $region49: #{forward.25} parent=0
    _
  %s7 = ssub.s32 1, %s5
  %s8 = scalar_select 0, %s7, %s5
  loop: start=0, step=1, limit=4
  $region2: #{forward.25} parent=0 // loop_pre_header
    _
  $region3: #{forward.25} parent=0 // loop_header
    %s10 = sphi 0, %s14
    %p11 = scmp.ge.s32.totalorder %s10, 4
    %s17 = sphi 0, %s29
    %s18 = sphi 0, %s25
    %s19 = sphi 0, %s17
    %s20 = sphi 0, %s18
    %s21 = sphi 0, %s19
    %s22 = sphi 0, %s20
    %s34 = sphi 0, %s36
    %s37 = sphi 0, %s34
    %s38 = sphi 0, %s37
    %s54 = sphi 0, %s38
    %s60 = sphi 0, %s62
    %s63 = sphi 0, %s60
    %s64 = sphi 0, %s63
    %s80 = sphi 0, %s64
    %s86 = sphi 0, %s88
    %s89 = sphi 0, %s86
    %s90 = sphi 0, %s89
    %s106 = sphi 0, %s90
    %s112 = sphi 0, %s114
    %s115 = sphi 0, %s112
    %s116 = sphi 0, %s115
    %s132 = sphi 0, %s116
    %s140 = sphi 0, %s142
    %s143 = sphi 0, %s140
    %s144 = sphi 0, %s143
    %s160 = sphi 0, %s144
  $region4: #{forward.25} parent=0 // loop_header_branch
    %13 = sbr.rel (%p11) target = $region8
  $region5: #{forward.25} parent=0 // loop_body
    %s15 = ssub.s32 %s10, 1
    %s16 = ssub.s32 %s10, 2
    %s23 = sadd.s32 1, %s18
    %p24 = scmp.ge.s32.totalorder %s23, 1
    %s25 = scalar_select %p24, 0, %s23
    %s26 = sadd.s32 1, %s17
    %s27 = scalar_select %p24, %s26, %s17
    %p28 = scmp.ge.s32.totalorder %s27, 2
    %s29 = scalar_select %p28, 0, %s27
    %s30 = ssub.s32 %s17, %s29
    %s31 = ssub.s32 %s18, %s25
    %s32 = sor.u32 %s30, %s31
    %p33 = scmp.eq.s32.totalorder %s32, 0
    %s35 = sadd.s32 %s34, 1
    %s36 = scalar_select %p33, %s34, %s35
    %p39 = pneg %p33
    %p40 = scmp.eq.s32.totalorder %s10, 1
    %p41 = por %p39, %p40
    %p42 = scmp.ne.s32.totalorder %s34, %s37
    %p43 = scmp.eq.s32.totalorder %s10, 0
    %p44 = por %p42, %p43
    %p45 = scmp.ne.s32.totalorder %s34, %s37
    %p46 = scmp.eq.s32.totalorder %s15, 1
    %p47 = por %p45, %p46
    %p48 = scmp.ne.s32.totalorder %s37, %s38
    %p49 = scmp.eq.s32.totalorder %s15, 0
    %p50 = por %p48, %p49
    %p51 = scmp.ne.s32.totalorder %s37, %s38
    %p52 = scmp.eq.s32.totalorder %s16, 1
    %p53 = por %p51, %p52
    %p55 = scmp.ne.s32.totalorder %s38, %s54
    %p56 = scmp.eq.s32.totalorder %s16, 0
    %p57 = por %p55, %p56
    %s58 = ssub.s32 %s18, %s25
    %p59 = scmp.eq.s32.totalorder %s58, 0
    %s61 = sadd.s32 %s60, 1
    %s62 = scalar_select %p59, %s60, %s61
    %p65 = pneg %p59
    %p66 = scmp.eq.s32.totalorder %s10, 1
    %p67 = por %p65, %p66
    %p68 = scmp.ne.s32.totalorder %s60, %s63
    %p69 = scmp.eq.s32.totalorder %s10, 0
    %p70 = por %p68, %p69
    %p71 = scmp.ne.s32.totalorder %s60, %s63
    %p72 = scmp.eq.s32.totalorder %s15, 1
    %p73 = por %p71, %p72
    %p74 = scmp.ne.s32.totalorder %s63, %s64
    %p75 = scmp.eq.s32.totalorder %s15, 0
    %p76 = por %p74, %p75
    %p77 = scmp.ne.s32.totalorder %s63, %s64
    %p78 = scmp.eq.s32.totalorder %s16, 1
    %p79 = por %p77, %p78
    %p81 = scmp.ne.s32.totalorder %s64, %s80
    %p82 = scmp.eq.s32.totalorder %s16, 0
    %p83 = por %p81, %p82
    %s84 = ssub.s32 %s17, %s29
    %p85 = scmp.eq.s32.totalorder %s84, 0
    %s87 = sadd.s32 %s86, 1
    %s88 = scalar_select %p85, %s86, %s87
    %p91 = pneg %p85
    %p92 = scmp.eq.s32.totalorder %s10, 1
    %p93 = por %p91, %p92
    %p94 = scmp.ne.s32.totalorder %s86, %s89
    %p95 = scmp.eq.s32.totalorder %s10, 0
    %p96 = por %p94, %p95
    %p97 = scmp.ne.s32.totalorder %s86, %s89
    %p98 = scmp.eq.s32.totalorder %s15, 1
    %p99 = por %p97, %p98
    %p100 = scmp.ne.s32.totalorder %s89, %s90
    %p101 = scmp.eq.s32.totalorder %s15, 0
    %p102 = por %p100, %p101
    %p103 = scmp.ne.s32.totalorder %s89, %s90
    %p104 = scmp.eq.s32.totalorder %s16, 1
    %p105 = por %p103, %p104
    %p107 = scmp.ne.s32.totalorder %s90, %s106
    %p108 = scmp.eq.s32.totalorder %s16, 0
    %p109 = por %p107, %p108
    %s110 = ssub.s32 %s17, %s29
    %p111 = scmp.eq.s32.totalorder %s110, 0
    %s113 = sadd.s32 %s112, 1
    %s114 = scalar_select %p111, %s112, %s113
    %p117 = pneg %p111
    %p118 = scmp.eq.s32.totalorder %s10, 1
    %p119 = por %p117, %p118
    %p120 = scmp.ne.s32.totalorder %s112, %s115
    %p121 = scmp.eq.s32.totalorder %s10, 0
    %p122 = por %p120, %p121
    %p123 = scmp.ne.s32.totalorder %s112, %s115
    %p124 = scmp.eq.s32.totalorder %s15, 1
    %p125 = por %p123, %p124
    %p126 = scmp.ne.s32.totalorder %s115, %s116
    %p127 = scmp.eq.s32.totalorder %s15, 0
    %p128 = por %p126, %p127
    %p129 = scmp.ne.s32.totalorder %s115, %s116
    %p130 = scmp.eq.s32.totalorder %s16, 1
    %p131 = por %p129, %p130
    %p133 = scmp.ne.s32.totalorder %s116, %s132
    %p134 = scmp.eq.s32.totalorder %s16, 0
    %p135 = por %p133, %p134
    %s136 = ssub.s32 %s17, %s29
    %s137 = ssub.s32 %s18, %s25
    %s138 = sor.u32 %s136, %s137
    %p139 = scmp.eq.s32.totalorder %s138, 0
    %s141 = sadd.s32 %s140, 1
    %s142 = scalar_select %p139, %s140, %s141
    %p145 = pneg %p139
    %p146 = scmp.eq.s32.totalorder %s10, 1
    %p147 = por %p145, %p146
    %p148 = scmp.ne.s32.totalorder %s140, %s143
    %p149 = scmp.eq.s32.totalorder %s10, 0
    %p150 = por %p148, %p149
    %p151 = scmp.ne.s32.totalorder %s140, %s143
    %p152 = scmp.eq.s32.totalorder %s15, 1
    %p153 = por %p151, %p152
    %p154 = scmp.ne.s32.totalorder %s143, %s144
    %p155 = scmp.eq.s32.totalorder %s15, 0
    %p156 = por %p154, %p155
    %p157 = scmp.ne.s32.totalorder %s143, %s144
    %p158 = scmp.eq.s32.totalorder %s16, 1
    %p159 = por %p157, %p158
    %p161 = scmp.ne.s32.totalorder %s144, %s160
    %p162 = scmp.eq.s32.totalorder %s16, 0
    %p163 = por %p161, %p162
    %p164 = scmp.le.s32.totalorder 1, %s10
    %p165 = scmp.lt.s32.totalorder %s10, 3
    %p166 = pnand %p164, %p165
    %p167 = pneg %p166
    // Predicated region
    $region9: #{forward.25} parent=5 // pred_check
      _
    $region10: #{forward.25} parent=5 // pred_check_branch
      %169 = sbr.rel (%p166) target = $region12
    $region11: #{forward.25} parent=5 // pred_region
      %s170 = ssub.s32 %s10, 1
      // Predicated region
      $region13: #{forward.25} parent=11 // pred_check
        %p171 = pneg %p76
      $region14: #{forward.25} parent=11 // pred_check_branch
        %173 = sbr.rel (%p171) target = $region16
      $region15: #{forward.25} parent=11 // pred_region
        %s174 = smul.u32 2, %s20
        %p175 = scmp.lt.s32.totalorder %s174, 1
        %s176 = scalar_select %p175, %s174, 1
        %s177 = smul.addr %s176, 8
        %s178 = scalar_lea.vmem %s1, %s177
        %s179 = smul.u32 2, %s20
      $region16: #{forward.25} parent=11 // pred_fallthru
        _
    $region12: #{forward.25} parent=5 // pred_fallthru
      _
    %p180 = scmp.lt.s32.totalorder %s10, 2
    // Predicated region
    $region17: #{forward.25} parent=5 // pred_check
      %p181 = pneg %p180
    $region18: #{forward.25} parent=5 // pred_check_branch
      %183 = sbr.rel (%p181) target = $region20
    $region19: #{forward.25} parent=5 // pred_region
      // Predicated region
      $region21: #{forward.25} parent=19 // pred_check
        %p184 = pneg %p44
      $region22: #{forward.25} parent=19 // pred_check_branch
        %186 = sbr.rel (%p184) target = $region24
      $region23: #{forward.25} parent=19 // pred_region
        %s187 = smul.u32 2, %s18
        %p188 = scmp.lt.s32.totalorder %s17, 1
        %s189 = scalar_select %p188, %s17, 1
        %p190 = scmp.lt.s32.totalorder %s187, 1
        %s191 = scalar_select %p190, %s187, 1
        %s192 = smul.addr %s189, 10
        %s193 = sadd.s32 %s191, %s192
        %s194 = smul.addr %s193, 4
        %s195 = scalar_lea.vmem %s0, %s194
        %s196 = smul.u32 2, %s18
      $region24: #{forward.25} parent=19 // pred_fallthru
        _
      // Predicated region
      $region25: #{forward.25} parent=19 // pred_check
        %p197 = pneg %p96
      $region26: #{forward.25} parent=19 // pred_check_branch
        %199 = sbr.rel (%p197) target = $region28
      $region27: #{forward.25} parent=19 // pred_region
        %p200 = scmp.lt.s32.totalorder %s17, 1
        %s201 = scalar_select %p200, %s17, 1
        %s202 = smul.addr %s201, 2
        %s203 = smul.addr %s202, 4
        %s204 = scalar_lea.vmem %s2, %s203
      $region28: #{forward.25} parent=19 // pred_fallthru
        _
      // Predicated region
      $region29: #{forward.25} parent=19 // pred_check
        %p205 = pneg %p122
      $region30: #{forward.25} parent=19 // pred_check_branch
        %207 = sbr.rel (%p205) target = $region32
      $region31: #{forward.25} parent=19 // pred_region
        %p208 = scmp.lt.s32.totalorder %s17, 1
        %s209 = scalar_select %p208, %s17, 1
        %s210 = scalar_lea.vmem %s3, %s209
      $region32: #{forward.25} parent=19 // pred_fallthru
        _
    $region20: #{forward.25} parent=5 // pred_fallthru
      _
    %p211 = scmp.le.s32.totalorder 1, %s10
    %p212 = scmp.lt.s32.totalorder %s10, 3
    %p213 = pnand %p211, %p212
    %p214 = pneg %p213
    // Predicated region
    $region33: #{forward.25} parent=5 // pred_check
      _
    $region34: #{forward.25} parent=5 // pred_check_branch
      %216 = sbr.rel (%p213) target = $region36
    $region35: #{forward.25} parent=5 // pred_region
      %s217 = ssub.s32 %s10, 1
      %s218 = smul.u32 2, %s20
      %p219 = scmp.lt.s32.totalorder %s19, 1
      %s220 = scalar_select %p219, %s19, 1
      %p221 = scmp.lt.s32.totalorder %s218, 1
      %s222 = scalar_select %p221, %s218, 1
      %s223 = smul.addr %s220, 10
      %s224 = sadd.s32 %s222, %s223
      %s225 = smul.addr %s224, 4
      %s226 = scalar_lea.vmem %s0, %s225
      %p227 = pneg %p50
      %p228 = pneg %p47
      %s229 = smul.u32 2, %s20
      %p230 = scmp.lt.s32.totalorder %s229, 1
      %s231 = scalar_select %p230, %s229, 1
      %s232 = smul.addr %s231, 8
      %s233 = scalar_lea.vmem %s1, %s232
      %p234 = pneg %p76
      %p235 = pneg %p73
      %p236 = scmp.lt.s32.totalorder %s19, 1
      %s237 = scalar_select %p236, %s19, 1
      %s238 = smul.addr %s237, 2
      %s239 = smul.addr %s238, 4
      %s240 = scalar_lea.vmem %s2, %s239
      %p241 = pneg %p102
      %p242 = pneg %p99
      %p243 = scmp.lt.s32.totalorder %s19, 1
      %s244 = scalar_select %p243, %s19, 1
      %s245 = scalar_lea.vmem %s3, %s244
      %p246 = pneg %p128
      %p247 = pneg %p125
      %p248 = pneg %p156
      %p249 = pneg %p153
      %s250 = smul.u32 2, %s20
      %p251 = scmp.lt.s32.totalorder %s19, 1
      %s252 = scalar_select %p251, %s19, 1
      %p253 = scmp.lt.s32.totalorder %s250, 1
      %s254 = scalar_select %p253, %s250, 1
      %s255 = smul.addr %s252, 2
      %s256 = sadd.s32 %s254, %s255
      %s257 = smul.addr %s256, 4
      %s258 = scalar_lea.vmem %s4, %s257
      %s259 = smul.u32 2, %s20
      %p260 = scmp.lt.s32.totalorder %s19, 1
      %s261 = scalar_select %p260, %s19, 1
      %p262 = scmp.lt.s32.totalorder %s259, 1
      %s263 = scalar_select %p262, %s259, 1
      %s264 = smul.addr %s261, 10
      %s265 = sadd.s32 %s263, %s264
      %s266 = smul.addr %s265, 4
      %s267 = scalar_lea.vmem %s0, %s266
      %s268 = smul.u32 2, %s20
      %s269 = smul.u32 2, %s20
      %p270 = scmp.lt.s32.totalorder %s269, 1
      %s271 = scalar_select %p270, %s269, 1
      %s272 = smul.addr %s271, 8
      %s273 = scalar_lea.vmem %s1, %s272
      %s274 = smul.u32 2, %s20
      %p275 = scmp.lt.s32.totalorder %s19, 1
      %s276 = scalar_select %p275, %s19, 1
      %s277 = smul.addr %s276, 2
      %s278 = smul.addr %s277, 4
      %s279 = scalar_lea.vmem %s2, %s278
      %p280 = scmp.lt.s32.totalorder %s19, 1
      %s281 = scalar_select %p280, %s19, 1
      %s282 = scalar_lea.vmem %s3, %s281
      %s283 = smul.u32 2, %s20
      %p284 = scmp.lt.s32.totalorder %s19, 1
      %s285 = scalar_select %p284, %s19, 1
      %p286 = scmp.lt.s32.totalorder %s283, 1
      %s287 = scalar_select %p286, %s283, 1
      %s288 = smul.addr %s285, 2
      %s289 = sadd.s32 %s287, %s288
      %s290 = smul.addr %s289, 4
      %s291 = scalar_lea.vmem %s4, %s290
      %s292 = smul.u32 2, %s20
      %v294 = vld [vmem:[%s279] sm:$0xf]
      %v295 = vld [vmem:[%s279 + $0x4] sm:$0xf]
      %v296 = vld [vmem:[%s282] sm:$0x1]
      %v297 = vld [vmem:[%s273] sm:$0xff]
      %v298 = vld [vmem:[%s273 + $0x8] sm:$0xff]
      %v299 = vld [vmem:[%s267] sm:$0xf]
      %v300 = vld [vmem:[%s267 + $0x4] sm:$0xf]
      %v301 = vunpack.c.l.bf16 %v299
      %v302 = vunpack.c.l.bf16 %v300
      %v305 = vunpack.c.l.b16 %v294
      %v306 = vunpack.c.l.b16 %v295
      %v307 = vpack.c.b16 %v306, %v305
      %vm309 = vcmask 130048
      %v311 = vsel %vm309, 0, 0
      %313 = vmatprep.subr.bf16.mxu0 0
      %314 = vmatpush1.bf16.msra.mxu0 %v307
      %315 = vmatprep.subr.bf16.mxu0 0
      %316 = vmatpush1.bf16.msra.mxu0 0
      %317 = vmatprep.subr.bf16.mxu0 0
      %318 = vmatpush1.bf16.msra.mxu0 0
      %319 = vmatprep.subr.bf16.mxu0 0
      %320 = vmatpush1.bf16.msra.mxu0 0
      %321 = vmatprep.subr.bf16.mxu0 0
      %322 = vmatpush1.bf16.msra.mxu0 0
      %323 = vmatprep.subr.bf16.mxu0 0
      %324 = vmatpush1.bf16.msra.mxu0 0
      %325 = vmatprep.subr.bf16.mxu0 0
      %326 = vmatpush1.bf16.msra.mxu0 0
      %327 = vmatprep.subr.bf16.mxu0 0
      %328 = vmatpush1.bf16.msra.mxu0 0
      %329 = vmatprep.subr.bf16.mxu0 0
      %330 = vmatpush1.bf16.msra.mxu0 0
      %331 = vmatprep.subr.bf16.mxu0 0
      %332 = vmatpush1.bf16.msra.mxu0 0
      %333 = vmatprep.subr.bf16.mxu0 0
      %334 = vmatpush1.bf16.msra.mxu0 0
      %335 = vmatprep.subr.bf16.mxu0 0
      %336 = vmatpush1.bf16.msra.mxu0 0
      %337 = vmatprep.subr.bf16.mxu0 0
      %338 = vmatpush1.bf16.msra.mxu0 0
      %339 = vmatprep.subr.bf16.mxu0 0
      %340 = vmatpush1.bf16.msra.mxu0 0
      %341 = vmatprep.subr.bf16.mxu0 0
      %342 = vmatpush1.bf16.msra.mxu0 0
      %343 = vmatprep.subr.bf16.mxu0 0
      %344 = vmatpush1.bf16.msra.mxu0 0
      %345 = vmatprep.mubr.bf16.mxu0 0
      %346 = vmatmul.mubr.bf16.gmra.mrb[0].mxu0 %v311
      %v347 = vpop.f32.mrb[0].mxu0
      %v348 = vadd.f32 0.0, %v347
      %v349 = vpop.f32.mrb[0].mxu0
      %v350 = vpop.f32.mrb[0].mxu0
      %v351 = vadd.f32 0.0, %v350
      %v352 = vpop.f32.mrb[0].mxu0
      %353 = vdwg.mxu0
      %v354 = vadd.f32 %v301, %v348
      %v355 = vadd.f32 %v302, %v351
      %v357 = vlaneseq
      %v358 = vshrl.u32 %v357, 7
      %v359 = vsub.s32 0, %v358
      %v360 = vrot.slane %v296, %v359
      %v362 = vadd.f32 %v354, %v360
      %v363 = vadd.f32 %v355, %v360
      %v364 = vsub.f32 0.0, %v362
      %v365 = vsub.f32 0.0, %v363
      %v366 = vmul.f32 %v364, 1.442695
      %v367 = vpow.pop %v366
      %v368 = vmul.f32 %v365, 1.442695
      %v369 = vpow.pop %v368
      %v370 = vadd.f32 %v367, 1.0
      %v371 = vadd.f32 %v369, 1.0
      %v372 = vrcp.pop %v370
      %v373 = vmul.f32 1.0, %v372
      %v374 = vrcp.pop %v371
      %v375 = vmul.f32 1.0, %v374
      %v376 = vtanh.pop %v362
      %v377 = vtanh.pop %v363
      %v378 = vmul.f32 %v373, 0.0
      %v379 = vmul.f32 %v375, 0.0
      %382 = vrot.lane.b32.xlu0 %v376, 96
      %v383 = vpop.permute.xlu0 %382
      %384 = vrot.lane.b32.xlu0 %v377, 96
      %v385 = vpop.permute.xlu0 %384
      %v388 = vmul.f32 %v373, %v383
      %v389 = vmul.f32 %v375, %v385
      %392 = vrot.lane.b32.xlu0 %v388, 16
      %v393 = vpop.permute.xlu0 %392
      %394 = vrot.lane.b32.xlu0 %v389, 16
      %v395 = vpop.permute.xlu0 %394
      %v398 = vadd.f32 %v378, %v393
      %v399 = vadd.f32 %v379, %v395
      %v400 = vtanh.pop %v398
      %v401 = vtanh.pop %v399
      %404 = vrot.lane.b32.xlu0 %v400, 32
      %v405 = vpop.permute.xlu0 %404
      %406 = vrot.lane.b32.xlu0 %v401, 32
      %v407 = vpop.permute.xlu0 %406
      %v410 = vmul.f32 %v373, %v405
      %v411 = vmul.f32 %v375, %v407
      %vm412 = vcmp.gt.s32.totalorder %v297, 0
      %vm413 = vcmp.gt.s32.totalorder %v298, 0
      %v414 = vsel %vm412, 1, 0
      %v415 = vsel %vm413, 1, 0
      %416 = vset.pattern.permute.xlu0 0
      %417 = vperm.xlu0 %416, %v414
      %v418 = vpop.permute.xlu0 %417
      %419 = vset.pattern.permute.xlu0 0
      %420 = vperm.xlu0 %419, %v415
      %v421 = vpop.permute.xlu0 %420
      %vm422 = vcmp.eq.s32.totalorder %v418, 1
      %vm423 = vcmp.eq.s32.totalorder %v421, 1
      %v424 = vsel %vm422, %v410, 0.0
      %v425 = vsel %vm423, %v411, 0.0
      %v426 = vsel %vm422, %v398, 0.0
      %v427 = vsel %vm423, %v399, 0.0
      %s428 = scalar_lea.vmem %s267, 8
      %v429 = vld [vmem:[%s428] sm:$0xf]
      %v430 = vld [vmem:[%s428 + $0x4] sm:$0xf]
      %v431 = vunpack.c.l.bf16 %v429
      %v432 = vunpack.c.l.bf16 %v430
      %v433 = vpack.c.bf16 %v425, %v424
      %435 = vrot.lane.b32.xlu0 %v433, 80
      %v436 = vpop.permute.xlu0 %435
      %v438 = vsel %vm309, %v436, 0
      %440 = vmatprep.subr.bf16.mxu0 0
      %441 = vmatpush1.bf16.msra.mxu0 %v307
      %442 = vmatprep.subr.bf16.mxu0 0
      %443 = vmatpush1.bf16.msra.mxu0 0
      %444 = vmatprep.subr.bf16.mxu0 0
      %445 = vmatpush1.bf16.msra.mxu0 0
      %446 = vmatprep.subr.bf16.mxu0 0
      %447 = vmatpush1.bf16.msra.mxu0 0
      %448 = vmatprep.subr.bf16.mxu0 0
      %449 = vmatpush1.bf16.msra.mxu0 0
      %450 = vmatprep.subr.bf16.mxu0 0
      %451 = vmatpush1.bf16.msra.mxu0 0
      %452 = vmatprep.subr.bf16.mxu0 0
      %453 = vmatpush1.bf16.msra.mxu0 0
      %454 = vmatprep.subr.bf16.mxu0 0
      %455 = vmatpush1.bf16.msra.mxu0 0
      %456 = vmatprep.subr.bf16.mxu0 0
      %457 = vmatpush1.bf16.msra.mxu0 0
      %458 = vmatprep.subr.bf16.mxu0 0
      %459 = vmatpush1.bf16.msra.mxu0 0
      %460 = vmatprep.subr.bf16.mxu0 0
      %461 = vmatpush1.bf16.msra.mxu0 0
      %462 = vmatprep.subr.bf16.mxu0 0
      %463 = vmatpush1.bf16.msra.mxu0 0
      %464 = vmatprep.subr.bf16.mxu0 0
      %465 = vmatpush1.bf16.msra.mxu0 0
      %466 = vmatprep.subr.bf16.mxu0 0
      %467 = vmatpush1.bf16.msra.mxu0 0
      %468 = vmatprep.subr.bf16.mxu0 0
      %469 = vmatpush1.bf16.msra.mxu0 0
      %470 = vmatprep.subr.bf16.mxu0 0
      %471 = vmatpush1.bf16.msra.mxu0 0
      %472 = vmatprep.mubr.bf16.mxu0 0
      %473 = vmatmul.mubr.bf16.gmra.mrb[0].mxu0 %v438
      %v474 = vpop.f32.mrb[0].mxu0
      %v475 = vadd.f32 0.0, %v474
      %v476 = vpop.f32.mrb[0].mxu0
      %v477 = vpop.f32.mrb[0].mxu0
      %v478 = vadd.f32 0.0, %v477
      %v479 = vpop.f32.mrb[0].mxu0
      %480 = vdwg.mxu0
      %v481 = vadd.f32 %v431, %v475
      %v482 = vadd.f32 %v432, %v478
      %v483 = vadd.f32 %v481, %v360
      %v484 = vadd.f32 %v482, %v360
      %v485 = vsub.f32 0.0, %v483
      %v486 = vsub.f32 0.0, %v484
      %v487 = vmul.f32 %v485, 1.442695
      %v488 = vpow.pop %v487
      %v489 = vmul.f32 %v486, 1.442695
      %v490 = vpow.pop %v489
      %v491 = vadd.f32 %v488, 1.0
      %v492 = vadd.f32 %v490, 1.0
      %v493 = vrcp.pop %v491
      %v494 = vmul.f32 1.0, %v493
      %v495 = vrcp.pop %v492
      %v496 = vmul.f32 1.0, %v495
      %v497 = vtanh.pop %v483
      %v498 = vtanh.pop %v484
      %v499 = vmul.f32 %v494, %v426
      %v500 = vmul.f32 %v496, %v427
      %503 = vrot.lane.b32.xlu0 %v497, 96
      %v504 = vpop.permute.xlu0 %503
      %505 = vrot.lane.b32.xlu0 %v498, 96
      %v506 = vpop.permute.xlu0 %505
      %v509 = vmul.f32 %v494, %v504
      %v510 = vmul.f32 %v496, %v506
      %513 = vrot.lane.b32.xlu0 %v509, 16
      %v514 = vpop.permute.xlu0 %513
      %515 = vrot.lane.b32.xlu0 %v510, 16
      %v516 = vpop.permute.xlu0 %515
      %v519 = vadd.f32 %v499, %v514
      %v520 = vadd.f32 %v500, %v516
      %v521 = vtanh.pop %v519
      %v522 = vtanh.pop %v520
      %525 = vrot.lane.b32.xlu0 %v521, 32
      %v526 = vpop.permute.xlu0 %525
      %527 = vrot.lane.b32.xlu0 %v522, 32
      %v528 = vpop.permute.xlu0 %527
      %v531 = vmul.f32 %v494, %v526
      %v532 = vmul.f32 %v496, %v528
      %vm533 = vcmp.gt.s32.totalorder %v297, 1
      %vm534 = vcmp.gt.s32.totalorder %v298, 1
      %v535 = vsel %vm533, 1, 0
      %v536 = vsel %vm534, 1, 0
      %537 = vset.pattern.permute.xlu0 0
      %538 = vperm.xlu0 %537, %v535
      %v539 = vpop.permute.xlu0 %538
      %540 = vset.pattern.permute.xlu0 0
      %541 = vperm.xlu0 %540, %v536
      %v542 = vpop.permute.xlu0 %541
      %vm543 = vcmp.eq.s32.totalorder %v539, 1
      %vm544 = vcmp.eq.s32.totalorder %v542, 1
      %v545 = vsel %vm543, %v531, %v424
      %v546 = vsel %vm544, %v532, %v425
      %v547 = vsel %vm543, %v519, %v426
      %v548 = vsel %vm544, %v520, %v427
      %s549 = scalar_lea.vmem %s267, 16
      %v550 = vld [vmem:[%s549] sm:$0xf]
      %v551 = vld [vmem:[%s549 + $0x4] sm:$0xf]
      %v552 = vunpack.c.l.bf16 %v550
      %v553 = vunpack.c.l.bf16 %v551
      %v554 = vpack.c.bf16 %v546, %v545
      %556 = vrot.lane.b32.xlu0 %v554, 80
      %v557 = vpop.permute.xlu0 %556
      %v559 = vsel %vm309, %v557, 0
      %561 = vmatprep.subr.bf16.mxu0 0
      %562 = vmatpush1.bf16.msra.mxu0 %v307
      %563 = vmatprep.subr.bf16.mxu0 0
      %564 = vmatpush1.bf16.msra.mxu0 0
      %565 = vmatprep.subr.bf16.mxu0 0
      %566 = vmatpush1.bf16.msra.mxu0 0
      %567 = vmatprep.subr.bf16.mxu0 0
      %568 = vmatpush1.bf16.msra.mxu0 0
      %569 = vmatprep.subr.bf16.mxu0 0
      %570 = vmatpush1.bf16.msra.mxu0 0
      %571 = vmatprep.subr.bf16.mxu0 0
      %572 = vmatpush1.bf16.msra.mxu0 0
      %573 = vmatprep.subr.bf16.mxu0 0
      %574 = vmatpush1.bf16.msra.mxu0 0
      %575 = vmatprep.subr.bf16.mxu0 0
      %576 = vmatpush1.bf16.msra.mxu0 0
      %577 = vmatprep.subr.bf16.mxu0 0
      %578 = vmatpush1.bf16.msra.mxu0 0
      %579 = vmatprep.subr.bf16.mxu0 0
      %580 = vmatpush1.bf16.msra.mxu0 0
      %581 = vmatprep.subr.bf16.mxu0 0
      %582 = vmatpush1.bf16.msra.mxu0 0
      %583 = vmatprep.subr.bf16.mxu0 0
      %584 = vmatpush1.bf16.msra.mxu0 0
      %585 = vmatprep.subr.bf16.mxu0 0
      %586 = vmatpush1.bf16.msra.mxu0 0
      %587 = vmatprep.subr.bf16.mxu0 0
      %588 = vmatpush1.bf16.msra.mxu0 0
      %589 = vmatprep.subr.bf16.mxu0 0
      %590 = vmatpush1.bf16.msra.mxu0 0
      %591 = vmatprep.subr.bf16.mxu0 0
      %592 = vmatpush1.bf16.msra.mxu0 0
      %593 = vmatprep.mubr.bf16.mxu0 0
      %594 = vmatmul.mubr.bf16.gmra.mrb[0].mxu0 %v559
      %v595 = vpop.f32.mrb[0].mxu0
      %v596 = vadd.f32 0.0, %v595
      %v597 = vpop.f32.mrb[0].mxu0
      %v598 = vpop.f32.mrb[0].mxu0
      %v599 = vadd.f32 0.0, %v598
      %v600 = vpop.f32.mrb[0].mxu0
      %601 = vdwg.mxu0
      %v602 = vadd.f32 %v552, %v596
      %v603 = vadd.f32 %v553, %v599
      %v604 = vadd.f32 %v602, %v360
      %v605 = vadd.f32 %v603, %v360
      %v606 = vsub.f32 0.0, %v604
      %v607 = vsub.f32 0.0, %v605
      %v608 = vmul.f32 %v606, 1.442695
      %v609 = vpow.pop %v608
      %v610 = vmul.f32 %v607, 1.442695
      %v611 = vpow.pop %v610
      %v612 = vadd.f32 %v609, 1.0
      %v613 = vadd.f32 %v611, 1.0
      %v614 = vrcp.pop %v612
      %v615 = vmul.f32 1.0, %v614
      %v616 = vrcp.pop %v613
      %v617 = vmul.f32 1.0, %v616
      %v618 = vtanh.pop %v604
      %v619 = vtanh.pop %v605
      %v620 = vmul.f32 %v615, %v547
      %v621 = vmul.f32 %v617, %v548
      %624 = vrot.lane.b32.xlu0 %v618, 96
      %v625 = vpop.permute.xlu0 %624
      %626 = vrot.lane.b32.xlu0 %v619, 96
      %v627 = vpop.permute.xlu0 %626
      %v630 = vmul.f32 %v615, %v625
      %v631 = vmul.f32 %v617, %v627
      %634 = vrot.lane.b32.xlu0 %v630, 16
      %v635 = vpop.permute.xlu0 %634
      %636 = vrot.lane.b32.xlu0 %v631, 16
      %v637 = vpop.permute.xlu0 %636
      %v640 = vadd.f32 %v620, %v635
      %v641 = vadd.f32 %v621, %v637
      %v642 = vtanh.pop %v640
      %v643 = vtanh.pop %v641
      %646 = vrot.lane.b32.xlu0 %v642, 32
      %v647 = vpop.permute.xlu0 %646
      %648 = vrot.lane.b32.xlu0 %v643, 32
      %v649 = vpop.permute.xlu0 %648
      %v652 = vmul.f32 %v615, %v647
      %v653 = vmul.f32 %v617, %v649
      %vm654 = vcmp.gt.s32.totalorder %v297, 2
      %vm655 = vcmp.gt.s32.totalorder %v298, 2
      %v656 = vsel %vm654, 1, 0
      %v657 = vsel %vm655, 1, 0
      %658 = vset.pattern.permute.xlu0 0
      %659 = vperm.xlu0 %658, %v656
      %v660 = vpop.permute.xlu0 %659
      %661 = vset.pattern.permute.xlu0 0
      %662 = vperm.xlu0 %661, %v657
      %v663 = vpop.permute.xlu0 %662
      %vm664 = vcmp.eq.s32.totalorder %v660, 1
      %vm665 = vcmp.eq.s32.totalorder %v663, 1
      %v666 = vsel %vm664, %v652, %v545
      %v667 = vsel %vm665, %v653, %v546
      %v668 = vsel %vm664, %v640, %v547
      %v669 = vsel %vm665, %v641, %v548
      %s670 = scalar_lea.vmem %s267, 24
      %v671 = vld [vmem:[%s670] sm:$0xf]
      %v672 = vld [vmem:[%s670 + $0x4] sm:$0xf]
      %v673 = vunpack.c.l.bf16 %v671
      %v674 = vunpack.c.l.bf16 %v672
      %v675 = vpack.c.bf16 %v667, %v666
      %677 = vrot.lane.b32.xlu0 %v675, 80
      %v678 = vpop.permute.xlu0 %677
      %v680 = vsel %vm309, %v678, 0
      %682 = vmatprep.subr.bf16.mxu0 0
      %683 = vmatpush1.bf16.msra.mxu0 %v307
      %684 = vmatprep.subr.bf16.mxu0 0
      %685 = vmatpush1.bf16.msra.mxu0 0
      %686 = vmatprep.subr.bf16.mxu0 0
      %687 = vmatpush1.bf16.msra.mxu0 0
      %688 = vmatprep.subr.bf16.mxu0 0
      %689 = vmatpush1.bf16.msra.mxu0 0
      %690 = vmatprep.subr.bf16.mxu0 0
      %691 = vmatpush1.bf16.msra.mxu0 0
      %692 = vmatprep.subr.bf16.mxu0 0
      %693 = vmatpush1.bf16.msra.mxu0 0
      %694 = vmatprep.subr.bf16.mxu0 0
      %695 = vmatpush1.bf16.msra.mxu0 0
      %696 = vmatprep.subr.bf16.mxu0 0
      %697 = vmatpush1.bf16.msra.mxu0 0
      %698 = vmatprep.subr.bf16.mxu0 0
      %699 = vmatpush1.bf16.msra.mxu0 0
      %700 = vmatprep.subr.bf16.mxu0 0
      %701 = vmatpush1.bf16.msra.mxu0 0
      %702 = vmatprep.subr.bf16.mxu0 0
      %703 = vmatpush1.bf16.msra.mxu0 0
      %704 = vmatprep.subr.bf16.mxu0 0
      %705 = vmatpush1.bf16.msra.mxu0 0
      %706 = vmatprep.subr.bf16.mxu0 0
      %707 = vmatpush1.bf16.msra.mxu0 0
      %708 = vmatprep.subr.bf16.mxu0 0
      %709 = vmatpush1.bf16.msra.mxu0 0
      %710 = vmatprep.subr.bf16.mxu0 0
      %711 = vmatpush1.bf16.msra.mxu0 0
      %712 = vmatprep.subr.bf16.mxu0 0
      %713 = vmatpush1.bf16.msra.mxu0 0
      %714 = vmatprep.mubr.bf16.mxu0 0
      %715 = vmatmul.mubr.bf16.gmra.mrb[0].mxu0 %v680
      %v716 = vpop.f32.mrb[0].mxu0
      %v717 = vadd.f32 0.0, %v716
      %v718 = vpop.f32.mrb[0].mxu0
      %v719 = vpop.f32.mrb[0].mxu0
      %v720 = vadd.f32 0.0, %v719
      %v721 = vpop.f32.mrb[0].mxu0
      %722 = vdwg.mxu0
      %v723 = vadd.f32 %v673, %v717
      %v724 = vadd.f32 %v674, %v720
      %v725 = vadd.f32 %v723, %v360
      %v726 = vadd.f32 %v724, %v360
      %v727 = vsub.f32 0.0, %v725
      %v728 = vsub.f32 0.0, %v726
      %v729 = vmul.f32 %v727, 1.442695
      %v730 = vpow.pop %v729
      %v731 = vmul.f32 %v728, 1.442695
      %v732 = vpow.pop %v731
      %v733 = vadd.f32 %v730, 1.0
      %v734 = vadd.f32 %v732, 1.0
      %v735 = vrcp.pop %v733
      %v736 = vmul.f32 1.0, %v735
      %v737 = vrcp.pop %v734
      %v738 = vmul.f32 1.0, %v737
      %v739 = vtanh.pop %v725
      %v740 = vtanh.pop %v726
      %v741 = vmul.f32 %v736, %v668
      %v742 = vmul.f32 %v738, %v669
      %745 = vrot.lane.b32.xlu0 %v739, 96
      %v746 = vpop.permute.xlu0 %745
      %747 = vrot.lane.b32.xlu0 %v740, 96
      %v748 = vpop.permute.xlu0 %747
      %v751 = vmul.f32 %v736, %v746
      %v752 = vmul.f32 %v738, %v748
      %755 = vrot.lane.b32.xlu0 %v751, 16
      %v756 = vpop.permute.xlu0 %755
      %757 = vrot.lane.b32.xlu0 %v752, 16
      %v758 = vpop.permute.xlu0 %757
      %v761 = vadd.f32 %v741, %v756
      %v762 = vadd.f32 %v742, %v758
      %v763 = vtanh.pop %v761
      %v764 = vtanh.pop %v762
      %767 = vrot.lane.b32.xlu0 %v763, 32
      %v768 = vpop.permute.xlu0 %767
      %769 = vrot.lane.b32.xlu0 %v764, 32
      %v770 = vpop.permute.xlu0 %769
      %v773 = vmul.f32 %v736, %v768
      %v774 = vmul.f32 %v738, %v770
      %vm775 = vcmp.gt.s32.totalorder %v297, 3
      %vm776 = vcmp.gt.s32.totalorder %v298, 3
      %v777 = vsel %vm775, 1, 0
      %v778 = vsel %vm776, 1, 0
      %779 = vset.pattern.permute.xlu0 0
      %780 = vperm.xlu0 %779, %v777
      %v781 = vpop.permute.xlu0 %780
      %782 = vset.pattern.permute.xlu0 0
      %783 = vperm.xlu0 %782, %v778
      %v784 = vpop.permute.xlu0 %783
      %vm785 = vcmp.eq.s32.totalorder %v781, 1
      %vm786 = vcmp.eq.s32.totalorder %v784, 1
      %v787 = vsel %vm785, %v773, %v666
      %v788 = vsel %vm786, %v774, %v667
      %v789 = vsel %vm785, %v761, %v668
      %v790 = vsel %vm786, %v762, %v669
      %s791 = scalar_lea.vmem %s267, 32
      %v792 = vld [vmem:[%s791] sm:$0xf]
      %v793 = vld [vmem:[%s791 + $0x4] sm:$0xf]
      %v794 = vunpack.c.l.bf16 %v792
      %v795 = vunpack.c.l.bf16 %v793
      %v796 = vpack.c.bf16 %v788, %v787
      %798 = vrot.lane.b32.xlu0 %v796, 80
      %v799 = vpop.permute.xlu0 %798
      %v801 = vsel %vm309, %v799, 0
      %803 = vmatprep.subr.bf16.mxu0 0
      %804 = vmatpush1.bf16.msra.mxu0 %v307
      %805 = vmatprep.subr.bf16.mxu0 0
      %806 = vmatpush1.bf16.msra.mxu0 0
      %807 = vmatprep.subr.bf16.mxu0 0
      %808 = vmatpush1.bf16.msra.mxu0 0
      %809 = vmatprep.subr.bf16.mxu0 0
      %810 = vmatpush1.bf16.msra.mxu0 0
      %811 = vmatprep.subr.bf16.mxu0 0
      %812 = vmatpush1.bf16.msra.mxu0 0
      %813 = vmatprep.subr.bf16.mxu0 0
      %814 = vmatpush1.bf16.msra.mxu0 0
      %815 = vmatprep.subr.bf16.mxu0 0
      %816 = vmatpush1.bf16.msra.mxu0 0
      %817 = vmatprep.subr.bf16.mxu0 0
      %818 = vmatpush1.bf16.msra.mxu0 0
      %819 = vmatprep.subr.bf16.mxu0 0
      %820 = vmatpush1.bf16.msra.mxu0 0
      %821 = vmatprep.subr.bf16.mxu0 0
      %822 = vmatpush1.bf16.msra.mxu0 0
      %823 = vmatprep.subr.bf16.mxu0 0
      %824 = vmatpush1.bf16.msra.mxu0 0
      %825 = vmatprep.subr.bf16.mxu0 0
      %826 = vmatpush1.bf16.msra.mxu0 0
      %827 = vmatprep.subr.bf16.mxu0 0
      %828 = vmatpush1.bf16.msra.mxu0 0
      %829 = vmatprep.subr.bf16.mxu0 0
      %830 = vmatpush1.bf16.msra.mxu0 0
      %831 = vmatprep.subr.bf16.mxu0 0
      %832 = vmatpush1.bf16.msra.mxu0 0
      %833 = vmatprep.subr.bf16.mxu0 0
      %834 = vmatpush1.bf16.msra.mxu0 0
      %835 = vmatprep.mubr.bf16.mxu0 0
      %836 = vmatmul.mubr.bf16.gmra.mrb[0].mxu0 %v801
      %v837 = vpop.f32.mrb[0].mxu0
      %v838 = vadd.f32 0.0, %v837
      %v839 = vpop.f32.mrb[0].mxu0
      %v840 = vpop.f32.mrb[0].mxu0
      %v841 = vadd.f32 0.0, %v840
      %v842 = vpop.f32.mrb[0].mxu0
      %843 = vdwg.mxu0
      %v844 = vadd.f32 %v794, %v838
      %v845 = vadd.f32 %v795, %v841
      %v846 = vadd.f32 %v844, %v360
      %v847 = vadd.f32 %v845, %v360
      %v848 = vsub.f32 0.0, %v846
      %v849 = vsub.f32 0.0, %v847
      %v850 = vmul.f32 %v848, 1.442695
      %v851 = vpow.pop %v850
      %v852 = vmul.f32 %v849, 1.442695
      %v853 = vpow.pop %v852
      %v854 = vadd.f32 %v851, 1.0
      %v855 = vadd.f32 %v853, 1.0
      %v856 = vrcp.pop %v854
      %v857 = vmul.f32 1.0, %v856
      %v858 = vrcp.pop %v855
      %v859 = vmul.f32 1.0, %v858
      %v860 = vtanh.pop %v846
      %v861 = vtanh.pop %v847
      %v862 = vmul.f32 %v857, %v789
      %v863 = vmul.f32 %v859, %v790
      %866 = vrot.lane.b32.xlu0 %v860, 96
      %v867 = vpop.permute.xlu0 %866
      %868 = vrot.lane.b32.xlu0 %v861, 96
      %v869 = vpop.permute.xlu0 %868
      %v872 = vmul.f32 %v857, %v867
      %v873 = vmul.f32 %v859, %v869
      %876 = vrot.lane.b32.xlu0 %v872, 16
      %v877 = vpop.permute.xlu0 %876
      %878 = vrot.lane.b32.xlu0 %v873, 16
      %v879 = vpop.permute.xlu0 %878
      %v882 = vadd.f32 %v862, %v877
      %v883 = vadd.f32 %v863, %v879
      %v884 = vtanh.pop %v882
      %v885 = vtanh.pop %v883
      %888 = vrot.lane.b32.xlu0 %v884, 32
      %v889 = vpop.permute.xlu0 %888
      %890 = vrot.lane.b32.xlu0 %v885, 32
      %v891 = vpop.permute.xlu0 %890
      %v894 = vmul.f32 %v857, %v889
      %v895 = vmul.f32 %v859, %v891
      %vm896 = vcmp.gt.s32.totalorder %v297, 4
      %vm897 = vcmp.gt.s32.totalorder %v298, 4
      %v898 = vsel %vm896, 1, 0
      %v899 = vsel %vm897, 1, 0
      %900 = vset.pattern.permute.xlu0 0
      %901 = vperm.xlu0 %900, %v898
      %v902 = vpop.permute.xlu0 %901
      %903 = vset.pattern.permute.xlu0 0
      %904 = vperm.xlu0 %903, %v899
      %v905 = vpop.permute.xlu0 %904
      %vm906 = vcmp.eq.s32.totalorder %v902, 1
      %vm907 = vcmp.eq.s32.totalorder %v905, 1
      %v908 = vsel %vm906, %v894, %v787
      %v909 = vsel %vm907, %v895, %v788
      %v910 = vpack.c.bf16 %v909, %v908
      %v912 = vunpack.c.l.b16 %v910
      %v913 = vunpack.c.h.b16 %v910
      %v914 = vpack.c.b16 %v912, %v912
      %v915 = vpack.c.b16 %v913, %v913
      %916 = vrot.lane.b32.xlu0 %v914, 80
      %v917 = vpop.permute.xlu0 %916
      %918 = vrot.lane.b32.xlu0 %v915, 80
      %v919 = vpop.permute.xlu0 %918
      %vm922 = vcmask 125952
      %923 = vst.msk [vmem:[%s291] sm:$0xf] %vm922, %v917
      %924 = vst.msk [vmem:[%s291 + $0x4] sm:$0xf] %vm922, %v919
      %s925 = smul.u32 2, %s20
      %p926 = scmp.lt.s32.totalorder %s19, 1
      %s927 = scalar_select %p926, %s19, 1
      %p928 = scmp.lt.s32.totalorder %s925, 1
      %s929 = scalar_select %p928, %s925, 1
      %s930 = smul.addr %s927, 2
      %s931 = sadd.s32 %s929, %s930
      %s932 = smul.addr %s931, 4
      %s933 = scalar_lea.vmem %s4, %s932
      // Predicated region
      $region37: #{forward.25} parent=35 // pred_check
        %p934 = pneg %p153
      $region38: #{forward.25} parent=35 // pred_check_branch
        %936 = sbr.rel (%p934) target = $region40
      $region39: #{forward.25} parent=35 // pred_region
        %s937 = smul.u32 2, %s20
      $region40: #{forward.25} parent=35 // pred_fallthru
        _
    $region36: #{forward.25} parent=5 // pred_fallthru
      _
    %p938 = scmp.le.s32.totalorder 2, %s10
    // Predicated region
    $region41: #{forward.25} parent=5 // pred_check
      %p939 = pneg %p938
    $region42: #{forward.25} parent=5 // pred_check_branch
      %941 = sbr.rel (%p939) target = $region44
    $region43: #{forward.25} parent=5 // pred_region
      %s942 = ssub.s32 %s10, 2
      // Predicated region
      $region45: #{forward.25} parent=43 // pred_check
        %p943 = pneg %p159
      $region46: #{forward.25} parent=43 // pred_check_branch
        %945 = sbr.rel (%p943) target = $region48
      $region47: #{forward.25} parent=43 // pred_region
        %s946 = smul.u32 2, %s22
        %p947 = scmp.lt.s32.totalorder %s21, 1
        %s948 = scalar_select %p947, %s21, 1
        %p949 = scmp.lt.s32.totalorder %s946, 1
        %s950 = scalar_select %p949, %s946, 1
        %s951 = smul.addr %s948, 2
        %s952 = sadd.s32 %s950, %s951
        %s953 = smul.addr %s952, 4
        %s954 = scalar_lea.vmem %s4, %s953
      $region48: #{forward.25} parent=43 // pred_fallthru
        _
    $region44: #{forward.25} parent=5 // pred_fallthru
      _
  $region6: #{forward.25} parent=0 // loop_footer
    %s14 = sadd.s32 1, %s10
  $region7: #{forward.25} parent=0 // loop_footer_branch
    %9 = sbr.rel target = $region3
  $region8: #{forward.25} parent=0 // loop_exit
    _

// kernel: forward.26
$region0: #{forward.26}
  #allocation0 [shape = 'u32[]', space=smem, size = 0x4, offset = 0x4, fixed_abs, tag = 'smem constant byte address 0x4 - core index']
  #allocation1 [shape = 'u32[144,128]{1,0:T(1,128)}', space=vmem, size = 0x12000, scoped, tag = 'internal scratch']
  %s0 = inlined_call_operand.vmem [shape: bf16[16,64], index: 0, kind: input, shape index: {}]
  %s1 = inlined_call_operand.vmem [shape: bf16[64,32], index: 1, kind: input, shape index: {}]
  %s2 = inlined_call_operand.vmem [shape: f32[1,32], index: 2, kind: input, shape index: {}]
  %s3 = inlined_call_operand.vmem [shape: bf16[16,32], index: 3, kind: output, shape index: {}]
  %s4 = sld [smem:[#allocation0]]
  $region22: #{forward.26} parent=0
    _
  %s6 = ssub.s32 1, %s4
  %s7 = scalar_select 0, %s6, %s4
  // Predicated region
  $region2: #{forward.26} parent=0 // pred_check
    _
  $region3: #{forward.26} parent=0 // pred_check_branch
    %9 = sbr.rel (0) target = $region5
  $region4: #{forward.26} parent=0 // pred_region
    _
  $region5: #{forward.26} parent=0 // pred_fallthru
    _
  // Predicated region
  $region6: #{forward.26} parent=0 // pred_check
    _
  $region7: #{forward.26} parent=0 // pred_check_branch
    %11 = sbr.rel (0) target = $region9
  $region8: #{forward.26} parent=0 // pred_region
    _
  $region9: #{forward.26} parent=0 // pred_fallthru
    _
  // Predicated region
  $region10: #{forward.26} parent=0 // pred_check
    _
  $region11: #{forward.26} parent=0 // pred_check_branch
    %13 = sbr.rel (0) target = $region13
  $region12: #{forward.26} parent=0 // pred_region
    _
  $region13: #{forward.26} parent=0 // pred_fallthru
    _
  %v15 = vld [vmem:[%s0] sm:$0xf]
  %v16 = vld [vmem:[%s0 + $0x4] sm:$0xf]
  %v17 = vld [vmem:[%s1] sm:$0xf]
  %v18 = vld [vmem:[%s1 + $0x4] sm:$0xf]
  %v19 = vld [vmem:[%s1 + $0x8] sm:$0xf]
  %v20 = vld [vmem:[%s1 + $0xc] sm:$0xf]
  %v21 = vld [vmem:[%s1 + $0x10] sm:$0xf]
  %v22 = vld [vmem:[%s1 + $0x14] sm:$0xf]
  %v23 = vld [vmem:[%s1 + $0x18] sm:$0xf]
  %v24 = vld [vmem:[%s1 + $0x1c] sm:$0xf]
  %v25 = vld [vmem:[%s2] sm:$0x1]
  %v27 = vlaneseq
  %v28 = vshrl.u32 %v27, 7
  %v29 = vsub.s32 0, %v28
  %v30 = vrot.slane %v25, %v29
  %v34 = vunpack.c.l.b16 %v15
  %v35 = vunpack.c.l.b16 %v16
  %v36 = vpack.c.b16 %v35, %v34
  %v45 = vunpack.c.l.b16 %v17
  %v46 = vunpack.c.l.b16 %v18
  %v47 = vunpack.c.l.b16 %v19
  %v48 = vunpack.c.l.b16 %v20
  %v49 = vunpack.c.l.b16 %v21
  %v50 = vunpack.c.l.b16 %v22
  %v51 = vunpack.c.l.b16 %v23
  %v52 = vunpack.c.l.b16 %v24
  %v53 = vpack.c.b16 %v46, %v45
  %v54 = vpack.c.b16 %v48, %v47
  %v55 = vpack.c.b16 %v50, %v49
  %v56 = vpack.c.b16 %v52, %v51
  %vm61 = vcmask 523264
  %v63 = vsel %vm61, %v36, 0
  %65 = vmatprep.subr.bf16.mxu0 0
  %66 = vmatpush1.bf16.msra.mxu0 %v53
  %67 = vmatprep.subr.bf16.mxu0 0
  %68 = vmatpush1.bf16.msra.mxu0 %v54
  %69 = vmatprep.subr.bf16.mxu0 0
  %70 = vmatpush1.bf16.msra.mxu0 %v55
  %71 = vmatprep.subr.bf16.mxu0 0
  %72 = vmatpush1.bf16.msra.mxu0 %v56
  %73 = vmatprep.subr.bf16.mxu0 0
  %74 = vmatpush1.bf16.msra.mxu0 0
  %75 = vmatprep.subr.bf16.mxu0 0
  %76 = vmatpush1.bf16.msra.mxu0 0
  %77 = vmatprep.subr.bf16.mxu0 0
  %78 = vmatpush1.bf16.msra.mxu0 0
  %79 = vmatprep.subr.bf16.mxu0 0
  %80 = vmatpush1.bf16.msra.mxu0 0
  %81 = vmatprep.subr.bf16.mxu0 0
  %82 = vmatpush1.bf16.msra.mxu0 0
  %83 = vmatprep.subr.bf16.mxu0 0
  %84 = vmatpush1.bf16.msra.mxu0 0
  %85 = vmatprep.subr.bf16.mxu0 0
  %86 = vmatpush1.bf16.msra.mxu0 0
  %87 = vmatprep.subr.bf16.mxu0 0
  %88 = vmatpush1.bf16.msra.mxu0 0
  %89 = vmatprep.subr.bf16.mxu0 0
  %90 = vmatpush1.bf16.msra.mxu0 0
  %91 = vmatprep.subr.bf16.mxu0 0
  %92 = vmatpush1.bf16.msra.mxu0 0
  %93 = vmatprep.subr.bf16.mxu0 0
  %94 = vmatpush1.bf16.msra.mxu0 0
  %95 = vmatprep.subr.bf16.mxu0 0
  %96 = vmatpush1.bf16.msra.mxu0 0
  %97 = vmatprep.mubr.bf16.mxu0 0
  %98 = vmatmul.mubr.bf16.gmra.mrb[0].mxu0 %v63
  %v99 = vpop.f32.mrb[0].mxu0
  %v100 = vadd.f32 %v30, %v99
  %v101 = vpop.f32.mrb[0].mxu0
  %v102 = vpop.f32.mrb[0].mxu0
  %v103 = vadd.f32 %v30, %v102
  %v104 = vpop.f32.mrb[0].mxu0
  %105 = vdwg.mxu0
  %v106 = vtanh.pop %v100
  %v107 = vtanh.pop %v103
  %v108 = vpack.c.bf16 %v107, %v106
  %v110 = vunpack.c.l.b16 %v108
  %v111 = vunpack.c.h.b16 %v108
  %v112 = vpack.c.b16 %v110, %v110
  %v113 = vpack.c.b16 %v111, %v111
  %vm116 = vcmask 257024
  %117 = vst.msk [vmem:[%s3] sm:$0xf] %vm116, %v112
  %118 = vst.msk [vmem:[%s3 + $0x4] sm:$0xf] %vm116, %v113
  // Predicated region
  $region14: #{forward.26} parent=0 // pred_check
    _
  $region15: #{forward.26} parent=0 // pred_check_branch
    %120 = sbr.rel (0) target = $region17
  $region16: #{forward.26} parent=0 // pred_region
    _
  $region17: #{forward.26} parent=0 // pred_fallthru
    _
  // Predicated region
  $region18: #{forward.26} parent=0 // pred_check
    _
  $region19: #{forward.26} parent=0 // pred_check_branch
    %122 = sbr.rel (0) target = $region21
  $region20: #{forward.26} parent=0 // pred_region
    _
  $region21: #{forward.26} parent=0 // pred_fallthru
    _

// kernel: forward.27
$region0: #{forward.27}
  #allocation0 [shape = 'u32[]', space=smem, size = 0x4, offset = 0x4, fixed_abs, tag = 'smem constant byte address 0x4 - core index']
  #allocation1 [shape = 'u32[144,128]{1,0:T(1,128)}', space=vmem, size = 0x12000, scoped, tag = 'internal scratch']
  %s0 = inlined_call_operand.vmem [shape: bf16[16,32], index: 0, kind: input, shape index: {}]
  %s1 = inlined_call_operand.vmem [shape: bf16[32,96], index: 1, kind: input, shape index: {}]
  %s2 = inlined_call_operand.vmem [shape: f32[1,96], index: 2, kind: input, shape index: {}]
  %s3 = inlined_call_operand.vmem [shape: bf16[16,96], index: 3, kind: output, shape index: {}]
  %s4 = sld [smem:[#allocation0]]
  $region22: #{forward.27} parent=0
    _
  %s6 = ssub.s32 1, %s4
  %s7 = scalar_select 0, %s6, %s4
  // Predicated region
  $region2: #{forward.27} parent=0 // pred_check
    _
  $region3: #{forward.27} parent=0 // pred_check_branch
    %9 = sbr.rel (0) target = $region5
  $region4: #{forward.27} parent=0 // pred_region
    _
  $region5: #{forward.27} parent=0 // pred_fallthru
    _
  // Predicated region
  $region6: #{forward.27} parent=0 // pred_check
    _
  $region7: #{forward.27} parent=0 // pred_check_branch
    %11 = sbr.rel (0) target = $region9
  $region8: #{forward.27} parent=0 // pred_region
    _
  $region9: #{forward.27} parent=0 // pred_fallthru
    _
  // Predicated region
  $region10: #{forward.27} parent=0 // pred_check
    _
  $region11: #{forward.27} parent=0 // pred_check_branch
    %13 = sbr.rel (0) target = $region13
  $region12: #{forward.27} parent=0 // pred_region
    _
  $region13: #{forward.27} parent=0 // pred_fallthru
    _
  %v15 = vld [vmem:[%s0] sm:$0xf]
  %v16 = vld [vmem:[%s0 + $0x4] sm:$0xf]
  %v17 = vld [vmem:[%s1] sm:$0xf]
  %v18 = vld [vmem:[%s1 + $0x4] sm:$0xf]
  %v19 = vld [vmem:[%s1 + $0x8] sm:$0xf]
  %v20 = vld [vmem:[%s1 + $0xc] sm:$0xf]
  %v21 = vld [vmem:[%s2] sm:$0x1]
  %v23 = vlaneseq
  %v24 = vshrl.u32 %v23, 7
  %v25 = vsub.s32 0, %v24
  %v26 = vrot.slane %v21, %v25
  %v30 = vunpack.c.l.b16 %v15
  %v31 = vunpack.c.l.b16 %v16
  %v32 = vpack.c.b16 %v31, %v30
  %v37 = vunpack.c.l.b16 %v17
  %v38 = vunpack.c.l.b16 %v18
  %v39 = vunpack.c.l.b16 %v19
  %v40 = vunpack.c.l.b16 %v20
  %v41 = vpack.c.b16 %v38, %v37
  %v42 = vpack.c.b16 %v40, %v39
  %vm45 = vcmask 261120
  %v47 = vsel %vm45, %v32, 0
  %49 = vmatprep.subr.bf16.mxu0 0
  %50 = vmatpush1.bf16.msra.mxu0 %v41
  %51 = vmatprep.subr.bf16.mxu0 0
  %52 = vmatpush1.bf16.msra.mxu0 %v42
  %53 = vmatprep.subr.bf16.mxu0 0
  %54 = vmatpush1.bf16.msra.mxu0 0
  %55 = vmatprep.subr.bf16.mxu0 0
  %56 = vmatpush1.bf16.msra.mxu0 0
  %57 = vmatprep.subr.bf16.mxu0 0
  %58 = vmatpush1.bf16.msra.mxu0 0
  %59 = vmatprep.subr.bf16.mxu0 0
  %60 = vmatpush1.bf16.msra.mxu0 0
  %61 = vmatprep.subr.bf16.mxu0 0
  %62 = vmatpush1.bf16.msra.mxu0 0
  %63 = vmatprep.subr.bf16.mxu0 0
  %64 = vmatpush1.bf16.msra.mxu0 0
  %65 = vmatprep.subr.bf16.mxu0 0
  %66 = vmatpush1.bf16.msra.mxu0 0
  %67 = vmatprep.subr.bf16.mxu0 0
  %68 = vmatpush1.bf16.msra.mxu0 0
  %69 = vmatprep.subr.bf16.mxu0 0
  %70 = vmatpush1.bf16.msra.mxu0 0
  %71 = vmatprep.subr.bf16.mxu0 0
  %72 = vmatpush1.bf16.msra.mxu0 0
  %73 = vmatprep.subr.bf16.mxu0 0
  %74 = vmatpush1.bf16.msra.mxu0 0
  %75 = vmatprep.subr.bf16.mxu0 0
  %76 = vmatpush1.bf16.msra.mxu0 0
  %77 = vmatprep.subr.bf16.mxu0 0
  %78 = vmatpush1.bf16.msra.mxu0 0
  %79 = vmatprep.subr.bf16.mxu0 0
  %80 = vmatpush1.bf16.msra.mxu0 0
  %81 = vmatprep.mubr.bf16.mxu0 0
  %82 = vmatmul.mubr.bf16.gmra.mrb[0].mxu0 %v47
  %v83 = vpop.f32.mrb[0].mxu0
  %v84 = vadd.f32 %v26, %v83
  %v85 = vpop.f32.mrb[0].mxu0
  %v86 = vpop.f32.mrb[0].mxu0
  %v87 = vadd.f32 %v26, %v86
  %v88 = vpop.f32.mrb[0].mxu0
  %89 = vdwg.mxu0
  %v90 = vpack.c.bf16 %v87, %v84
  %v92 = vunpack.c.l.b16 %v90
  %v93 = vunpack.c.h.b16 %v90
  %v94 = vpack.c.b16 %v92, %v92
  %v95 = vpack.c.b16 %v93, %v93
  %vm98 = vcmask 781312
  %99 = vst.msk [vmem:[%s3] sm:$0xf] %vm98, %v94
  %100 = vst.msk [vmem:[%s3 + $0x4] sm:$0xf] %vm98, %v95
  // Predicated region
  $region14: #{forward.27} parent=0 // pred_check
    _
  $region15: #{forward.27} parent=0 // pred_check_branch
    %102 = sbr.rel (0) target = $region17
  $region16: #{forward.27} parent=0 // pred_region
    _
  $region17: #{forward.27} parent=0 // pred_fallthru
    _
  // Predicated region
  $region18: #{forward.27} parent=0 // pred_check
    _
  $region19: #{forward.27} parent=0 // pred_check_branch
    %104 = sbr.rel (0) target = $region21
  $region20: #{forward.27} parent=0 // pred_region
    _
  $region21: #{forward.27} parent=0 // pred_fallthru
    _

// kernel: forward.33
$region0: #{forward.33}
  #allocation0 [shape = 'u32[]', space=smem, size = 0x4, offset = 0x4, fixed_abs, tag = 'smem constant byte address 0x4 - core index']
  #allocation1 [shape = 'u32[144,128]{1,0:T(1,128)}', space=vmem, size = 0x12000, scoped, tag = 'internal scratch']
  %s0 = inlined_call_operand.vmem [shape: bf16[16,32], index: 0, kind: input, shape index: {}]
  %s1 = inlined_call_operand.vmem [shape: f32[1,32], index: 1, kind: input, shape index: {}]
  %s2 = inlined_call_operand.vmem [shape: f32[1,32], index: 2, kind: input, shape index: {}]
  %s3 = inlined_call_operand.vmem [shape: bf16[16,32], index: 3, kind: output, shape index: {}]
  %s4 = sld [smem:[#allocation0]]
  $region22: #{forward.33} parent=0
    _
  %s6 = ssub.s32 1, %s4
  %s7 = scalar_select 0, %s6, %s4
  // Predicated region
  $region2: #{forward.33} parent=0 // pred_check
    _
  $region3: #{forward.33} parent=0 // pred_check_branch
    %9 = sbr.rel (0) target = $region5
  $region4: #{forward.33} parent=0 // pred_region
    _
  $region5: #{forward.33} parent=0 // pred_fallthru
    _
  // Predicated region
  $region6: #{forward.33} parent=0 // pred_check
    _
  $region7: #{forward.33} parent=0 // pred_check_branch
    %11 = sbr.rel (0) target = $region9
  $region8: #{forward.33} parent=0 // pred_region
    _
  $region9: #{forward.33} parent=0 // pred_fallthru
    _
  // Predicated region
  $region10: #{forward.33} parent=0 // pred_check
    _
  $region11: #{forward.33} parent=0 // pred_check_branch
    %13 = sbr.rel (0) target = $region13
  $region12: #{forward.33} parent=0 // pred_region
    _
  $region13: #{forward.33} parent=0 // pred_fallthru
    _
  %v14 = vld [vmem:[%s0] sm:$0xf]
  %v15 = vld [vmem:[%s0 + $0x4] sm:$0xf]
  %v16 = vunpack.c.l.bf16 %v14
  %v17 = vunpack.c.l.bf16 %v15
  %v18 = vld [vmem:[%s1] sm:$0x1]
  %v19 = vld [vmem:[%s2] sm:$0x1]
  %vm20 = vcmask 261120
  %v21 = vsel %vm20, %v16, 0.0
  %22 = vadd.xlane.f32.xlu0 %v21
  %v23 = vpop.xlane.xlu0 %22
  %v24 = vsel %vm20, %v17, 0.0
  %25 = vadd.xlane.f32.xlu0 %v24
  %v26 = vpop.xlane.xlu0 %25
  %v27 = vrcp.pop 32.0
  %v28 = vmul.f32 %v23, %v27
  %v29 = vmul.f32 %v26, %v27
  %v30 = vsub.f32 %v16, %v28
  %v31 = vsub.f32 %v17, %v29
  %v32 = vmul.f32 %v30, %v30
  %v33 = vmul.f32 %v31, %v31
  %v34 = vsel %vm20, %v32, 0.0
  %35 = vadd.xlane.f32.xlu0 %v34
  %v36 = vpop.xlane.xlu0 %35
  %v37 = vsel %vm20, %v33, 0.0
  %38 = vadd.xlane.f32.xlu0 %v37
  %v39 = vpop.xlane.xlu0 %38
  %v40 = vmul.f32 %v36, %v27
  %v41 = vmul.f32 %v39, %v27
  %v42 = vadd.f32 %v40, 1e-05
  %v43 = vadd.f32 %v41, 1e-05
  %v44 = vrsqrt.pop %v42
  %v45 = vrsqrt.pop %v43
  %v46 = vmul.f32 %v30, %v44
  %v47 = vmul.f32 %v31, %v45
  %v49 = vlaneseq
  %v50 = vshrl.u32 %v49, 7
  %v51 = vsub.s32 0, %v50
  %v52 = vrot.slane %v18, %v51
  %v54 = vmul.f32 %v46, %v52
  %v55 = vmul.f32 %v47, %v52
  %v57 = vlaneseq
  %v58 = vshrl.u32 %v57, 7
  %v59 = vsub.s32 0, %v58
  %v60 = vrot.slane %v19, %v59
  %v62 = vadd.f32 %v54, %v60
  %v63 = vadd.f32 %v55, %v60
  %v64 = vpack.c.bf16 %v63, %v62
  %v66 = vunpack.c.l.b16 %v64
  %v67 = vunpack.c.h.b16 %v64
  %v68 = vpack.c.b16 %v66, %v66
  %v69 = vpack.c.b16 %v67, %v67
  %vm72 = vcmask 257024
  %73 = vst.msk [vmem:[%s3] sm:$0xf] %vm72, %v68
  %74 = vst.msk [vmem:[%s3 + $0x4] sm:$0xf] %vm72, %v69
  // Predicated region
  $region14: #{forward.33} parent=0 // pred_check
    _
  $region15: #{forward.33} parent=0 // pred_check_branch
    %76 = sbr.rel (0) target = $region17
  $region16: #{forward.33} parent=0 // pred_region
    _
  $region17: #{forward.33} parent=0 // pred_fallthru
    _
  // Predicated region
  $region18: #{forward.33} parent=0 // pred_check
    _
  $region19: #{forward.33} parent=0 // pred_check_branch
    %78 = sbr.rel (0) target = $region21
  $region20: #{forward.33} parent=0 // pred_region
    _
  $region21: #{forward.33} parent=0 // pred_fallthru
    _

// kernel: forward.29
$region0: #{forward.29}
  #allocation0 [shape = 'u32[]', space=smem, size = 0x4, offset = 0x4, fixed_abs, tag = 'smem constant byte address 0x4 - core index']
  #allocation1 [shape = 'u32[144,128]{1,0:T(1,128)}', space=vmem, size = 0x12000, scoped, tag = 'internal scratch']
  %s0 = inlined_call_operand.vmem [shape: bf16[16,32], index: 0, kind: input, shape index: {}]
  %s1 = inlined_call_operand.vmem [shape: bf16[32,64], index: 1, kind: input, shape index: {}]
  %s2 = inlined_call_operand.vmem [shape: f32[1,64], index: 2, kind: input, shape index: {}]
  %s3 = inlined_call_operand.vmem [shape: bf16[64,32], index: 3, kind: input, shape index: {}]
  %s4 = inlined_call_operand.vmem [shape: f32[1,32], index: 4, kind: input, shape index: {}]
  %s5 = inlined_call_operand.vmem [shape: f32[1,32], index: 5, kind: input, shape index: {}]
  %s6 = inlined_call_operand.vmem [shape: f32[1,32], index: 6, kind: input, shape index: {}]
  %s7 = inlined_call_operand.vmem [shape: bf16[16,32], index: 7, kind: output, shape index: {}]
  %s8 = sld [smem:[#allocation0]]
  $region38: #{forward.29} parent=0
    _
  %s10 = ssub.s32 1, %s8
  %s11 = scalar_select 0, %s10, %s8
  // Predicated region
  $region2: #{forward.29} parent=0 // pred_check
    _
  $region3: #{forward.29} parent=0 // pred_check_branch
    %13 = sbr.rel (0) target = $region5
  $region4: #{forward.29} parent=0 // pred_region
    _
  $region5: #{forward.29} parent=0 // pred_fallthru
    _
  // Predicated region
  $region6: #{forward.29} parent=0 // pred_check
    _
  $region7: #{forward.29} parent=0 // pred_check_branch
    %15 = sbr.rel (0) target = $region9
  $region8: #{forward.29} parent=0 // pred_region
    _
  $region9: #{forward.29} parent=0 // pred_fallthru
    _
  // Predicated region
  $region10: #{forward.29} parent=0 // pred_check
    _
  $region11: #{forward.29} parent=0 // pred_check_branch
    %17 = sbr.rel (0) target = $region13
  $region12: #{forward.29} parent=0 // pred_region
    _
  $region13: #{forward.29} parent=0 // pred_fallthru
    _
  // Predicated region
  $region14: #{forward.29} parent=0 // pred_check
    _
  $region15: #{forward.29} parent=0 // pred_check_branch
    %19 = sbr.rel (0) target = $region17
  $region16: #{forward.29} parent=0 // pred_region
    _
  $region17: #{forward.29} parent=0 // pred_fallthru
    _
  // Predicated region
  $region18: #{forward.29} parent=0 // pred_check
    _
  $region19: #{forward.29} parent=0 // pred_check_branch
    %21 = sbr.rel (0) target = $region21
  $region20: #{forward.29} parent=0 // pred_region
    _
  $region21: #{forward.29} parent=0 // pred_fallthru
    _
  // Predicated region
  $region22: #{forward.29} parent=0 // pred_check
    _
  $region23: #{forward.29} parent=0 // pred_check_branch
    %23 = sbr.rel (0) target = $region25
  $region24: #{forward.29} parent=0 // pred_region
    _
  $region25: #{forward.29} parent=0 // pred_fallthru
    _
  // Predicated region
  $region26: #{forward.29} parent=0 // pred_check
    _
  $region27: #{forward.29} parent=0 // pred_check_branch
    %25 = sbr.rel (0) target = $region29
  $region28: #{forward.29} parent=0 // pred_region
    _
  $region29: #{forward.29} parent=0 // pred_fallthru
    _
  %v27 = vld [vmem:[%s0] sm:$0xf]
  %v28 = vld [vmem:[%s0 + $0x4] sm:$0xf]
  %v29 = vld [vmem:[%s1] sm:$0xf]
  %v30 = vld [vmem:[%s1 + $0x4] sm:$0xf]
  %v31 = vld [vmem:[%s1 + $0x8] sm:$0xf]
  %v32 = vld [vmem:[%s1 + $0xc] sm:$0xf]
  %v33 = vld [vmem:[%s2] sm:$0x1]
  %v35 = vlaneseq
  %v36 = vshrl.u32 %v35, 7
  %v37 = vsub.s32 0, %v36
  %v38 = vrot.slane %v33, %v37
  %v42 = vunpack.c.l.b16 %v27
  %v43 = vunpack.c.l.b16 %v28
  %v44 = vpack.c.b16 %v43, %v42
  %v49 = vunpack.c.l.b16 %v29
  %v50 = vunpack.c.l.b16 %v30
  %v51 = vunpack.c.l.b16 %v31
  %v52 = vunpack.c.l.b16 %v32
  %v53 = vpack.c.b16 %v50, %v49
  %v54 = vpack.c.b16 %v52, %v51
  %vm57 = vcmask 261120
  %v59 = vsel %vm57, %v44, 0
  %61 = vmatprep.subr.bf16.mxu0 0
  %62 = vmatpush1.bf16.msra.mxu0 %v53
  %63 = vmatprep.subr.bf16.mxu0 0
  %64 = vmatpush1.bf16.msra.mxu0 %v54
  %65 = vmatprep.subr.bf16.mxu0 0
  %66 = vmatpush1.bf16.msra.mxu0 0
  %67 = vmatprep.subr.bf16.mxu0 0
  %68 = vmatpush1.bf16.msra.mxu0 0
  %69 = vmatprep.subr.bf16.mxu0 0
  %70 = vmatpush1.bf16.msra.mxu0 0
  %71 = vmatprep.subr.bf16.mxu0 0
  %72 = vmatpush1.bf16.msra.mxu0 0
  %73 = vmatprep.subr.bf16.mxu0 0
  %74 = vmatpush1.bf16.msra.mxu0 0
  %75 = vmatprep.subr.bf16.mxu0 0
  %76 = vmatpush1.bf16.msra.mxu0 0
  %77 = vmatprep.subr.bf16.mxu0 0
  %78 = vmatpush1.bf16.msra.mxu0 0
  %79 = vmatprep.subr.bf16.mxu0 0
  %80 = vmatpush1.bf16.msra.mxu0 0
  %81 = vmatprep.subr.bf16.mxu0 0
  %82 = vmatpush1.bf16.msra.mxu0 0
  %83 = vmatprep.subr.bf16.mxu0 0
  %84 = vmatpush1.bf16.msra.mxu0 0
  %85 = vmatprep.subr.bf16.mxu0 0
  %86 = vmatpush1.bf16.msra.mxu0 0
  %87 = vmatprep.subr.bf16.mxu0 0
  %88 = vmatpush1.bf16.msra.mxu0 0
  %89 = vmatprep.subr.bf16.mxu0 0
  %90 = vmatpush1.bf16.msra.mxu0 0
  %91 = vmatprep.subr.bf16.mxu0 0
  %92 = vmatpush1.bf16.msra.mxu0 0
  %93 = vmatprep.mubr.bf16.mxu0 0
  %94 = vmatmul.mubr.bf16.gmra.mrb[0].mxu0 %v59
  %v95 = vpop.f32.mrb[0].mxu0
  %v96 = vadd.f32 %v38, %v95
  %v97 = vpop.f32.mrb[0].mxu0
  %v98 = vpop.f32.mrb[0].mxu0
  %v99 = vadd.f32 %v38, %v98
  %v100 = vpop.f32.mrb[0].mxu0
  %101 = vdwg.mxu0
  %v102 = vmax.f32 %v96, 0.0
  %v103 = vmax.f32 %v99, 0.0
  %v104 = vpack.c.bf16 %v103, %v102
  %v105 = vld [vmem:[%s3] sm:$0xf]
  %v106 = vld [vmem:[%s3 + $0x4] sm:$0xf]
  %v107 = vld [vmem:[%s3 + $0x8] sm:$0xf]
  %v108 = vld [vmem:[%s3 + $0xc] sm:$0xf]
  %v109 = vld [vmem:[%s3 + $0x10] sm:$0xf]
  %v110 = vld [vmem:[%s3 + $0x14] sm:$0xf]
  %v111 = vld [vmem:[%s3 + $0x18] sm:$0xf]
  %v112 = vld [vmem:[%s3 + $0x1c] sm:$0xf]
  %v113 = vld [vmem:[%s4] sm:$0x1]
  %v115 = vlaneseq
  %v116 = vshrl.u32 %v115, 7
  %v117 = vsub.s32 0, %v116
  %v118 = vrot.slane %v113, %v117
  %v128 = vunpack.c.l.b16 %v105
  %v129 = vunpack.c.l.b16 %v106
  %v130 = vunpack.c.l.b16 %v107
  %v131 = vunpack.c.l.b16 %v108
  %v132 = vunpack.c.l.b16 %v109
  %v133 = vunpack.c.l.b16 %v110
  %v134 = vunpack.c.l.b16 %v111
  %v135 = vunpack.c.l.b16 %v112
  %v136 = vpack.c.b16 %v129, %v128
  %v137 = vpack.c.b16 %v131, %v130
  %v138 = vpack.c.b16 %v133, %v132
  %v139 = vpack.c.b16 %v135, %v134
  %vm144 = vcmask 523264
  %v146 = vsel %vm144, %v104, 0
  %148 = vmatprep.subr.bf16.mxu0 0
  %149 = vmatpush1.bf16.msra.mxu0 %v136
  %150 = vmatprep.subr.bf16.mxu0 0
  %151 = vmatpush1.bf16.msra.mxu0 %v137
  %152 = vmatprep.subr.bf16.mxu0 0
  %153 = vmatpush1.bf16.msra.mxu0 %v138
  %154 = vmatprep.subr.bf16.mxu0 0
  %155 = vmatpush1.bf16.msra.mxu0 %v139
  %156 = vmatprep.subr.bf16.mxu0 0
  %157 = vmatpush1.bf16.msra.mxu0 0
  %158 = vmatprep.subr.bf16.mxu0 0
  %159 = vmatpush1.bf16.msra.mxu0 0
  %160 = vmatprep.subr.bf16.mxu0 0
  %161 = vmatpush1.bf16.msra.mxu0 0
  %162 = vmatprep.subr.bf16.mxu0 0
  %163 = vmatpush1.bf16.msra.mxu0 0
  %164 = vmatprep.subr.bf16.mxu0 0
  %165 = vmatpush1.bf16.msra.mxu0 0
  %166 = vmatprep.subr.bf16.mxu0 0
  %167 = vmatpush1.bf16.msra.mxu0 0
  %168 = vmatprep.subr.bf16.mxu0 0
  %169 = vmatpush1.bf16.msra.mxu0 0
  %170 = vmatprep.subr.bf16.mxu0 0
  %171 = vmatpush1.bf16.msra.mxu0 0
  %172 = vmatprep.subr.bf16.mxu0 0
  %173 = vmatpush1.bf16.msra.mxu0 0
  %174 = vmatprep.subr.bf16.mxu0 0
  %175 = vmatpush1.bf16.msra.mxu0 0
  %176 = vmatprep.subr.bf16.mxu0 0
  %177 = vmatpush1.bf16.msra.mxu0 0
  %178 = vmatprep.subr.bf16.mxu0 0
  %179 = vmatpush1.bf16.msra.mxu0 0
  %180 = vmatprep.mubr.bf16.mxu0 0
  %181 = vmatmul.mubr.bf16.gmra.mrb[0].mxu0 %v146
  %v182 = vpop.f32.mrb[0].mxu0
  %v183 = vadd.f32 %v118, %v182
  %v184 = vpop.f32.mrb[0].mxu0
  %v185 = vpop.f32.mrb[0].mxu0
  %v186 = vadd.f32 %v118, %v185
  %v187 = vpop.f32.mrb[0].mxu0
  %188 = vdwg.mxu0
  %v189 = vunpack.c.l.bf16 %v27
  %v190 = vunpack.c.l.bf16 %v28
  %v191 = vadd.f32 %v183, %v189
  %v192 = vadd.f32 %v186, %v190
  %v193 = vld [vmem:[%s5] sm:$0x1]
  %v194 = vld [vmem:[%s6] sm:$0x1]
  %v195 = vsel %vm57, %v191, 0.0
  %196 = vadd.xlane.f32.xlu0 %v195
  %v197 = vpop.xlane.xlu0 %196
  %v198 = vsel %vm57, %v192, 0.0
  %199 = vadd.xlane.f32.xlu0 %v198
  %v200 = vpop.xlane.xlu0 %199
  %v201 = vrcp.pop 32.0
  %v202 = vmul.f32 %v197, %v201
  %v203 = vmul.f32 %v200, %v201
  %v204 = vsub.f32 %v191, %v202
  %v205 = vsub.f32 %v192, %v203
  %v206 = vmul.f32 %v204, %v204
  %v207 = vmul.f32 %v205, %v205
  %v208 = vsel %vm57, %v206, 0.0
  %209 = vadd.xlane.f32.xlu0 %v208
  %v210 = vpop.xlane.xlu0 %209
  %v211 = vsel %vm57, %v207, 0.0
  %212 = vadd.xlane.f32.xlu0 %v211
  %v213 = vpop.xlane.xlu0 %212
  %v214 = vmul.f32 %v210, %v201
  %v215 = vmul.f32 %v213, %v201
  %v216 = vadd.f32 %v214, 1e-05
  %v217 = vadd.f32 %v215, 1e-05
  %v218 = vrsqrt.pop %v216
  %v219 = vrsqrt.pop %v217
  %v220 = vmul.f32 %v204, %v218
  %v221 = vmul.f32 %v205, %v219
  %v223 = vlaneseq
  %v224 = vshrl.u32 %v223, 7
  %v225 = vsub.s32 0, %v224
  %v226 = vrot.slane %v193, %v225
  %v228 = vmul.f32 %v220, %v226
  %v229 = vmul.f32 %v221, %v226
  %v231 = vlaneseq
  %v232 = vshrl.u32 %v231, 7
  %v233 = vsub.s32 0, %v232
  %v234 = vrot.slane %v194, %v233
  %v236 = vadd.f32 %v228, %v234
  %v237 = vadd.f32 %v229, %v234
  %v238 = vpack.c.bf16 %v237, %v236
  %v240 = vunpack.c.l.b16 %v238
  %v241 = vunpack.c.h.b16 %v238
  %v242 = vpack.c.b16 %v240, %v240
  %v243 = vpack.c.b16 %v241, %v241
  %vm246 = vcmask 257024
  %247 = vst.msk [vmem:[%s7] sm:$0xf] %vm246, %v242
  %248 = vst.msk [vmem:[%s7 + $0x4] sm:$0xf] %vm246, %v243
  // Predicated region
  $region30: #{forward.29} parent=0 // pred_check
    _
  $region31: #{forward.29} parent=0 // pred_check_branch
    %250 = sbr.rel (0) target = $region33
  $region32: #{forward.29} parent=0 // pred_region
    _
  $region33: #{forward.29} parent=0 // pred_fallthru
    _
  // Predicated region
  $region34: #{forward.29} parent=0 // pred_check
    _
  $region35: #{forward.29} parent=0 // pred_check_branch
    %252 = sbr.rel (0) target = $region37
  $region36: #{forward.29} parent=0 // pred_region
    _
  $region37: #{forward.29} parent=0 // pred_fallthru
    _

// kernel: forward.37
$region0: #{forward.37}
  #allocation0 [shape = 'u32[]', space=smem, size = 0x4, offset = 0x4, fixed_abs, tag = 'smem constant byte address 0x4 - core index']
  #allocation1 [shape = 'u32[144,128]{1,0:T(1,128)}', space=vmem, size = 0x12000, scoped, tag = 'internal scratch']
  %s0 = inlined_call_operand.vmem [shape: bf16[16,32], index: 0, kind: input, shape index: {}]
  %s1 = inlined_call_operand.vmem [shape: bf16[32,64], index: 1, kind: input, shape index: {}]
  %s2 = inlined_call_operand.vmem [shape: f32[1,64], index: 2, kind: input, shape index: {}]
  %s3 = inlined_call_operand.vmem [shape: bf16[16,64], index: 3, kind: output, shape index: {}]
  %s4 = sld [smem:[#allocation0]]
  $region22: #{forward.37} parent=0
    _
  %s6 = ssub.s32 1, %s4
  %s7 = scalar_select 0, %s6, %s4
  // Predicated region
  $region2: #{forward.37} parent=0 // pred_check
    _
  $region3: #{forward.37} parent=0 // pred_check_branch
    %9 = sbr.rel (0) target = $region5
  $region4: #{forward.37} parent=0 // pred_region
    _
  $region5: #{forward.37} parent=0 // pred_fallthru
    _
  // Predicated region
  $region6: #{forward.37} parent=0 // pred_check
    _
  $region7: #{forward.37} parent=0 // pred_check_branch
    %11 = sbr.rel (0) target = $region9
  $region8: #{forward.37} parent=0 // pred_region
    _
  $region9: #{forward.37} parent=0 // pred_fallthru
    _
  // Predicated region
  $region10: #{forward.37} parent=0 // pred_check
    _
  $region11: #{forward.37} parent=0 // pred_check_branch
    %13 = sbr.rel (0) target = $region13
  $region12: #{forward.37} parent=0 // pred_region
    _
  $region13: #{forward.37} parent=0 // pred_fallthru
    _
  %v15 = vld [vmem:[%s0] sm:$0xf]
  %v16 = vld [vmem:[%s0 + $0x4] sm:$0xf]
  %v17 = vld [vmem:[%s1] sm:$0xf]
  %v18 = vld [vmem:[%s1 + $0x4] sm:$0xf]
  %v19 = vld [vmem:[%s1 + $0x8] sm:$0xf]
  %v20 = vld [vmem:[%s1 + $0xc] sm:$0xf]
  %v21 = vld [vmem:[%s2] sm:$0x1]
  %v23 = vlaneseq
  %v24 = vshrl.u32 %v23, 7
  %v25 = vsub.s32 0, %v24
  %v26 = vrot.slane %v21, %v25
  %v30 = vunpack.c.l.b16 %v15
  %v31 = vunpack.c.l.b16 %v16
  %v32 = vpack.c.b16 %v31, %v30
  %v37 = vunpack.c.l.b16 %v17
  %v38 = vunpack.c.l.b16 %v18
  %v39 = vunpack.c.l.b16 %v19
  %v40 = vunpack.c.l.b16 %v20
  %v41 = vpack.c.b16 %v38, %v37
  %v42 = vpack.c.b16 %v40, %v39
  %vm45 = vcmask 261120
  %v47 = vsel %vm45, %v32, 0
  %49 = vmatprep.subr.bf16.mxu0 0
  %50 = vmatpush1.bf16.msra.mxu0 %v41
  %51 = vmatprep.subr.bf16.mxu0 0
  %52 = vmatpush1.bf16.msra.mxu0 %v42
  %53 = vmatprep.subr.bf16.mxu0 0
  %54 = vmatpush1.bf16.msra.mxu0 0
  %55 = vmatprep.subr.bf16.mxu0 0
  %56 = vmatpush1.bf16.msra.mxu0 0
  %57 = vmatprep.subr.bf16.mxu0 0
  %58 = vmatpush1.bf16.msra.mxu0 0
  %59 = vmatprep.subr.bf16.mxu0 0
  %60 = vmatpush1.bf16.msra.mxu0 0
  %61 = vmatprep.subr.bf16.mxu0 0
  %62 = vmatpush1.bf16.msra.mxu0 0
  %63 = vmatprep.subr.bf16.mxu0 0
  %64 = vmatpush1.bf16.msra.mxu0 0
  %65 = vmatprep.subr.bf16.mxu0 0
  %66 = vmatpush1.bf16.msra.mxu0 0
  %67 = vmatprep.subr.bf16.mxu0 0
  %68 = vmatpush1.bf16.msra.mxu0 0
  %69 = vmatprep.subr.bf16.mxu0 0
  %70 = vmatpush1.bf16.msra.mxu0 0
  %71 = vmatprep.subr.bf16.mxu0 0
  %72 = vmatpush1.bf16.msra.mxu0 0
  %73 = vmatprep.subr.bf16.mxu0 0
  %74 = vmatpush1.bf16.msra.mxu0 0
  %75 = vmatprep.subr.bf16.mxu0 0
  %76 = vmatpush1.bf16.msra.mxu0 0
  %77 = vmatprep.subr.bf16.mxu0 0
  %78 = vmatpush1.bf16.msra.mxu0 0
  %79 = vmatprep.subr.bf16.mxu0 0
  %80 = vmatpush1.bf16.msra.mxu0 0
  %81 = vmatprep.mubr.bf16.mxu0 0
  %82 = vmatmul.mubr.bf16.gmra.mrb[0].mxu0 %v47
  %v83 = vpop.f32.mrb[0].mxu0
  %v84 = vadd.f32 %v26, %v83
  %v85 = vpop.f32.mrb[0].mxu0
  %v86 = vpop.f32.mrb[0].mxu0
  %v87 = vadd.f32 %v26, %v86
  %v88 = vpop.f32.mrb[0].mxu0
  %89 = vdwg.mxu0
  %v90 = vpack.c.bf16 %v87, %v84
  %v92 = vunpack.c.l.b16 %v90
  %v93 = vunpack.c.h.b16 %v90
  %v94 = vpack.c.b16 %v92, %v92
  %v95 = vpack.c.b16 %v93, %v93
  %vm98 = vcmask 519168
  %99 = vst.msk [vmem:[%s3] sm:$0xf] %vm98, %v94
  %100 = vst.msk [vmem:[%s3 + $0x4] sm:$0xf] %vm98, %v95
  // Predicated region
  $region14: #{forward.37} parent=0 // pred_check
    _
  $region15: #{forward.37} parent=0 // pred_check_branch
    %102 = sbr.rel (0) target = $region17
  $region16: #{forward.37} parent=0 // pred_region
    _
  $region17: #{forward.37} parent=0 // pred_fallthru
    _
  // Predicated region
  $region18: #{forward.37} parent=0 // pred_check
    _
  $region19: #{forward.37} parent=0 // pred_check_branch
    %104 = sbr.rel (0) target = $region21
  $region20: #{forward.37} parent=0 // pred_region
    _
  $region21: #{forward.37} parent=0 // pred_fallthru
    _

// kernel: forward.28
$region0: #{forward.28}
  #allocation0 [shape = 'u32[]', space=smem, size = 0x4, offset = 0x4, fixed_abs, tag = 'smem constant byte address 0x4 - core index']
  #allocation1 [shape = 'u32[144,128]{1,0:T(1,128)}', space=vmem, size = 0x12000, scoped, tag = 'internal scratch']
  %s0 = inlined_call_operand.vmem [shape: bf16[2,8,96], index: 0, kind: input, shape index: {}]
  %s1 = inlined_call_operand.vmem [shape: f32[2,1,8], index: 1, kind: input, shape index: {}]
  %s2 = inlined_call_operand.vmem [shape: bf16[32,32], index: 2, kind: input, shape index: {}]
  %s3 = inlined_call_operand.vmem [shape: f32[1,32], index: 3, kind: input, shape index: {}]
  %s4 = inlined_call_operand.vmem [shape: bf16[2,8,32], index: 4, kind: input, shape index: {}]
  %s5 = inlined_call_operand.vmem [shape: f32[1,32], index: 5, kind: input, shape index: {}]
  %s6 = inlined_call_operand.vmem [shape: f32[1,32], index: 6, kind: input, shape index: {}]
  %s7 = inlined_call_operand.vmem [shape: bf16[2,8,32], index: 7, kind: output, shape index: {}]
  %s8 = sld [smem:[#allocation0]]
  $region61: #{forward.28} parent=0
    _
  %s10 = ssub.s32 1, %s8
  %s11 = scalar_select 0, %s10, %s8
  loop: start=0, step=1, limit=4
  $region2: #{forward.28} parent=0 // loop_pre_header
    _
  $region3: #{forward.28} parent=0 // loop_header
    %s13 = sphi 0, %s17
    %p14 = scmp.ge.s32.totalorder %s13, 4
    %s23 = sphi 0, %s25
    %s26 = sphi 0, %s23
    %s27 = sphi 0, %s26
    %s43 = sphi 0, %s27
    %s49 = sphi 0, %s51
    %s52 = sphi 0, %s49
    %s53 = sphi 0, %s52
    %s69 = sphi 0, %s53
    %s73 = sphi 0, %s73
    %s75 = sphi 0, %s73
    %s76 = sphi 0, %s75
    %s90 = sphi 0, %s76
    %s94 = sphi 0, %s94
    %s96 = sphi 0, %s94
    %s97 = sphi 0, %s96
    %s111 = sphi 0, %s97
    %s117 = sphi 0, %s119
    %s120 = sphi 0, %s117
    %s121 = sphi 0, %s120
    %s137 = sphi 0, %s121
    %s141 = sphi 0, %s141
    %s143 = sphi 0, %s141
    %s144 = sphi 0, %s143
    %s158 = sphi 0, %s144
    %s162 = sphi 0, %s162
    %s164 = sphi 0, %s162
    %s165 = sphi 0, %s164
    %s179 = sphi 0, %s165
    %s185 = sphi 0, %s187
    %s188 = sphi 0, %s185
    %s189 = sphi 0, %s188
    %s205 = sphi 0, %s189
  $region4: #{forward.28} parent=0 // loop_header_branch
    %16 = sbr.rel (%p14) target = $region8
  $region5: #{forward.28} parent=0 // loop_body
    %s18 = ssub.s32 %s13, 1
    %s19 = ssub.s32 %s13, 2
    %s20 = sadd.s32 %s13, 1
    %s21 = ssub.s32 %s13, %s20
    %p22 = scmp.eq.s32.totalorder %s21, 0
    %s24 = sadd.s32 %s23, 1
    %s25 = scalar_select %p22, %s23, %s24
    %p28 = pneg %p22
    %p29 = scmp.eq.s32.totalorder %s13, 1
    %p30 = por %p28, %p29
    %p31 = scmp.ne.s32.totalorder %s23, %s26
    %p32 = scmp.eq.s32.totalorder %s13, 0
    %p33 = por %p31, %p32
    %p34 = scmp.ne.s32.totalorder %s23, %s26
    %p35 = scmp.eq.s32.totalorder %s18, 1
    %p36 = por %p34, %p35
    %p37 = scmp.ne.s32.totalorder %s26, %s27
    %p38 = scmp.eq.s32.totalorder %s18, 0
    %p39 = por %p37, %p38
    %p40 = scmp.ne.s32.totalorder %s26, %s27
    %p41 = scmp.eq.s32.totalorder %s19, 1
    %p42 = por %p40, %p41
    %p44 = scmp.ne.s32.totalorder %s27, %s43
    %p45 = scmp.eq.s32.totalorder %s19, 0
    %p46 = por %p44, %p45
    %s47 = ssub.s32 %s13, %s20
    %p48 = scmp.eq.s32.totalorder %s47, 0
    %s50 = sadd.s32 %s49, 1
    %s51 = scalar_select %p48, %s49, %s50
    %p54 = pneg %p48
    %p55 = scmp.eq.s32.totalorder %s13, 1
    %p56 = por %p54, %p55
    %p57 = scmp.ne.s32.totalorder %s49, %s52
    %p58 = scmp.eq.s32.totalorder %s13, 0
    %p59 = por %p57, %p58
    %p60 = scmp.ne.s32.totalorder %s49, %s52
    %p61 = scmp.eq.s32.totalorder %s18, 1
    %p62 = por %p60, %p61
    %p63 = scmp.ne.s32.totalorder %s52, %s53
    %p64 = scmp.eq.s32.totalorder %s18, 0
    %p65 = por %p63, %p64
    %p66 = scmp.ne.s32.totalorder %s52, %s53
    %p67 = scmp.eq.s32.totalorder %s19, 1
    %p68 = por %p66, %p67
    %p70 = scmp.ne.s32.totalorder %s53, %s69
    %p71 = scmp.eq.s32.totalorder %s19, 0
    %p72 = por %p70, %p71
    %s74 = sadd.s32 %s73, 1
    %p77 = scmp.eq.s32.totalorder %s13, 1
    %p78 = scmp.ne.s32.totalorder %s73, %s75
    %p79 = scmp.eq.s32.totalorder %s13, 0
    %p80 = por %p78, %p79
    %p81 = scmp.ne.s32.totalorder %s73, %s75
    %p82 = scmp.eq.s32.totalorder %s18, 1
    %p83 = por %p81, %p82
    %p84 = scmp.ne.s32.totalorder %s75, %s76
    %p85 = scmp.eq.s32.totalorder %s18, 0
    %p86 = por %p84, %p85
    %p87 = scmp.ne.s32.totalorder %s75, %s76
    %p88 = scmp.eq.s32.totalorder %s19, 1
    %p89 = por %p87, %p88
    %p91 = scmp.ne.s32.totalorder %s76, %s90
    %p92 = scmp.eq.s32.totalorder %s19, 0
    %p93 = por %p91, %p92
    %s95 = sadd.s32 %s94, 1
    %p98 = scmp.eq.s32.totalorder %s13, 1
    %p99 = scmp.ne.s32.totalorder %s94, %s96
    %p100 = scmp.eq.s32.totalorder %s13, 0
    %p101 = por %p99, %p100
    %p102 = scmp.ne.s32.totalorder %s94, %s96
    %p103 = scmp.eq.s32.totalorder %s18, 1
    %p104 = por %p102, %p103
    %p105 = scmp.ne.s32.totalorder %s96, %s97
    %p106 = scmp.eq.s32.totalorder %s18, 0
    %p107 = por %p105, %p106
    %p108 = scmp.ne.s32.totalorder %s96, %s97
    %p109 = scmp.eq.s32.totalorder %s19, 1
    %p110 = por %p108, %p109
    %p112 = scmp.ne.s32.totalorder %s97, %s111
    %p113 = scmp.eq.s32.totalorder %s19, 0
    %p114 = por %p112, %p113
    %s115 = ssub.s32 %s13, %s20
    %p116 = scmp.eq.s32.totalorder %s115, 0
    %s118 = sadd.s32 %s117, 1
    %s119 = scalar_select %p116, %s117, %s118
    %p122 = pneg %p116
    %p123 = scmp.eq.s32.totalorder %s13, 1
    %p124 = por %p122, %p123
    %p125 = scmp.ne.s32.totalorder %s117, %s120
    %p126 = scmp.eq.s32.totalorder %s13, 0
    %p127 = por %p125, %p126
    %p128 = scmp.ne.s32.totalorder %s117, %s120
    %p129 = scmp.eq.s32.totalorder %s18, 1
    %p130 = por %p128, %p129
    %p131 = scmp.ne.s32.totalorder %s120, %s121
    %p132 = scmp.eq.s32.totalorder %s18, 0
    %p133 = por %p131, %p132
    %p134 = scmp.ne.s32.totalorder %s120, %s121
    %p135 = scmp.eq.s32.totalorder %s19, 1
    %p136 = por %p134, %p135
    %p138 = scmp.ne.s32.totalorder %s121, %s137
    %p139 = scmp.eq.s32.totalorder %s19, 0
    %p140 = por %p138, %p139
    %s142 = sadd.s32 %s141, 1
    %p145 = scmp.eq.s32.totalorder %s13, 1
    %p146 = scmp.ne.s32.totalorder %s141, %s143
    %p147 = scmp.eq.s32.totalorder %s13, 0
    %p148 = por %p146, %p147
    %p149 = scmp.ne.s32.totalorder %s141, %s143
    %p150 = scmp.eq.s32.totalorder %s18, 1
    %p151 = por %p149, %p150
    %p152 = scmp.ne.s32.totalorder %s143, %s144
    %p153 = scmp.eq.s32.totalorder %s18, 0
    %p154 = por %p152, %p153
    %p155 = scmp.ne.s32.totalorder %s143, %s144
    %p156 = scmp.eq.s32.totalorder %s19, 1
    %p157 = por %p155, %p156
    %p159 = scmp.ne.s32.totalorder %s144, %s158
    %p160 = scmp.eq.s32.totalorder %s19, 0
    %p161 = por %p159, %p160
    %s163 = sadd.s32 %s162, 1
    %p166 = scmp.eq.s32.totalorder %s13, 1
    %p167 = scmp.ne.s32.totalorder %s162, %s164
    %p168 = scmp.eq.s32.totalorder %s13, 0
    %p169 = por %p167, %p168
    %p170 = scmp.ne.s32.totalorder %s162, %s164
    %p171 = scmp.eq.s32.totalorder %s18, 1
    %p172 = por %p170, %p171
    %p173 = scmp.ne.s32.totalorder %s164, %s165
    %p174 = scmp.eq.s32.totalorder %s18, 0
    %p175 = por %p173, %p174
    %p176 = scmp.ne.s32.totalorder %s164, %s165
    %p177 = scmp.eq.s32.totalorder %s19, 1
    %p178 = por %p176, %p177
    %p180 = scmp.ne.s32.totalorder %s165, %s179
    %p181 = scmp.eq.s32.totalorder %s19, 0
    %p182 = por %p180, %p181
    %s183 = ssub.s32 %s13, %s20
    %p184 = scmp.eq.s32.totalorder %s183, 0
    %s186 = sadd.s32 %s185, 1
    %s187 = scalar_select %p184, %s185, %s186
    %p190 = pneg %p184
    %p191 = scmp.eq.s32.totalorder %s13, 1
    %p192 = por %p190, %p191
    %p193 = scmp.ne.s32.totalorder %s185, %s188
    %p194 = scmp.eq.s32.totalorder %s13, 0
    %p195 = por %p193, %p194
    %p196 = scmp.ne.s32.totalorder %s185, %s188
    %p197 = scmp.eq.s32.totalorder %s18, 1
    %p198 = por %p196, %p197
    %p199 = scmp.ne.s32.totalorder %s188, %s189
    %p200 = scmp.eq.s32.totalorder %s18, 0
    %p201 = por %p199, %p200
    %p202 = scmp.ne.s32.totalorder %s188, %s189
    %p203 = scmp.eq.s32.totalorder %s19, 1
    %p204 = por %p202, %p203
    %p206 = scmp.ne.s32.totalorder %s189, %s205
    %p207 = scmp.eq.s32.totalorder %s19, 0
    %p208 = por %p206, %p207
    %p209 = scmp.le.s32.totalorder 1, %s13
    %p210 = scmp.lt.s32.totalorder %s13, 3
    %p211 = pnand %p209, %p210
    %p212 = pneg %p211
    // Predicated region
    $region9: #{forward.28} parent=5 // pred_check
      _
    $region10: #{forward.28} parent=5 // pred_check_branch
      %214 = sbr.rel (%p211) target = $region12
    $region11: #{forward.28} parent=5 // pred_region
      %s215 = ssub.s32 %s13, 1
      // Predicated region
      $region13: #{forward.28} parent=11 // pred_check
        %p216 = pneg %p86
      $region14: #{forward.28} parent=11 // pred_check_branch
        %218 = sbr.rel (%p216) target = $region16
      $region15: #{forward.28} parent=11 // pred_region
        _
      $region16: #{forward.28} parent=11 // pred_fallthru
        _
      // Predicated region
      $region17: #{forward.28} parent=11 // pred_check
        %p219 = pneg %p107
      $region18: #{forward.28} parent=11 // pred_check_branch
        %221 = sbr.rel (%p219) target = $region20
      $region19: #{forward.28} parent=11 // pred_region
        _
      $region20: #{forward.28} parent=11 // pred_fallthru
        _
      // Predicated region
      $region21: #{forward.28} parent=11 // pred_check
        %p222 = pneg %p154
      $region22: #{forward.28} parent=11 // pred_check_branch
        %224 = sbr.rel (%p222) target = $region24
      $region23: #{forward.28} parent=11 // pred_region
        _
      $region24: #{forward.28} parent=11 // pred_fallthru
        _
      // Predicated region
      $region25: #{forward.28} parent=11 // pred_check
        %p225 = pneg %p175
      $region26: #{forward.28} parent=11 // pred_check_branch
        %227 = sbr.rel (%p225) target = $region28
      $region27: #{forward.28} parent=11 // pred_region
        _
      $region28: #{forward.28} parent=11 // pred_fallthru
        _
    $region12: #{forward.28} parent=5 // pred_fallthru
      _
    %p228 = scmp.lt.s32.totalorder %s13, 2
    // Predicated region
    $region29: #{forward.28} parent=5 // pred_check
      %p229 = pneg %p228
    $region30: #{forward.28} parent=5 // pred_check_branch
      %231 = sbr.rel (%p229) target = $region32
    $region31: #{forward.28} parent=5 // pred_region
      // Predicated region
      $region33: #{forward.28} parent=31 // pred_check
        %p232 = pneg %p33
      $region34: #{forward.28} parent=31 // pred_check_branch
        %234 = sbr.rel (%p232) target = $region36
      $region35: #{forward.28} parent=31 // pred_region
        %p235 = scmp.lt.s32.totalorder %s13, 1
        %s236 = scalar_select %p235, %s13, 1
        %s237 = smul.addr %s236, 4
        %s238 = scalar_lea.vmem %s0, %s237
      $region36: #{forward.28} parent=31 // pred_fallthru
        _
      // Predicated region
      $region37: #{forward.28} parent=31 // pred_check
        %p239 = pneg %p59
      $region38: #{forward.28} parent=31 // pred_check_branch
        %241 = sbr.rel (%p239) target = $region40
      $region39: #{forward.28} parent=31 // pred_region
        %p242 = scmp.lt.s32.totalorder %s13, 1
        %s243 = scalar_select %p242, %s13, 1
        %s244 = scalar_lea.vmem %s1, %s243
      $region40: #{forward.28} parent=31 // pred_fallthru
        _
      // Predicated region
      $region41: #{forward.28} parent=31 // pred_check
        %p245 = pneg %p127
      $region42: #{forward.28} parent=31 // pred_check_branch
        %247 = sbr.rel (%p245) target = $region44
      $region43: #{forward.28} parent=31 // pred_region
        %p248 = scmp.lt.s32.totalorder %s13, 1
        %s249 = scalar_select %p248, %s13, 1
        %s250 = smul.addr %s249, 4
        %s251 = scalar_lea.vmem %s4, %s250
      $region44: #{forward.28} parent=31 // pred_fallthru
        _
    $region32: #{forward.28} parent=5 // pred_fallthru
      _
    %p252 = scmp.le.s32.totalorder 1, %s13
    %p253 = scmp.lt.s32.totalorder %s13, 3
    %p254 = pnand %p252, %p253
    %p255 = pneg %p254
    // Predicated region
    $region45: #{forward.28} parent=5 // pred_check
      _
    $region46: #{forward.28} parent=5 // pred_check_branch
      %257 = sbr.rel (%p254) target = $region48
    $region47: #{forward.28} parent=5 // pred_region
      %s258 = ssub.s32 %s13, 1
      %p259 = scmp.lt.s32.totalorder %s18, 1
      %s260 = scalar_select %p259, %s18, 1
      %s261 = smul.addr %s260, 4
      %s262 = scalar_lea.vmem %s0, %s261
      %p263 = pneg %p39
      %p264 = pneg %p36
      %p265 = scmp.lt.s32.totalorder %s18, 1
      %s266 = scalar_select %p265, %s18, 1
      %s267 = scalar_lea.vmem %s1, %s266
      %p268 = pneg %p65
      %p269 = pneg %p62
      %p270 = pneg %p86
      %p271 = pneg %p83
      %p272 = pneg %p107
      %p273 = pneg %p104
      %p274 = scmp.lt.s32.totalorder %s18, 1
      %s275 = scalar_select %p274, %s18, 1
      %s276 = smul.addr %s275, 4
      %s277 = scalar_lea.vmem %s4, %s276
      %p278 = pneg %p133
      %p279 = pneg %p130
      %p280 = pneg %p154
      %p281 = pneg %p151
      %p282 = pneg %p175
      %p283 = pneg %p172
      %p284 = pneg %p201
      %p285 = pneg %p198
      %p286 = scmp.lt.s32.totalorder %s18, 1
      %s287 = scalar_select %p286, %s18, 1
      %s288 = smul.addr %s287, 4
      %s289 = scalar_lea.vmem %s7, %s288
      %p290 = scmp.lt.s32.totalorder %s18, 1
      %s291 = scalar_select %p290, %s18, 1
      %s292 = smul.addr %s291, 4
      %s293 = scalar_lea.vmem %s0, %s292
      %p294 = scmp.lt.s32.totalorder %s18, 1
      %s295 = scalar_select %p294, %s18, 1
      %s296 = scalar_lea.vmem %s1, %s295
      %p297 = scmp.lt.s32.totalorder %s18, 1
      %s298 = scalar_select %p297, %s18, 1
      %s299 = smul.addr %s298, 4
      %s300 = scalar_lea.vmem %s4, %s299
      %p301 = scmp.lt.s32.totalorder %s18, 1
      %s302 = scalar_select %p301, %s18, 1
      %s303 = smul.addr %s302, 4
      %s304 = scalar_lea.vmem %s7, %s303
      %v306 = vld [vmem:[%s293] sm:$0xf]
      %v307 = vld [vmem:[%s296] sm:$0x1]
      %v308 = vld [vmem:[%s2] sm:$0xf]
      %v309 = vld [vmem:[%s2 + $0x4] sm:$0xf]
      %v310 = vld [vmem:[%s2 + $0x8] sm:$0xf]
      %v311 = vld [vmem:[%s2 + $0xc] sm:$0xf]
      %v313 = vunpack.c.l.b16 %v306
      %v314 = vpack.c.b16 %v313, %v313
      %315 = vrot.lane.b32.xlu0 %v314, 96
      %v316 = vpop.permute.xlu0 %315
      %vm317 = vcmask 64512
      %v319 = vsel %vm317, %v306, 0
      %v322 = vsel %vm317, %v316, 0
      %324 = vmatprep.subr.bf16.mxu0 0
      %325 = vmatpush1.bf16.xpose.msra.mxu0 %v322
      %326 = vmatprep.subr.bf16.mxu0 0
      %327 = vmatpush1.bf16.xpose.msra.mxu0 0
      %328 = vmatprep.subr.bf16.mxu0 0
      %329 = vmatpush1.bf16.xpose.msra.mxu0 0
      %330 = vmatprep.subr.bf16.mxu0 0
      %331 = vmatpush1.bf16.xpose.msra.mxu0 0
      %332 = vmatprep.subr.bf16.mxu0 0
      %333 = vmatpush1.bf16.xpose.msra.mxu0 0
      %334 = vmatprep.subr.bf16.mxu0 0
      %335 = vmatpush1.bf16.xpose.msra.mxu0 0
      %336 = vmatprep.subr.bf16.mxu0 0
      %337 = vmatpush1.bf16.xpose.msra.mxu0 0
      %338 = vmatprep.subr.bf16.mxu0 0
      %339 = vmatpush1.bf16.xpose.msra.mxu0 0
      %340 = vmatprep.subr.bf16.mxu0 0
      %341 = vmatpush1.bf16.xpose.msra.mxu0 0
      %342 = vmatprep.subr.bf16.mxu0 0
      %343 = vmatpush1.bf16.xpose.msra.mxu0 0
      %344 = vmatprep.subr.bf16.mxu0 0
      %345 = vmatpush1.bf16.xpose.msra.mxu0 0
      %346 = vmatprep.subr.bf16.mxu0 0
      %347 = vmatpush1.bf16.xpose.msra.mxu0 0
      %348 = vmatprep.subr.bf16.mxu0 0
      %349 = vmatpush1.bf16.xpose.msra.mxu0 0
      %350 = vmatprep.subr.bf16.mxu0 0
      %351 = vmatpush1.bf16.xpose.msra.mxu0 0
      %352 = vmatprep.subr.bf16.mxu0 0
      %353 = vmatpush1.bf16.xpose.msra.mxu0 0
      %354 = vmatprep.subr.bf16.mxu0 0
      %355 = vmatpush1.bf16.xpose.msra.mxu0 0
      %356 = vmatprep.mubr.bf16.mxu0 0
      %357 = vmatmul.mubr.bf16.gmra.mrb[0].mxu0 %v319
      %v358 = vpop.f32.mrb[0].mxu0
      %v359 = vadd.f32 0.0, %v358
      %v360 = vpop.f32.mrb[0].mxu0
      %v361 = vpop.f32.mrb[0].mxu0
      %v362 = vpop.f32.mrb[0].mxu0
      %363 = vdwg.mxu0
      %v364 = vmul.f32 %v359, 0.35355338
      %v366 = vlaneseq
      %v367 = vshrl.u32 %v366, 7
      %v368 = vsub.s32 0, %v367
      %v369 = vrot.slane %v307, %v368
      %v371 = vadd.f32 %v364, %v369
      %v372 = vsel %vm317, %v371, -inf
      %373 = vmax.xlane.f32.xlu0 %v372
      %v374 = vpop.xlane.xlu0 %373
      %v375 = vsub.f32 %v371, %v374
      %v376 = vmul.f32 %v375, 1.442695
      %v377 = vpow.pop %v376
      %v378 = vsel %vm317, %v377, 0.0
      %379 = vadd.xlane.f32.xlu0 %v378
      %v380 = vpop.xlane.xlu0 %379
      %v381 = vrcp.pop %v380
      %v382 = vmul.f32 %v377, %v381
      %v383 = vpack.c.bf16 %v382, %v382
      %384 = vrot.lane.b32.xlu0 %v314, 64
      %v385 = vpop.permute.xlu0 %384
      %v387 = vsel %vm317, %v383, 0
      %vm389 = vcmask 1043456
      %v391 = vsel %vm389, %v385, 0
      %393 = vmatprep.subr.bf16.mxu0 0
      %394 = vmatpush1.bf16.msra.mxu0 %v391
      %395 = vmatprep.subr.bf16.mxu0 0
      %396 = vmatpush1.bf16.msra.mxu0 0
      %397 = vmatprep.subr.bf16.mxu0 0
      %398 = vmatpush1.bf16.msra.mxu0 0
      %399 = vmatprep.subr.bf16.mxu0 0
      %400 = vmatpush1.bf16.msra.mxu0 0
      %401 = vmatprep.subr.bf16.mxu0 0
      %402 = vmatpush1.bf16.msra.mxu0 0
      %403 = vmatprep.subr.bf16.mxu0 0
      %404 = vmatpush1.bf16.msra.mxu0 0
      %405 = vmatprep.subr.bf16.mxu0 0
      %406 = vmatpush1.bf16.msra.mxu0 0
      %407 = vmatprep.subr.bf16.mxu0 0
      %408 = vmatpush1.bf16.msra.mxu0 0
      %409 = vmatprep.subr.bf16.mxu0 0
      %410 = vmatpush1.bf16.msra.mxu0 0
      %411 = vmatprep.subr.bf16.mxu0 0
      %412 = vmatpush1.bf16.msra.mxu0 0
      %413 = vmatprep.subr.bf16.mxu0 0
      %414 = vmatpush1.bf16.msra.mxu0 0
      %415 = vmatprep.subr.bf16.mxu0 0
      %416 = vmatpush1.bf16.msra.mxu0 0
      %417 = vmatprep.subr.bf16.mxu0 0
      %418 = vmatpush1.bf16.msra.mxu0 0
      %419 = vmatprep.subr.bf16.mxu0 0
      %420 = vmatpush1.bf16.msra.mxu0 0
      %421 = vmatprep.subr.bf16.mxu0 0
      %422 = vmatpush1.bf16.msra.mxu0 0
      %423 = vmatprep.subr.bf16.mxu0 0
      %424 = vmatpush1.bf16.msra.mxu0 0
      %425 = vmatprep.mubr.bf16.mxu0 0
      %426 = vmatmul.mubr.bf16.gmra.mrb[0].mxu0 %v387
      %v427 = vpop.f32.mrb[0].mxu0
      %v428 = vadd.f32 0.0, %v427
      %v429 = vpop.f32.mrb[0].mxu0
      %v430 = vpop.f32.mrb[0].mxu0
      %v431 = vpop.f32.mrb[0].mxu0
      %432 = vdwg.mxu0
      %v433 = vpack.c.bf16 %v428, %v428
      %434 = vrot.lane.b32.xlu0 %v314, 120
      %v435 = vpop.permute.xlu0 %434
      %436 = vrot.lane.b32.xlu0 %v314, 88
      %v437 = vpop.permute.xlu0 %436
      %v439 = vsel %vm317, %v435, 0
      %v442 = vsel %vm317, %v437, 0
      %444 = vmatprep.subr.bf16.mxu0 0
      %445 = vmatpush1.bf16.xpose.msra.mxu0 %v442
      %446 = vmatprep.subr.bf16.mxu0 0
      %447 = vmatpush1.bf16.xpose.msra.mxu0 0
      %448 = vmatprep.subr.bf16.mxu0 0
      %449 = vmatpush1.bf16.xpose.msra.mxu0 0
      %450 = vmatprep.subr.bf16.mxu0 0
      %451 = vmatpush1.bf16.xpose.msra.mxu0 0
      %452 = vmatprep.subr.bf16.mxu0 0
      %453 = vmatpush1.bf16.xpose.msra.mxu0 0
      %454 = vmatprep.subr.bf16.mxu0 0
      %455 = vmatpush1.bf16.xpose.msra.mxu0 0
      %456 = vmatprep.subr.bf16.mxu0 0
      %457 = vmatpush1.bf16.xpose.msra.mxu0 0
      %458 = vmatprep.subr.bf16.mxu0 0
      %459 = vmatpush1.bf16.xpose.msra.mxu0 0
      %460 = vmatprep.subr.bf16.mxu0 0
      %461 = vmatpush1.bf16.xpose.msra.mxu0 0
      %462 = vmatprep.subr.bf16.mxu0 0
      %463 = vmatpush1.bf16.xpose.msra.mxu0 0
      %464 = vmatprep.subr.bf16.mxu0 0
      %465 = vmatpush1.bf16.xpose.msra.mxu0 0
      %466 = vmatprep.subr.bf16.mxu0 0
      %467 = vmatpush1.bf16.xpose.msra.mxu0 0
      %468 = vmatprep.subr.bf16.mxu0 0
      %469 = vmatpush1.bf16.xpose.msra.mxu0 0
      %470 = vmatprep.subr.bf16.mxu0 0
      %471 = vmatpush1.bf16.xpose.msra.mxu0 0
      %472 = vmatprep.subr.bf16.mxu0 0
      %473 = vmatpush1.bf16.xpose.msra.mxu0 0
      %474 = vmatprep.subr.bf16.mxu0 0
      %475 = vmatpush1.bf16.xpose.msra.mxu0 0
      %476 = vmatprep.mubr.bf16.mxu0 0
      %477 = vmatmul.mubr.bf16.gmra.mrb[0].mxu0 %v439
      %v478 = vpop.f32.mrb[0].mxu0
      %v479 = vadd.f32 0.0, %v478
      %v480 = vpop.f32.mrb[0].mxu0
      %v481 = vpop.f32.mrb[0].mxu0
      %v482 = vpop.f32.mrb[0].mxu0
      %483 = vdwg.mxu0
      %v484 = vmul.f32 %v479, 0.35355338
      %v485 = vadd.f32 %v484, %v369
      %v486 = vsel %vm317, %v485, -inf
      %487 = vmax.xlane.f32.xlu0 %v486
      %v488 = vpop.xlane.xlu0 %487
      %v489 = vsub.f32 %v485, %v488
      %v490 = vmul.f32 %v489, 1.442695
      %v491 = vpow.pop %v490
      %v492 = vsel %vm317, %v491, 0.0
      %493 = vadd.xlane.f32.xlu0 %v492
      %v494 = vpop.xlane.xlu0 %493
      %v495 = vrcp.pop %v494
      %v496 = vmul.f32 %v491, %v495
      %v497 = vpack.c.bf16 %v496, %v496
      %498 = vrot.lane.b32.xlu0 %v314, 56
      %v499 = vpop.permute.xlu0 %498
      %v501 = vsel %vm317, %v497, 0
      %v504 = vsel %vm389, %v499, 0
      %506 = vmatprep.subr.bf16.mxu0 0
      %507 = vmatpush1.bf16.msra.mxu0 %v504
      %508 = vmatprep.subr.bf16.mxu0 0
      %509 = vmatpush1.bf16.msra.mxu0 0
      %510 = vmatprep.subr.bf16.mxu0 0
      %511 = vmatpush1.bf16.msra.mxu0 0
      %512 = vmatprep.subr.bf16.mxu0 0
      %513 = vmatpush1.bf16.msra.mxu0 0
      %514 = vmatprep.subr.bf16.mxu0 0
      %515 = vmatpush1.bf16.msra.mxu0 0
      %516 = vmatprep.subr.bf16.mxu0 0
      %517 = vmatpush1.bf16.msra.mxu0 0
      %518 = vmatprep.subr.bf16.mxu0 0
      %519 = vmatpush1.bf16.msra.mxu0 0
      %520 = vmatprep.subr.bf16.mxu0 0
      %521 = vmatpush1.bf16.msra.mxu0 0
      %522 = vmatprep.subr.bf16.mxu0 0
      %523 = vmatpush1.bf16.msra.mxu0 0
      %524 = vmatprep.subr.bf16.mxu0 0
      %525 = vmatpush1.bf16.msra.mxu0 0
      %526 = vmatprep.subr.bf16.mxu0 0
      %527 = vmatpush1.bf16.msra.mxu0 0
      %528 = vmatprep.subr.bf16.mxu0 0
      %529 = vmatpush1.bf16.msra.mxu0 0
      %530 = vmatprep.subr.bf16.mxu0 0
      %531 = vmatpush1.bf16.msra.mxu0 0
      %532 = vmatprep.subr.bf16.mxu0 0
      %533 = vmatpush1.bf16.msra.mxu0 0
      %534 = vmatprep.subr.bf16.mxu0 0
      %535 = vmatpush1.bf16.msra.mxu0 0
      %536 = vmatprep.subr.bf16.mxu0 0
      %537 = vmatpush1.bf16.msra.mxu0 0
      %538 = vmatprep.mubr.bf16.mxu0 0
      %539 = vmatmul.mubr.bf16.gmra.mrb[0].mxu0 %v501
      %v540 = vpop.f32.mrb[0].mxu0
      %v541 = vadd.f32 0.0, %v540
      %v542 = vpop.f32.mrb[0].mxu0
      %v543 = vpop.f32.mrb[0].mxu0
      %v544 = vpop.f32.mrb[0].mxu0
      %545 = vdwg.mxu0
      %v546 = vpack.c.bf16 %v541, %v541
      %v548 = vsel %vm317, %v546, 0
      %v551 = vsel %vm389, %v309, 0
      %553 = vmatprep.subr.bf16.mxu0 0
      %554 = vmatpush1.bf16.msra.mxu0 %v551
      %555 = vmatprep.subr.bf16.mxu0 0
      %556 = vmatpush1.bf16.msra.mxu0 0
      %557 = vmatprep.subr.bf16.mxu0 0
      %558 = vmatpush1.bf16.msra.mxu0 0
      %559 = vmatprep.subr.bf16.mxu0 0
      %560 = vmatpush1.bf16.msra.mxu0 0
      %561 = vmatprep.subr.bf16.mxu0 0
      %562 = vmatpush1.bf16.msra.mxu0 0
      %563 = vmatprep.subr.bf16.mxu0 0
      %564 = vmatpush1.bf16.msra.mxu0 0
      %565 = vmatprep.subr.bf16.mxu0 0
      %566 = vmatpush1.bf16.msra.mxu0 0
      %567 = vmatprep.subr.bf16.mxu0 0
      %568 = vmatpush1.bf16.msra.mxu0 0
      %569 = vmatprep.subr.bf16.mxu0 0
      %570 = vmatpush1.bf16.msra.mxu0 0
      %571 = vmatprep.subr.bf16.mxu0 0
      %572 = vmatpush1.bf16.msra.mxu0 0
      %573 = vmatprep.subr.bf16.mxu0 0
      %574 = vmatpush1.bf16.msra.mxu0 0
      %575 = vmatprep.subr.bf16.mxu0 0
      %576 = vmatpush1.bf16.msra.mxu0 0
      %577 = vmatprep.subr.bf16.mxu0 0
      %578 = vmatpush1.bf16.msra.mxu0 0
      %579 = vmatprep.subr.bf16.mxu0 0
      %580 = vmatpush1.bf16.msra.mxu0 0
      %581 = vmatprep.subr.bf16.mxu0 0
      %582 = vmatpush1.bf16.msra.mxu0 0
      %583 = vmatprep.subr.bf16.mxu0 0
      %584 = vmatpush1.bf16.msra.mxu0 0
      %585 = vmatprep.mubr.bf16.mxu0 0
      %586 = vmatmul.mubr.bf16.gmra.mrb[0].mxu0 %v548
      %v587 = vpop.f32.mrb[0].mxu0
      %v588 = vadd.f32 0.0, %v587
      %v589 = vpop.f32.mrb[0].mxu0
      %v590 = vpop.f32.mrb[0].mxu0
      %v591 = vpop.f32.mrb[0].mxu0
      %592 = vdwg.mxu0
      %v594 = vsel %vm317, %v433, 0
      %v597 = vsel %vm389, %v308, 0
      %599 = vmatprep.subr.bf16.mxu0 0
      %600 = vmatpush1.bf16.msra.mxu0 %v597
      %601 = vmatprep.subr.bf16.mxu0 0
      %602 = vmatpush1.bf16.msra.mxu0 0
      %603 = vmatprep.subr.bf16.mxu0 0
      %604 = vmatpush1.bf16.msra.mxu0 0
      %605 = vmatprep.subr.bf16.mxu0 0
      %606 = vmatpush1.bf16.msra.mxu0 0
      %607 = vmatprep.subr.bf16.mxu0 0
      %608 = vmatpush1.bf16.msra.mxu0 0
      %609 = vmatprep.subr.bf16.mxu0 0
      %610 = vmatpush1.bf16.msra.mxu0 0
      %611 = vmatprep.subr.bf16.mxu0 0
      %612 = vmatpush1.bf16.msra.mxu0 0
      %613 = vmatprep.subr.bf16.mxu0 0
      %614 = vmatpush1.bf16.msra.mxu0 0
      %615 = vmatprep.subr.bf16.mxu0 0
      %616 = vmatpush1.bf16.msra.mxu0 0
      %617 = vmatprep.subr.bf16.mxu0 0
      %618 = vmatpush1.bf16.msra.mxu0 0
      %619 = vmatprep.subr.bf16.mxu0 0
      %620 = vmatpush1.bf16.msra.mxu0 0
      %621 = vmatprep.subr.bf16.mxu0 0
      %622 = vmatpush1.bf16.msra.mxu0 0
      %623 = vmatprep.subr.bf16.mxu0 0
      %624 = vmatpush1.bf16.msra.mxu0 0
      %625 = vmatprep.subr.bf16.mxu0 0
      %626 = vmatpush1.bf16.msra.mxu0 0
      %627 = vmatprep.subr.bf16.mxu0 0
      %628 = vmatpush1.bf16.msra.mxu0 0
      %629 = vmatprep.subr.bf16.mxu0 0
      %630 = vmatpush1.bf16.msra.mxu0 0
      %631 = vmatprep.mubr.bf16.mxu0 0
      %632 = vmatmul.mubr.bf16.gmra.mrb[0].mxu0 %v594
      %v633 = vpop.f32.mrb[0].mxu0
      %v634 = vadd.f32 %v588, %v633
      %v635 = vpop.f32.mrb[0].mxu0
      %v636 = vpop.f32.mrb[0].mxu0
      %v637 = vpop.f32.mrb[0].mxu0
      %638 = vdwg.mxu0
      %639 = vrot.lane.b32.xlu0 %v314, 112
      %v640 = vpop.permute.xlu0 %639
      %641 = vrot.lane.b32.xlu0 %v314, 80
      %v642 = vpop.permute.xlu0 %641
      %v644 = vsel %vm317, %v640, 0
      %v647 = vsel %vm317, %v642, 0
      %649 = vmatprep.subr.bf16.mxu0 0
      %650 = vmatpush1.bf16.xpose.msra.mxu0 %v647
      %651 = vmatprep.subr.bf16.mxu0 0
      %652 = vmatpush1.bf16.xpose.msra.mxu0 0
      %653 = vmatprep.subr.bf16.mxu0 0
      %654 = vmatpush1.bf16.xpose.msra.mxu0 0
      %655 = vmatprep.subr.bf16.mxu0 0
      %656 = vmatpush1.bf16.xpose.msra.mxu0 0
      %657 = vmatprep.subr.bf16.mxu0 0
      %658 = vmatpush1.bf16.xpose.msra.mxu0 0
      %659 = vmatprep.subr.bf16.mxu0 0
      %660 = vmatpush1.bf16.xpose.msra.mxu0 0
      %661 = vmatprep.subr.bf16.mxu0 0
      %662 = vmatpush1.bf16.xpose.msra.mxu0 0
      %663 = vmatprep.subr.bf16.mxu0 0
      %664 = vmatpush1.bf16.xpose.msra.mxu0 0
      %665 = vmatprep.subr.bf16.mxu0 0
      %666 = vmatpush1.bf16.xpose.msra.mxu0 0
      %667 = vmatprep.subr.bf16.mxu0 0
      %668 = vmatpush1.bf16.xpose.msra.mxu0 0
      %669 = vmatprep.subr.bf16.mxu0 0
      %670 = vmatpush1.bf16.xpose.msra.mxu0 0
      %671 = vmatprep.subr.bf16.mxu0 0
      %672 = vmatpush1.bf16.xpose.msra.mxu0 0
      %673 = vmatprep.subr.bf16.mxu0 0
      %674 = vmatpush1.bf16.xpose.msra.mxu0 0
      %675 = vmatprep.subr.bf16.mxu0 0
      %676 = vmatpush1.bf16.xpose.msra.mxu0 0
      %677 = vmatprep.subr.bf16.mxu0 0
      %678 = vmatpush1.bf16.xpose.msra.mxu0 0
      %679 = vmatprep.subr.bf16.mxu0 0
      %680 = vmatpush1.bf16.xpose.msra.mxu0 0
      %681 = vmatprep.mubr.bf16.mxu0 0
      %682 = vmatmul.mubr.bf16.gmra.mrb[0].mxu0 %v644
      %v683 = vpop.f32.mrb[0].mxu0
      %v684 = vadd.f32 0.0, %v683
      %v685 = vpop.f32.mrb[0].mxu0
      %v686 = vpop.f32.mrb[0].mxu0
      %v687 = vpop.f32.mrb[0].mxu0
      %688 = vdwg.mxu0
      %v689 = vmul.f32 %v684, 0.35355338
      %v690 = vadd.f32 %v689, %v369
      %v691 = vsel %vm317, %v690, -inf
      %692 = vmax.xlane.f32.xlu0 %v691
      %v693 = vpop.xlane.xlu0 %692
      %v694 = vsub.f32 %v690, %v693
      %v695 = vmul.f32 %v694, 1.442695
      %v696 = vpow.pop %v695
      %v697 = vsel %vm317, %v696, 0.0
      %698 = vadd.xlane.f32.xlu0 %v697
      %v699 = vpop.xlane.xlu0 %698
      %v700 = vrcp.pop %v699
      %v701 = vmul.f32 %v696, %v700
      %v702 = vpack.c.bf16 %v701, %v701
      %703 = vrot.lane.b32.xlu0 %v314, 48
      %v704 = vpop.permute.xlu0 %703
      %v706 = vsel %vm317, %v702, 0
      %v709 = vsel %vm389, %v704, 0
      %711 = vmatprep.subr.bf16.mxu0 0
      %712 = vmatpush1.bf16.msra.mxu0 %v709
      %713 = vmatprep.subr.bf16.mxu0 0
      %714 = vmatpush1.bf16.msra.mxu0 0
      %715 = vmatprep.subr.bf16.mxu0 0
      %716 = vmatpush1.bf16.msra.mxu0 0
      %717 = vmatprep.subr.bf16.mxu0 0
      %718 = vmatpush1.bf16.msra.mxu0 0
      %719 = vmatprep.subr.bf16.mxu0 0
      %720 = vmatpush1.bf16.msra.mxu0 0
      %721 = vmatprep.subr.bf16.mxu0 0
      %722 = vmatpush1.bf16.msra.mxu0 0
      %723 = vmatprep.subr.bf16.mxu0 0
      %724 = vmatpush1.bf16.msra.mxu0 0
      %725 = vmatprep.subr.bf16.mxu0 0
      %726 = vmatpush1.bf16.msra.mxu0 0
      %727 = vmatprep.subr.bf16.mxu0 0
      %728 = vmatpush1.bf16.msra.mxu0 0
      %729 = vmatprep.subr.bf16.mxu0 0
      %730 = vmatpush1.bf16.msra.mxu0 0
      %731 = vmatprep.subr.bf16.mxu0 0
      %732 = vmatpush1.bf16.msra.mxu0 0
      %733 = vmatprep.subr.bf16.mxu0 0
      %734 = vmatpush1.bf16.msra.mxu0 0
      %735 = vmatprep.subr.bf16.mxu0 0
      %736 = vmatpush1.bf16.msra.mxu0 0
      %737 = vmatprep.subr.bf16.mxu0 0
      %738 = vmatpush1.bf16.msra.mxu0 0
      %739 = vmatprep.subr.bf16.mxu0 0
      %740 = vmatpush1.bf16.msra.mxu0 0
      %741 = vmatprep.subr.bf16.mxu0 0
      %742 = vmatpush1.bf16.msra.mxu0 0
      %743 = vmatprep.mubr.bf16.mxu0 0
      %744 = vmatmul.mubr.bf16.gmra.mrb[0].mxu0 %v706
      %v745 = vpop.f32.mrb[0].mxu0
      %v746 = vadd.f32 0.0, %v745
      %v747 = vpop.f32.mrb[0].mxu0
      %v748 = vpop.f32.mrb[0].mxu0
      %v749 = vpop.f32.mrb[0].mxu0
      %750 = vdwg.mxu0
      %v751 = vpack.c.bf16 %v746, %v746
      %v753 = vsel %vm317, %v751, 0
      %v756 = vsel %vm389, %v310, 0
      %758 = vmatprep.subr.bf16.mxu0 0
      %759 = vmatpush1.bf16.msra.mxu0 %v756
      %760 = vmatprep.subr.bf16.mxu0 0
      %761 = vmatpush1.bf16.msra.mxu0 0
      %762 = vmatprep.subr.bf16.mxu0 0
      %763 = vmatpush1.bf16.msra.mxu0 0
      %764 = vmatprep.subr.bf16.mxu0 0
      %765 = vmatpush1.bf16.msra.mxu0 0
      %766 = vmatprep.subr.bf16.mxu0 0
      %767 = vmatpush1.bf16.msra.mxu0 0
      %768 = vmatprep.subr.bf16.mxu0 0
      %769 = vmatpush1.bf16.msra.mxu0 0
      %770 = vmatprep.subr.bf16.mxu0 0
      %771 = vmatpush1.bf16.msra.mxu0 0
      %772 = vmatprep.subr.bf16.mxu0 0
      %773 = vmatpush1.bf16.msra.mxu0 0
      %774 = vmatprep.subr.bf16.mxu0 0
      %775 = vmatpush1.bf16.msra.mxu0 0
      %776 = vmatprep.subr.bf16.mxu0 0
      %777 = vmatpush1.bf16.msra.mxu0 0
      %778 = vmatprep.subr.bf16.mxu0 0
      %779 = vmatpush1.bf16.msra.mxu0 0
      %780 = vmatprep.subr.bf16.mxu0 0
      %781 = vmatpush1.bf16.msra.mxu0 0
      %782 = vmatprep.subr.bf16.mxu0 0
      %783 = vmatpush1.bf16.msra.mxu0 0
      %784 = vmatprep.subr.bf16.mxu0 0
      %785 = vmatpush1.bf16.msra.mxu0 0
      %786 = vmatprep.subr.bf16.mxu0 0
      %787 = vmatpush1.bf16.msra.mxu0 0
      %788 = vmatprep.subr.bf16.mxu0 0
      %789 = vmatpush1.bf16.msra.mxu0 0
      %790 = vmatprep.mubr.bf16.mxu0 0
      %791 = vmatmul.mubr.bf16.gmra.mrb[0].mxu0 %v753
      %v792 = vpop.f32.mrb[0].mxu0
      %v793 = vadd.f32 0.0, %v792
      %v794 = vpop.f32.mrb[0].mxu0
      %v795 = vpop.f32.mrb[0].mxu0
      %v796 = vpop.f32.mrb[0].mxu0
      %797 = vdwg.mxu0
      %v798 = vadd.f32 %v634, %v793
      %799 = vrot.lane.b32.xlu0 %v314, 104
      %v800 = vpop.permute.xlu0 %799
      %801 = vrot.lane.b32.xlu0 %v314, 72
      %v802 = vpop.permute.xlu0 %801
      %v804 = vsel %vm317, %v800, 0
      %v807 = vsel %vm317, %v802, 0
      %809 = vmatprep.subr.bf16.mxu0 0
      %810 = vmatpush1.bf16.xpose.msra.mxu0 %v807
      %811 = vmatprep.subr.bf16.mxu0 0
      %812 = vmatpush1.bf16.xpose.msra.mxu0 0
      %813 = vmatprep.subr.bf16.mxu0 0
      %814 = vmatpush1.bf16.xpose.msra.mxu0 0
      %815 = vmatprep.subr.bf16.mxu0 0
      %816 = vmatpush1.bf16.xpose.msra.mxu0 0
      %817 = vmatprep.subr.bf16.mxu0 0
      %818 = vmatpush1.bf16.xpose.msra.mxu0 0
      %819 = vmatprep.subr.bf16.mxu0 0
      %820 = vmatpush1.bf16.xpose.msra.mxu0 0
      %821 = vmatprep.subr.bf16.mxu0 0
      %822 = vmatpush1.bf16.xpose.msra.mxu0 0
      %823 = vmatprep.subr.bf16.mxu0 0
      %824 = vmatpush1.bf16.xpose.msra.mxu0 0
      %825 = vmatprep.subr.bf16.mxu0 0
      %826 = vmatpush1.bf16.xpose.msra.mxu0 0
      %827 = vmatprep.subr.bf16.mxu0 0
      %828 = vmatpush1.bf16.xpose.msra.mxu0 0
      %829 = vmatprep.subr.bf16.mxu0 0
      %830 = vmatpush1.bf16.xpose.msra.mxu0 0
      %831 = vmatprep.subr.bf16.mxu0 0
      %832 = vmatpush1.bf16.xpose.msra.mxu0 0
      %833 = vmatprep.subr.bf16.mxu0 0
      %834 = vmatpush1.bf16.xpose.msra.mxu0 0
      %835 = vmatprep.subr.bf16.mxu0 0
      %836 = vmatpush1.bf16.xpose.msra.mxu0 0
      %837 = vmatprep.subr.bf16.mxu0 0
      %838 = vmatpush1.bf16.xpose.msra.mxu0 0
      %839 = vmatprep.subr.bf16.mxu0 0
      %840 = vmatpush1.bf16.xpose.msra.mxu0 0
      %841 = vmatprep.mubr.bf16.mxu0 0
      %842 = vmatmul.mubr.bf16.gmra.mrb[0].mxu0 %v804
      %v843 = vpop.f32.mrb[0].mxu0
      %v844 = vadd.f32 0.0, %v843
      %v845 = vpop.f32.mrb[0].mxu0
      %v846 = vpop.f32.mrb[0].mxu0
      %v847 = vpop.f32.mrb[0].mxu0
      %848 = vdwg.mxu0
      %v849 = vmul.f32 %v844, 0.35355338
      %v850 = vadd.f32 %v849, %v369
      %v851 = vsel %vm317, %v850, -inf
      %852 = vmax.xlane.f32.xlu0 %v851
      %v853 = vpop.xlane.xlu0 %852
      %v854 = vsub.f32 %v850, %v853
      %v855 = vmul.f32 %v854, 1.442695
      %v856 = vpow.pop %v855
      %v857 = vsel %vm317, %v856, 0.0
      %858 = vadd.xlane.f32.xlu0 %v857
      %v859 = vpop.xlane.xlu0 %858
      %v860 = vrcp.pop %v859
      %v861 = vmul.f32 %v856, %v860
      %v862 = vpack.c.bf16 %v861, %v861
      %863 = vrot.lane.b32.xlu0 %v314, 40
      %v864 = vpop.permute.xlu0 %863
      %v866 = vsel %vm317, %v862, 0
      %v869 = vsel %vm389, %v864, 0
      %871 = vmatprep.subr.bf16.mxu0 0
      %872 = vmatpush1.bf16.msra.mxu0 %v869
      %873 = vmatprep.subr.bf16.mxu0 0
      %874 = vmatpush1.bf16.msra.mxu0 0
      %875 = vmatprep.subr.bf16.mxu0 0
      %876 = vmatpush1.bf16.msra.mxu0 0
      %877 = vmatprep.subr.bf16.mxu0 0
      %878 = vmatpush1.bf16.msra.mxu0 0
      %879 = vmatprep.subr.bf16.mxu0 0
      %880 = vmatpush1.bf16.msra.mxu0 0
      %881 = vmatprep.subr.bf16.mxu0 0
      %882 = vmatpush1.bf16.msra.mxu0 0
      %883 = vmatprep.subr.bf16.mxu0 0
      %884 = vmatpush1.bf16.msra.mxu0 0
      %885 = vmatprep.subr.bf16.mxu0 0
      %886 = vmatpush1.bf16.msra.mxu0 0
      %887 = vmatprep.subr.bf16.mxu0 0
      %888 = vmatpush1.bf16.msra.mxu0 0
      %889 = vmatprep.subr.bf16.mxu0 0
      %890 = vmatpush1.bf16.msra.mxu0 0
      %891 = vmatprep.subr.bf16.mxu0 0
      %892 = vmatpush1.bf16.msra.mxu0 0
      %893 = vmatprep.subr.bf16.mxu0 0
      %894 = vmatpush1.bf16.msra.mxu0 0
      %895 = vmatprep.subr.bf16.mxu0 0
      %896 = vmatpush1.bf16.msra.mxu0 0
      %897 = vmatprep.subr.bf16.mxu0 0
      %898 = vmatpush1.bf16.msra.mxu0 0
      %899 = vmatprep.subr.bf16.mxu0 0
      %900 = vmatpush1.bf16.msra.mxu0 0
      %901 = vmatprep.subr.bf16.mxu0 0
      %902 = vmatpush1.bf16.msra.mxu0 0
      %903 = vmatprep.mubr.bf16.mxu0 0
      %904 = vmatmul.mubr.bf16.gmra.mrb[0].mxu0 %v866
      %v905 = vpop.f32.mrb[0].mxu0
      %v906 = vadd.f32 0.0, %v905
      %v907 = vpop.f32.mrb[0].mxu0
      %v908 = vpop.f32.mrb[0].mxu0
      %v909 = vpop.f32.mrb[0].mxu0
      %910 = vdwg.mxu0
      %v911 = vpack.c.bf16 %v906, %v906
      %v913 = vsel %vm317, %v911, 0
      %v916 = vsel %vm389, %v311, 0
      %918 = vmatprep.subr.bf16.mxu0 0
      %919 = vmatpush1.bf16.msra.mxu0 %v916
      %920 = vmatprep.subr.bf16.mxu0 0
      %921 = vmatpush1.bf16.msra.mxu0 0
      %922 = vmatprep.subr.bf16.mxu0 0
      %923 = vmatpush1.bf16.msra.mxu0 0
      %924 = vmatprep.subr.bf16.mxu0 0
      %925 = vmatpush1.bf16.msra.mxu0 0
      %926 = vmatprep.subr.bf16.mxu0 0
      %927 = vmatpush1.bf16.msra.mxu0 0
      %928 = vmatprep.subr.bf16.mxu0 0
      %929 = vmatpush1.bf16.msra.mxu0 0
      %930 = vmatprep.subr.bf16.mxu0 0
      %931 = vmatpush1.bf16.msra.mxu0 0
      %932 = vmatprep.subr.bf16.mxu0 0
      %933 = vmatpush1.bf16.msra.mxu0 0
      %934 = vmatprep.subr.bf16.mxu0 0
      %935 = vmatpush1.bf16.msra.mxu0 0
      %936 = vmatprep.subr.bf16.mxu0 0
      %937 = vmatpush1.bf16.msra.mxu0 0
      %938 = vmatprep.subr.bf16.mxu0 0
      %939 = vmatpush1.bf16.msra.mxu0 0
      %940 = vmatprep.subr.bf16.mxu0 0
      %941 = vmatpush1.bf16.msra.mxu0 0
      %942 = vmatprep.subr.bf16.mxu0 0
      %943 = vmatpush1.bf16.msra.mxu0 0
      %944 = vmatprep.subr.bf16.mxu0 0
      %945 = vmatpush1.bf16.msra.mxu0 0
      %946 = vmatprep.subr.bf16.mxu0 0
      %947 = vmatpush1.bf16.msra.mxu0 0
      %948 = vmatprep.subr.bf16.mxu0 0
      %949 = vmatpush1.bf16.msra.mxu0 0
      %950 = vmatprep.mubr.bf16.mxu0 0
      %951 = vmatmul.mubr.bf16.gmra.mrb[0].mxu0 %v913
      %v952 = vpop.f32.mrb[0].mxu0
      %v953 = vadd.f32 0.0, %v952
      %v954 = vpop.f32.mrb[0].mxu0
      %v955 = vpop.f32.mrb[0].mxu0
      %v956 = vpop.f32.mrb[0].mxu0
      %957 = vdwg.mxu0
      %v958 = vadd.f32 %v798, %v953
      %v959 = vld [vmem:[%s3] sm:$0x1]
      %v961 = vlaneseq
      %v962 = vshrl.u32 %v961, 7
      %v963 = vsub.s32 0, %v962
      %v964 = vrot.slane %v959, %v963
      %v966 = vadd.f32 %v958, %v964
      %v967 = vld [vmem:[%s300] sm:$0xf]
      %v968 = vunpack.c.l.bf16 %v967
      %v969 = vadd.f32 %v966, %v968
      %v970 = vld [vmem:[%s5] sm:$0x1]
      %v971 = vld [vmem:[%s6] sm:$0x1]
      %vm972 = vcmask 261120
      %v973 = vsel %vm972, %v969, 0.0
      %974 = vadd.xlane.f32.xlu0 %v973
      %v975 = vpop.xlane.xlu0 %974
      %v976 = vrcp.pop 32.0
      %v977 = vmul.f32 %v975, %v976
      %v978 = vsub.f32 %v969, %v977
      %v979 = vmul.f32 %v978, %v978
      %v980 = vsel %vm972, %v979, 0.0
      %981 = vadd.xlane.f32.xlu0 %v980
      %v982 = vpop.xlane.xlu0 %981
      %v983 = vmul.f32 %v982, %v976
      %v984 = vadd.f32 %v983, 1e-05
      %v985 = vrsqrt.pop %v984
      %v986 = vmul.f32 %v978, %v985
      %v988 = vlaneseq
      %v989 = vshrl.u32 %v988, 7
      %v990 = vsub.s32 0, %v989
      %v991 = vrot.slane %v970, %v990
      %v993 = vmul.f32 %v986, %v991
      %v995 = vlaneseq
      %v996 = vshrl.u32 %v995, 7
      %v997 = vsub.s32 0, %v996
      %v998 = vrot.slane %v971, %v997
      %v1000 = vadd.f32 %v993, %v998
      %v1001 = vpack.c.bf16 %v1000, %v1000
      %vm1002 = vcmask 257024
      %1003 = vst.msk [vmem:[%s304] sm:$0xf] %vm1002, %v1001
      %p1004 = scmp.lt.s32.totalorder %s18, 1
      %s1005 = scalar_select %p1004, %s18, 1
      %s1006 = smul.addr %s1005, 4
      %s1007 = scalar_lea.vmem %s7, %s1006
      // Predicated region
      $region49: #{forward.28} parent=47 // pred_check
        %p1008 = pneg %p198
      $region50: #{forward.28} parent=47 // pred_check_branch
        %1010 = sbr.rel (%p1008) target = $region52
      $region51: #{forward.28} parent=47 // pred_region
        _
      $region52: #{forward.28} parent=47 // pred_fallthru
        _
    $region48: #{forward.28} parent=5 // pred_fallthru
      _
    %p1011 = scmp.le.s32.totalorder 2, %s13
    // Predicated region
    $region53: #{forward.28} parent=5 // pred_check
      %p1012 = pneg %p1011
    $region54: #{forward.28} parent=5 // pred_check_branch
      %1014 = sbr.rel (%p1012) target = $region56
    $region55: #{forward.28} parent=5 // pred_region
      %s1015 = ssub.s32 %s13, 2
      // Predicated region
      $region57: #{forward.28} parent=55 // pred_check
        %p1016 = pneg %p204
      $region58: #{forward.28} parent=55 // pred_check_branch
        %1018 = sbr.rel (%p1016) target = $region60
      $region59: #{forward.28} parent=55 // pred_region
        %p1019 = scmp.lt.s32.totalorder %s19, 1
        %s1020 = scalar_select %p1019, %s19, 1
        %s1021 = smul.addr %s1020, 4
        %s1022 = scalar_lea.vmem %s7, %s1021
      $region60: #{forward.28} parent=55 // pred_fallthru
        _
    $region56: #{forward.28} parent=5 // pred_fallthru
      _
  $region6: #{forward.28} parent=0 // loop_footer
    %s17 = sadd.s32 1, %s13
  $region7: #{forward.28} parent=0 // loop_footer_branch
    %12 = sbr.rel target = $region3
  $region8: #{forward.28} parent=0 // loop_exit
    _

// kernel: forward.36
$region0: #{forward.36}
  #allocation0 [shape = 'u32[]', space=smem, size = 0x4, offset = 0x4, fixed_abs, tag = 'smem constant byte address 0x4 - core index']
  #allocation1 [shape = 'u32[144,128]{1,0:T(1,128)}', space=vmem, size = 0x12000, scoped, tag = 'internal scratch']
  %s0 = inlined_call_operand.vmem [shape: bf16[12,32], index: 0, kind: input, shape index: {}]
  %s1 = inlined_call_operand.vmem [shape: bf16[32,32], index: 1, kind: input, shape index: {}]
  %s2 = inlined_call_operand.vmem [shape: f32[1,32], index: 2, kind: input, shape index: {}]
  %s3 = inlined_call_operand.vmem [shape: bf16[12,32], index: 3, kind: output, shape index: {}]
  %s4 = sld [smem:[#allocation0]]
  $region22: #{forward.36} parent=0
    _
  %s6 = ssub.s32 1, %s4
  %s7 = scalar_select 0, %s6, %s4
  // Predicated region
  $region2: #{forward.36} parent=0 // pred_check
    _
  $region3: #{forward.36} parent=0 // pred_check_branch
    %9 = sbr.rel (0) target = $region5
  $region4: #{forward.36} parent=0 // pred_region
    _
  $region5: #{forward.36} parent=0 // pred_fallthru
    _
  // Predicated region
  $region6: #{forward.36} parent=0 // pred_check
    _
  $region7: #{forward.36} parent=0 // pred_check_branch
    %11 = sbr.rel (0) target = $region9
  $region8: #{forward.36} parent=0 // pred_region
    _
  $region9: #{forward.36} parent=0 // pred_fallthru
    _
  // Predicated region
  $region10: #{forward.36} parent=0 // pred_check
    _
  $region11: #{forward.36} parent=0 // pred_check_branch
    %13 = sbr.rel (0) target = $region13
  $region12: #{forward.36} parent=0 // pred_region
    _
  $region13: #{forward.36} parent=0 // pred_fallthru
    _
  %v15 = vld [vmem:[%s0] sm:$0xf]
  %v16 = vld [vmem:[%s0 + $0x4] sm:$0x3]
  %v17 = vld [vmem:[%s1] sm:$0xf]
  %v18 = vld [vmem:[%s1 + $0x4] sm:$0xf]
  %v19 = vld [vmem:[%s1 + $0x8] sm:$0xf]
  %v20 = vld [vmem:[%s1 + $0xc] sm:$0xf]
  %v21 = vld [vmem:[%s2] sm:$0x1]
  %v23 = vlaneseq
  %v24 = vshrl.u32 %v23, 7
  %v25 = vsub.s32 0, %v24
  %v26 = vrot.slane %v21, %v25
  %v30 = vunpack.c.l.b16 %v15
  %v31 = vunpack.c.l.b16 %v16
  %v32 = vpack.c.b16 %v31, %v30
  %v37 = vunpack.c.l.b16 %v17
  %v38 = vunpack.c.l.b16 %v18
  %v39 = vunpack.c.l.b16 %v19
  %v40 = vunpack.c.l.b16 %v20
  %v41 = vpack.c.b16 %v38, %v37
  %v42 = vpack.c.b16 %v40, %v39
  %vm45 = vcmask 261120
  %v47 = vsel %vm45, %v32, 0
  %49 = vmatprep.subr.bf16.mxu0 0
  %50 = vmatpush1.bf16.msra.mxu0 %v41
  %51 = vmatprep.subr.bf16.mxu0 0
  %52 = vmatpush1.bf16.msra.mxu0 %v42
  %53 = vmatprep.subr.bf16.mxu0 0
  %54 = vmatpush1.bf16.msra.mxu0 0
  %55 = vmatprep.subr.bf16.mxu0 0
  %56 = vmatpush1.bf16.msra.mxu0 0
  %57 = vmatprep.subr.bf16.mxu0 0
  %58 = vmatpush1.bf16.msra.mxu0 0
  %59 = vmatprep.subr.bf16.mxu0 0
  %60 = vmatpush1.bf16.msra.mxu0 0
  %61 = vmatprep.subr.bf16.mxu0 0
  %62 = vmatpush1.bf16.msra.mxu0 0
  %63 = vmatprep.subr.bf16.mxu0 0
  %64 = vmatpush1.bf16.msra.mxu0 0
  %65 = vmatprep.subr.bf16.mxu0 0
  %66 = vmatpush1.bf16.msra.mxu0 0
  %67 = vmatprep.subr.bf16.mxu0 0
  %68 = vmatpush1.bf16.msra.mxu0 0
  %69 = vmatprep.subr.bf16.mxu0 0
  %70 = vmatpush1.bf16.msra.mxu0 0
  %71 = vmatprep.subr.bf16.mxu0 0
  %72 = vmatpush1.bf16.msra.mxu0 0
  %73 = vmatprep.subr.bf16.mxu0 0
  %74 = vmatpush1.bf16.msra.mxu0 0
  %75 = vmatprep.subr.bf16.mxu0 0
  %76 = vmatpush1.bf16.msra.mxu0 0
  %77 = vmatprep.subr.bf16.mxu0 0
  %78 = vmatpush1.bf16.msra.mxu0 0
  %79 = vmatprep.subr.bf16.mxu0 0
  %80 = vmatpush1.bf16.msra.mxu0 0
  %81 = vmatprep.mubr.bf16.mxu0 0
  %82 = vmatmul.mubr.bf16.gmra.mrb[0].mxu0 %v47
  %v83 = vpop.f32.mrb[0].mxu0
  %v84 = vadd.f32 %v26, %v83
  %v85 = vpop.f32.mrb[0].mxu0
  %v86 = vpop.f32.mrb[0].mxu0
  %v87 = vadd.f32 %v26, %v86
  %v88 = vpop.f32.mrb[0].mxu0
  %89 = vdwg.mxu0
  %v90 = vpack.c.bf16 %v87, %v84
  %v92 = vunpack.c.l.b16 %v90
  %v93 = vunpack.c.h.b16 %v90
  %v94 = vpack.c.b16 %v92, %v92
  %v95 = vpack.c.b16 %v93, %v93
  %vm98 = vcmask 257024
  %99 = vst.msk [vmem:[%s3] sm:$0xf] %vm98, %v94
  %vm100 = vcmask 254976
  %101 = vst.msk [vmem:[%s3 + $0x4] sm:$0x3] %vm100, %v95
  // Predicated region
  $region14: #{forward.36} parent=0 // pred_check
    _
  $region15: #{forward.36} parent=0 // pred_check_branch
    %103 = sbr.rel (0) target = $region17
  $region16: #{forward.36} parent=0 // pred_region
    _
  $region17: #{forward.36} parent=0 // pred_fallthru
    _
  // Predicated region
  $region18: #{forward.36} parent=0 // pred_check
    _
  $region19: #{forward.36} parent=0 // pred_check_branch
    %105 = sbr.rel (0) target = $region21
  $region20: #{forward.36} parent=0 // pred_region
    _
  $region21: #{forward.36} parent=0 // pred_fallthru
    _

// kernel: forward.34
$region0: #{forward.34}
  #allocation0 [shape = 'u32[]', space=smem, size = 0x4, offset = 0x4, fixed_abs, tag = 'smem constant byte address 0x4 - core index']
  #allocation1 [shape = 'u32[144,128]{1,0:T(1,128)}', space=vmem, size = 0x12000, scoped, tag = 'internal scratch']
  %s0 = inlined_call_operand.vmem [shape: bf16[12,32], index: 0, kind: input, shape index: {}]
  %s1 = inlined_call_operand.vmem [shape: bf16[32,96], index: 1, kind: input, shape index: {}]
  %s2 = inlined_call_operand.vmem [shape: f32[1,96], index: 2, kind: input, shape index: {}]
  %s3 = inlined_call_operand.vmem [shape: bf16[12,96], index: 3, kind: output, shape index: {}]
  %s4 = sld [smem:[#allocation0]]
  $region22: #{forward.34} parent=0
    _
  %s6 = ssub.s32 1, %s4
  %s7 = scalar_select 0, %s6, %s4
  // Predicated region
  $region2: #{forward.34} parent=0 // pred_check
    _
  $region3: #{forward.34} parent=0 // pred_check_branch
    %9 = sbr.rel (0) target = $region5
  $region4: #{forward.34} parent=0 // pred_region
    _
  $region5: #{forward.34} parent=0 // pred_fallthru
    _
  // Predicated region
  $region6: #{forward.34} parent=0 // pred_check
    _
  $region7: #{forward.34} parent=0 // pred_check_branch
    %11 = sbr.rel (0) target = $region9
  $region8: #{forward.34} parent=0 // pred_region
    _
  $region9: #{forward.34} parent=0 // pred_fallthru
    _
  // Predicated region
  $region10: #{forward.34} parent=0 // pred_check
    _
  $region11: #{forward.34} parent=0 // pred_check_branch
    %13 = sbr.rel (0) target = $region13
  $region12: #{forward.34} parent=0 // pred_region
    _
  $region13: #{forward.34} parent=0 // pred_fallthru
    _
  %v15 = vld [vmem:[%s0] sm:$0xf]
  %v16 = vld [vmem:[%s0 + $0x4] sm:$0x3]
  %v17 = vld [vmem:[%s1] sm:$0xf]
  %v18 = vld [vmem:[%s1 + $0x4] sm:$0xf]
  %v19 = vld [vmem:[%s1 + $0x8] sm:$0xf]
  %v20 = vld [vmem:[%s1 + $0xc] sm:$0xf]
  %v21 = vld [vmem:[%s2] sm:$0x1]
  %v23 = vlaneseq
  %v24 = vshrl.u32 %v23, 7
  %v25 = vsub.s32 0, %v24
  %v26 = vrot.slane %v21, %v25
  %v30 = vunpack.c.l.b16 %v15
  %v31 = vunpack.c.l.b16 %v16
  %v32 = vpack.c.b16 %v31, %v30
  %v37 = vunpack.c.l.b16 %v17
  %v38 = vunpack.c.l.b16 %v18
  %v39 = vunpack.c.l.b16 %v19
  %v40 = vunpack.c.l.b16 %v20
  %v41 = vpack.c.b16 %v38, %v37
  %v42 = vpack.c.b16 %v40, %v39
  %vm45 = vcmask 261120
  %v47 = vsel %vm45, %v32, 0
  %49 = vmatprep.subr.bf16.mxu0 0
  %50 = vmatpush1.bf16.msra.mxu0 %v41
  %51 = vmatprep.subr.bf16.mxu0 0
  %52 = vmatpush1.bf16.msra.mxu0 %v42
  %53 = vmatprep.subr.bf16.mxu0 0
  %54 = vmatpush1.bf16.msra.mxu0 0
  %55 = vmatprep.subr.bf16.mxu0 0
  %56 = vmatpush1.bf16.msra.mxu0 0
  %57 = vmatprep.subr.bf16.mxu0 0
  %58 = vmatpush1.bf16.msra.mxu0 0
  %59 = vmatprep.subr.bf16.mxu0 0
  %60 = vmatpush1.bf16.msra.mxu0 0
  %61 = vmatprep.subr.bf16.mxu0 0
  %62 = vmatpush1.bf16.msra.mxu0 0
  %63 = vmatprep.subr.bf16.mxu0 0
  %64 = vmatpush1.bf16.msra.mxu0 0
  %65 = vmatprep.subr.bf16.mxu0 0
  %66 = vmatpush1.bf16.msra.mxu0 0
  %67 = vmatprep.subr.bf16.mxu0 0
  %68 = vmatpush1.bf16.msra.mxu0 0
  %69 = vmatprep.subr.bf16.mxu0 0
  %70 = vmatpush1.bf16.msra.mxu0 0
  %71 = vmatprep.subr.bf16.mxu0 0
  %72 = vmatpush1.bf16.msra.mxu0 0
  %73 = vmatprep.subr.bf16.mxu0 0
  %74 = vmatpush1.bf16.msra.mxu0 0
  %75 = vmatprep.subr.bf16.mxu0 0
  %76 = vmatpush1.bf16.msra.mxu0 0
  %77 = vmatprep.subr.bf16.mxu0 0
  %78 = vmatpush1.bf16.msra.mxu0 0
  %79 = vmatprep.subr.bf16.mxu0 0
  %80 = vmatpush1.bf16.msra.mxu0 0
  %81 = vmatprep.mubr.bf16.mxu0 0
  %82 = vmatmul.mubr.bf16.gmra.mrb[0].mxu0 %v47
  %v83 = vpop.f32.mrb[0].mxu0
  %v84 = vadd.f32 %v26, %v83
  %v85 = vpop.f32.mrb[0].mxu0
  %v86 = vpop.f32.mrb[0].mxu0
  %v87 = vadd.f32 %v26, %v86
  %v88 = vpop.f32.mrb[0].mxu0
  %89 = vdwg.mxu0
  %v90 = vpack.c.bf16 %v87, %v84
  %v92 = vunpack.c.l.b16 %v90
  %v93 = vunpack.c.h.b16 %v90
  %v94 = vpack.c.b16 %v92, %v92
  %v95 = vpack.c.b16 %v93, %v93
  %vm98 = vcmask 781312
  %99 = vst.msk [vmem:[%s3] sm:$0xf] %vm98, %v94
  %vm100 = vcmask 779264
  %101 = vst.msk [vmem:[%s3 + $0x4] sm:$0x3] %vm100, %v95
  // Predicated region
  $region14: #{forward.34} parent=0 // pred_check
    _
  $region15: #{forward.34} parent=0 // pred_check_branch
    %103 = sbr.rel (0) target = $region17
  $region16: #{forward.34} parent=0 // pred_region
    _
  $region17: #{forward.34} parent=0 // pred_fallthru
    _
  // Predicated region
  $region18: #{forward.34} parent=0 // pred_check
    _
  $region19: #{forward.34} parent=0 // pred_check_branch
    %105 = sbr.rel (0) target = $region21
  $region20: #{forward.34} parent=0 // pred_region
    _
  $region21: #{forward.34} parent=0 // pred_fallthru
    _

// kernel: forward.35
$region0: #{forward.35}
  #allocation0 [shape = 'u32[]', space=smem, size = 0x4, offset = 0x4, fixed_abs, tag = 'smem constant byte address 0x4 - core index']
  #allocation1 [shape = 'u32[144,128]{1,0:T(1,128)}', space=vmem, size = 0x12000, scoped, tag = 'internal scratch']
  %s0 = inlined_call_operand.vmem [shape: bf16[2,6,96], index: 0, kind: input, shape index: {}]
  %s1 = inlined_call_operand.vmem [shape: f32[2,1,6], index: 1, kind: input, shape index: {}]
  %s2 = inlined_call_operand.vmem [shape: bf16[32,32], index: 2, kind: input, shape index: {}]
  %s3 = inlined_call_operand.vmem [shape: f32[1,32], index: 3, kind: input, shape index: {}]
  %s4 = inlined_call_operand.vmem [shape: bf16[2,6,32], index: 4, kind: input, shape index: {}]
  %s5 = inlined_call_operand.vmem [shape: f32[1,32], index: 5, kind: input, shape index: {}]
  %s6 = inlined_call_operand.vmem [shape: f32[1,32], index: 6, kind: input, shape index: {}]
  %s7 = inlined_call_operand.vmem [shape: bf16[2,6,32], index: 7, kind: output, shape index: {}]
  %s8 = sld [smem:[#allocation0]]
  $region61: #{forward.35} parent=0
    _
  %s10 = ssub.s32 1, %s8
  %s11 = scalar_select 0, %s10, %s8
  loop: start=0, step=1, limit=4
  $region2: #{forward.35} parent=0 // loop_pre_header
    _
  $region3: #{forward.35} parent=0 // loop_header
    %s13 = sphi 0, %s17
    %p14 = scmp.ge.s32.totalorder %s13, 4
    %s23 = sphi 0, %s25
    %s26 = sphi 0, %s23
    %s27 = sphi 0, %s26
    %s43 = sphi 0, %s27
    %s49 = sphi 0, %s51
    %s52 = sphi 0, %s49
    %s53 = sphi 0, %s52
    %s69 = sphi 0, %s53
    %s73 = sphi 0, %s73
    %s75 = sphi 0, %s73
    %s76 = sphi 0, %s75
    %s90 = sphi 0, %s76
    %s94 = sphi 0, %s94
    %s96 = sphi 0, %s94
    %s97 = sphi 0, %s96
    %s111 = sphi 0, %s97
    %s117 = sphi 0, %s119
    %s120 = sphi 0, %s117
    %s121 = sphi 0, %s120
    %s137 = sphi 0, %s121
    %s141 = sphi 0, %s141
    %s143 = sphi 0, %s141
    %s144 = sphi 0, %s143
    %s158 = sphi 0, %s144
    %s162 = sphi 0, %s162
    %s164 = sphi 0, %s162
    %s165 = sphi 0, %s164
    %s179 = sphi 0, %s165
    %s185 = sphi 0, %s187
    %s188 = sphi 0, %s185
    %s189 = sphi 0, %s188
    %s205 = sphi 0, %s189
  $region4: #{forward.35} parent=0 // loop_header_branch
    %16 = sbr.rel (%p14) target = $region8
  $region5: #{forward.35} parent=0 // loop_body
    %s18 = ssub.s32 %s13, 1
    %s19 = ssub.s32 %s13, 2
    %s20 = sadd.s32 %s13, 1
    %s21 = ssub.s32 %s13, %s20
    %p22 = scmp.eq.s32.totalorder %s21, 0
    %s24 = sadd.s32 %s23, 1
    %s25 = scalar_select %p22, %s23, %s24
    %p28 = pneg %p22
    %p29 = scmp.eq.s32.totalorder %s13, 1
    %p30 = por %p28, %p29
    %p31 = scmp.ne.s32.totalorder %s23, %s26
    %p32 = scmp.eq.s32.totalorder %s13, 0
    %p33 = por %p31, %p32
    %p34 = scmp.ne.s32.totalorder %s23, %s26
    %p35 = scmp.eq.s32.totalorder %s18, 1
    %p36 = por %p34, %p35
    %p37 = scmp.ne.s32.totalorder %s26, %s27
    %p38 = scmp.eq.s32.totalorder %s18, 0
    %p39 = por %p37, %p38
    %p40 = scmp.ne.s32.totalorder %s26, %s27
    %p41 = scmp.eq.s32.totalorder %s19, 1
    %p42 = por %p40, %p41
    %p44 = scmp.ne.s32.totalorder %s27, %s43
    %p45 = scmp.eq.s32.totalorder %s19, 0
    %p46 = por %p44, %p45
    %s47 = ssub.s32 %s13, %s20
    %p48 = scmp.eq.s32.totalorder %s47, 0
    %s50 = sadd.s32 %s49, 1
    %s51 = scalar_select %p48, %s49, %s50
    %p54 = pneg %p48
    %p55 = scmp.eq.s32.totalorder %s13, 1
    %p56 = por %p54, %p55
    %p57 = scmp.ne.s32.totalorder %s49, %s52
    %p58 = scmp.eq.s32.totalorder %s13, 0
    %p59 = por %p57, %p58
    %p60 = scmp.ne.s32.totalorder %s49, %s52
    %p61 = scmp.eq.s32.totalorder %s18, 1
    %p62 = por %p60, %p61
    %p63 = scmp.ne.s32.totalorder %s52, %s53
    %p64 = scmp.eq.s32.totalorder %s18, 0
    %p65 = por %p63, %p64
    %p66 = scmp.ne.s32.totalorder %s52, %s53
    %p67 = scmp.eq.s32.totalorder %s19, 1
    %p68 = por %p66, %p67
    %p70 = scmp.ne.s32.totalorder %s53, %s69
    %p71 = scmp.eq.s32.totalorder %s19, 0
    %p72 = por %p70, %p71
    %s74 = sadd.s32 %s73, 1
    %p77 = scmp.eq.s32.totalorder %s13, 1
    %p78 = scmp.ne.s32.totalorder %s73, %s75
    %p79 = scmp.eq.s32.totalorder %s13, 0
    %p80 = por %p78, %p79
    %p81 = scmp.ne.s32.totalorder %s73, %s75
    %p82 = scmp.eq.s32.totalorder %s18, 1
    %p83 = por %p81, %p82
    %p84 = scmp.ne.s32.totalorder %s75, %s76
    %p85 = scmp.eq.s32.totalorder %s18, 0
    %p86 = por %p84, %p85
    %p87 = scmp.ne.s32.totalorder %s75, %s76
    %p88 = scmp.eq.s32.totalorder %s19, 1
    %p89 = por %p87, %p88
    %p91 = scmp.ne.s32.totalorder %s76, %s90
    %p92 = scmp.eq.s32.totalorder %s19, 0
    %p93 = por %p91, %p92
    %s95 = sadd.s32 %s94, 1
    %p98 = scmp.eq.s32.totalorder %s13, 1
    %p99 = scmp.ne.s32.totalorder %s94, %s96
    %p100 = scmp.eq.s32.totalorder %s13, 0
    %p101 = por %p99, %p100
    %p102 = scmp.ne.s32.totalorder %s94, %s96
    %p103 = scmp.eq.s32.totalorder %s18, 1
    %p104 = por %p102, %p103
    %p105 = scmp.ne.s32.totalorder %s96, %s97
    %p106 = scmp.eq.s32.totalorder %s18, 0
    %p107 = por %p105, %p106
    %p108 = scmp.ne.s32.totalorder %s96, %s97
    %p109 = scmp.eq.s32.totalorder %s19, 1
    %p110 = por %p108, %p109
    %p112 = scmp.ne.s32.totalorder %s97, %s111
    %p113 = scmp.eq.s32.totalorder %s19, 0
    %p114 = por %p112, %p113
    %s115 = ssub.s32 %s13, %s20
    %p116 = scmp.eq.s32.totalorder %s115, 0
    %s118 = sadd.s32 %s117, 1
    %s119 = scalar_select %p116, %s117, %s118
    %p122 = pneg %p116
    %p123 = scmp.eq.s32.totalorder %s13, 1
    %p124 = por %p122, %p123
    %p125 = scmp.ne.s32.totalorder %s117, %s120
    %p126 = scmp.eq.s32.totalorder %s13, 0
    %p127 = por %p125, %p126
    %p128 = scmp.ne.s32.totalorder %s117, %s120
    %p129 = scmp.eq.s32.totalorder %s18, 1
    %p130 = por %p128, %p129
    %p131 = scmp.ne.s32.totalorder %s120, %s121
    %p132 = scmp.eq.s32.totalorder %s18, 0
    %p133 = por %p131, %p132
    %p134 = scmp.ne.s32.totalorder %s120, %s121
    %p135 = scmp.eq.s32.totalorder %s19, 1
    %p136 = por %p134, %p135
    %p138 = scmp.ne.s32.totalorder %s121, %s137
    %p139 = scmp.eq.s32.totalorder %s19, 0
    %p140 = por %p138, %p139
    %s142 = sadd.s32 %s141, 1
    %p145 = scmp.eq.s32.totalorder %s13, 1
    %p146 = scmp.ne.s32.totalorder %s141, %s143
    %p147 = scmp.eq.s32.totalorder %s13, 0
    %p148 = por %p146, %p147
    %p149 = scmp.ne.s32.totalorder %s141, %s143
    %p150 = scmp.eq.s32.totalorder %s18, 1
    %p151 = por %p149, %p150
    %p152 = scmp.ne.s32.totalorder %s143, %s144
    %p153 = scmp.eq.s32.totalorder %s18, 0
    %p154 = por %p152, %p153
    %p155 = scmp.ne.s32.totalorder %s143, %s144
    %p156 = scmp.eq.s32.totalorder %s19, 1
    %p157 = por %p155, %p156
    %p159 = scmp.ne.s32.totalorder %s144, %s158
    %p160 = scmp.eq.s32.totalorder %s19, 0
    %p161 = por %p159, %p160
    %s163 = sadd.s32 %s162, 1
    %p166 = scmp.eq.s32.totalorder %s13, 1
    %p167 = scmp.ne.s32.totalorder %s162, %s164
    %p168 = scmp.eq.s32.totalorder %s13, 0
    %p169 = por %p167, %p168
    %p170 = scmp.ne.s32.totalorder %s162, %s164
    %p171 = scmp.eq.s32.totalorder %s18, 1
    %p172 = por %p170, %p171
    %p173 = scmp.ne.s32.totalorder %s164, %s165
    %p174 = scmp.eq.s32.totalorder %s18, 0
    %p175 = por %p173, %p174
    %p176 = scmp.ne.s32.totalorder %s164, %s165
    %p177 = scmp.eq.s32.totalorder %s19, 1
    %p178 = por %p176, %p177
    %p180 = scmp.ne.s32.totalorder %s165, %s179
    %p181 = scmp.eq.s32.totalorder %s19, 0
    %p182 = por %p180, %p181
    %s183 = ssub.s32 %s13, %s20
    %p184 = scmp.eq.s32.totalorder %s183, 0
    %s186 = sadd.s32 %s185, 1
    %s187 = scalar_select %p184, %s185, %s186
    %p190 = pneg %p184
    %p191 = scmp.eq.s32.totalorder %s13, 1
    %p192 = por %p190, %p191
    %p193 = scmp.ne.s32.totalorder %s185, %s188
    %p194 = scmp.eq.s32.totalorder %s13, 0
    %p195 = por %p193, %p194
    %p196 = scmp.ne.s32.totalorder %s185, %s188
    %p197 = scmp.eq.s32.totalorder %s18, 1
    %p198 = por %p196, %p197
    %p199 = scmp.ne.s32.totalorder %s188, %s189
    %p200 = scmp.eq.s32.totalorder %s18, 0
    %p201 = por %p199, %p200
    %p202 = scmp.ne.s32.totalorder %s188, %s189
    %p203 = scmp.eq.s32.totalorder %s19, 1
    %p204 = por %p202, %p203
    %p206 = scmp.ne.s32.totalorder %s189, %s205
    %p207 = scmp.eq.s32.totalorder %s19, 0
    %p208 = por %p206, %p207
    %p209 = scmp.le.s32.totalorder 1, %s13
    %p210 = scmp.lt.s32.totalorder %s13, 3
    %p211 = pnand %p209, %p210
    %p212 = pneg %p211
    // Predicated region
    $region9: #{forward.35} parent=5 // pred_check
      _
    $region10: #{forward.35} parent=5 // pred_check_branch
      %214 = sbr.rel (%p211) target = $region12
    $region11: #{forward.35} parent=5 // pred_region
      %s215 = ssub.s32 %s13, 1
      // Predicated region
      $region13: #{forward.35} parent=11 // pred_check
        %p216 = pneg %p86
      $region14: #{forward.35} parent=11 // pred_check_branch
        %218 = sbr.rel (%p216) target = $region16
      $region15: #{forward.35} parent=11 // pred_region
        _
      $region16: #{forward.35} parent=11 // pred_fallthru
        _
      // Predicated region
      $region17: #{forward.35} parent=11 // pred_check
        %p219 = pneg %p107
      $region18: #{forward.35} parent=11 // pred_check_branch
        %221 = sbr.rel (%p219) target = $region20
      $region19: #{forward.35} parent=11 // pred_region
        _
      $region20: #{forward.35} parent=11 // pred_fallthru
        _
      // Predicated region
      $region21: #{forward.35} parent=11 // pred_check
        %p222 = pneg %p154
      $region22: #{forward.35} parent=11 // pred_check_branch
        %224 = sbr.rel (%p222) target = $region24
      $region23: #{forward.35} parent=11 // pred_region
        _
      $region24: #{forward.35} parent=11 // pred_fallthru
        _
      // Predicated region
      $region25: #{forward.35} parent=11 // pred_check
        %p225 = pneg %p175
      $region26: #{forward.35} parent=11 // pred_check_branch
        %227 = sbr.rel (%p225) target = $region28
      $region27: #{forward.35} parent=11 // pred_region
        _
      $region28: #{forward.35} parent=11 // pred_fallthru
        _
    $region12: #{forward.35} parent=5 // pred_fallthru
      _
    %p228 = scmp.lt.s32.totalorder %s13, 2
    // Predicated region
    $region29: #{forward.35} parent=5 // pred_check
      %p229 = pneg %p228
    $region30: #{forward.35} parent=5 // pred_check_branch
      %231 = sbr.rel (%p229) target = $region32
    $region31: #{forward.35} parent=5 // pred_region
      // Predicated region
      $region33: #{forward.35} parent=31 // pred_check
        %p232 = pneg %p33
      $region34: #{forward.35} parent=31 // pred_check_branch
        %234 = sbr.rel (%p232) target = $region36
      $region35: #{forward.35} parent=31 // pred_region
        %p235 = scmp.lt.s32.totalorder %s13, 1
        %s236 = scalar_select %p235, %s13, 1
        %s237 = smul.addr %s236, 4
        %s238 = scalar_lea.vmem %s0, %s237
      $region36: #{forward.35} parent=31 // pred_fallthru
        _
      // Predicated region
      $region37: #{forward.35} parent=31 // pred_check
        %p239 = pneg %p59
      $region38: #{forward.35} parent=31 // pred_check_branch
        %241 = sbr.rel (%p239) target = $region40
      $region39: #{forward.35} parent=31 // pred_region
        %p242 = scmp.lt.s32.totalorder %s13, 1
        %s243 = scalar_select %p242, %s13, 1
        %s244 = scalar_lea.vmem %s1, %s243
      $region40: #{forward.35} parent=31 // pred_fallthru
        _
      // Predicated region
      $region41: #{forward.35} parent=31 // pred_check
        %p245 = pneg %p127
      $region42: #{forward.35} parent=31 // pred_check_branch
        %247 = sbr.rel (%p245) target = $region44
      $region43: #{forward.35} parent=31 // pred_region
        %p248 = scmp.lt.s32.totalorder %s13, 1
        %s249 = scalar_select %p248, %s13, 1
        %s250 = smul.addr %s249, 4
        %s251 = scalar_lea.vmem %s4, %s250
      $region44: #{forward.35} parent=31 // pred_fallthru
        _
    $region32: #{forward.35} parent=5 // pred_fallthru
      _
    %p252 = scmp.le.s32.totalorder 1, %s13
    %p253 = scmp.lt.s32.totalorder %s13, 3
    %p254 = pnand %p252, %p253
    %p255 = pneg %p254
    // Predicated region
    $region45: #{forward.35} parent=5 // pred_check
      _
    $region46: #{forward.35} parent=5 // pred_check_branch
      %257 = sbr.rel (%p254) target = $region48
    $region47: #{forward.35} parent=5 // pred_region
      %s258 = ssub.s32 %s13, 1
      %p259 = scmp.lt.s32.totalorder %s18, 1
      %s260 = scalar_select %p259, %s18, 1
      %s261 = smul.addr %s260, 4
      %s262 = scalar_lea.vmem %s0, %s261
      %p263 = pneg %p39
      %p264 = pneg %p36
      %p265 = scmp.lt.s32.totalorder %s18, 1
      %s266 = scalar_select %p265, %s18, 1
      %s267 = scalar_lea.vmem %s1, %s266
      %p268 = pneg %p65
      %p269 = pneg %p62
      %p270 = pneg %p86
      %p271 = pneg %p83
      %p272 = pneg %p107
      %p273 = pneg %p104
      %p274 = scmp.lt.s32.totalorder %s18, 1
      %s275 = scalar_select %p274, %s18, 1
      %s276 = smul.addr %s275, 4
      %s277 = scalar_lea.vmem %s4, %s276
      %p278 = pneg %p133
      %p279 = pneg %p130
      %p280 = pneg %p154
      %p281 = pneg %p151
      %p282 = pneg %p175
      %p283 = pneg %p172
      %p284 = pneg %p201
      %p285 = pneg %p198
      %p286 = scmp.lt.s32.totalorder %s18, 1
      %s287 = scalar_select %p286, %s18, 1
      %s288 = smul.addr %s287, 4
      %s289 = scalar_lea.vmem %s7, %s288
      %p290 = scmp.lt.s32.totalorder %s18, 1
      %s291 = scalar_select %p290, %s18, 1
      %s292 = smul.addr %s291, 4
      %s293 = scalar_lea.vmem %s0, %s292
      %p294 = scmp.lt.s32.totalorder %s18, 1
      %s295 = scalar_select %p294, %s18, 1
      %s296 = scalar_lea.vmem %s1, %s295
      %p297 = scmp.lt.s32.totalorder %s18, 1
      %s298 = scalar_select %p297, %s18, 1
      %s299 = smul.addr %s298, 4
      %s300 = scalar_lea.vmem %s4, %s299
      %p301 = scmp.lt.s32.totalorder %s18, 1
      %s302 = scalar_select %p301, %s18, 1
      %s303 = smul.addr %s302, 4
      %s304 = scalar_lea.vmem %s7, %s303
      %v306 = vld [vmem:[%s293] sm:$0x7]
      %v307 = vld [vmem:[%s296] sm:$0x1]
      %v308 = vlaneseq
      %v309 = vshrl.u32 %v308, 7
      %v310 = vlaneseq
      %v311 = vand.u32 %v310, 127
      %vm312 = vcmp.gt.s32.totalorder %v311, %v309
      %v313 = vsel %vm312, -1e+09, 0.0
      %v315 = vlaneseq
      %v316 = vshrl.u32 %v315, 7
      %v317 = vsub.s32 0, %v316
      %v318 = vrot.slane %v307, %v317
      %v320 = vadd.f32 %v318, %v313
      %v321 = vld [vmem:[%s2] sm:$0xf]
      %v322 = vld [vmem:[%s2 + $0x4] sm:$0xf]
      %v323 = vld [vmem:[%s2 + $0x8] sm:$0xf]
      %v324 = vld [vmem:[%s2 + $0xc] sm:$0xf]
      %v326 = vunpack.c.l.b16 %v306
      %v327 = vpack.c.b16 %v326, %v326
      %328 = vrot.lane.b32.xlu0 %v327, 96
      %v329 = vpop.permute.xlu0 %328
      %vm330 = vcmask 64512
      %v332 = vsel %vm330, %v306, 0
      %v335 = vsel %vm330, %v329, 0
      %337 = vmatprep.subr.bf16.mxu0 0
      %338 = vmatpush1.bf16.xpose.msra.mxu0 %v335
      %339 = vmatprep.subr.bf16.mxu0 0
      %340 = vmatpush1.bf16.xpose.msra.mxu0 0
      %341 = vmatprep.subr.bf16.mxu0 0
      %342 = vmatpush1.bf16.xpose.msra.mxu0 0
      %343 = vmatprep.subr.bf16.mxu0 0
      %344 = vmatpush1.bf16.xpose.msra.mxu0 0
      %345 = vmatprep.subr.bf16.mxu0 0
      %346 = vmatpush1.bf16.xpose.msra.mxu0 0
      %347 = vmatprep.subr.bf16.mxu0 0
      %348 = vmatpush1.bf16.xpose.msra.mxu0 0
      %349 = vmatprep.subr.bf16.mxu0 0
      %350 = vmatpush1.bf16.xpose.msra.mxu0 0
      %351 = vmatprep.subr.bf16.mxu0 0
      %352 = vmatpush1.bf16.xpose.msra.mxu0 0
      %353 = vmatprep.subr.bf16.mxu0 0
      %354 = vmatpush1.bf16.xpose.msra.mxu0 0
      %355 = vmatprep.subr.bf16.mxu0 0
      %356 = vmatpush1.bf16.xpose.msra.mxu0 0
      %357 = vmatprep.subr.bf16.mxu0 0
      %358 = vmatpush1.bf16.xpose.msra.mxu0 0
      %359 = vmatprep.subr.bf16.mxu0 0
      %360 = vmatpush1.bf16.xpose.msra.mxu0 0
      %361 = vmatprep.subr.bf16.mxu0 0
      %362 = vmatpush1.bf16.xpose.msra.mxu0 0
      %363 = vmatprep.subr.bf16.mxu0 0
      %364 = vmatpush1.bf16.xpose.msra.mxu0 0
      %365 = vmatprep.subr.bf16.mxu0 0
      %366 = vmatpush1.bf16.xpose.msra.mxu0 0
      %367 = vmatprep.subr.bf16.mxu0 0
      %368 = vmatpush1.bf16.xpose.msra.mxu0 0
      %369 = vmatprep.mubr.bf16.mxu0 0
      %370 = vmatmul.mubr.bf16.gmra.mrb[0].mxu0 %v332
      %v371 = vpop.f32.mrb[0].mxu0
      %v372 = vadd.f32 0.0, %v371
      %v373 = vpop.f32.mrb[0].mxu0
      %v374 = vpop.f32.mrb[0].mxu0
      %v375 = vpop.f32.mrb[0].mxu0
      %376 = vdwg.mxu0
      %v377 = vmul.f32 %v372, 0.35355338
      %v378 = vadd.f32 %v377, %v320
      %vm379 = vcmask 46080
      %v380 = vsel %vm379, %v378, -inf
      %381 = vmax.xlane.f32.xlu0 %v380
      %v382 = vpop.xlane.xlu0 %381
      %v383 = vsub.f32 %v378, %v382
      %v384 = vmul.f32 %v383, 1.442695
      %v385 = vpow.pop %v384
      %v386 = vsel %vm379, %v385, 0.0
      %387 = vadd.xlane.f32.xlu0 %v386
      %v388 = vpop.xlane.xlu0 %387
      %v389 = vrcp.pop %v388
      %v390 = vmul.f32 %v385, %v389
      %v391 = vpack.c.bf16 %v390, %v390
      %392 = vrot.lane.b32.xlu0 %v327, 64
      %v393 = vpop.permute.xlu0 %392
      %vm394 = vcmask 48128
      %v396 = vsel %vm394, %v391, 0
      %vm398 = vcmask 1042432
      %v400 = vsel %vm398, %v393, 0
      %402 = vmatprep.subr.bf16.mxu0 0
      %403 = vmatpush1.bf16.msra.mxu0 %v400
      %404 = vmatprep.subr.bf16.mxu0 0
      %405 = vmatpush1.bf16.msra.mxu0 0
      %406 = vmatprep.subr.bf16.mxu0 0
      %407 = vmatpush1.bf16.msra.mxu0 0
      %408 = vmatprep.subr.bf16.mxu0 0
      %409 = vmatpush1.bf16.msra.mxu0 0
      %410 = vmatprep.subr.bf16.mxu0 0
      %411 = vmatpush1.bf16.msra.mxu0 0
      %412 = vmatprep.subr.bf16.mxu0 0
      %413 = vmatpush1.bf16.msra.mxu0 0
      %414 = vmatprep.subr.bf16.mxu0 0
      %415 = vmatpush1.bf16.msra.mxu0 0
      %416 = vmatprep.subr.bf16.mxu0 0
      %417 = vmatpush1.bf16.msra.mxu0 0
      %418 = vmatprep.subr.bf16.mxu0 0
      %419 = vmatpush1.bf16.msra.mxu0 0
      %420 = vmatprep.subr.bf16.mxu0 0
      %421 = vmatpush1.bf16.msra.mxu0 0
      %422 = vmatprep.subr.bf16.mxu0 0
      %423 = vmatpush1.bf16.msra.mxu0 0
      %424 = vmatprep.subr.bf16.mxu0 0
      %425 = vmatpush1.bf16.msra.mxu0 0
      %426 = vmatprep.subr.bf16.mxu0 0
      %427 = vmatpush1.bf16.msra.mxu0 0
      %428 = vmatprep.subr.bf16.mxu0 0
      %429 = vmatpush1.bf16.msra.mxu0 0
      %430 = vmatprep.subr.bf16.mxu0 0
      %431 = vmatpush1.bf16.msra.mxu0 0
      %432 = vmatprep.subr.bf16.mxu0 0
      %433 = vmatpush1.bf16.msra.mxu0 0
      %434 = vmatprep.mubr.bf16.mxu0 0
      %435 = vmatmul.mubr.bf16.gmra.mrb[0].mxu0 %v396
      %v436 = vpop.f32.mrb[0].mxu0
      %v437 = vadd.f32 0.0, %v436
      %v438 = vpop.f32.mrb[0].mxu0
      %v439 = vpop.f32.mrb[0].mxu0
      %v440 = vpop.f32.mrb[0].mxu0
      %441 = vdwg.mxu0
      %v442 = vpack.c.bf16 %v437, %v437
      %443 = vrot.lane.b32.xlu0 %v327, 120
      %v444 = vpop.permute.xlu0 %443
      %445 = vrot.lane.b32.xlu0 %v327, 88
      %v446 = vpop.permute.xlu0 %445
      %v448 = vsel %vm330, %v444, 0
      %v451 = vsel %vm330, %v446, 0
      %453 = vmatprep.subr.bf16.mxu0 0
      %454 = vmatpush1.bf16.xpose.msra.mxu0 %v451
      %455 = vmatprep.subr.bf16.mxu0 0
      %456 = vmatpush1.bf16.xpose.msra.mxu0 0
      %457 = vmatprep.subr.bf16.mxu0 0
      %458 = vmatpush1.bf16.xpose.msra.mxu0 0
      %459 = vmatprep.subr.bf16.mxu0 0
      %460 = vmatpush1.bf16.xpose.msra.mxu0 0
      %461 = vmatprep.subr.bf16.mxu0 0
      %462 = vmatpush1.bf16.xpose.msra.mxu0 0
      %463 = vmatprep.subr.bf16.mxu0 0
      %464 = vmatpush1.bf16.xpose.msra.mxu0 0
      %465 = vmatprep.subr.bf16.mxu0 0
      %466 = vmatpush1.bf16.xpose.msra.mxu0 0
      %467 = vmatprep.subr.bf16.mxu0 0
      %468 = vmatpush1.bf16.xpose.msra.mxu0 0
      %469 = vmatprep.subr.bf16.mxu0 0
      %470 = vmatpush1.bf16.xpose.msra.mxu0 0
      %471 = vmatprep.subr.bf16.mxu0 0
      %472 = vmatpush1.bf16.xpose.msra.mxu0 0
      %473 = vmatprep.subr.bf16.mxu0 0
      %474 = vmatpush1.bf16.xpose.msra.mxu0 0
      %475 = vmatprep.subr.bf16.mxu0 0
      %476 = vmatpush1.bf16.xpose.msra.mxu0 0
      %477 = vmatprep.subr.bf16.mxu0 0
      %478 = vmatpush1.bf16.xpose.msra.mxu0 0
      %479 = vmatprep.subr.bf16.mxu0 0
      %480 = vmatpush1.bf16.xpose.msra.mxu0 0
      %481 = vmatprep.subr.bf16.mxu0 0
      %482 = vmatpush1.bf16.xpose.msra.mxu0 0
      %483 = vmatprep.subr.bf16.mxu0 0
      %484 = vmatpush1.bf16.xpose.msra.mxu0 0
      %485 = vmatprep.mubr.bf16.mxu0 0
      %486 = vmatmul.mubr.bf16.gmra.mrb[0].mxu0 %v448
      %v487 = vpop.f32.mrb[0].mxu0
      %v488 = vadd.f32 0.0, %v487
      %v489 = vpop.f32.mrb[0].mxu0
      %v490 = vpop.f32.mrb[0].mxu0
      %v491 = vpop.f32.mrb[0].mxu0
      %492 = vdwg.mxu0
      %v493 = vmul.f32 %v488, 0.35355338
      %v494 = vadd.f32 %v493, %v320
      %v495 = vsel %vm379, %v494, -inf
      %496 = vmax.xlane.f32.xlu0 %v495
      %v497 = vpop.xlane.xlu0 %496
      %v498 = vsub.f32 %v494, %v497
      %v499 = vmul.f32 %v498, 1.442695
      %v500 = vpow.pop %v499
      %v501 = vsel %vm379, %v500, 0.0
      %502 = vadd.xlane.f32.xlu0 %v501
      %v503 = vpop.xlane.xlu0 %502
      %v504 = vrcp.pop %v503
      %v505 = vmul.f32 %v500, %v504
      %v506 = vpack.c.bf16 %v505, %v505
      %507 = vrot.lane.b32.xlu0 %v327, 56
      %v508 = vpop.permute.xlu0 %507
      %v510 = vsel %vm394, %v506, 0
      %v513 = vsel %vm398, %v508, 0
      %515 = vmatprep.subr.bf16.mxu0 0
      %516 = vmatpush1.bf16.msra.mxu0 %v513
      %517 = vmatprep.subr.bf16.mxu0 0
      %518 = vmatpush1.bf16.msra.mxu0 0
      %519 = vmatprep.subr.bf16.mxu0 0
      %520 = vmatpush1.bf16.msra.mxu0 0
      %521 = vmatprep.subr.bf16.mxu0 0
      %522 = vmatpush1.bf16.msra.mxu0 0
      %523 = vmatprep.subr.bf16.mxu0 0
      %524 = vmatpush1.bf16.msra.mxu0 0
      %525 = vmatprep.subr.bf16.mxu0 0
      %526 = vmatpush1.bf16.msra.mxu0 0
      %527 = vmatprep.subr.bf16.mxu0 0
      %528 = vmatpush1.bf16.msra.mxu0 0
      %529 = vmatprep.subr.bf16.mxu0 0
      %530 = vmatpush1.bf16.msra.mxu0 0
      %531 = vmatprep.subr.bf16.mxu0 0
      %532 = vmatpush1.bf16.msra.mxu0 0
      %533 = vmatprep.subr.bf16.mxu0 0
      %534 = vmatpush1.bf16.msra.mxu0 0
      %535 = vmatprep.subr.bf16.mxu0 0
      %536 = vmatpush1.bf16.msra.mxu0 0
      %537 = vmatprep.subr.bf16.mxu0 0
      %538 = vmatpush1.bf16.msra.mxu0 0
      %539 = vmatprep.subr.bf16.mxu0 0
      %540 = vmatpush1.bf16.msra.mxu0 0
      %541 = vmatprep.subr.bf16.mxu0 0
      %542 = vmatpush1.bf16.msra.mxu0 0
      %543 = vmatprep.subr.bf16.mxu0 0
      %544 = vmatpush1.bf16.msra.mxu0 0
      %545 = vmatprep.subr.bf16.mxu0 0
      %546 = vmatpush1.bf16.msra.mxu0 0
      %547 = vmatprep.mubr.bf16.mxu0 0
      %548 = vmatmul.mubr.bf16.gmra.mrb[0].mxu0 %v510
      %v549 = vpop.f32.mrb[0].mxu0
      %v550 = vadd.f32 0.0, %v549
      %v551 = vpop.f32.mrb[0].mxu0
      %v552 = vpop.f32.mrb[0].mxu0
      %v553 = vpop.f32.mrb[0].mxu0
      %554 = vdwg.mxu0
      %v555 = vpack.c.bf16 %v550, %v550
      %v557 = vsel %vm330, %v555, 0
      %vm559 = vcmask 1043456
      %v561 = vsel %vm559, %v322, 0
      %563 = vmatprep.subr.bf16.mxu0 0
      %564 = vmatpush1.bf16.msra.mxu0 %v561
      %565 = vmatprep.subr.bf16.mxu0 0
      %566 = vmatpush1.bf16.msra.mxu0 0
      %567 = vmatprep.subr.bf16.mxu0 0
      %568 = vmatpush1.bf16.msra.mxu0 0
      %569 = vmatprep.subr.bf16.mxu0 0
      %570 = vmatpush1.bf16.msra.mxu0 0
      %571 = vmatprep.subr.bf16.mxu0 0
      %572 = vmatpush1.bf16.msra.mxu0 0
      %573 = vmatprep.subr.bf16.mxu0 0
      %574 = vmatpush1.bf16.msra.mxu0 0
      %575 = vmatprep.subr.bf16.mxu0 0
      %576 = vmatpush1.bf16.msra.mxu0 0
      %577 = vmatprep.subr.bf16.mxu0 0
      %578 = vmatpush1.bf16.msra.mxu0 0
      %579 = vmatprep.subr.bf16.mxu0 0
      %580 = vmatpush1.bf16.msra.mxu0 0
      %581 = vmatprep.subr.bf16.mxu0 0
      %582 = vmatpush1.bf16.msra.mxu0 0
      %583 = vmatprep.subr.bf16.mxu0 0
      %584 = vmatpush1.bf16.msra.mxu0 0
      %585 = vmatprep.subr.bf16.mxu0 0
      %586 = vmatpush1.bf16.msra.mxu0 0
      %587 = vmatprep.subr.bf16.mxu0 0
      %588 = vmatpush1.bf16.msra.mxu0 0
      %589 = vmatprep.subr.bf16.mxu0 0
      %590 = vmatpush1.bf16.msra.mxu0 0
      %591 = vmatprep.subr.bf16.mxu0 0
      %592 = vmatpush1.bf16.msra.mxu0 0
      %593 = vmatprep.subr.bf16.mxu0 0
      %594 = vmatpush1.bf16.msra.mxu0 0
      %595 = vmatprep.mubr.bf16.mxu0 0
      %596 = vmatmul.mubr.bf16.gmra.mrb[0].mxu0 %v557
      %v597 = vpop.f32.mrb[0].mxu0
      %v598 = vadd.f32 0.0, %v597
      %v599 = vpop.f32.mrb[0].mxu0
      %v600 = vpop.f32.mrb[0].mxu0
      %v601 = vpop.f32.mrb[0].mxu0
      %602 = vdwg.mxu0
      %v604 = vsel %vm330, %v442, 0
      %v607 = vsel %vm559, %v321, 0
      %609 = vmatprep.subr.bf16.mxu0 0
      %610 = vmatpush1.bf16.msra.mxu0 %v607
      %611 = vmatprep.subr.bf16.mxu0 0
      %612 = vmatpush1.bf16.msra.mxu0 0
      %613 = vmatprep.subr.bf16.mxu0 0
      %614 = vmatpush1.bf16.msra.mxu0 0
      %615 = vmatprep.subr.bf16.mxu0 0
      %616 = vmatpush1.bf16.msra.mxu0 0
      %617 = vmatprep.subr.bf16.mxu0 0
      %618 = vmatpush1.bf16.msra.mxu0 0
      %619 = vmatprep.subr.bf16.mxu0 0
      %620 = vmatpush1.bf16.msra.mxu0 0
      %621 = vmatprep.subr.bf16.mxu0 0
      %622 = vmatpush1.bf16.msra.mxu0 0
      %623 = vmatprep.subr.bf16.mxu0 0
      %624 = vmatpush1.bf16.msra.mxu0 0
      %625 = vmatprep.subr.bf16.mxu0 0
      %626 = vmatpush1.bf16.msra.mxu0 0
      %627 = vmatprep.subr.bf16.mxu0 0
      %628 = vmatpush1.bf16.msra.mxu0 0
      %629 = vmatprep.subr.bf16.mxu0 0
      %630 = vmatpush1.bf16.msra.mxu0 0
      %631 = vmatprep.subr.bf16.mxu0 0
      %632 = vmatpush1.bf16.msra.mxu0 0
      %633 = vmatprep.subr.bf16.mxu0 0
      %634 = vmatpush1.bf16.msra.mxu0 0
      %635 = vmatprep.subr.bf16.mxu0 0
      %636 = vmatpush1.bf16.msra.mxu0 0
      %637 = vmatprep.subr.bf16.mxu0 0
      %638 = vmatpush1.bf16.msra.mxu0 0
      %639 = vmatprep.subr.bf16.mxu0 0
      %640 = vmatpush1.bf16.msra.mxu0 0
      %641 = vmatprep.mubr.bf16.mxu0 0
      %642 = vmatmul.mubr.bf16.gmra.mrb[0].mxu0 %v604
      %v643 = vpop.f32.mrb[0].mxu0
      %v644 = vadd.f32 %v598, %v643
      %v645 = vpop.f32.mrb[0].mxu0
      %v646 = vpop.f32.mrb[0].mxu0
      %v647 = vpop.f32.mrb[0].mxu0
      %648 = vdwg.mxu0
      %649 = vrot.lane.b32.xlu0 %v327, 112
      %v650 = vpop.permute.xlu0 %649
      %651 = vrot.lane.b32.xlu0 %v327, 80
      %v652 = vpop.permute.xlu0 %651
      %v654 = vsel %vm330, %v650, 0
      %v657 = vsel %vm330, %v652, 0
      %659 = vmatprep.subr.bf16.mxu0 0
      %660 = vmatpush1.bf16.xpose.msra.mxu0 %v657
      %661 = vmatprep.subr.bf16.mxu0 0
      %662 = vmatpush1.bf16.xpose.msra.mxu0 0
      %663 = vmatprep.subr.bf16.mxu0 0
      %664 = vmatpush1.bf16.xpose.msra.mxu0 0
      %665 = vmatprep.subr.bf16.mxu0 0
      %666 = vmatpush1.bf16.xpose.msra.mxu0 0
      %667 = vmatprep.subr.bf16.mxu0 0
      %668 = vmatpush1.bf16.xpose.msra.mxu0 0
      %669 = vmatprep.subr.bf16.mxu0 0
      %670 = vmatpush1.bf16.xpose.msra.mxu0 0
      %671 = vmatprep.subr.bf16.mxu0 0
      %672 = vmatpush1.bf16.xpose.msra.mxu0 0
      %673 = vmatprep.subr.bf16.mxu0 0
      %674 = vmatpush1.bf16.xpose.msra.mxu0 0
      %675 = vmatprep.subr.bf16.mxu0 0
      %676 = vmatpush1.bf16.xpose.msra.mxu0 0
      %677 = vmatprep.subr.bf16.mxu0 0
      %678 = vmatpush1.bf16.xpose.msra.mxu0 0
      %679 = vmatprep.subr.bf16.mxu0 0
      %680 = vmatpush1.bf16.xpose.msra.mxu0 0
      %681 = vmatprep.subr.bf16.mxu0 0
      %682 = vmatpush1.bf16.xpose.msra.mxu0 0
      %683 = vmatprep.subr.bf16.mxu0 0
      %684 = vmatpush1.bf16.xpose.msra.mxu0 0
      %685 = vmatprep.subr.bf16.mxu0 0
      %686 = vmatpush1.bf16.xpose.msra.mxu0 0
      %687 = vmatprep.subr.bf16.mxu0 0
      %688 = vmatpush1.bf16.xpose.msra.mxu0 0
      %689 = vmatprep.subr.bf16.mxu0 0
      %690 = vmatpush1.bf16.xpose.msra.mxu0 0
      %691 = vmatprep.mubr.bf16.mxu0 0
      %692 = vmatmul.mubr.bf16.gmra.mrb[0].mxu0 %v654
      %v693 = vpop.f32.mrb[0].mxu0
      %v694 = vadd.f32 0.0, %v693
      %v695 = vpop.f32.mrb[0].mxu0
      %v696 = vpop.f32.mrb[0].mxu0
      %v697 = vpop.f32.mrb[0].mxu0
      %698 = vdwg.mxu0
      %v699 = vmul.f32 %v694, 0.35355338
      %v700 = vadd.f32 %v699, %v320
      %v701 = vsel %vm379, %v700, -inf
      %702 = vmax.xlane.f32.xlu0 %v701
      %v703 = vpop.xlane.xlu0 %702
      %v704 = vsub.f32 %v700, %v703
      %v705 = vmul.f32 %v704, 1.442695
      %v706 = vpow.pop %v705
      %v707 = vsel %vm379, %v706, 0.0
      %708 = vadd.xlane.f32.xlu0 %v707
      %v709 = vpop.xlane.xlu0 %708
      %v710 = vrcp.pop %v709
      %v711 = vmul.f32 %v706, %v710
      %v712 = vpack.c.bf16 %v711, %v711
      %713 = vrot.lane.b32.xlu0 %v327, 48
      %v714 = vpop.permute.xlu0 %713
      %v716 = vsel %vm394, %v712, 0
      %v719 = vsel %vm398, %v714, 0
      %721 = vmatprep.subr.bf16.mxu0 0
      %722 = vmatpush1.bf16.msra.mxu0 %v719
      %723 = vmatprep.subr.bf16.mxu0 0
      %724 = vmatpush1.bf16.msra.mxu0 0
      %725 = vmatprep.subr.bf16.mxu0 0
      %726 = vmatpush1.bf16.msra.mxu0 0
      %727 = vmatprep.subr.bf16.mxu0 0
      %728 = vmatpush1.bf16.msra.mxu0 0
      %729 = vmatprep.subr.bf16.mxu0 0
      %730 = vmatpush1.bf16.msra.mxu0 0
      %731 = vmatprep.subr.bf16.mxu0 0
      %732 = vmatpush1.bf16.msra.mxu0 0
      %733 = vmatprep.subr.bf16.mxu0 0
      %734 = vmatpush1.bf16.msra.mxu0 0
      %735 = vmatprep.subr.bf16.mxu0 0
      %736 = vmatpush1.bf16.msra.mxu0 0
      %737 = vmatprep.subr.bf16.mxu0 0
      %738 = vmatpush1.bf16.msra.mxu0 0
      %739 = vmatprep.subr.bf16.mxu0 0
      %740 = vmatpush1.bf16.msra.mxu0 0
      %741 = vmatprep.subr.bf16.mxu0 0
      %742 = vmatpush1.bf16.msra.mxu0 0
      %743 = vmatprep.subr.bf16.mxu0 0
      %744 = vmatpush1.bf16.msra.mxu0 0
      %745 = vmatprep.subr.bf16.mxu0 0
      %746 = vmatpush1.bf16.msra.mxu0 0
      %747 = vmatprep.subr.bf16.mxu0 0
      %748 = vmatpush1.bf16.msra.mxu0 0
      %749 = vmatprep.subr.bf16.mxu0 0
      %750 = vmatpush1.bf16.msra.mxu0 0
      %751 = vmatprep.subr.bf16.mxu0 0
      %752 = vmatpush1.bf16.msra.mxu0 0
      %753 = vmatprep.mubr.bf16.mxu0 0
      %754 = vmatmul.mubr.bf16.gmra.mrb[0].mxu0 %v716
      %v755 = vpop.f32.mrb[0].mxu0
      %v756 = vadd.f32 0.0, %v755
      %v757 = vpop.f32.mrb[0].mxu0
      %v758 = vpop.f32.mrb[0].mxu0
      %v759 = vpop.f32.mrb[0].mxu0
      %760 = vdwg.mxu0
      %v761 = vpack.c.bf16 %v756, %v756
      %v763 = vsel %vm330, %v761, 0
      %v766 = vsel %vm559, %v323, 0
      %768 = vmatprep.subr.bf16.mxu0 0
      %769 = vmatpush1.bf16.msra.mxu0 %v766
      %770 = vmatprep.subr.bf16.mxu0 0
      %771 = vmatpush1.bf16.msra.mxu0 0
      %772 = vmatprep.subr.bf16.mxu0 0
      %773 = vmatpush1.bf16.msra.mxu0 0
      %774 = vmatprep.subr.bf16.mxu0 0
      %775 = vmatpush1.bf16.msra.mxu0 0
      %776 = vmatprep.subr.bf16.mxu0 0
      %777 = vmatpush1.bf16.msra.mxu0 0
      %778 = vmatprep.subr.bf16.mxu0 0
      %779 = vmatpush1.bf16.msra.mxu0 0
      %780 = vmatprep.subr.bf16.mxu0 0
      %781 = vmatpush1.bf16.msra.mxu0 0
      %782 = vmatprep.subr.bf16.mxu0 0
      %783 = vmatpush1.bf16.msra.mxu0 0
      %784 = vmatprep.subr.bf16.mxu0 0
      %785 = vmatpush1.bf16.msra.mxu0 0
      %786 = vmatprep.subr.bf16.mxu0 0
      %787 = vmatpush1.bf16.msra.mxu0 0
      %788 = vmatprep.subr.bf16.mxu0 0
      %789 = vmatpush1.bf16.msra.mxu0 0
      %790 = vmatprep.subr.bf16.mxu0 0
      %791 = vmatpush1.bf16.msra.mxu0 0
      %792 = vmatprep.subr.bf16.mxu0 0
      %793 = vmatpush1.bf16.msra.mxu0 0
      %794 = vmatprep.subr.bf16.mxu0 0
      %795 = vmatpush1.bf16.msra.mxu0 0
      %796 = vmatprep.subr.bf16.mxu0 0
      %797 = vmatpush1.bf16.msra.mxu0 0
      %798 = vmatprep.subr.bf16.mxu0 0
      %799 = vmatpush1.bf16.msra.mxu0 0
      %800 = vmatprep.mubr.bf16.mxu0 0
      %801 = vmatmul.mubr.bf16.gmra.mrb[0].mxu0 %v763
      %v802 = vpop.f32.mrb[0].mxu0
      %v803 = vadd.f32 0.0, %v802
      %v804 = vpop.f32.mrb[0].mxu0
      %v805 = vpop.f32.mrb[0].mxu0
      %v806 = vpop.f32.mrb[0].mxu0
      %807 = vdwg.mxu0
      %v808 = vadd.f32 %v644, %v803
      %809 = vrot.lane.b32.xlu0 %v327, 104
      %v810 = vpop.permute.xlu0 %809
      %811 = vrot.lane.b32.xlu0 %v327, 72
      %v812 = vpop.permute.xlu0 %811
      %v814 = vsel %vm330, %v810, 0
      %v817 = vsel %vm330, %v812, 0
      %819 = vmatprep.subr.bf16.mxu0 0
      %820 = vmatpush1.bf16.xpose.msra.mxu0 %v817
      %821 = vmatprep.subr.bf16.mxu0 0
      %822 = vmatpush1.bf16.xpose.msra.mxu0 0
      %823 = vmatprep.subr.bf16.mxu0 0
      %824 = vmatpush1.bf16.xpose.msra.mxu0 0
      %825 = vmatprep.subr.bf16.mxu0 0
      %826 = vmatpush1.bf16.xpose.msra.mxu0 0
      %827 = vmatprep.subr.bf16.mxu0 0
      %828 = vmatpush1.bf16.xpose.msra.mxu0 0
      %829 = vmatprep.subr.bf16.mxu0 0
      %830 = vmatpush1.bf16.xpose.msra.mxu0 0
      %831 = vmatprep.subr.bf16.mxu0 0
      %832 = vmatpush1.bf16.xpose.msra.mxu0 0
      %833 = vmatprep.subr.bf16.mxu0 0
      %834 = vmatpush1.bf16.xpose.msra.mxu0 0
      %835 = vmatprep.subr.bf16.mxu0 0
      %836 = vmatpush1.bf16.xpose.msra.mxu0 0
      %837 = vmatprep.subr.bf16.mxu0 0
      %838 = vmatpush1.bf16.xpose.msra.mxu0 0
      %839 = vmatprep.subr.bf16.mxu0 0
      %840 = vmatpush1.bf16.xpose.msra.mxu0 0
      %841 = vmatprep.subr.bf16.mxu0 0
      %842 = vmatpush1.bf16.xpose.msra.mxu0 0
      %843 = vmatprep.subr.bf16.mxu0 0
      %844 = vmatpush1.bf16.xpose.msra.mxu0 0
      %845 = vmatprep.subr.bf16.mxu0 0
      %846 = vmatpush1.bf16.xpose.msra.mxu0 0
      %847 = vmatprep.subr.bf16.mxu0 0
      %848 = vmatpush1.bf16.xpose.msra.mxu0 0
      %849 = vmatprep.subr.bf16.mxu0 0
      %850 = vmatpush1.bf16.xpose.msra.mxu0 0
      %851 = vmatprep.mubr.bf16.mxu0 0
      %852 = vmatmul.mubr.bf16.gmra.mrb[0].mxu0 %v814
      %v853 = vpop.f32.mrb[0].mxu0
      %v854 = vadd.f32 0.0, %v853
      %v855 = vpop.f32.mrb[0].mxu0
      %v856 = vpop.f32.mrb[0].mxu0
      %v857 = vpop.f32.mrb[0].mxu0
      %858 = vdwg.mxu0
      %v859 = vmul.f32 %v854, 0.35355338
      %v860 = vadd.f32 %v859, %v320
      %v861 = vsel %vm379, %v860, -inf
      %862 = vmax.xlane.f32.xlu0 %v861
      %v863 = vpop.xlane.xlu0 %862
      %v864 = vsub.f32 %v860, %v863
      %v865 = vmul.f32 %v864, 1.442695
      %v866 = vpow.pop %v865
      %v867 = vsel %vm379, %v866, 0.0
      %868 = vadd.xlane.f32.xlu0 %v867
      %v869 = vpop.xlane.xlu0 %868
      %v870 = vrcp.pop %v869
      %v871 = vmul.f32 %v866, %v870
      %v872 = vpack.c.bf16 %v871, %v871
      %873 = vrot.lane.b32.xlu0 %v327, 40
      %v874 = vpop.permute.xlu0 %873
      %v876 = vsel %vm394, %v872, 0
      %v879 = vsel %vm398, %v874, 0
      %881 = vmatprep.subr.bf16.mxu0 0
      %882 = vmatpush1.bf16.msra.mxu0 %v879
      %883 = vmatprep.subr.bf16.mxu0 0
      %884 = vmatpush1.bf16.msra.mxu0 0
      %885 = vmatprep.subr.bf16.mxu0 0
      %886 = vmatpush1.bf16.msra.mxu0 0
      %887 = vmatprep.subr.bf16.mxu0 0
      %888 = vmatpush1.bf16.msra.mxu0 0
      %889 = vmatprep.subr.bf16.mxu0 0
      %890 = vmatpush1.bf16.msra.mxu0 0
      %891 = vmatprep.subr.bf16.mxu0 0
      %892 = vmatpush1.bf16.msra.mxu0 0
      %893 = vmatprep.subr.bf16.mxu0 0
      %894 = vmatpush1.bf16.msra.mxu0 0
      %895 = vmatprep.subr.bf16.mxu0 0
      %896 = vmatpush1.bf16.msra.mxu0 0
      %897 = vmatprep.subr.bf16.mxu0 0
      %898 = vmatpush1.bf16.msra.mxu0 0
      %899 = vmatprep.subr.bf16.mxu0 0
      %900 = vmatpush1.bf16.msra.mxu0 0
      %901 = vmatprep.subr.bf16.mxu0 0
      %902 = vmatpush1.bf16.msra.mxu0 0
      %903 = vmatprep.subr.bf16.mxu0 0
      %904 = vmatpush1.bf16.msra.mxu0 0
      %905 = vmatprep.subr.bf16.mxu0 0
      %906 = vmatpush1.bf16.msra.mxu0 0
      %907 = vmatprep.subr.bf16.mxu0 0
      %908 = vmatpush1.bf16.msra.mxu0 0
      %909 = vmatprep.subr.bf16.mxu0 0
      %910 = vmatpush1.bf16.msra.mxu0 0
      %911 = vmatprep.subr.bf16.mxu0 0
      %912 = vmatpush1.bf16.msra.mxu0 0
      %913 = vmatprep.mubr.bf16.mxu0 0
      %914 = vmatmul.mubr.bf16.gmra.mrb[0].mxu0 %v876
      %v915 = vpop.f32.mrb[0].mxu0
      %v916 = vadd.f32 0.0, %v915
      %v917 = vpop.f32.mrb[0].mxu0
      %v918 = vpop.f32.mrb[0].mxu0
      %v919 = vpop.f32.mrb[0].mxu0
      %920 = vdwg.mxu0
      %v921 = vpack.c.bf16 %v916, %v916
      %v923 = vsel %vm330, %v921, 0
      %v926 = vsel %vm559, %v324, 0
      %928 = vmatprep.subr.bf16.mxu0 0
      %929 = vmatpush1.bf16.msra.mxu0 %v926
      %930 = vmatprep.subr.bf16.mxu0 0
      %931 = vmatpush1.bf16.msra.mxu0 0
      %932 = vmatprep.subr.bf16.mxu0 0
      %933 = vmatpush1.bf16.msra.mxu0 0
      %934 = vmatprep.subr.bf16.mxu0 0
      %935 = vmatpush1.bf16.msra.mxu0 0
      %936 = vmatprep.subr.bf16.mxu0 0
      %937 = vmatpush1.bf16.msra.mxu0 0
      %938 = vmatprep.subr.bf16.mxu0 0
      %939 = vmatpush1.bf16.msra.mxu0 0
      %940 = vmatprep.subr.bf16.mxu0 0
      %941 = vmatpush1.bf16.msra.mxu0 0
      %942 = vmatprep.subr.bf16.mxu0 0
      %943 = vmatpush1.bf16.msra.mxu0 0
      %944 = vmatprep.subr.bf16.mxu0 0
      %945 = vmatpush1.bf16.msra.mxu0 0
      %946 = vmatprep.subr.bf16.mxu0 0
      %947 = vmatpush1.bf16.msra.mxu0 0
      %948 = vmatprep.subr.bf16.mxu0 0
      %949 = vmatpush1.bf16.msra.mxu0 0
      %950 = vmatprep.subr.bf16.mxu0 0
      %951 = vmatpush1.bf16.msra.mxu0 0
      %952 = vmatprep.subr.bf16.mxu0 0
      %953 = vmatpush1.bf16.msra.mxu0 0
      %954 = vmatprep.subr.bf16.mxu0 0
      %955 = vmatpush1.bf16.msra.mxu0 0
      %956 = vmatprep.subr.bf16.mxu0 0
      %957 = vmatpush1.bf16.msra.mxu0 0
      %958 = vmatprep.subr.bf16.mxu0 0
      %959 = vmatpush1.bf16.msra.mxu0 0
      %960 = vmatprep.mubr.bf16.mxu0 0
      %961 = vmatmul.mubr.bf16.gmra.mrb[0].mxu0 %v923
      %v962 = vpop.f32.mrb[0].mxu0
      %v963 = vadd.f32 0.0, %v962
      %v964 = vpop.f32.mrb[0].mxu0
      %v965 = vpop.f32.mrb[0].mxu0
      %v966 = vpop.f32.mrb[0].mxu0
      %967 = vdwg.mxu0
      %v968 = vadd.f32 %v808, %v963
      %v969 = vld [vmem:[%s3] sm:$0x1]
      %v971 = vlaneseq
      %v972 = vshrl.u32 %v971, 7
      %v973 = vsub.s32 0, %v972
      %v974 = vrot.slane %v969, %v973
      %v976 = vadd.f32 %v968, %v974
      %v977 = vld [vmem:[%s300] sm:$0x7]
      %v978 = vunpack.c.l.bf16 %v977
      %v979 = vadd.f32 %v976, %v978
      %v980 = vld [vmem:[%s5] sm:$0x1]
      %v981 = vld [vmem:[%s6] sm:$0x1]
      %vm982 = vcmask 259072
      %v983 = vsel %vm982, %v979, 0.0
      %984 = vadd.xlane.f32.xlu0 %v983
      %v985 = vpop.xlane.xlu0 %984
      %v986 = vrcp.pop 32.0
      %v987 = vmul.f32 %v985, %v986
      %v988 = vsub.f32 %v979, %v987
      %v989 = vmul.f32 %v988, %v988
      %v990 = vsel %vm982, %v989, 0.0
      %991 = vadd.xlane.f32.xlu0 %v990
      %v992 = vpop.xlane.xlu0 %991
      %v993 = vmul.f32 %v992, %v986
      %v994 = vadd.f32 %v993, 1e-05
      %v995 = vrsqrt.pop %v994
      %v996 = vmul.f32 %v988, %v995
      %v998 = vlaneseq
      %v999 = vshrl.u32 %v998, 7
      %v1000 = vsub.s32 0, %v999
      %v1001 = vrot.slane %v980, %v1000
      %v1003 = vmul.f32 %v996, %v1001
      %v1005 = vlaneseq
      %v1006 = vshrl.u32 %v1005, 7
      %v1007 = vsub.s32 0, %v1006
      %v1008 = vrot.slane %v981, %v1007
      %v1010 = vadd.f32 %v1003, %v1008
      %v1011 = vpack.c.bf16 %v1010, %v1010
      %vm1012 = vcmask 256000
      %1013 = vst.msk [vmem:[%s304] sm:$0x7] %vm1012, %v1011
      %p1014 = scmp.lt.s32.totalorder %s18, 1
      %s1015 = scalar_select %p1014, %s18, 1
      %s1016 = smul.addr %s1015, 4
      %s1017 = scalar_lea.vmem %s7, %s1016
      // Predicated region
      $region49: #{forward.35} parent=47 // pred_check
        %p1018 = pneg %p198
      $region50: #{forward.35} parent=47 // pred_check_branch
        %1020 = sbr.rel (%p1018) target = $region52
      $region51: #{forward.35} parent=47 // pred_region
        _
      $region52: #{forward.35} parent=47 // pred_fallthru
        _
    $region48: #{forward.35} parent=5 // pred_fallthru
      _
    %p1021 = scmp.le.s32.totalorder 2, %s13
    // Predicated region
    $region53: #{forward.35} parent=5 // pred_check
      %p1022 = pneg %p1021
    $region54: #{forward.35} parent=5 // pred_check_branch
      %1024 = sbr.rel (%p1022) target = $region56
    $region55: #{forward.35} parent=5 // pred_region
      %s1025 = ssub.s32 %s13, 2
      // Predicated region
      $region57: #{forward.35} parent=55 // pred_check
        %p1026 = pneg %p204
      $region58: #{forward.35} parent=55 // pred_check_branch
        %1028 = sbr.rel (%p1026) target = $region60
      $region59: #{forward.35} parent=55 // pred_region
        %p1029 = scmp.lt.s32.totalorder %s19, 1
        %s1030 = scalar_select %p1029, %s19, 1
        %s1031 = smul.addr %s1030, 4
        %s1032 = scalar_lea.vmem %s7, %s1031
      $region60: #{forward.35} parent=55 // pred_fallthru
        _
    $region56: #{forward.35} parent=5 // pred_fallthru
      _
  $region6: #{forward.35} parent=0 // loop_footer
    %s17 = sadd.s32 1, %s13
  $region7: #{forward.35} parent=0 // loop_footer_branch
    %12 = sbr.rel target = $region3
  $region8: #{forward.35} parent=0 // loop_exit
    _

// kernel: forward.39
$region0: #{forward.39}
  #allocation0 [shape = 'u32[]', space=smem, size = 0x4, offset = 0x4, fixed_abs, tag = 'smem constant byte address 0x4 - core index']
  #allocation1 [shape = 'u32[144,128]{1,0:T(1,128)}', space=vmem, size = 0x12000, scoped, tag = 'internal scratch']
  %s0 = inlined_call_operand.vmem [shape: bf16[12,32], index: 0, kind: input, shape index: {}]
  %s1 = inlined_call_operand.vmem [shape: bf16[32,64], index: 1, kind: input, shape index: {}]
  %s2 = inlined_call_operand.vmem [shape: f32[1,64], index: 2, kind: input, shape index: {}]
  %s3 = inlined_call_operand.vmem [shape: bf16[64,32], index: 3, kind: input, shape index: {}]
  %s4 = inlined_call_operand.vmem [shape: f32[1,32], index: 4, kind: input, shape index: {}]
  %s5 = inlined_call_operand.vmem [shape: f32[1,32], index: 5, kind: input, shape index: {}]
  %s6 = inlined_call_operand.vmem [shape: f32[1,32], index: 6, kind: input, shape index: {}]
  %s7 = inlined_call_operand.vmem [shape: bf16[12,32], index: 7, kind: output, shape index: {}]
  %s8 = sld [smem:[#allocation0]]
  $region38: #{forward.39} parent=0
    _
  %s10 = ssub.s32 1, %s8
  %s11 = scalar_select 0, %s10, %s8
  // Predicated region
  $region2: #{forward.39} parent=0 // pred_check
    _
  $region3: #{forward.39} parent=0 // pred_check_branch
    %13 = sbr.rel (0) target = $region5
  $region4: #{forward.39} parent=0 // pred_region
    _
  $region5: #{forward.39} parent=0 // pred_fallthru
    _
  // Predicated region
  $region6: #{forward.39} parent=0 // pred_check
    _
  $region7: #{forward.39} parent=0 // pred_check_branch
    %15 = sbr.rel (0) target = $region9
  $region8: #{forward.39} parent=0 // pred_region
    _
  $region9: #{forward.39} parent=0 // pred_fallthru
    _
  // Predicated region
  $region10: #{forward.39} parent=0 // pred_check
    _
  $region11: #{forward.39} parent=0 // pred_check_branch
    %17 = sbr.rel (0) target = $region13
  $region12: #{forward.39} parent=0 // pred_region
    _
  $region13: #{forward.39} parent=0 // pred_fallthru
    _
  // Predicated region
  $region14: #{forward.39} parent=0 // pred_check
    _
  $region15: #{forward.39} parent=0 // pred_check_branch
    %19 = sbr.rel (0) target = $region17
  $region16: #{forward.39} parent=0 // pred_region
    _
  $region17: #{forward.39} parent=0 // pred_fallthru
    _
  // Predicated region
  $region18: #{forward.39} parent=0 // pred_check
    _
  $region19: #{forward.39} parent=0 // pred_check_branch
    %21 = sbr.rel (0) target = $region21
  $region20: #{forward.39} parent=0 // pred_region
    _
  $region21: #{forward.39} parent=0 // pred_fallthru
    _
  // Predicated region
  $region22: #{forward.39} parent=0 // pred_check
    _
  $region23: #{forward.39} parent=0 // pred_check_branch
    %23 = sbr.rel (0) target = $region25
  $region24: #{forward.39} parent=0 // pred_region
    _
  $region25: #{forward.39} parent=0 // pred_fallthru
    _
  // Predicated region
  $region26: #{forward.39} parent=0 // pred_check
    _
  $region27: #{forward.39} parent=0 // pred_check_branch
    %25 = sbr.rel (0) target = $region29
  $region28: #{forward.39} parent=0 // pred_region
    _
  $region29: #{forward.39} parent=0 // pred_fallthru
    _
  %v27 = vld [vmem:[%s0] sm:$0xf]
  %v28 = vld [vmem:[%s0 + $0x4] sm:$0x3]
  %v29 = vld [vmem:[%s1] sm:$0xf]
  %v30 = vld [vmem:[%s1 + $0x4] sm:$0xf]
  %v31 = vld [vmem:[%s1 + $0x8] sm:$0xf]
  %v32 = vld [vmem:[%s1 + $0xc] sm:$0xf]
  %v33 = vld [vmem:[%s2] sm:$0x1]
  %v35 = vlaneseq
  %v36 = vshrl.u32 %v35, 7
  %v37 = vsub.s32 0, %v36
  %v38 = vrot.slane %v33, %v37
  %v42 = vunpack.c.l.b16 %v27
  %v43 = vunpack.c.l.b16 %v28
  %v44 = vpack.c.b16 %v43, %v42
  %v49 = vunpack.c.l.b16 %v29
  %v50 = vunpack.c.l.b16 %v30
  %v51 = vunpack.c.l.b16 %v31
  %v52 = vunpack.c.l.b16 %v32
  %v53 = vpack.c.b16 %v50, %v49
  %v54 = vpack.c.b16 %v52, %v51
  %vm57 = vcmask 261120
  %v59 = vsel %vm57, %v44, 0
  %61 = vmatprep.subr.bf16.mxu0 0
  %62 = vmatpush1.bf16.msra.mxu0 %v53
  %63 = vmatprep.subr.bf16.mxu0 0
  %64 = vmatpush1.bf16.msra.mxu0 %v54
  %65 = vmatprep.subr.bf16.mxu0 0
  %66 = vmatpush1.bf16.msra.mxu0 0
  %67 = vmatprep.subr.bf16.mxu0 0
  %68 = vmatpush1.bf16.msra.mxu0 0
  %69 = vmatprep.subr.bf16.mxu0 0
  %70 = vmatpush1.bf16.msra.mxu0 0
  %71 = vmatprep.subr.bf16.mxu0 0
  %72 = vmatpush1.bf16.msra.mxu0 0
  %73 = vmatprep.subr.bf16.mxu0 0
  %74 = vmatpush1.bf16.msra.mxu0 0
  %75 = vmatprep.subr.bf16.mxu0 0
  %76 = vmatpush1.bf16.msra.mxu0 0
  %77 = vmatprep.subr.bf16.mxu0 0
  %78 = vmatpush1.bf16.msra.mxu0 0
  %79 = vmatprep.subr.bf16.mxu0 0
  %80 = vmatpush1.bf16.msra.mxu0 0
  %81 = vmatprep.subr.bf16.mxu0 0
  %82 = vmatpush1.bf16.msra.mxu0 0
  %83 = vmatprep.subr.bf16.mxu0 0
  %84 = vmatpush1.bf16.msra.mxu0 0
  %85 = vmatprep.subr.bf16.mxu0 0
  %86 = vmatpush1.bf16.msra.mxu0 0
  %87 = vmatprep.subr.bf16.mxu0 0
  %88 = vmatpush1.bf16.msra.mxu0 0
  %89 = vmatprep.subr.bf16.mxu0 0
  %90 = vmatpush1.bf16.msra.mxu0 0
  %91 = vmatprep.subr.bf16.mxu0 0
  %92 = vmatpush1.bf16.msra.mxu0 0
  %93 = vmatprep.mubr.bf16.mxu0 0
  %94 = vmatmul.mubr.bf16.gmra.mrb[0].mxu0 %v59
  %v95 = vpop.f32.mrb[0].mxu0
  %v96 = vadd.f32 %v38, %v95
  %v97 = vpop.f32.mrb[0].mxu0
  %v98 = vpop.f32.mrb[0].mxu0
  %v99 = vadd.f32 %v38, %v98
  %v100 = vpop.f32.mrb[0].mxu0
  %101 = vdwg.mxu0
  %v102 = vmax.f32 %v96, 0.0
  %v103 = vmax.f32 %v99, 0.0
  %v104 = vpack.c.bf16 %v103, %v102
  %v105 = vld [vmem:[%s3] sm:$0xf]
  %v106 = vld [vmem:[%s3 + $0x4] sm:$0xf]
  %v107 = vld [vmem:[%s3 + $0x8] sm:$0xf]
  %v108 = vld [vmem:[%s3 + $0xc] sm:$0xf]
  %v109 = vld [vmem:[%s3 + $0x10] sm:$0xf]
  %v110 = vld [vmem:[%s3 + $0x14] sm:$0xf]
  %v111 = vld [vmem:[%s3 + $0x18] sm:$0xf]
  %v112 = vld [vmem:[%s3 + $0x1c] sm:$0xf]
  %v113 = vld [vmem:[%s4] sm:$0x1]
  %v115 = vlaneseq
  %v116 = vshrl.u32 %v115, 7
  %v117 = vsub.s32 0, %v116
  %v118 = vrot.slane %v113, %v117
  %v128 = vunpack.c.l.b16 %v105
  %v129 = vunpack.c.l.b16 %v106
  %v130 = vunpack.c.l.b16 %v107
  %v131 = vunpack.c.l.b16 %v108
  %v132 = vunpack.c.l.b16 %v109
  %v133 = vunpack.c.l.b16 %v110
  %v134 = vunpack.c.l.b16 %v111
  %v135 = vunpack.c.l.b16 %v112
  %v136 = vpack.c.b16 %v129, %v128
  %v137 = vpack.c.b16 %v131, %v130
  %v138 = vpack.c.b16 %v133, %v132
  %v139 = vpack.c.b16 %v135, %v134
  %vm144 = vcmask 523264
  %v146 = vsel %vm144, %v104, 0
  %148 = vmatprep.subr.bf16.mxu0 0
  %149 = vmatpush1.bf16.msra.mxu0 %v136
  %150 = vmatprep.subr.bf16.mxu0 0
  %151 = vmatpush1.bf16.msra.mxu0 %v137
  %152 = vmatprep.subr.bf16.mxu0 0
  %153 = vmatpush1.bf16.msra.mxu0 %v138
  %154 = vmatprep.subr.bf16.mxu0 0
  %155 = vmatpush1.bf16.msra.mxu0 %v139
  %156 = vmatprep.subr.bf16.mxu0 0
  %157 = vmatpush1.bf16.msra.mxu0 0
  %158 = vmatprep.subr.bf16.mxu0 0
  %159 = vmatpush1.bf16.msra.mxu0 0
  %160 = vmatprep.subr.bf16.mxu0 0
  %161 = vmatpush1.bf16.msra.mxu0 0
  %162 = vmatprep.subr.bf16.mxu0 0
  %163 = vmatpush1.bf16.msra.mxu0 0
  %164 = vmatprep.subr.bf16.mxu0 0
  %165 = vmatpush1.bf16.msra.mxu0 0
  %166 = vmatprep.subr.bf16.mxu0 0
  %167 = vmatpush1.bf16.msra.mxu0 0
  %168 = vmatprep.subr.bf16.mxu0 0
  %169 = vmatpush1.bf16.msra.mxu0 0
  %170 = vmatprep.subr.bf16.mxu0 0
  %171 = vmatpush1.bf16.msra.mxu0 0
  %172 = vmatprep.subr.bf16.mxu0 0
  %173 = vmatpush1.bf16.msra.mxu0 0
  %174 = vmatprep.subr.bf16.mxu0 0
  %175 = vmatpush1.bf16.msra.mxu0 0
  %176 = vmatprep.subr.bf16.mxu0 0
  %177 = vmatpush1.bf16.msra.mxu0 0
  %178 = vmatprep.subr.bf16.mxu0 0
  %179 = vmatpush1.bf16.msra.mxu0 0
  %180 = vmatprep.mubr.bf16.mxu0 0
  %181 = vmatmul.mubr.bf16.gmra.mrb[0].mxu0 %v146
  %v182 = vpop.f32.mrb[0].mxu0
  %v183 = vadd.f32 %v118, %v182
  %v184 = vpop.f32.mrb[0].mxu0
  %v185 = vpop.f32.mrb[0].mxu0
  %v186 = vadd.f32 %v118, %v185
  %v187 = vpop.f32.mrb[0].mxu0
  %188 = vdwg.mxu0
  %v189 = vunpack.c.l.bf16 %v27
  %v190 = vunpack.c.l.bf16 %v28
  %v191 = vadd.f32 %v183, %v189
  %v192 = vadd.f32 %v186, %v190
  %v193 = vld [vmem:[%s5] sm:$0x1]
  %v194 = vld [vmem:[%s6] sm:$0x1]
  %v195 = vsel %vm57, %v191, 0.0
  %196 = vadd.xlane.f32.xlu0 %v195
  %v197 = vpop.xlane.xlu0 %196
  %vm198 = vcmask 257024
  %v199 = vsel %vm198, %v192, 0.0
  %200 = vadd.xlane.f32.xlu0 %v199
  %v201 = vpop.xlane.xlu0 %200
  %v202 = vrcp.pop 32.0
  %v203 = vmul.f32 %v197, %v202
  %v204 = vmul.f32 %v201, %v202
  %v205 = vsub.f32 %v191, %v203
  %v206 = vsub.f32 %v192, %v204
  %v207 = vmul.f32 %v205, %v205
  %v208 = vmul.f32 %v206, %v206
  %v209 = vsel %vm57, %v207, 0.0
  %210 = vadd.xlane.f32.xlu0 %v209
  %v211 = vpop.xlane.xlu0 %210
  %v212 = vsel %vm198, %v208, 0.0
  %213 = vadd.xlane.f32.xlu0 %v212
  %v214 = vpop.xlane.xlu0 %213
  %v215 = vmul.f32 %v211, %v202
  %v216 = vmul.f32 %v214, %v202
  %v217 = vadd.f32 %v215, 1e-05
  %v218 = vadd.f32 %v216, 1e-05
  %v219 = vrsqrt.pop %v217
  %v220 = vrsqrt.pop %v218
  %v221 = vmul.f32 %v205, %v219
  %v222 = vmul.f32 %v206, %v220
  %v224 = vlaneseq
  %v225 = vshrl.u32 %v224, 7
  %v226 = vsub.s32 0, %v225
  %v227 = vrot.slane %v193, %v226
  %v229 = vmul.f32 %v221, %v227
  %v230 = vmul.f32 %v222, %v227
  %v232 = vlaneseq
  %v233 = vshrl.u32 %v232, 7
  %v234 = vsub.s32 0, %v233
  %v235 = vrot.slane %v194, %v234
  %v237 = vadd.f32 %v229, %v235
  %v238 = vadd.f32 %v230, %v235
  %v239 = vpack.c.bf16 %v238, %v237
  %v241 = vunpack.c.l.b16 %v239
  %v242 = vunpack.c.h.b16 %v239
  %v243 = vpack.c.b16 %v241, %v241
  %v244 = vpack.c.b16 %v242, %v242
  %247 = vst.msk [vmem:[%s7] sm:$0xf] %vm198, %v243
  %vm248 = vcmask 254976
  %249 = vst.msk [vmem:[%s7 + $0x4] sm:$0x3] %vm248, %v244
  // Predicated region
  $region30: #{forward.39} parent=0 // pred_check
    _
  $region31: #{forward.39} parent=0 // pred_check_branch
    %251 = sbr.rel (0) target = $region33
  $region32: #{forward.39} parent=0 // pred_region
    _
  $region33: #{forward.39} parent=0 // pred_fallthru
    _
  // Predicated region
  $region34: #{forward.39} parent=0 // pred_check
    _
  $region35: #{forward.39} parent=0 // pred_check_branch
    %253 = sbr.rel (0) target = $region37
  $region36: #{forward.39} parent=0 // pred_region
    _
  $region37: #{forward.39} parent=0 // pred_fallthru
    _

// kernel: forward.38
$region0: #{forward.38}
  #allocation0 [shape = 'u32[]', space=smem, size = 0x4, offset = 0x4, fixed_abs, tag = 'smem constant byte address 0x4 - core index']
  #allocation1 [shape = 'u32[144,128]{1,0:T(1,128)}', space=vmem, size = 0x12000, scoped, tag = 'internal scratch']
  %s0 = inlined_call_operand.vmem [shape: bf16[2,6,32], index: 0, kind: input, shape index: {}]
  %s1 = inlined_call_operand.vmem [shape: bf16[2,8,64], index: 1, kind: input, shape index: {}]
  %s2 = inlined_call_operand.vmem [shape: f32[2,1,8], index: 2, kind: input, shape index: {}]
  %s3 = inlined_call_operand.vmem [shape: bf16[32,32], index: 3, kind: input, shape index: {}]
  %s4 = inlined_call_operand.vmem [shape: f32[1,32], index: 4, kind: input, shape index: {}]
  %s5 = inlined_call_operand.vmem [shape: bf16[2,6,32], index: 5, kind: input, shape index: {}]
  %s6 = inlined_call_operand.vmem [shape: f32[1,32], index: 6, kind: input, shape index: {}]
  %s7 = inlined_call_operand.vmem [shape: f32[1,32], index: 7, kind: input, shape index: {}]
  %s8 = inlined_call_operand.vmem [shape: bf16[2,6,32], index: 8, kind: output, shape index: {}]
  %s9 = sld [smem:[#allocation0]]
  $region65: #{forward.38} parent=0
    _
  %s11 = ssub.s32 1, %s9
  %s12 = scalar_select 0, %s11, %s9
  loop: start=0, step=1, limit=4
  $region2: #{forward.38} parent=0 // loop_pre_header
    _
  $region3: #{forward.38} parent=0 // loop_header
    %s14 = sphi 0, %s18
    %p15 = scmp.ge.s32.totalorder %s14, 4
    %s24 = sphi 0, %s26
    %s27 = sphi 0, %s24
    %s28 = sphi 0, %s27
    %s44 = sphi 0, %s28
    %s50 = sphi 0, %s52
    %s53 = sphi 0, %s50
    %s54 = sphi 0, %s53
    %s70 = sphi 0, %s54
    %s76 = sphi 0, %s78
    %s79 = sphi 0, %s76
    %s80 = sphi 0, %s79
    %s96 = sphi 0, %s80
    %s100 = sphi 0, %s100
    %s102 = sphi 0, %s100
    %s103 = sphi 0, %s102
    %s117 = sphi 0, %s103
    %s121 = sphi 0, %s121
    %s123 = sphi 0, %s121
    %s124 = sphi 0, %s123
    %s138 = sphi 0, %s124
    %s144 = sphi 0, %s146
    %s147 = sphi 0, %s144
    %s148 = sphi 0, %s147
    %s164 = sphi 0, %s148
    %s168 = sphi 0, %s168
    %s170 = sphi 0, %s168
    %s171 = sphi 0, %s170
    %s185 = sphi 0, %s171
    %s189 = sphi 0, %s189
    %s191 = sphi 0, %s189
    %s192 = sphi 0, %s191
    %s206 = sphi 0, %s192
    %s212 = sphi 0, %s214
    %s215 = sphi 0, %s212
    %s216 = sphi 0, %s215
    %s232 = sphi 0, %s216
  $region4: #{forward.38} parent=0 // loop_header_branch
    %17 = sbr.rel (%p15) target = $region8
  $region5: #{forward.38} parent=0 // loop_body
    %s19 = ssub.s32 %s14, 1
    %s20 = ssub.s32 %s14, 2
    %s21 = sadd.s32 %s14, 1
    %s22 = ssub.s32 %s14, %s21
    %p23 = scmp.eq.s32.totalorder %s22, 0
    %s25 = sadd.s32 %s24, 1
    %s26 = scalar_select %p23, %s24, %s25
    %p29 = pneg %p23
    %p30 = scmp.eq.s32.totalorder %s14, 1
    %p31 = por %p29, %p30
    %p32 = scmp.ne.s32.totalorder %s24, %s27
    %p33 = scmp.eq.s32.totalorder %s14, 0
    %p34 = por %p32, %p33
    %p35 = scmp.ne.s32.totalorder %s24, %s27
    %p36 = scmp.eq.s32.totalorder %s19, 1
    %p37 = por %p35, %p36
    %p38 = scmp.ne.s32.totalorder %s27, %s28
    %p39 = scmp.eq.s32.totalorder %s19, 0
    %p40 = por %p38, %p39
    %p41 = scmp.ne.s32.totalorder %s27, %s28
    %p42 = scmp.eq.s32.totalorder %s20, 1
    %p43 = por %p41, %p42
    %p45 = scmp.ne.s32.totalorder %s28, %s44
    %p46 = scmp.eq.s32.totalorder %s20, 0
    %p47 = por %p45, %p46
    %s48 = ssub.s32 %s14, %s21
    %p49 = scmp.eq.s32.totalorder %s48, 0
    %s51 = sadd.s32 %s50, 1
    %s52 = scalar_select %p49, %s50, %s51
    %p55 = pneg %p49
    %p56 = scmp.eq.s32.totalorder %s14, 1
    %p57 = por %p55, %p56
    %p58 = scmp.ne.s32.totalorder %s50, %s53
    %p59 = scmp.eq.s32.totalorder %s14, 0
    %p60 = por %p58, %p59
    %p61 = scmp.ne.s32.totalorder %s50, %s53
    %p62 = scmp.eq.s32.totalorder %s19, 1
    %p63 = por %p61, %p62
    %p64 = scmp.ne.s32.totalorder %s53, %s54
    %p65 = scmp.eq.s32.totalorder %s19, 0
    %p66 = por %p64, %p65
    %p67 = scmp.ne.s32.totalorder %s53, %s54
    %p68 = scmp.eq.s32.totalorder %s20, 1
    %p69 = por %p67, %p68
    %p71 = scmp.ne.s32.totalorder %s54, %s70
    %p72 = scmp.eq.s32.totalorder %s20, 0
    %p73 = por %p71, %p72
    %s74 = ssub.s32 %s14, %s21
    %p75 = scmp.eq.s32.totalorder %s74, 0
    %s77 = sadd.s32 %s76, 1
    %s78 = scalar_select %p75, %s76, %s77
    %p81 = pneg %p75
    %p82 = scmp.eq.s32.totalorder %s14, 1
    %p83 = por %p81, %p82
    %p84 = scmp.ne.s32.totalorder %s76, %s79
    %p85 = scmp.eq.s32.totalorder %s14, 0
    %p86 = por %p84, %p85
    %p87 = scmp.ne.s32.totalorder %s76, %s79
    %p88 = scmp.eq.s32.totalorder %s19, 1
    %p89 = por %p87, %p88
    %p90 = scmp.ne.s32.totalorder %s79, %s80
    %p91 = scmp.eq.s32.totalorder %s19, 0
    %p92 = por %p90, %p91
    %p93 = scmp.ne.s32.totalorder %s79, %s80
    %p94 = scmp.eq.s32.totalorder %s20, 1
    %p95 = por %p93, %p94
    %p97 = scmp.ne.s32.totalorder %s80, %s96
    %p98 = scmp.eq.s32.totalorder %s20, 0
    %p99 = por %p97, %p98
    %s101 = sadd.s32 %s100, 1
    %p104 = scmp.eq.s32.totalorder %s14, 1
    %p105 = scmp.ne.s32.totalorder %s100, %s102
    %p106 = scmp.eq.s32.totalorder %s14, 0
    %p107 = por %p105, %p106
    %p108 = scmp.ne.s32.totalorder %s100, %s102
    %p109 = scmp.eq.s32.totalorder %s19, 1
    %p110 = por %p108, %p109
    %p111 = scmp.ne.s32.totalorder %s102, %s103
    %p112 = scmp.eq.s32.totalorder %s19, 0
    %p113 = por %p111, %p112
    %p114 = scmp.ne.s32.totalorder %s102, %s103
    %p115 = scmp.eq.s32.totalorder %s20, 1
    %p116 = por %p114, %p115
    %p118 = scmp.ne.s32.totalorder %s103, %s117
    %p119 = scmp.eq.s32.totalorder %s20, 0
    %p120 = por %p118, %p119
    %s122 = sadd.s32 %s121, 1
    %p125 = scmp.eq.s32.totalorder %s14, 1
    %p126 = scmp.ne.s32.totalorder %s121, %s123
    %p127 = scmp.eq.s32.totalorder %s14, 0
    %p128 = por %p126, %p127
    %p129 = scmp.ne.s32.totalorder %s121, %s123
    %p130 = scmp.eq.s32.totalorder %s19, 1
    %p131 = por %p129, %p130
    %p132 = scmp.ne.s32.totalorder %s123, %s124
    %p133 = scmp.eq.s32.totalorder %s19, 0
    %p134 = por %p132, %p133
    %p135 = scmp.ne.s32.totalorder %s123, %s124
    %p136 = scmp.eq.s32.totalorder %s20, 1
    %p137 = por %p135, %p136
    %p139 = scmp.ne.s32.totalorder %s124, %s138
    %p140 = scmp.eq.s32.totalorder %s20, 0
    %p141 = por %p139, %p140
    %s142 = ssub.s32 %s14, %s21
    %p143 = scmp.eq.s32.totalorder %s142, 0
    %s145 = sadd.s32 %s144, 1
    %s146 = scalar_select %p143, %s144, %s145
    %p149 = pneg %p143
    %p150 = scmp.eq.s32.totalorder %s14, 1
    %p151 = por %p149, %p150
    %p152 = scmp.ne.s32.totalorder %s144, %s147
    %p153 = scmp.eq.s32.totalorder %s14, 0
    %p154 = por %p152, %p153
    %p155 = scmp.ne.s32.totalorder %s144, %s147
    %p156 = scmp.eq.s32.totalorder %s19, 1
    %p157 = por %p155, %p156
    %p158 = scmp.ne.s32.totalorder %s147, %s148
    %p159 = scmp.eq.s32.totalorder %s19, 0
    %p160 = por %p158, %p159
    %p161 = scmp.ne.s32.totalorder %s147, %s148
    %p162 = scmp.eq.s32.totalorder %s20, 1
    %p163 = por %p161, %p162
    %p165 = scmp.ne.s32.totalorder %s148, %s164
    %p166 = scmp.eq.s32.totalorder %s20, 0
    %p167 = por %p165, %p166
    %s169 = sadd.s32 %s168, 1
    %p172 = scmp.eq.s32.totalorder %s14, 1
    %p173 = scmp.ne.s32.totalorder %s168, %s170
    %p174 = scmp.eq.s32.totalorder %s14, 0
    %p175 = por %p173, %p174
    %p176 = scmp.ne.s32.totalorder %s168, %s170
    %p177 = scmp.eq.s32.totalorder %s19, 1
    %p178 = por %p176, %p177
    %p179 = scmp.ne.s32.totalorder %s170, %s171
    %p180 = scmp.eq.s32.totalorder %s19, 0
    %p181 = por %p179, %p180
    %p182 = scmp.ne.s32.totalorder %s170, %s171
    %p183 = scmp.eq.s32.totalorder %s20, 1
    %p184 = por %p182, %p183
    %p186 = scmp.ne.s32.totalorder %s171, %s185
    %p187 = scmp.eq.s32.totalorder %s20, 0
    %p188 = por %p186, %p187
    %s190 = sadd.s32 %s189, 1
    %p193 = scmp.eq.s32.totalorder %s14, 1
    %p194 = scmp.ne.s32.totalorder %s189, %s191
    %p195 = scmp.eq.s32.totalorder %s14, 0
    %p196 = por %p194, %p195
    %p197 = scmp.ne.s32.totalorder %s189, %s191
    %p198 = scmp.eq.s32.totalorder %s19, 1
    %p199 = por %p197, %p198
    %p200 = scmp.ne.s32.totalorder %s191, %s192
    %p201 = scmp.eq.s32.totalorder %s19, 0
    %p202 = por %p200, %p201
    %p203 = scmp.ne.s32.totalorder %s191, %s192
    %p204 = scmp.eq.s32.totalorder %s20, 1
    %p205 = por %p203, %p204
    %p207 = scmp.ne.s32.totalorder %s192, %s206
    %p208 = scmp.eq.s32.totalorder %s20, 0
    %p209 = por %p207, %p208
    %s210 = ssub.s32 %s14, %s21
    %p211 = scmp.eq.s32.totalorder %s210, 0
    %s213 = sadd.s32 %s212, 1
    %s214 = scalar_select %p211, %s212, %s213
    %p217 = pneg %p211
    %p218 = scmp.eq.s32.totalorder %s14, 1
    %p219 = por %p217, %p218
    %p220 = scmp.ne.s32.totalorder %s212, %s215
    %p221 = scmp.eq.s32.totalorder %s14, 0
    %p222 = por %p220, %p221
    %p223 = scmp.ne.s32.totalorder %s212, %s215
    %p224 = scmp.eq.s32.totalorder %s19, 1
    %p225 = por %p223, %p224
    %p226 = scmp.ne.s32.totalorder %s215, %s216
    %p227 = scmp.eq.s32.totalorder %s19, 0
    %p228 = por %p226, %p227
    %p229 = scmp.ne.s32.totalorder %s215, %s216
    %p230 = scmp.eq.s32.totalorder %s20, 1
    %p231 = por %p229, %p230
    %p233 = scmp.ne.s32.totalorder %s216, %s232
    %p234 = scmp.eq.s32.totalorder %s20, 0
    %p235 = por %p233, %p234
    %p236 = scmp.le.s32.totalorder 1, %s14
    %p237 = scmp.lt.s32.totalorder %s14, 3
    %p238 = pnand %p236, %p237
    %p239 = pneg %p238
    // Predicated region
    $region9: #{forward.38} parent=5 // pred_check
      _
    $region10: #{forward.38} parent=5 // pred_check_branch
      %241 = sbr.rel (%p238) target = $region12
    $region11: #{forward.38} parent=5 // pred_region
      %s242 = ssub.s32 %s14, 1
      // Predicated region
      $region13: #{forward.38} parent=11 // pred_check
        %p243 = pneg %p113
      $region14: #{forward.38} parent=11 // pred_check_branch
        %245 = sbr.rel (%p243) target = $region16
      $region15: #{forward.38} parent=11 // pred_region
        _
      $region16: #{forward.38} parent=11 // pred_fallthru
        _
      // Predicated region
      $region17: #{forward.38} parent=11 // pred_check
        %p246 = pneg %p134
      $region18: #{forward.38} parent=11 // pred_check_branch
        %248 = sbr.rel (%p246) target = $region20
      $region19: #{forward.38} parent=11 // pred_region
        _
      $region20: #{forward.38} parent=11 // pred_fallthru
        _
      // Predicated region
      $region21: #{forward.38} parent=11 // pred_check
        %p249 = pneg %p181
      $region22: #{forward.38} parent=11 // pred_check_branch
        %251 = sbr.rel (%p249) target = $region24
      $region23: #{forward.38} parent=11 // pred_region
        _
      $region24: #{forward.38} parent=11 // pred_fallthru
        _
      // Predicated region
      $region25: #{forward.38} parent=11 // pred_check
        %p252 = pneg %p202
      $region26: #{forward.38} parent=11 // pred_check_branch
        %254 = sbr.rel (%p252) target = $region28
      $region27: #{forward.38} parent=11 // pred_region
        _
      $region28: #{forward.38} parent=11 // pred_fallthru
        _
    $region12: #{forward.38} parent=5 // pred_fallthru
      _
    %p255 = scmp.lt.s32.totalorder %s14, 2
    // Predicated region
    $region29: #{forward.38} parent=5 // pred_check
      %p256 = pneg %p255
    $region30: #{forward.38} parent=5 // pred_check_branch
      %258 = sbr.rel (%p256) target = $region32
    $region31: #{forward.38} parent=5 // pred_region
      // Predicated region
      $region33: #{forward.38} parent=31 // pred_check
        %p259 = pneg %p34
      $region34: #{forward.38} parent=31 // pred_check_branch
        %261 = sbr.rel (%p259) target = $region36
      $region35: #{forward.38} parent=31 // pred_region
        %p262 = scmp.lt.s32.totalorder %s14, 1
        %s263 = scalar_select %p262, %s14, 1
        %s264 = smul.addr %s263, 4
        %s265 = scalar_lea.vmem %s0, %s264
      $region36: #{forward.38} parent=31 // pred_fallthru
        _
      // Predicated region
      $region37: #{forward.38} parent=31 // pred_check
        %p266 = pneg %p60
      $region38: #{forward.38} parent=31 // pred_check_branch
        %268 = sbr.rel (%p266) target = $region40
      $region39: #{forward.38} parent=31 // pred_region
        %p269 = scmp.lt.s32.totalorder %s14, 1
        %s270 = scalar_select %p269, %s14, 1
        %s271 = smul.addr %s270, 4
        %s272 = scalar_lea.vmem %s1, %s271
      $region40: #{forward.38} parent=31 // pred_fallthru
        _
      // Predicated region
      $region41: #{forward.38} parent=31 // pred_check
        %p273 = pneg %p86
      $region42: #{forward.38} parent=31 // pred_check_branch
        %275 = sbr.rel (%p273) target = $region44
      $region43: #{forward.38} parent=31 // pred_region
        %p276 = scmp.lt.s32.totalorder %s14, 1
        %s277 = scalar_select %p276, %s14, 1
        %s278 = scalar_lea.vmem %s2, %s277
      $region44: #{forward.38} parent=31 // pred_fallthru
        _
      // Predicated region
      $region45: #{forward.38} parent=31 // pred_check
        %p279 = pneg %p154
      $region46: #{forward.38} parent=31 // pred_check_branch
        %281 = sbr.rel (%p279) target = $region48
      $region47: #{forward.38} parent=31 // pred_region
        %p282 = scmp.lt.s32.totalorder %s14, 1
        %s283 = scalar_select %p282, %s14, 1
        %s284 = smul.addr %s283, 4
        %s285 = scalar_lea.vmem %s5, %s284
      $region48: #{forward.38} parent=31 // pred_fallthru
        _
    $region32: #{forward.38} parent=5 // pred_fallthru
      _
    %p286 = scmp.le.s32.totalorder 1, %s14
    %p287 = scmp.lt.s32.totalorder %s14, 3
    %p288 = pnand %p286, %p287
    %p289 = pneg %p288
    // Predicated region
    $region49: #{forward.38} parent=5 // pred_check
      _
    $region50: #{forward.38} parent=5 // pred_check_branch
      %291 = sbr.rel (%p288) target = $region52
    $region51: #{forward.38} parent=5 // pred_region
      %s292 = ssub.s32 %s14, 1
      %p293 = scmp.lt.s32.totalorder %s19, 1
      %s294 = scalar_select %p293, %s19, 1
      %s295 = smul.addr %s294, 4
      %s296 = scalar_lea.vmem %s0, %s295
      %p297 = pneg %p40
      %p298 = pneg %p37
      %p299 = scmp.lt.s32.totalorder %s19, 1
      %s300 = scalar_select %p299, %s19, 1
      %s301 = smul.addr %s300, 4
      %s302 = scalar_lea.vmem %s1, %s301
      %p303 = pneg %p66
      %p304 = pneg %p63
      %p305 = scmp.lt.s32.totalorder %s19, 1
      %s306 = scalar_select %p305, %s19, 1
      %s307 = scalar_lea.vmem %s2, %s306
      %p308 = pneg %p92
      %p309 = pneg %p89
      %p310 = pneg %p113
      %p311 = pneg %p110
      %p312 = pneg %p134
      %p313 = pneg %p131
      %p314 = scmp.lt.s32.totalorder %s19, 1
      %s315 = scalar_select %p314, %s19, 1
      %s316 = smul.addr %s315, 4
      %s317 = scalar_lea.vmem %s5, %s316
      %p318 = pneg %p160
      %p319 = pneg %p157
      %p320 = pneg %p181
      %p321 = pneg %p178
      %p322 = pneg %p202
      %p323 = pneg %p199
      %p324 = pneg %p228
      %p325 = pneg %p225
      %p326 = scmp.lt.s32.totalorder %s19, 1
      %s327 = scalar_select %p326, %s19, 1
      %s328 = smul.addr %s327, 4
      %s329 = scalar_lea.vmem %s8, %s328
      %p330 = scmp.lt.s32.totalorder %s19, 1
      %s331 = scalar_select %p330, %s19, 1
      %s332 = smul.addr %s331, 4
      %s333 = scalar_lea.vmem %s0, %s332
      %p334 = scmp.lt.s32.totalorder %s19, 1
      %s335 = scalar_select %p334, %s19, 1
      %s336 = smul.addr %s335, 4
      %s337 = scalar_lea.vmem %s1, %s336
      %p338 = scmp.lt.s32.totalorder %s19, 1
      %s339 = scalar_select %p338, %s19, 1
      %s340 = scalar_lea.vmem %s2, %s339
      %p341 = scmp.lt.s32.totalorder %s19, 1
      %s342 = scalar_select %p341, %s19, 1
      %s343 = smul.addr %s342, 4
      %s344 = scalar_lea.vmem %s5, %s343
      %p345 = scmp.lt.s32.totalorder %s19, 1
      %s346 = scalar_select %p345, %s19, 1
      %s347 = smul.addr %s346, 4
      %s348 = scalar_lea.vmem %s8, %s347
      %v350 = vld [vmem:[%s333] sm:$0x7]
      %v351 = vld [vmem:[%s337] sm:$0xf]
      %v352 = vld [vmem:[%s340] sm:$0x1]
      %v353 = vld [vmem:[%s3] sm:$0xf]
      %v354 = vld [vmem:[%s3 + $0x4] sm:$0xf]
      %v355 = vld [vmem:[%s3 + $0x8] sm:$0xf]
      %v356 = vld [vmem:[%s3 + $0xc] sm:$0xf]
      %vm357 = vcmask 64512
      %v359 = vsel %vm357, %v350, 0
      %v362 = vsel %vm357, %v351, 0
      %364 = vmatprep.subr.bf16.mxu0 0
      %365 = vmatpush1.bf16.xpose.msra.mxu0 %v362
      %366 = vmatprep.subr.bf16.mxu0 0
      %367 = vmatpush1.bf16.xpose.msra.mxu0 0
      %368 = vmatprep.subr.bf16.mxu0 0
      %369 = vmatpush1.bf16.xpose.msra.mxu0 0
      %370 = vmatprep.subr.bf16.mxu0 0
      %371 = vmatpush1.bf16.xpose.msra.mxu0 0
      %372 = vmatprep.subr.bf16.mxu0 0
      %373 = vmatpush1.bf16.xpose.msra.mxu0 0
      %374 = vmatprep.subr.bf16.mxu0 0
      %375 = vmatpush1.bf16.xpose.msra.mxu0 0
      %376 = vmatprep.subr.bf16.mxu0 0
      %377 = vmatpush1.bf16.xpose.msra.mxu0 0
      %378 = vmatprep.subr.bf16.mxu0 0
      %379 = vmatpush1.bf16.xpose.msra.mxu0 0
      %380 = vmatprep.subr.bf16.mxu0 0
      %381 = vmatpush1.bf16.xpose.msra.mxu0 0
      %382 = vmatprep.subr.bf16.mxu0 0
      %383 = vmatpush1.bf16.xpose.msra.mxu0 0
      %384 = vmatprep.subr.bf16.mxu0 0
      %385 = vmatpush1.bf16.xpose.msra.mxu0 0
      %386 = vmatprep.subr.bf16.mxu0 0
      %387 = vmatpush1.bf16.xpose.msra.mxu0 0
      %388 = vmatprep.subr.bf16.mxu0 0
      %389 = vmatpush1.bf16.xpose.msra.mxu0 0
      %390 = vmatprep.subr.bf16.mxu0 0
      %391 = vmatpush1.bf16.xpose.msra.mxu0 0
      %392 = vmatprep.subr.bf16.mxu0 0
      %393 = vmatpush1.bf16.xpose.msra.mxu0 0
      %394 = vmatprep.subr.bf16.mxu0 0
      %395 = vmatpush1.bf16.xpose.msra.mxu0 0
      %396 = vmatprep.mubr.bf16.mxu0 0
      %397 = vmatmul.mubr.bf16.gmra.mrb[0].mxu0 %v359
      %v398 = vpop.f32.mrb[0].mxu0
      %v399 = vadd.f32 0.0, %v398
      %v400 = vpop.f32.mrb[0].mxu0
      %v401 = vpop.f32.mrb[0].mxu0
      %v402 = vpop.f32.mrb[0].mxu0
      %403 = vdwg.mxu0
      %v404 = vmul.f32 %v399, 0.35355338
      %v406 = vlaneseq
      %v407 = vshrl.u32 %v406, 7
      %v408 = vsub.s32 0, %v407
      %v409 = vrot.slane %v352, %v408
      %v411 = vadd.f32 %v404, %v409
      %vm412 = vcmask 62464
      %v413 = vsel %vm412, %v411, -inf
      %414 = vmax.xlane.f32.xlu0 %v413
      %v415 = vpop.xlane.xlu0 %414
      %v416 = vsub.f32 %v411, %v415
      %v417 = vmul.f32 %v416, 1.442695
      %v418 = vpow.pop %v417
      %v419 = vsel %vm412, %v418, 0.0
      %420 = vadd.xlane.f32.xlu0 %v419
      %v421 = vpop.xlane.xlu0 %420
      %v422 = vrcp.pop %v421
      %v423 = vmul.f32 %v418, %v422
      %v424 = vpack.c.bf16 %v423, %v423
      %v426 = vunpack.c.l.b16 %v351
      %v427 = vpack.c.b16 %v426, %v426
      %428 = vrot.lane.b32.xlu0 %v427, 96
      %v429 = vpop.permute.xlu0 %428
      %v431 = vsel %vm357, %v424, 0
      %vm433 = vcmask 1043456
      %v435 = vsel %vm433, %v429, 0
      %437 = vmatprep.subr.bf16.mxu0 0
      %438 = vmatpush1.bf16.msra.mxu0 %v435
      %439 = vmatprep.subr.bf16.mxu0 0
      %440 = vmatpush1.bf16.msra.mxu0 0
      %441 = vmatprep.subr.bf16.mxu0 0
      %442 = vmatpush1.bf16.msra.mxu0 0
      %443 = vmatprep.subr.bf16.mxu0 0
      %444 = vmatpush1.bf16.msra.mxu0 0
      %445 = vmatprep.subr.bf16.mxu0 0
      %446 = vmatpush1.bf16.msra.mxu0 0
      %447 = vmatprep.subr.bf16.mxu0 0
      %448 = vmatpush1.bf16.msra.mxu0 0
      %449 = vmatprep.subr.bf16.mxu0 0
      %450 = vmatpush1.bf16.msra.mxu0 0
      %451 = vmatprep.subr.bf16.mxu0 0
      %452 = vmatpush1.bf16.msra.mxu0 0
      %453 = vmatprep.subr.bf16.mxu0 0
      %454 = vmatpush1.bf16.msra.mxu0 0
      %455 = vmatprep.subr.bf16.mxu0 0
      %456 = vmatpush1.bf16.msra.mxu0 0
      %457 = vmatprep.subr.bf16.mxu0 0
      %458 = vmatpush1.bf16.msra.mxu0 0
      %459 = vmatprep.subr.bf16.mxu0 0
      %460 = vmatpush1.bf16.msra.mxu0 0
      %461 = vmatprep.subr.bf16.mxu0 0
      %462 = vmatpush1.bf16.msra.mxu0 0
      %463 = vmatprep.subr.bf16.mxu0 0
      %464 = vmatpush1.bf16.msra.mxu0 0
      %465 = vmatprep.subr.bf16.mxu0 0
      %466 = vmatpush1.bf16.msra.mxu0 0
      %467 = vmatprep.subr.bf16.mxu0 0
      %468 = vmatpush1.bf16.msra.mxu0 0
      %469 = vmatprep.mubr.bf16.mxu0 0
      %470 = vmatmul.mubr.bf16.gmra.mrb[0].mxu0 %v431
      %v471 = vpop.f32.mrb[0].mxu0
      %v472 = vadd.f32 0.0, %v471
      %v473 = vpop.f32.mrb[0].mxu0
      %v474 = vpop.f32.mrb[0].mxu0
      %v475 = vpop.f32.mrb[0].mxu0
      %476 = vdwg.mxu0
      %v477 = vpack.c.bf16 %v472, %v472
      %v479 = vunpack.c.l.b16 %v350
      %v480 = vpack.c.b16 %v479, %v479
      %481 = vrot.lane.b32.xlu0 %v480, 120
      %v482 = vpop.permute.xlu0 %481
      %483 = vrot.lane.b32.xlu0 %v427, 120
      %v484 = vpop.permute.xlu0 %483
      %v486 = vsel %vm357, %v482, 0
      %v489 = vsel %vm357, %v484, 0
      %491 = vmatprep.subr.bf16.mxu0 0
      %492 = vmatpush1.bf16.xpose.msra.mxu0 %v489
      %493 = vmatprep.subr.bf16.mxu0 0
      %494 = vmatpush1.bf16.xpose.msra.mxu0 0
      %495 = vmatprep.subr.bf16.mxu0 0
      %496 = vmatpush1.bf16.xpose.msra.mxu0 0
      %497 = vmatprep.subr.bf16.mxu0 0
      %498 = vmatpush1.bf16.xpose.msra.mxu0 0
      %499 = vmatprep.subr.bf16.mxu0 0
      %500 = vmatpush1.bf16.xpose.msra.mxu0 0
      %501 = vmatprep.subr.bf16.mxu0 0
      %502 = vmatpush1.bf16.xpose.msra.mxu0 0
      %503 = vmatprep.subr.bf16.mxu0 0
      %504 = vmatpush1.bf16.xpose.msra.mxu0 0
      %505 = vmatprep.subr.bf16.mxu0 0
      %506 = vmatpush1.bf16.xpose.msra.mxu0 0
      %507 = vmatprep.subr.bf16.mxu0 0
      %508 = vmatpush1.bf16.xpose.msra.mxu0 0
      %509 = vmatprep.subr.bf16.mxu0 0
      %510 = vmatpush1.bf16.xpose.msra.mxu0 0
      %511 = vmatprep.subr.bf16.mxu0 0
      %512 = vmatpush1.bf16.xpose.msra.mxu0 0
      %513 = vmatprep.subr.bf16.mxu0 0
      %514 = vmatpush1.bf16.xpose.msra.mxu0 0
      %515 = vmatprep.subr.bf16.mxu0 0
      %516 = vmatpush1.bf16.xpose.msra.mxu0 0
      %517 = vmatprep.subr.bf16.mxu0 0
      %518 = vmatpush1.bf16.xpose.msra.mxu0 0
      %519 = vmatprep.subr.bf16.mxu0 0
      %520 = vmatpush1.bf16.xpose.msra.mxu0 0
      %521 = vmatprep.subr.bf16.mxu0 0
      %522 = vmatpush1.bf16.xpose.msra.mxu0 0
      %523 = vmatprep.mubr.bf16.mxu0 0
      %524 = vmatmul.mubr.bf16.gmra.mrb[0].mxu0 %v486
      %v525 = vpop.f32.mrb[0].mxu0
      %v526 = vadd.f32 0.0, %v525
      %v527 = vpop.f32.mrb[0].mxu0
      %v528 = vpop.f32.mrb[0].mxu0
      %v529 = vpop.f32.mrb[0].mxu0
      %530 = vdwg.mxu0
      %v531 = vmul.f32 %v526, 0.35355338
      %v532 = vadd.f32 %v531, %v409
      %v533 = vsel %vm412, %v532, -inf
      %534 = vmax.xlane.f32.xlu0 %v533
      %v535 = vpop.xlane.xlu0 %534
      %v536 = vsub.f32 %v532, %v535
      %v537 = vmul.f32 %v536, 1.442695
      %v538 = vpow.pop %v537
      %v539 = vsel %vm412, %v538, 0.0
      %540 = vadd.xlane.f32.xlu0 %v539
      %v541 = vpop.xlane.xlu0 %540
      %v542 = vrcp.pop %v541
      %v543 = vmul.f32 %v538, %v542
      %v544 = vpack.c.bf16 %v543, %v543
      %545 = vrot.lane.b32.xlu0 %v427, 88
      %v546 = vpop.permute.xlu0 %545
      %v548 = vsel %vm357, %v544, 0
      %v551 = vsel %vm433, %v546, 0
      %553 = vmatprep.subr.bf16.mxu0 0
      %554 = vmatpush1.bf16.msra.mxu0 %v551
      %555 = vmatprep.subr.bf16.mxu0 0
      %556 = vmatpush1.bf16.msra.mxu0 0
      %557 = vmatprep.subr.bf16.mxu0 0
      %558 = vmatpush1.bf16.msra.mxu0 0
      %559 = vmatprep.subr.bf16.mxu0 0
      %560 = vmatpush1.bf16.msra.mxu0 0
      %561 = vmatprep.subr.bf16.mxu0 0
      %562 = vmatpush1.bf16.msra.mxu0 0
      %563 = vmatprep.subr.bf16.mxu0 0
      %564 = vmatpush1.bf16.msra.mxu0 0
      %565 = vmatprep.subr.bf16.mxu0 0
      %566 = vmatpush1.bf16.msra.mxu0 0
      %567 = vmatprep.subr.bf16.mxu0 0
      %568 = vmatpush1.bf16.msra.mxu0 0
      %569 = vmatprep.subr.bf16.mxu0 0
      %570 = vmatpush1.bf16.msra.mxu0 0
      %571 = vmatprep.subr.bf16.mxu0 0
      %572 = vmatpush1.bf16.msra.mxu0 0
      %573 = vmatprep.subr.bf16.mxu0 0
      %574 = vmatpush1.bf16.msra.mxu0 0
      %575 = vmatprep.subr.bf16.mxu0 0
      %576 = vmatpush1.bf16.msra.mxu0 0
      %577 = vmatprep.subr.bf16.mxu0 0
      %578 = vmatpush1.bf16.msra.mxu0 0
      %579 = vmatprep.subr.bf16.mxu0 0
      %580 = vmatpush1.bf16.msra.mxu0 0
      %581 = vmatprep.subr.bf16.mxu0 0
      %582 = vmatpush1.bf16.msra.mxu0 0
      %583 = vmatprep.subr.bf16.mxu0 0
      %584 = vmatpush1.bf16.msra.mxu0 0
      %585 = vmatprep.mubr.bf16.mxu0 0
      %586 = vmatmul.mubr.bf16.gmra.mrb[0].mxu0 %v548
      %v587 = vpop.f32.mrb[0].mxu0
      %v588 = vadd.f32 0.0, %v587
      %v589 = vpop.f32.mrb[0].mxu0
      %v590 = vpop.f32.mrb[0].mxu0
      %v591 = vpop.f32.mrb[0].mxu0
      %592 = vdwg.mxu0
      %v593 = vpack.c.bf16 %v588, %v588
      %v595 = vsel %vm357, %v593, 0
      %v598 = vsel %vm433, %v354, 0
      %600 = vmatprep.subr.bf16.mxu0 0
      %601 = vmatpush1.bf16.msra.mxu0 %v598
      %602 = vmatprep.subr.bf16.mxu0 0
      %603 = vmatpush1.bf16.msra.mxu0 0
      %604 = vmatprep.subr.bf16.mxu0 0
      %605 = vmatpush1.bf16.msra.mxu0 0
      %606 = vmatprep.subr.bf16.mxu0 0
      %607 = vmatpush1.bf16.msra.mxu0 0
      %608 = vmatprep.subr.bf16.mxu0 0
      %609 = vmatpush1.bf16.msra.mxu0 0
      %610 = vmatprep.subr.bf16.mxu0 0
      %611 = vmatpush1.bf16.msra.mxu0 0
      %612 = vmatprep.subr.bf16.mxu0 0
      %613 = vmatpush1.bf16.msra.mxu0 0
      %614 = vmatprep.subr.bf16.mxu0 0
      %615 = vmatpush1.bf16.msra.mxu0 0
      %616 = vmatprep.subr.bf16.mxu0 0
      %617 = vmatpush1.bf16.msra.mxu0 0
      %618 = vmatprep.subr.bf16.mxu0 0
      %619 = vmatpush1.bf16.msra.mxu0 0
      %620 = vmatprep.subr.bf16.mxu0 0
      %621 = vmatpush1.bf16.msra.mxu0 0
      %622 = vmatprep.subr.bf16.mxu0 0
      %623 = vmatpush1.bf16.msra.mxu0 0
      %624 = vmatprep.subr.bf16.mxu0 0
      %625 = vmatpush1.bf16.msra.mxu0 0
      %626 = vmatprep.subr.bf16.mxu0 0
      %627 = vmatpush1.bf16.msra.mxu0 0
      %628 = vmatprep.subr.bf16.mxu0 0
      %629 = vmatpush1.bf16.msra.mxu0 0
      %630 = vmatprep.subr.bf16.mxu0 0
      %631 = vmatpush1.bf16.msra.mxu0 0
      %632 = vmatprep.mubr.bf16.mxu0 0
      %633 = vmatmul.mubr.bf16.gmra.mrb[0].mxu0 %v595
      %v634 = vpop.f32.mrb[0].mxu0
      %v635 = vadd.f32 0.0, %v634
      %v636 = vpop.f32.mrb[0].mxu0
      %v637 = vpop.f32.mrb[0].mxu0
      %v638 = vpop.f32.mrb[0].mxu0
      %639 = vdwg.mxu0
      %v641 = vsel %vm357, %v477, 0
      %v644 = vsel %vm433, %v353, 0
      %646 = vmatprep.subr.bf16.mxu0 0
      %647 = vmatpush1.bf16.msra.mxu0 %v644
      %648 = vmatprep.subr.bf16.mxu0 0
      %649 = vmatpush1.bf16.msra.mxu0 0
      %650 = vmatprep.subr.bf16.mxu0 0
      %651 = vmatpush1.bf16.msra.mxu0 0
      %652 = vmatprep.subr.bf16.mxu0 0
      %653 = vmatpush1.bf16.msra.mxu0 0
      %654 = vmatprep.subr.bf16.mxu0 0
      %655 = vmatpush1.bf16.msra.mxu0 0
      %656 = vmatprep.subr.bf16.mxu0 0
      %657 = vmatpush1.bf16.msra.mxu0 0
      %658 = vmatprep.subr.bf16.mxu0 0
      %659 = vmatpush1.bf16.msra.mxu0 0
      %660 = vmatprep.subr.bf16.mxu0 0
      %661 = vmatpush1.bf16.msra.mxu0 0
      %662 = vmatprep.subr.bf16.mxu0 0
      %663 = vmatpush1.bf16.msra.mxu0 0
      %664 = vmatprep.subr.bf16.mxu0 0
      %665 = vmatpush1.bf16.msra.mxu0 0
      %666 = vmatprep.subr.bf16.mxu0 0
      %667 = vmatpush1.bf16.msra.mxu0 0
      %668 = vmatprep.subr.bf16.mxu0 0
      %669 = vmatpush1.bf16.msra.mxu0 0
      %670 = vmatprep.subr.bf16.mxu0 0
      %671 = vmatpush1.bf16.msra.mxu0 0
      %672 = vmatprep.subr.bf16.mxu0 0
      %673 = vmatpush1.bf16.msra.mxu0 0
      %674 = vmatprep.subr.bf16.mxu0 0
      %675 = vmatpush1.bf16.msra.mxu0 0
      %676 = vmatprep.subr.bf16.mxu0 0
      %677 = vmatpush1.bf16.msra.mxu0 0
      %678 = vmatprep.mubr.bf16.mxu0 0
      %679 = vmatmul.mubr.bf16.gmra.mrb[0].mxu0 %v641
      %v680 = vpop.f32.mrb[0].mxu0
      %v681 = vadd.f32 %v635, %v680
      %v682 = vpop.f32.mrb[0].mxu0
      %v683 = vpop.f32.mrb[0].mxu0
      %v684 = vpop.f32.mrb[0].mxu0
      %685 = vdwg.mxu0
      %686 = vrot.lane.b32.xlu0 %v480, 112
      %v687 = vpop.permute.xlu0 %686
      %688 = vrot.lane.b32.xlu0 %v427, 112
      %v689 = vpop.permute.xlu0 %688
      %v691 = vsel %vm357, %v687, 0
      %v694 = vsel %vm357, %v689, 0
      %696 = vmatprep.subr.bf16.mxu0 0
      %697 = vmatpush1.bf16.xpose.msra.mxu0 %v694
      %698 = vmatprep.subr.bf16.mxu0 0
      %699 = vmatpush1.bf16.xpose.msra.mxu0 0
      %700 = vmatprep.subr.bf16.mxu0 0
      %701 = vmatpush1.bf16.xpose.msra.mxu0 0
      %702 = vmatprep.subr.bf16.mxu0 0
      %703 = vmatpush1.bf16.xpose.msra.mxu0 0
      %704 = vmatprep.subr.bf16.mxu0 0
      %705 = vmatpush1.bf16.xpose.msra.mxu0 0
      %706 = vmatprep.subr.bf16.mxu0 0
      %707 = vmatpush1.bf16.xpose.msra.mxu0 0
      %708 = vmatprep.subr.bf16.mxu0 0
      %709 = vmatpush1.bf16.xpose.msra.mxu0 0
      %710 = vmatprep.subr.bf16.mxu0 0
      %711 = vmatpush1.bf16.xpose.msra.mxu0 0
      %712 = vmatprep.subr.bf16.mxu0 0
      %713 = vmatpush1.bf16.xpose.msra.mxu0 0
      %714 = vmatprep.subr.bf16.mxu0 0
      %715 = vmatpush1.bf16.xpose.msra.mxu0 0
      %716 = vmatprep.subr.bf16.mxu0 0
      %717 = vmatpush1.bf16.xpose.msra.mxu0 0
      %718 = vmatprep.subr.bf16.mxu0 0
      %719 = vmatpush1.bf16.xpose.msra.mxu0 0
      %720 = vmatprep.subr.bf16.mxu0 0
      %721 = vmatpush1.bf16.xpose.msra.mxu0 0
      %722 = vmatprep.subr.bf16.mxu0 0
      %723 = vmatpush1.bf16.xpose.msra.mxu0 0
      %724 = vmatprep.subr.bf16.mxu0 0
      %725 = vmatpush1.bf16.xpose.msra.mxu0 0
      %726 = vmatprep.subr.bf16.mxu0 0
      %727 = vmatpush1.bf16.xpose.msra.mxu0 0
      %728 = vmatprep.mubr.bf16.mxu0 0
      %729 = vmatmul.mubr.bf16.gmra.mrb[0].mxu0 %v691
      %v730 = vpop.f32.mrb[0].mxu0
      %v731 = vadd.f32 0.0, %v730
      %v732 = vpop.f32.mrb[0].mxu0
      %v733 = vpop.f32.mrb[0].mxu0
      %v734 = vpop.f32.mrb[0].mxu0
      %735 = vdwg.mxu0
      %v736 = vmul.f32 %v731, 0.35355338
      %v737 = vadd.f32 %v736, %v409
      %v738 = vsel %vm412, %v737, -inf
      %739 = vmax.xlane.f32.xlu0 %v738
      %v740 = vpop.xlane.xlu0 %739
      %v741 = vsub.f32 %v737, %v740
      %v742 = vmul.f32 %v741, 1.442695
      %v743 = vpow.pop %v742
      %v744 = vsel %vm412, %v743, 0.0
      %745 = vadd.xlane.f32.xlu0 %v744
      %v746 = vpop.xlane.xlu0 %745
      %v747 = vrcp.pop %v746
      %v748 = vmul.f32 %v743, %v747
      %v749 = vpack.c.bf16 %v748, %v748
      %750 = vrot.lane.b32.xlu0 %v427, 80
      %v751 = vpop.permute.xlu0 %750
      %v753 = vsel %vm357, %v749, 0
      %v756 = vsel %vm433, %v751, 0
      %758 = vmatprep.subr.bf16.mxu0 0
      %759 = vmatpush1.bf16.msra.mxu0 %v756
      %760 = vmatprep.subr.bf16.mxu0 0
      %761 = vmatpush1.bf16.msra.mxu0 0
      %762 = vmatprep.subr.bf16.mxu0 0
      %763 = vmatpush1.bf16.msra.mxu0 0
      %764 = vmatprep.subr.bf16.mxu0 0
      %765 = vmatpush1.bf16.msra.mxu0 0
      %766 = vmatprep.subr.bf16.mxu0 0
      %767 = vmatpush1.bf16.msra.mxu0 0
      %768 = vmatprep.subr.bf16.mxu0 0
      %769 = vmatpush1.bf16.msra.mxu0 0
      %770 = vmatprep.subr.bf16.mxu0 0
      %771 = vmatpush1.bf16.msra.mxu0 0
      %772 = vmatprep.subr.bf16.mxu0 0
      %773 = vmatpush1.bf16.msra.mxu0 0
      %774 = vmatprep.subr.bf16.mxu0 0
      %775 = vmatpush1.bf16.msra.mxu0 0
      %776 = vmatprep.subr.bf16.mxu0 0
      %777 = vmatpush1.bf16.msra.mxu0 0
      %778 = vmatprep.subr.bf16.mxu0 0
      %779 = vmatpush1.bf16.msra.mxu0 0
      %780 = vmatprep.subr.bf16.mxu0 0
      %781 = vmatpush1.bf16.msra.mxu0 0
      %782 = vmatprep.subr.bf16.mxu0 0
      %783 = vmatpush1.bf16.msra.mxu0 0
      %784 = vmatprep.subr.bf16.mxu0 0
      %785 = vmatpush1.bf16.msra.mxu0 0
      %786 = vmatprep.subr.bf16.mxu0 0
      %787 = vmatpush1.bf16.msra.mxu0 0
      %788 = vmatprep.subr.bf16.mxu0 0
      %789 = vmatpush1.bf16.msra.mxu0 0
      %790 = vmatprep.mubr.bf16.mxu0 0
      %791 = vmatmul.mubr.bf16.gmra.mrb[0].mxu0 %v753
      %v792 = vpop.f32.mrb[0].mxu0
      %v793 = vadd.f32 0.0, %v792
      %v794 = vpop.f32.mrb[0].mxu0
      %v795 = vpop.f32.mrb[0].mxu0
      %v796 = vpop.f32.mrb[0].mxu0
      %797 = vdwg.mxu0
      %v798 = vpack.c.bf16 %v793, %v793
      %v800 = vsel %vm357, %v798, 0
      %v803 = vsel %vm433, %v355, 0
      %805 = vmatprep.subr.bf16.mxu0 0
      %806 = vmatpush1.bf16.msra.mxu0 %v803
      %807 = vmatprep.subr.bf16.mxu0 0
      %808 = vmatpush1.bf16.msra.mxu0 0
      %809 = vmatprep.subr.bf16.mxu0 0
      %810 = vmatpush1.bf16.msra.mxu0 0
      %811 = vmatprep.subr.bf16.mxu0 0
      %812 = vmatpush1.bf16.msra.mxu0 0
      %813 = vmatprep.subr.bf16.mxu0 0
      %814 = vmatpush1.bf16.msra.mxu0 0
      %815 = vmatprep.subr.bf16.mxu0 0
      %816 = vmatpush1.bf16.msra.mxu0 0
      %817 = vmatprep.subr.bf16.mxu0 0
      %818 = vmatpush1.bf16.msra.mxu0 0
      %819 = vmatprep.subr.bf16.mxu0 0
      %820 = vmatpush1.bf16.msra.mxu0 0
      %821 = vmatprep.subr.bf16.mxu0 0
      %822 = vmatpush1.bf16.msra.mxu0 0
      %823 = vmatprep.subr.bf16.mxu0 0
      %824 = vmatpush1.bf16.msra.mxu0 0
      %825 = vmatprep.subr.bf16.mxu0 0
      %826 = vmatpush1.bf16.msra.mxu0 0
      %827 = vmatprep.subr.bf16.mxu0 0
      %828 = vmatpush1.bf16.msra.mxu0 0
      %829 = vmatprep.subr.bf16.mxu0 0
      %830 = vmatpush1.bf16.msra.mxu0 0
      %831 = vmatprep.subr.bf16.mxu0 0
      %832 = vmatpush1.bf16.msra.mxu0 0
      %833 = vmatprep.subr.bf16.mxu0 0
      %834 = vmatpush1.bf16.msra.mxu0 0
      %835 = vmatprep.subr.bf16.mxu0 0
      %836 = vmatpush1.bf16.msra.mxu0 0
      %837 = vmatprep.mubr.bf16.mxu0 0
      %838 = vmatmul.mubr.bf16.gmra.mrb[0].mxu0 %v800
      %v839 = vpop.f32.mrb[0].mxu0
      %v840 = vadd.f32 0.0, %v839
      %v841 = vpop.f32.mrb[0].mxu0
      %v842 = vpop.f32.mrb[0].mxu0
      %v843 = vpop.f32.mrb[0].mxu0
      %844 = vdwg.mxu0
      %v845 = vadd.f32 %v681, %v840
      %846 = vrot.lane.b32.xlu0 %v480, 104
      %v847 = vpop.permute.xlu0 %846
      %848 = vrot.lane.b32.xlu0 %v427, 104
      %v849 = vpop.permute.xlu0 %848
      %v851 = vsel %vm357, %v847, 0
      %v854 = vsel %vm357, %v849, 0
      %856 = vmatprep.subr.bf16.mxu0 0
      %857 = vmatpush1.bf16.xpose.msra.mxu0 %v854
      %858 = vmatprep.subr.bf16.mxu0 0
      %859 = vmatpush1.bf16.xpose.msra.mxu0 0
      %860 = vmatprep.subr.bf16.mxu0 0
      %861 = vmatpush1.bf16.xpose.msra.mxu0 0
      %862 = vmatprep.subr.bf16.mxu0 0
      %863 = vmatpush1.bf16.xpose.msra.mxu0 0
      %864 = vmatprep.subr.bf16.mxu0 0
      %865 = vmatpush1.bf16.xpose.msra.mxu0 0
      %866 = vmatprep.subr.bf16.mxu0 0
      %867 = vmatpush1.bf16.xpose.msra.mxu0 0
      %868 = vmatprep.subr.bf16.mxu0 0
      %869 = vmatpush1.bf16.xpose.msra.mxu0 0
      %870 = vmatprep.subr.bf16.mxu0 0
      %871 = vmatpush1.bf16.xpose.msra.mxu0 0
      %872 = vmatprep.subr.bf16.mxu0 0
      %873 = vmatpush1.bf16.xpose.msra.mxu0 0
      %874 = vmatprep.subr.bf16.mxu0 0
      %875 = vmatpush1.bf16.xpose.msra.mxu0 0
      %876 = vmatprep.subr.bf16.mxu0 0
      %877 = vmatpush1.bf16.xpose.msra.mxu0 0
      %878 = vmatprep.subr.bf16.mxu0 0
      %879 = vmatpush1.bf16.xpose.msra.mxu0 0
      %880 = vmatprep.subr.bf16.mxu0 0
      %881 = vmatpush1.bf16.xpose.msra.mxu0 0
      %882 = vmatprep.subr.bf16.mxu0 0
      %883 = vmatpush1.bf16.xpose.msra.mxu0 0
      %884 = vmatprep.subr.bf16.mxu0 0
      %885 = vmatpush1.bf16.xpose.msra.mxu0 0
      %886 = vmatprep.subr.bf16.mxu0 0
      %887 = vmatpush1.bf16.xpose.msra.mxu0 0
      %888 = vmatprep.mubr.bf16.mxu0 0
      %889 = vmatmul.mubr.bf16.gmra.mrb[0].mxu0 %v851
      %v890 = vpop.f32.mrb[0].mxu0
      %v891 = vadd.f32 0.0, %v890
      %v892 = vpop.f32.mrb[0].mxu0
      %v893 = vpop.f32.mrb[0].mxu0
      %v894 = vpop.f32.mrb[0].mxu0
      %895 = vdwg.mxu0
      %v896 = vmul.f32 %v891, 0.35355338
      %v897 = vadd.f32 %v896, %v409
      %v898 = vsel %vm412, %v897, -inf
      %899 = vmax.xlane.f32.xlu0 %v898
      %v900 = vpop.xlane.xlu0 %899
      %v901 = vsub.f32 %v897, %v900
      %v902 = vmul.f32 %v901, 1.442695
      %v903 = vpow.pop %v902
      %v904 = vsel %vm412, %v903, 0.0
      %905 = vadd.xlane.f32.xlu0 %v904
      %v906 = vpop.xlane.xlu0 %905
      %v907 = vrcp.pop %v906
      %v908 = vmul.f32 %v903, %v907
      %v909 = vpack.c.bf16 %v908, %v908
      %910 = vrot.lane.b32.xlu0 %v427, 72
      %v911 = vpop.permute.xlu0 %910
      %v913 = vsel %vm357, %v909, 0
      %v916 = vsel %vm433, %v911, 0
      %918 = vmatprep.subr.bf16.mxu0 0
      %919 = vmatpush1.bf16.msra.mxu0 %v916
      %920 = vmatprep.subr.bf16.mxu0 0
      %921 = vmatpush1.bf16.msra.mxu0 0
      %922 = vmatprep.subr.bf16.mxu0 0
      %923 = vmatpush1.bf16.msra.mxu0 0
      %924 = vmatprep.subr.bf16.mxu0 0
      %925 = vmatpush1.bf16.msra.mxu0 0
      %926 = vmatprep.subr.bf16.mxu0 0
      %927 = vmatpush1.bf16.msra.mxu0 0
      %928 = vmatprep.subr.bf16.mxu0 0
      %929 = vmatpush1.bf16.msra.mxu0 0
      %930 = vmatprep.subr.bf16.mxu0 0
      %931 = vmatpush1.bf16.msra.mxu0 0
      %932 = vmatprep.subr.bf16.mxu0 0
      %933 = vmatpush1.bf16.msra.mxu0 0
      %934 = vmatprep.subr.bf16.mxu0 0
      %935 = vmatpush1.bf16.msra.mxu0 0
      %936 = vmatprep.subr.bf16.mxu0 0
      %937 = vmatpush1.bf16.msra.mxu0 0
      %938 = vmatprep.subr.bf16.mxu0 0
      %939 = vmatpush1.bf16.msra.mxu0 0
      %940 = vmatprep.subr.bf16.mxu0 0
      %941 = vmatpush1.bf16.msra.mxu0 0
      %942 = vmatprep.subr.bf16.mxu0 0
      %943 = vmatpush1.bf16.msra.mxu0 0
      %944 = vmatprep.subr.bf16.mxu0 0
      %945 = vmatpush1.bf16.msra.mxu0 0
      %946 = vmatprep.subr.bf16.mxu0 0
      %947 = vmatpush1.bf16.msra.mxu0 0
      %948 = vmatprep.subr.bf16.mxu0 0
      %949 = vmatpush1.bf16.msra.mxu0 0
      %950 = vmatprep.mubr.bf16.mxu0 0
      %951 = vmatmul.mubr.bf16.gmra.mrb[0].mxu0 %v913
      %v952 = vpop.f32.mrb[0].mxu0
      %v953 = vadd.f32 0.0, %v952
      %v954 = vpop.f32.mrb[0].mxu0
      %v955 = vpop.f32.mrb[0].mxu0
      %v956 = vpop.f32.mrb[0].mxu0
      %957 = vdwg.mxu0
      %v958 = vpack.c.bf16 %v953, %v953
      %v960 = vsel %vm357, %v958, 0
      %v963 = vsel %vm433, %v356, 0
      %965 = vmatprep.subr.bf16.mxu0 0
      %966 = vmatpush1.bf16.msra.mxu0 %v963
      %967 = vmatprep.subr.bf16.mxu0 0
      %968 = vmatpush1.bf16.msra.mxu0 0
      %969 = vmatprep.subr.bf16.mxu0 0
      %970 = vmatpush1.bf16.msra.mxu0 0
      %971 = vmatprep.subr.bf16.mxu0 0
      %972 = vmatpush1.bf16.msra.mxu0 0
      %973 = vmatprep.subr.bf16.mxu0 0
      %974 = vmatpush1.bf16.msra.mxu0 0
      %975 = vmatprep.subr.bf16.mxu0 0
      %976 = vmatpush1.bf16.msra.mxu0 0
      %977 = vmatprep.subr.bf16.mxu0 0
      %978 = vmatpush1.bf16.msra.mxu0 0
      %979 = vmatprep.subr.bf16.mxu0 0
      %980 = vmatpush1.bf16.msra.mxu0 0
      %981 = vmatprep.subr.bf16.mxu0 0
      %982 = vmatpush1.bf16.msra.mxu0 0
      %983 = vmatprep.subr.bf16.mxu0 0
      %984 = vmatpush1.bf16.msra.mxu0 0
      %985 = vmatprep.subr.bf16.mxu0 0
      %986 = vmatpush1.bf16.msra.mxu0 0
      %987 = vmatprep.subr.bf16.mxu0 0
      %988 = vmatpush1.bf16.msra.mxu0 0
      %989 = vmatprep.subr.bf16.mxu0 0
      %990 = vmatpush1.bf16.msra.mxu0 0
      %991 = vmatprep.subr.bf16.mxu0 0
      %992 = vmatpush1.bf16.msra.mxu0 0
      %993 = vmatprep.subr.bf16.mxu0 0
      %994 = vmatpush1.bf16.msra.mxu0 0
      %995 = vmatprep.subr.bf16.mxu0 0
      %996 = vmatpush1.bf16.msra.mxu0 0
      %997 = vmatprep.mubr.bf16.mxu0 0
      %998 = vmatmul.mubr.bf16.gmra.mrb[0].mxu0 %v960
      %v999 = vpop.f32.mrb[0].mxu0
      %v1000 = vadd.f32 0.0, %v999
      %v1001 = vpop.f32.mrb[0].mxu0
      %v1002 = vpop.f32.mrb[0].mxu0
      %v1003 = vpop.f32.mrb[0].mxu0
      %1004 = vdwg.mxu0
      %v1005 = vadd.f32 %v845, %v1000
      %v1006 = vld [vmem:[%s4] sm:$0x1]
      %v1008 = vlaneseq
      %v1009 = vshrl.u32 %v1008, 7
      %v1010 = vsub.s32 0, %v1009
      %v1011 = vrot.slane %v1006, %v1010
      %v1013 = vadd.f32 %v1005, %v1011
      %v1014 = vld [vmem:[%s344] sm:$0x7]
      %v1015 = vunpack.c.l.bf16 %v1014
      %v1016 = vadd.f32 %v1013, %v1015
      %v1017 = vld [vmem:[%s6] sm:$0x1]
      %v1018 = vld [vmem:[%s7] sm:$0x1]
      %vm1019 = vcmask 259072
      %v1020 = vsel %vm1019, %v1016, 0.0
      %1021 = vadd.xlane.f32.xlu0 %v1020
      %v1022 = vpop.xlane.xlu0 %1021
      %v1023 = vrcp.pop 32.0
      %v1024 = vmul.f32 %v1022, %v1023
      %v1025 = vsub.f32 %v1016, %v1024
      %v1026 = vmul.f32 %v1025, %v1025
      %v1027 = vsel %vm1019, %v1026, 0.0
      %1028 = vadd.xlane.f32.xlu0 %v1027
      %v1029 = vpop.xlane.xlu0 %1028
      %v1030 = vmul.f32 %v1029, %v1023
      %v1031 = vadd.f32 %v1030, 1e-05
      %v1032 = vrsqrt.pop %v1031
      %v1033 = vmul.f32 %v1025, %v1032
      %v1035 = vlaneseq
      %v1036 = vshrl.u32 %v1035, 7
      %v1037 = vsub.s32 0, %v1036
      %v1038 = vrot.slane %v1017, %v1037
      %v1040 = vmul.f32 %v1033, %v1038
      %v1042 = vlaneseq
      %v1043 = vshrl.u32 %v1042, 7
      %v1044 = vsub.s32 0, %v1043
      %v1045 = vrot.slane %v1018, %v1044
      %v1047 = vadd.f32 %v1040, %v1045
      %v1048 = vpack.c.bf16 %v1047, %v1047
      %vm1049 = vcmask 256000
      %1050 = vst.msk [vmem:[%s348] sm:$0x7] %vm1049, %v1048
      %p1051 = scmp.lt.s32.totalorder %s19, 1
      %s1052 = scalar_select %p1051, %s19, 1
      %s1053 = smul.addr %s1052, 4
      %s1054 = scalar_lea.vmem %s8, %s1053
      // Predicated region
      $region53: #{forward.38} parent=51 // pred_check
        %p1055 = pneg %p225
      $region54: #{forward.38} parent=51 // pred_check_branch
        %1057 = sbr.rel (%p1055) target = $region56
      $region55: #{forward.38} parent=51 // pred_region
        _
      $region56: #{forward.38} parent=51 // pred_fallthru
        _
    $region52: #{forward.38} parent=5 // pred_fallthru
      _
    %p1058 = scmp.le.s32.totalorder 2, %s14
    // Predicated region
    $region57: #{forward.38} parent=5 // pred_check
      %p1059 = pneg %p1058
    $region58: #{forward.38} parent=5 // pred_check_branch
      %1061 = sbr.rel (%p1059) target = $region60
    $region59: #{forward.38} parent=5 // pred_region
      %s1062 = ssub.s32 %s14, 2
      // Predicated region
      $region61: #{forward.38} parent=59 // pred_check
        %p1063 = pneg %p231
      $region62: #{forward.38} parent=59 // pred_check_branch
        %1065 = sbr.rel (%p1063) target = $region64
      $region63: #{forward.38} parent=59 // pred_region
        %p1066 = scmp.lt.s32.totalorder %s20, 1
        %s1067 = scalar_select %p1066, %s20, 1
        %s1068 = smul.addr %s1067, 4
        %s1069 = scalar_lea.vmem %s8, %s1068
      $region64: #{forward.38} parent=59 // pred_fallthru
        _
    $region60: #{forward.38} parent=5 // pred_fallthru
      _
  $region6: #{forward.38} parent=0 // loop_footer
    %s18 = sadd.s32 1, %s14
  $region7: #{forward.38} parent=0 // loop_footer_branch
    %13 = sbr.rel target = $region3
  $region8: #{forward.38} parent=0 // loop_exit
    _

// kernel: forward.46
$region0: #{forward.46}
  #allocation0 [shape = 'u32[]', space=smem, size = 0x4, offset = 0x4, fixed_abs, tag = 'smem constant byte address 0x4 - core index']
  #allocation1 [shape = 'u32[144,128]{1,0:T(1,128)}', space=vmem, size = 0x12000, scoped, tag = 'internal scratch']
  %s0 = inlined_call_operand.vmem [shape: bf16[12,32], index: 0, kind: input, shape index: {}]
  %s1 = inlined_call_operand.vmem [shape: f32[1,32], index: 1, kind: input, shape index: {}]
  %s2 = inlined_call_operand.vmem [shape: f32[1,32], index: 2, kind: input, shape index: {}]
  %s3 = inlined_call_operand.vmem [shape: bf16[12,32], index: 3, kind: output, shape index: {}]
  %s4 = sld [smem:[#allocation0]]
  $region22: #{forward.46} parent=0
    _
  %s6 = ssub.s32 1, %s4
  %s7 = scalar_select 0, %s6, %s4
  // Predicated region
  $region2: #{forward.46} parent=0 // pred_check
    _
  $region3: #{forward.46} parent=0 // pred_check_branch
    %9 = sbr.rel (0) target = $region5
  $region4: #{forward.46} parent=0 // pred_region
    _
  $region5: #{forward.46} parent=0 // pred_fallthru
    _
  // Predicated region
  $region6: #{forward.46} parent=0 // pred_check
    _
  $region7: #{forward.46} parent=0 // pred_check_branch
    %11 = sbr.rel (0) target = $region9
  $region8: #{forward.46} parent=0 // pred_region
    _
  $region9: #{forward.46} parent=0 // pred_fallthru
    _
  // Predicated region
  $region10: #{forward.46} parent=0 // pred_check
    _
  $region11: #{forward.46} parent=0 // pred_check_branch
    %13 = sbr.rel (0) target = $region13
  $region12: #{forward.46} parent=0 // pred_region
    _
  $region13: #{forward.46} parent=0 // pred_fallthru
    _
  %v14 = vld [vmem:[%s0] sm:$0xf]
  %v15 = vld [vmem:[%s0 + $0x4] sm:$0x3]
  %v16 = vunpack.c.l.bf16 %v14
  %v17 = vunpack.c.l.bf16 %v15
  %v18 = vld [vmem:[%s1] sm:$0x1]
  %v19 = vld [vmem:[%s2] sm:$0x1]
  %vm20 = vcmask 261120
  %v21 = vsel %vm20, %v16, 0.0
  %22 = vadd.xlane.f32.xlu0 %v21
  %v23 = vpop.xlane.xlu0 %22
  %vm24 = vcmask 257024
  %v25 = vsel %vm24, %v17, 0.0
  %26 = vadd.xlane.f32.xlu0 %v25
  %v27 = vpop.xlane.xlu0 %26
  %v28 = vrcp.pop 32.0
  %v29 = vmul.f32 %v23, %v28
  %v30 = vmul.f32 %v27, %v28
  %v31 = vsub.f32 %v16, %v29
  %v32 = vsub.f32 %v17, %v30
  %v33 = vmul.f32 %v31, %v31
  %v34 = vmul.f32 %v32, %v32
  %v35 = vsel %vm20, %v33, 0.0
  %36 = vadd.xlane.f32.xlu0 %v35
  %v37 = vpop.xlane.xlu0 %36
  %v38 = vsel %vm24, %v34, 0.0
  %39 = vadd.xlane.f32.xlu0 %v38
  %v40 = vpop.xlane.xlu0 %39
  %v41 = vmul.f32 %v37, %v28
  %v42 = vmul.f32 %v40, %v28
  %v43 = vadd.f32 %v41, 1e-05
  %v44 = vadd.f32 %v42, 1e-05
  %v45 = vrsqrt.pop %v43
  %v46 = vrsqrt.pop %v44
  %v47 = vmul.f32 %v31, %v45
  %v48 = vmul.f32 %v32, %v46
  %v50 = vlaneseq
  %v51 = vshrl.u32 %v50, 7
  %v52 = vsub.s32 0, %v51
  %v53 = vrot.slane %v18, %v52
  %v55 = vmul.f32 %v47, %v53
  %v56 = vmul.f32 %v48, %v53
  %v58 = vlaneseq
  %v59 = vshrl.u32 %v58, 7
  %v60 = vsub.s32 0, %v59
  %v61 = vrot.slane %v19, %v60
  %v63 = vadd.f32 %v55, %v61
  %v64 = vadd.f32 %v56, %v61
  %v65 = vpack.c.bf16 %v64, %v63
  %v67 = vunpack.c.l.b16 %v65
  %v68 = vunpack.c.h.b16 %v65
  %v69 = vpack.c.b16 %v67, %v67
  %v70 = vpack.c.b16 %v68, %v68
  %73 = vst.msk [vmem:[%s3] sm:$0xf] %vm24, %v69
  %vm74 = vcmask 254976
  %75 = vst.msk [vmem:[%s3 + $0x4] sm:$0x3] %vm74, %v70
  // Predicated region
  $region14: #{forward.46} parent=0 // pred_check
    _
  $region15: #{forward.46} parent=0 // pred_check_branch
    %77 = sbr.rel (0) target = $region17
  $region16: #{forward.46} parent=0 // pred_region
    _
  $region17: #{forward.46} parent=0 // pred_fallthru
    _
  // Predicated region
  $region18: #{forward.46} parent=0 // pred_check
    _
  $region19: #{forward.46} parent=0 // pred_check_branch
    %79 = sbr.rel (0) target = $region21
  $region20: #{forward.46} parent=0 // pred_region
    _
  $region21: #{forward.46} parent=0 // pred_fallthru
    _

// kernel: forward.47
$region0: #{forward.47}
  #allocation0 [shape = 'u32[]', space=smem, size = 0x4, offset = 0x4, fixed_abs, tag = 'smem constant byte address 0x4 - core index']
  #allocation1 [shape = 'u32[144,128]{1,0:T(1,128)}', space=vmem, size = 0x12000, scoped, tag = 'internal scratch']
  %s0 = inlined_call_operand.vmem [shape: bf16[12,32], index: 0, kind: input, shape index: {}]
  %s1 = inlined_call_operand.vmem [shape: bf16[32,24], index: 1, kind: input, shape index: {}]
  %s2 = inlined_call_operand.vmem [shape: f32[1,24], index: 2, kind: input, shape index: {}]
  %s3 = inlined_call_operand.vmem [shape: f32[12,24], index: 3, kind: output, shape index: {}]
  %s4 = sld [smem:[#allocation0]]
  $region22: #{forward.47} parent=0
    _
  %s6 = ssub.s32 1, %s4
  %s7 = scalar_select 0, %s6, %s4
  // Predicated region
  $region2: #{forward.47} parent=0 // pred_check
    _
  $region3: #{forward.47} parent=0 // pred_check_branch
    %9 = sbr.rel (0) target = $region5
  $region4: #{forward.47} parent=0 // pred_region
    _
  $region5: #{forward.47} parent=0 // pred_fallthru
    _
  // Predicated region
  $region6: #{forward.47} parent=0 // pred_check
    _
  $region7: #{forward.47} parent=0 // pred_check_branch
    %11 = sbr.rel (0) target = $region9
  $region8: #{forward.47} parent=0 // pred_region
    _
  $region9: #{forward.47} parent=0 // pred_fallthru
    _
  // Predicated region
  $region10: #{forward.47} parent=0 // pred_check
    _
  $region11: #{forward.47} parent=0 // pred_check_branch
    %13 = sbr.rel (0) target = $region13
  $region12: #{forward.47} parent=0 // pred_region
    _
  $region13: #{forward.47} parent=0 // pred_fallthru
    _
  %v15 = vld [vmem:[%s0] sm:$0xf]
  %v16 = vld [vmem:[%s0 + $0x4] sm:$0x3]
  %v17 = vld [vmem:[%s1] sm:$0xf]
  %v18 = vld [vmem:[%s1 + $0x4] sm:$0xf]
  %v19 = vld [vmem:[%s1 + $0x8] sm:$0xf]
  %v20 = vld [vmem:[%s1 + $0xc] sm:$0xf]
  %v21 = vld [vmem:[%s2] sm:$0x1]
  %v23 = vlaneseq
  %v24 = vshrl.u32 %v23, 7
  %v25 = vsub.s32 0, %v24
  %v26 = vrot.slane %v21, %v25
  %v30 = vunpack.c.l.b16 %v15
  %v31 = vunpack.c.l.b16 %v16
  %v32 = vpack.c.b16 %v31, %v30
  %v37 = vunpack.c.l.b16 %v17
  %v38 = vunpack.c.l.b16 %v18
  %v39 = vunpack.c.l.b16 %v19
  %v40 = vunpack.c.l.b16 %v20
  %v41 = vpack.c.b16 %v38, %v37
  %v42 = vpack.c.b16 %v40, %v39
  %vm45 = vcmask 261120
  %v47 = vsel %vm45, %v32, 0
  %49 = vmatprep.subr.bf16.mxu0 0
  %50 = vmatpush1.bf16.msra.mxu0 %v41
  %51 = vmatprep.subr.bf16.mxu0 0
  %52 = vmatpush1.bf16.msra.mxu0 %v42
  %53 = vmatprep.subr.bf16.mxu0 0
  %54 = vmatpush1.bf16.msra.mxu0 0
  %55 = vmatprep.subr.bf16.mxu0 0
  %56 = vmatpush1.bf16.msra.mxu0 0
  %57 = vmatprep.subr.bf16.mxu0 0
  %58 = vmatpush1.bf16.msra.mxu0 0
  %59 = vmatprep.subr.bf16.mxu0 0
  %60 = vmatpush1.bf16.msra.mxu0 0
  %61 = vmatprep.subr.bf16.mxu0 0
  %62 = vmatpush1.bf16.msra.mxu0 0
  %63 = vmatprep.subr.bf16.mxu0 0
  %64 = vmatpush1.bf16.msra.mxu0 0
  %65 = vmatprep.subr.bf16.mxu0 0
  %66 = vmatpush1.bf16.msra.mxu0 0
  %67 = vmatprep.subr.bf16.mxu0 0
  %68 = vmatpush1.bf16.msra.mxu0 0
  %69 = vmatprep.subr.bf16.mxu0 0
  %70 = vmatpush1.bf16.msra.mxu0 0
  %71 = vmatprep.subr.bf16.mxu0 0
  %72 = vmatpush1.bf16.msra.mxu0 0
  %73 = vmatprep.subr.bf16.mxu0 0
  %74 = vmatpush1.bf16.msra.mxu0 0
  %75 = vmatprep.subr.bf16.mxu0 0
  %76 = vmatpush1.bf16.msra.mxu0 0
  %77 = vmatprep.subr.bf16.mxu0 0
  %78 = vmatpush1.bf16.msra.mxu0 0
  %79 = vmatprep.subr.bf16.mxu0 0
  %80 = vmatpush1.bf16.msra.mxu0 0
  %81 = vmatprep.mubr.bf16.mxu0 0
  %82 = vmatmul.mubr.bf16.gmra.mrb[0].mxu0 %v47
  %v83 = vpop.f32.mrb[0].mxu0
  %v84 = vadd.f32 %v26, %v83
  %v85 = vpop.f32.mrb[0].mxu0
  %v86 = vpop.f32.mrb[0].mxu0
  %v87 = vadd.f32 %v26, %v86
  %v88 = vpop.f32.mrb[0].mxu0
  %89 = vdwg.mxu0
  %vm90 = vcmask 195584
  %91 = vst.msk [vmem:[%s3] sm:$0xff] %vm90, %v84
  %vm92 = vcmask 191488
  %93 = vst.msk [vmem:[%s3 + $0x8] sm:$0xf] %vm92, %v87
  // Predicated region
  $region14: #{forward.47} parent=0 // pred_check
    _
  $region15: #{forward.47} parent=0 // pred_check_branch
    %95 = sbr.rel (0) target = $region17
  $region16: #{forward.47} parent=0 // pred_region
    _
  $region17: #{forward.47} parent=0 // pred_fallthru
    _
  // Predicated region
  $region18: #{forward.47} parent=0 // pred_check
    _
  $region19: #{forward.47} parent=0 // pred_check_branch
    %97 = sbr.rel (0) target = $region21
  $region20: #{forward.47} parent=0 // pred_region
    _
  $region21: #{forward.47} parent=0 // pred_fallthru
    _

</llo_original>
